<compile_context>
chip_gen: v7x
topology: tpu7x:2x2x1
jax: 0.10.0
libtpu: 0.0.40
codegen_flags: <defaults>
</compile_context>

<pallas_src>
import jax
import jax.numpy as jnp
from jax.experimental import pallas as pl
from jax.experimental.pallas import tpu as pltpu


# ---------------------------------------------------------------------------
# In-kernel helpers (traced inside the single fused kernel)
# ---------------------------------------------------------------------------
def _pool2x2(y, H, W, TB, C):
    """2x2/2 max-pool on a lane-dense (H*W*TB, C) slab.

    Row order is (h, w, b_local); all reshapes split/merge dims only at
    multiples of 8 sublanes (TB % 8 == 0), so they are free relabels.
    Returns (H//2, (W//2)*TB, C).
    """
    t = y.reshape(H // 2, 2, W * TB, C)
    yh = jnp.maximum(t[:, 0], t[:, 1])                     # max over h pairs
    u = yh.reshape(H // 2, W // 2, 2 * TB, C)
    yo = jnp.maximum(u[:, :, :TB, :], u[:, :, TB:, :])     # max over w pairs
    return yo.reshape(H // 2, (W // 2) * TB, C)


def _conv_block(p, x, w_ref, b_ref, H, W, TB, Cin, Cout):
    """3x3 same-conv + bias + ReLU + 2x2 maxpool, Cin contraction on the MXU.

    p     : (H+2, (W+2)*TB, Cin) f32 persistent padded VMEM scratch
    x     : (H, W*TB, Cin) f32 pooled output of the previous layer
    w_ref : (9, Cin, Cout) bf16 tap-major weights
    b_ref : (1, Cout) f32
    Returns (H//2, (W//2)*TB, Cout) f32.
    """
    WB = (W + 2) * TB
    # Zero only the halo; the interior is fully overwritten below.  Done every
    # grid step (not gated on program_id == 0): scratch persists across steps
    # and is per-core under megacore, so a step-0 gate would leave the second
    # core's halo uninitialized.
    zrow = jnp.zeros((1, WB, Cin), jnp.float32)
    p[0:1, :, :] = zrow
    p[H + 1:H + 2, :, :] = zrow
    zcol = jnp.zeros((H, TB, Cin), jnp.float32)
    p[1:H + 1, 0:TB, :] = zcol
    p[1:H + 1, (W + 1) * TB:WB, :] = zcol
    p[1:H + 1, TB:(W + 1) * TB, :] = x

    M = H * W * TB
    acc = None
    # TODO(synk): on v6e/v7x the 9 taps could be merged into a single
    # (M, 9*Cin) x (9*Cin, Cout) matmul (im2col via minor-dim concatenate) for
    # better MXU K-efficiency; kept as per-tap K=Cin dots here because every
    # tap slice is already an aligned zero-relayout view, accumulation stays
    # f32 (v5e-safe), and it avoids unaligned lane concatenation.
    for t in range(9):
        kh, kw = divmod(t, 3)
        tap = p[kh:kh + H, kw * TB:(kw + W) * TB, :].reshape(M, Cin)
        d = jnp.dot(tap.astype(jnp.bfloat16), w_ref[t],
                    preferred_element_type=jnp.float32)
        acc = d if acc is None else acc + d                 # init from first tap
    y = jnp.maximum(acc + b_ref[...], 0.0)                  # (M, Cout) f32
    return _pool2x2(y, H, W, TB, Cout)


def cnn_fused_kernel(pat_ref, w1, b1, w2, b2, w3, b3, w4, b4,
                     fw1, fb1, fw2, fb2, o_ref, p2, p3, p4):
    """Whole network for one batch tile.

    pat_ref : (16*16*TB, 16) bf16 layer-1 im2col patches (9 taps + 7 zero cols)
    o_ref   : (TB, 10) f32 logits
    p2/p3/p4: padded VMEM scratch for the conv-2/3/4 inputs.
    """
    TB = o_ref.shape[0]

    # ---- layer 1: one MXU dot over the wrapper-built im2col patches --------
    y = jnp.dot(pat_ref[...], w1[...], preferred_element_type=jnp.float32)
    y = jnp.maximum(y + b1[...], 0.0)                       # (256*TB, 32)
    y = _pool2x2(y, 16, 16, TB, 32)                         # (8, 8*TB, 32)

    # ---- layers 2-4 ---------------------------------------------------------
    y = _conv_block(p2, y, w2, b2, 8, 8, TB, 32, 64)        # (4, 4*TB, 64)
    y = _conv_block(p3, y, w3, b3, 4, 4, TB, 64, 128)       # (2, 2*TB, 128)
    y = _conv_block(p4, y, w4, b4, 2, 2, TB, 128, 256)      # (1, TB, 256)

    # ---- classifier head (final spatial size 1x1 -> flatten == (B, 256)) ---
    feat = y.reshape(TB, 256).astype(jnp.bfloat16)
    h = jnp.dot(feat, fw1[...], preferred_element_type=jnp.float32) + fb1[...]
    h = jnp.maximum(h, 0.0)
    # TODO(synk): nn.Dropout(0.5) is identity at inference; a train-mode mask
    # would use pltpu.prng_seed / pltpu.prng_random_bits seeded per grid step.
    o_ref[...] = (jnp.dot(h.astype(jnp.bfloat16), fw2[...],
                          preferred_element_type=jnp.float32) + fb2[...])


# ---------------------------------------------------------------------------
# Wrapper: one pallas_call, grid over batch tiles
# ---------------------------------------------------------------------------
def _round_up(n, m):
    return ((n + m - 1) // m) * m


@jax.jit
def cnn_forward(x_nchw, params):
    B = x_nchw.shape[0]
    H0 = W0 = 16
    Bp = _round_up(max(B, 1), 8)                  # sublane-friendly batch
    TB = 32 if Bp % 32 == 0 else (16 if Bp % 16 == 0 else 8)
    G = Bp // TB

    bf = jnp.bfloat16
    # ---- layer-1 im2col patch matrix, rows ordered (tile, h, w, b_local) ----
    x = x_nchw[:, 0].astype(jnp.float32)                    # (B, 16, 16)
    x = jnp.pad(x, ((0, Bp - B), (1, 1), (1, 1)))           # (Bp, 18, 18)
    taps = [x[:, kh:kh + H0, kw:kw + W0]
            for kh in range(3) for kw in range(3)]          # 9 x (Bp, 16, 16)
    pat = jnp.stack(taps, axis=-1)                          # (Bp, 16, 16, 9)
    pat = jnp.pad(pat, ((0, 0), (0, 0), (0, 0), (0, 7)))    # K: 9 -> 16
    pat = pat.reshape(G, TB, H0, W0, 16).transpose(0, 2, 3, 1, 4)
    pat = pat.reshape(G * H0 * W0 * TB, 16).astype(bf)

    # ---- weights: tap-major, bf16 for the MXU; biases stay f32 --------------
    (w1, b1), (w2, b2), (w3, b3), (w4, b4) = params["convs"]
    (fw1, fb1), (fw2, fb2) = params["fcs"]
    args = [
        pat,
        jnp.pad(w1.reshape(9, 32), ((0, 7), (0, 0))).astype(bf), b1.reshape(1, -1),
        w2.reshape(9, 32, 64).astype(bf), b2.reshape(1, -1),
        w3.reshape(9, 64, 128).astype(bf), b3.reshape(1, -1),
        w4.reshape(9, 128, 256).astype(bf), b4.reshape(1, -1),
        fw1.astype(bf), fb1.reshape(1, -1),
        fw2.astype(bf), fb2.reshape(1, -1),
    ]

    def _resident(a):   # whole array in VMEM; same block every step -> one DMA
        return pl.BlockSpec(a.shape, lambda t, nd=a.ndim: (0,) * nd)

    in_specs = ([pl.BlockSpec((H0 * W0 * TB, 16), lambda t: (t, 0))] +
                [_resident(a) for a in args[1:]])

    out = pl.pallas_call(
        cnn_fused_kernel,
        out_shape=jax.ShapeDtypeStruct((Bp, 10), jnp.float32),
        grid_spec=pltpu.PrefetchScalarGridSpec(
            num_scalar_prefetch=0,
            grid=(G,),
            in_specs=in_specs,
            out_specs=pl.BlockSpec((TB, 10), lambda t: (t, 0)),
            scratch_shapes=[
                pltpu.VMEM((10, 10 * TB, 32), jnp.float32),   # conv2 padded in
                pltpu.VMEM((6, 6 * TB, 64), jnp.float32),     # conv3 padded in
                pltpu.VMEM((4, 4 * TB, 128), jnp.float32),    # conv4 padded in
            ]),
        compiler_params=pltpu.CompilerParams(
            dimension_semantics=("parallel",),
            vmem_limit_bytes=32 * 1024 * 1024),
    )(*args)
    return out[:B]


# ---------------------------------------------------------------------------
# Deterministic parameter init (shapes from the PyTorch module)
# ---------------------------------------------------------------------------
def init_params(key):
    conv_cfg = [(1, 32), (32, 64), (64, 128), (128, 256)]
    fc_cfg = [(256, 512), (512, 10)]
    keys = jax.random.split(key, 2 * (len(conv_cfg) + len(fc_cfg)))
    ki = 0
    params = {"convs": [], "fcs": []}
    for cin, cout in conv_cfg:
        std = (cin * 9) ** -0.5
        w = std * jax.random.normal(keys[ki], (3, 3, cin, cout), jnp.float32)
        ki += 1
        b = 0.01 * jax.random.normal(keys[ki], (cout,), jnp.float32)
        ki += 1
        params["convs"].append((w, b))
    for fin, fout in fc_cfg:
        std = fin ** -0.5
        w = std * jax.random.normal(keys[ki], (fin, fout), jnp.float32)
        ki += 1
        b = 0.01 * jax.random.normal(keys[ki], (fout,), jnp.float32)
        ki += 1
        params["fcs"].append((w, b))
    return params


# ---------------------------------------------------------------------------
# Pure-JAX reference (same math, high precision, used only for the check)
# ---------------------------------------------------------------------------
def reference_forward(x_nchw, params):
    hp = jax.lax.Precision.HIGHEST
    x = jnp.transpose(x_nchw, (0, 2, 3, 1)).astype(jnp.float32)  # NHWC
    for w, b in params["convs"]:
        x = jax.lax.conv_general_dilated(
            x, w, window_strides=(1, 1), padding=((1, 1), (1, 1)),
            dimension_numbers=("NHWC", "HWIO", "NHWC"), precision=hp)
        x = jax.nn.relu(x + b)
        x = jax.lax.reduce_window(
            x, -jnp.inf, jax.lax.max, (1, 2, 2, 1), (1, 2, 2, 1), "VALID")
    x = x.reshape(x.shape[0], -1)
    (w1, b1), (w2, b2) = params["fcs"]
    x = jax.nn.relu(jnp.dot(x, w1, precision=hp) + b1)
    return jnp.dot(x, w2, precision=hp) + b2


if __name__ == "__main__":
    key = jax.random.PRNGKey(0)
    k_params, k_x = jax.random.split(key)
    params = init_params(k_params)

    # fc1 expects 256*1*1 features => input spatial must be 16x16, 1 channel.
    x = jax.random.normal(k_x, (2, 1, 16, 16), jnp.float32)   # NCHW, as PyTorch

    out = jax.block_until_ready(cnn_forward(x, params))
    ref = reference_forward(x, params)
    assert out.shape == (2, 10), out.shape

    # Tolerance covers bf16 matmul inputs (f32 accumulation) vs the
    # HIGHEST-precision f32 XLA reference.
    err = float(jnp.max(jnp.abs(out - ref)))
    assert jnp.allclose(out, ref, atol=1e-1, rtol=1e-1), f"max abs err {err}"

    print("KERNEL_OK")
</pallas_src>

<mosaic_0001>
module attributes {stable_mosaic.version = 11 : i64} {
  func.func @cnn_fused_kernel(%arg0: i32, %arg1: memref<2048x16xbf16, #tpu.memory_space<vmem>>, %arg2: memref<16x32xbf16, #tpu.memory_space<vmem>>, %arg3: memref<1x32xf32, #tpu.memory_space<vmem>>, %arg4: memref<9x32x64xbf16, #tpu.memory_space<vmem>>, %arg5: memref<1x64xf32, #tpu.memory_space<vmem>>, %arg6: memref<9x64x128xbf16, #tpu.memory_space<vmem>>, %arg7: memref<1x128xf32, #tpu.memory_space<vmem>>, %arg8: memref<9x128x256xbf16, #tpu.memory_space<vmem>>, %arg9: memref<1x256xf32, #tpu.memory_space<vmem>>, %arg10: memref<256x512xbf16, #tpu.memory_space<vmem>>, %arg11: memref<1x512xf32, #tpu.memory_space<vmem>>, %arg12: memref<512x10xbf16, #tpu.memory_space<vmem>>, %arg13: memref<1x10xf32, #tpu.memory_space<vmem>>, %arg14: memref<8x10xf32, #tpu.memory_space<vmem>>, %arg15: memref<10x80x32xf32, #tpu.memory_space<vmem>>, %arg16: memref<6x48x64xf32, #tpu.memory_space<vmem>>, %arg17: memref<4x32x128xf32, #tpu.memory_space<vmem>>) attributes {dimension_semantics = [#tpu.dimension_semantics<parallel>], iteration_bounds = array<i64: 1>, scalar_prefetch = 0 : i64, scratch_operands = 3 : i64, tpu.core_type = #tpu.core_type<tc>, window_params = [{transform_indices = @transform_0, window_bounds = array<i64: 2048, 16>}, {pipeline_mode = #tpu.pipeline_mode<synchronous>, transform_indices = @transform_1, window_bounds = array<i64: 16, 32>}, {pipeline_mode = #tpu.pipeline_mode<synchronous>, transform_indices = @transform_2, window_bounds = array<i64: 1, 32>}, {pipeline_mode = #tpu.pipeline_mode<synchronous>, transform_indices = @transform_3, window_bounds = array<i64: 9, 32, 64>}, {pipeline_mode = #tpu.pipeline_mode<synchronous>, transform_indices = @transform_4, window_bounds = array<i64: 1, 64>}, {pipeline_mode = #tpu.pipeline_mode<synchronous>, transform_indices = @transform_5, window_bounds = array<i64: 9, 64, 128>}, {pipeline_mode = #tpu.pipeline_mode<synchronous>, transform_indices = @transform_6, window_bounds = array<i64: 1, 128>}, {pipeline_mode = #tpu.pipeline_mode<synchronous>, transform_indices = @transform_7, window_bounds = array<i64: 9, 128, 256>}, {pipeline_mode = #tpu.pipeline_mode<synchronous>, transform_indices = @transform_8, window_bounds = array<i64: 1, 256>}, {pipeline_mode = #tpu.pipeline_mode<synchronous>, transform_indices = @transform_9, window_bounds = array<i64: 256, 512>}, {pipeline_mode = #tpu.pipeline_mode<synchronous>, transform_indices = @transform_10, window_bounds = array<i64: 1, 512>}, {pipeline_mode = #tpu.pipeline_mode<synchronous>, transform_indices = @transform_11, window_bounds = array<i64: 512, 10>}, {pipeline_mode = #tpu.pipeline_mode<synchronous>, transform_indices = @transform_12, window_bounds = array<i64: 1, 10>}, {transform_indices = @transform_13, window_bounds = array<i64: 8, 10>}]} {
    %c0 = arith.constant 0 : index
    %c0_0 = arith.constant 0 : index
    %0 = vector.load %arg1[%c0, %c0_0] : memref<2048x16xbf16, #tpu.memory_space<vmem>>, vector<2048x16xbf16>
    %c0_1 = arith.constant 0 : index
    %c0_2 = arith.constant 0 : index
    %1 = vector.load %arg2[%c0_1, %c0_2] : memref<16x32xbf16, #tpu.memory_space<vmem>>, vector<16x32xbf16>
    %cst = arith.constant dense<0.000000e+00> : vector<2048x32xf32>
    %2 = tpu.matmul %0, %1, %cst {dimension_numbers = #tpu.dot_dimension_numbers<[1], [0], [0], [1], [0, 0, 1, 1], [], []>} : vector<2048x16xbf16>, vector<16x32xbf16>, vector<2048x32xf32> -> vector<2048x32xf32>
    %c0_3 = arith.constant 0 : index
    %c0_4 = arith.constant 0 : index
    %3 = vector.load %arg3[%c0_3, %c0_4] : memref<1x32xf32, #tpu.memory_space<vmem>>, vector<1x32xf32>
    %4 = vector.broadcast %3 : vector<1x32xf32> to vector<2048x32xf32>
    %5 = arith.addf %2, %4 : vector<2048x32xf32>
    %cst_5 = arith.constant 0.000000e+00 : f32
    %6 = vector.broadcast %cst_5 : f32 to vector<2048x32xf32>
    %7 = arith.maximumf %5, %6 : vector<2048x32xf32>
    %8 = vector.shape_cast %7 : vector<2048x32xf32> to vector<8x2x128x32xf32>
    %9 = vector.extract_strided_slice %8 {offsets = [0, 0, 0, 0], sizes = [8, 1, 128, 32], strides = [1, 1, 1, 1]} : vector<8x2x128x32xf32> to vector<8x1x128x32xf32>
    %10 = vector.shape_cast %9 : vector<8x1x128x32xf32> to vector<8x128x32xf32>
    %11 = vector.extract_strided_slice %8 {offsets = [0, 1, 0, 0], sizes = [8, 1, 128, 32], strides = [1, 1, 1, 1]} : vector<8x2x128x32xf32> to vector<8x1x128x32xf32>
    %12 = vector.shape_cast %11 : vector<8x1x128x32xf32> to vector<8x128x32xf32>
    %13 = arith.maximumf %10, %12 : vector<8x128x32xf32>
    %14 = vector.shape_cast %13 : vector<8x128x32xf32> to vector<8x8x16x32xf32>
    %15 = vector.extract_strided_slice %14 {offsets = [0, 0, 0, 0], sizes = [8, 8, 8, 32], strides = [1, 1, 1, 1]} : vector<8x8x16x32xf32> to vector<8x8x8x32xf32>
    %16 = vector.extract_strided_slice %14 {offsets = [0, 0, 8, 0], sizes = [8, 8, 8, 32], strides = [1, 1, 1, 1]} : vector<8x8x16x32xf32> to vector<8x8x8x32xf32>
    %17 = arith.maximumf %15, %16 : vector<8x8x8x32xf32>
    %18 = vector.shape_cast %17 : vector<8x8x8x32xf32> to vector<8x64x32xf32>
    %cst_6 = arith.constant 0.000000e+00 : f32
    %19 = vector.broadcast %cst_6 : f32 to vector<1x80x32xf32>
    %c0_7 = arith.constant 0 : index
    %c0_8 = arith.constant 0 : index
    %c0_9 = arith.constant 0 : index
    %20 = vector.load %arg15[%c0_7, %c0_8, %c0_9] : memref<10x80x32xf32, #tpu.memory_space<vmem>>, vector<1x80x32xf32>
    tpu.vector_store %arg15[%c0_7, %c0_8, %c0_9], %19 {strides = array<i32>} : memref<10x80x32xf32, #tpu.memory_space<vmem>>, vector<1x80x32xf32>,
    %c9 = arith.constant 9 : index
    %c0_10 = arith.constant 0 : index
    %c0_11 = arith.constant 0 : index
    %21 = vector.load %arg15[%c9, %c0_10, %c0_11] : memref<10x80x32xf32, #tpu.memory_space<vmem>>, vector<1x80x32xf32>
    tpu.vector_store %arg15[%c9, %c0_10, %c0_11], %19 {strides = array<i32>} : memref<10x80x32xf32, #tpu.memory_space<vmem>>, vector<1x80x32xf32>,
    %cst_12 = arith.constant 0.000000e+00 : f32
    %22 = vector.broadcast %cst_12 : f32 to vector<8x8x32xf32>
    %c1 = arith.constant 1 : index
    %c0_13 = arith.constant 0 : index
    %c0_14 = arith.constant 0 : index
    %23 = vector.load %arg15[%c1, %c0_13, %c0_14] : memref<10x80x32xf32, #tpu.memory_space<vmem>>, vector<8x8x32xf32>
    tpu.vector_store %arg15[%c1, %c0_13, %c0_14], %22 {strides = array<i32>} : memref<10x80x32xf32, #tpu.memory_space<vmem>>, vector<8x8x32xf32>,
    %c1_15 = arith.constant 1 : index
    %c72 = arith.constant 72 : index
    %c0_16 = arith.constant 0 : index
    %24 = vector.load %arg15[%c1_15, %c72, %c0_16] : memref<10x80x32xf32, #tpu.memory_space<vmem>>, vector<8x8x32xf32>
    tpu.vector_store %arg15[%c1_15, %c72, %c0_16], %22 {strides = array<i32>} : memref<10x80x32xf32, #tpu.memory_space<vmem>>, vector<8x8x32xf32>,
    %c1_17 = arith.constant 1 : index
    %c8 = arith.constant 8 : index
    %c0_18 = arith.constant 0 : index
    %25 = vector.load %arg15[%c1_17, %c8, %c0_18] : memref<10x80x32xf32, #tpu.memory_space<vmem>>, vector<8x64x32xf32>
    tpu.vector_store %arg15[%c1_17, %c8, %c0_18], %18 {strides = array<i32>} : memref<10x80x32xf32, #tpu.memory_space<vmem>>, vector<8x64x32xf32>,
    %c0_19 = arith.constant 0 : index
    %c0_20 = arith.constant 0 : index
    %c0_21 = arith.constant 0 : index
    %26 = vector.load %arg15[%c0_19, %c0_20, %c0_21] : memref<10x80x32xf32, #tpu.memory_space<vmem>>, vector<8x64x32xf32>
    %27 = vector.shape_cast %26 : vector<8x64x32xf32> to vector<512x32xf32>
    %28 = arith.truncf %27 : vector<512x32xf32> to vector<512x32xbf16>
    %c0_22 = arith.constant 0 : index
    %c0_23 = arith.constant 0 : index
    %c0_24 = arith.constant 0 : index
    %29 = vector.load %arg4[%c0_22, %c0_23, %c0_24] : memref<9x32x64xbf16, #tpu.memory_space<vmem>>, vector<1x32x64xbf16>
    %30 = vector.shape_cast %29 : vector<1x32x64xbf16> to vector<32x64xbf16>
    %cst_25 = arith.constant dense<0.000000e+00> : vector<512x64xf32>
    %31 = tpu.matmul %28, %30, %cst_25 {dimension_numbers = #tpu.dot_dimension_numbers<[1], [0], [0], [1], [0, 0, 1, 1], [], []>} : vector<512x32xbf16>, vector<32x64xbf16>, vector<512x64xf32> -> vector<512x64xf32>
    %c0_26 = arith.constant 0 : index
    %c8_27 = arith.constant 8 : index
    %c0_28 = arith.constant 0 : index
    %32 = vector.load %arg15[%c0_26, %c8_27, %c0_28] : memref<10x80x32xf32, #tpu.memory_space<vmem>>, vector<8x64x32xf32>
    %33 = vector.shape_cast %32 : vector<8x64x32xf32> to vector<512x32xf32>
    %34 = arith.truncf %33 : vector<512x32xf32> to vector<512x32xbf16>
    %c1_29 = arith.constant 1 : index
    %c0_30 = arith.constant 0 : index
    %c0_31 = arith.constant 0 : index
    %35 = vector.load %arg4[%c1_29, %c0_30, %c0_31] : memref<9x32x64xbf16, #tpu.memory_space<vmem>>, vector<1x32x64xbf16>
    %36 = vector.shape_cast %35 : vector<1x32x64xbf16> to vector<32x64xbf16>
    %cst_32 = arith.constant dense<0.000000e+00> : vector<512x64xf32>
    %37 = tpu.matmul %34, %36, %cst_32 {dimension_numbers = #tpu.dot_dimension_numbers<[1], [0], [0], [1], [0, 0, 1, 1], [], []>} : vector<512x32xbf16>, vector<32x64xbf16>, vector<512x64xf32> -> vector<512x64xf32>
    %38 = arith.addf %31, %37 : vector<512x64xf32>
    %c0_33 = arith.constant 0 : index
    %c16 = arith.constant 16 : index
    %c0_34 = arith.constant 0 : index
    %39 = vector.load %arg15[%c0_33, %c16, %c0_34] : memref<10x80x32xf32, #tpu.memory_space<vmem>>, vector<8x64x32xf32>
    %40 = vector.shape_cast %39 : vector<8x64x32xf32> to vector<512x32xf32>
    %41 = arith.truncf %40 : vector<512x32xf32> to vector<512x32xbf16>
    %c2 = arith.constant 2 : index
    %c0_35 = arith.constant 0 : index
    %c0_36 = arith.constant 0 : index
    %42 = vector.load %arg4[%c2, %c0_35, %c0_36] : memref<9x32x64xbf16, #tpu.memory_space<vmem>>, vector<1x32x64xbf16>
    %43 = vector.shape_cast %42 : vector<1x32x64xbf16> to vector<32x64xbf16>
    %cst_37 = arith.constant dense<0.000000e+00> : vector<512x64xf32>
    %44 = tpu.matmul %41, %43, %cst_37 {dimension_numbers = #tpu.dot_dimension_numbers<[1], [0], [0], [1], [0, 0, 1, 1], [], []>} : vector<512x32xbf16>, vector<32x64xbf16>, vector<512x64xf32> -> vector<512x64xf32>
    %45 = arith.addf %38, %44 : vector<512x64xf32>
    %c1_38 = arith.constant 1 : index
    %c0_39 = arith.constant 0 : index
    %c0_40 = arith.constant 0 : index
    %46 = vector.load %arg15[%c1_38, %c0_39, %c0_40] : memref<10x80x32xf32, #tpu.memory_space<vmem>>, vector<8x64x32xf32>
    %47 = vector.shape_cast %46 : vector<8x64x32xf32> to vector<512x32xf32>
    %48 = arith.truncf %47 : vector<512x32xf32> to vector<512x32xbf16>
    %c3 = arith.constant 3 : index
    %c0_41 = arith.constant 0 : index
    %c0_42 = arith.constant 0 : index
    %49 = vector.load %arg4[%c3, %c0_41, %c0_42] : memref<9x32x64xbf16, #tpu.memory_space<vmem>>, vector<1x32x64xbf16>
    %50 = vector.shape_cast %49 : vector<1x32x64xbf16> to vector<32x64xbf16>
    %cst_43 = arith.constant dense<0.000000e+00> : vector<512x64xf32>
    %51 = tpu.matmul %48, %50, %cst_43 {dimension_numbers = #tpu.dot_dimension_numbers<[1], [0], [0], [1], [0, 0, 1, 1], [], []>} : vector<512x32xbf16>, vector<32x64xbf16>, vector<512x64xf32> -> vector<512x64xf32>
    %52 = arith.addf %45, %51 : vector<512x64xf32>
    %c1_44 = arith.constant 1 : index
    %c8_45 = arith.constant 8 : index
    %c0_46 = arith.constant 0 : index
    %53 = vector.load %arg15[%c1_44, %c8_45, %c0_46] : memref<10x80x32xf32, #tpu.memory_space<vmem>>, vector<8x64x32xf32>
    %54 = vector.shape_cast %53 : vector<8x64x32xf32> to vector<512x32xf32>
    %55 = arith.truncf %54 : vector<512x32xf32> to vector<512x32xbf16>
    %c4 = arith.constant 4 : index
    %c0_47 = arith.constant 0 : index
    %c0_48 = arith.constant 0 : index
    %56 = vector.load %arg4[%c4, %c0_47, %c0_48] : memref<9x32x64xbf16, #tpu.memory_space<vmem>>, vector<1x32x64xbf16>
    %57 = vector.shape_cast %56 : vector<1x32x64xbf16> to vector<32x64xbf16>
    %cst_49 = arith.constant dense<0.000000e+00> : vector<512x64xf32>
    %58 = tpu.matmul %55, %57, %cst_49 {dimension_numbers = #tpu.dot_dimension_numbers<[1], [0], [0], [1], [0, 0, 1, 1], [], []>} : vector<512x32xbf16>, vector<32x64xbf16>, vector<512x64xf32> -> vector<512x64xf32>
    %59 = arith.addf %52, %58 : vector<512x64xf32>
    %c1_50 = arith.constant 1 : index
    %c16_51 = arith.constant 16 : index
    %c0_52 = arith.constant 0 : index
    %60 = vector.load %arg15[%c1_50, %c16_51, %c0_52] : memref<10x80x32xf32, #tpu.memory_space<vmem>>, vector<8x64x32xf32>
    %61 = vector.shape_cast %60 : vector<8x64x32xf32> to vector<512x32xf32>
    %62 = arith.truncf %61 : vector<512x32xf32> to vector<512x32xbf16>
    %c5 = arith.constant 5 : index
    %c0_53 = arith.constant 0 : index
    %c0_54 = arith.constant 0 : index
    %63 = vector.load %arg4[%c5, %c0_53, %c0_54] : memref<9x32x64xbf16, #tpu.memory_space<vmem>>, vector<1x32x64xbf16>
    %64 = vector.shape_cast %63 : vector<1x32x64xbf16> to vector<32x64xbf16>
    %cst_55 = arith.constant dense<0.000000e+00> : vector<512x64xf32>
    %65 = tpu.matmul %62, %64, %cst_55 {dimension_numbers = #tpu.dot_dimension_numbers<[1], [0], [0], [1], [0, 0, 1, 1], [], []>} : vector<512x32xbf16>, vector<32x64xbf16>, vector<512x64xf32> -> vector<512x64xf32>
    %66 = arith.addf %59, %65 : vector<512x64xf32>
    %c2_56 = arith.constant 2 : index
    %c0_57 = arith.constant 0 : index
    %c0_58 = arith.constant 0 : index
    %67 = vector.load %arg15[%c2_56, %c0_57, %c0_58] : memref<10x80x32xf32, #tpu.memory_space<vmem>>, vector<8x64x32xf32>
    %68 = vector.shape_cast %67 : vector<8x64x32xf32> to vector<512x32xf32>
    %69 = arith.truncf %68 : vector<512x32xf32> to vector<512x32xbf16>
    %c6 = arith.constant 6 : index
    %c0_59 = arith.constant 0 : index
    %c0_60 = arith.constant 0 : index
    %70 = vector.load %arg4[%c6, %c0_59, %c0_60] : memref<9x32x64xbf16, #tpu.memory_space<vmem>>, vector<1x32x64xbf16>
    %71 = vector.shape_cast %70 : vector<1x32x64xbf16> to vector<32x64xbf16>
    %cst_61 = arith.constant dense<0.000000e+00> : vector<512x64xf32>
    %72 = tpu.matmul %69, %71, %cst_61 {dimension_numbers = #tpu.dot_dimension_numbers<[1], [0], [0], [1], [0, 0, 1, 1], [], []>} : vector<512x32xbf16>, vector<32x64xbf16>, vector<512x64xf32> -> vector<512x64xf32>
    %73 = arith.addf %66, %72 : vector<512x64xf32>
    %c2_62 = arith.constant 2 : index
    %c8_63 = arith.constant 8 : index
    %c0_64 = arith.constant 0 : index
    %74 = vector.load %arg15[%c2_62, %c8_63, %c0_64] : memref<10x80x32xf32, #tpu.memory_space<vmem>>, vector<8x64x32xf32>
    %75 = vector.shape_cast %74 : vector<8x64x32xf32> to vector<512x32xf32>
    %76 = arith.truncf %75 : vector<512x32xf32> to vector<512x32xbf16>
    %c7 = arith.constant 7 : index
    %c0_65 = arith.constant 0 : index
    %c0_66 = arith.constant 0 : index
    %77 = vector.load %arg4[%c7, %c0_65, %c0_66] : memref<9x32x64xbf16, #tpu.memory_space<vmem>>, vector<1x32x64xbf16>
    %78 = vector.shape_cast %77 : vector<1x32x64xbf16> to vector<32x64xbf16>
    %cst_67 = arith.constant dense<0.000000e+00> : vector<512x64xf32>
    %79 = tpu.matmul %76, %78, %cst_67 {dimension_numbers = #tpu.dot_dimension_numbers<[1], [0], [0], [1], [0, 0, 1, 1], [], []>} : vector<512x32xbf16>, vector<32x64xbf16>, vector<512x64xf32> -> vector<512x64xf32>
    %80 = arith.addf %73, %79 : vector<512x64xf32>
    %c2_68 = arith.constant 2 : index
    %c16_69 = arith.constant 16 : index
    %c0_70 = arith.constant 0 : index
    %81 = vector.load %arg15[%c2_68, %c16_69, %c0_70] : memref<10x80x32xf32, #tpu.memory_space<vmem>>, vector<8x64x32xf32>
    %82 = vector.shape_cast %81 : vector<8x64x32xf32> to vector<512x32xf32>
    %83 = arith.truncf %82 : vector<512x32xf32> to vector<512x32xbf16>
    %c8_71 = arith.constant 8 : index
    %c0_72 = arith.constant 0 : index
    %c0_73 = arith.constant 0 : index
    %84 = vector.load %arg4[%c8_71, %c0_72, %c0_73] : memref<9x32x64xbf16, #tpu.memory_space<vmem>>, vector<1x32x64xbf16>
    %85 = vector.shape_cast %84 : vector<1x32x64xbf16> to vector<32x64xbf16>
    %cst_74 = arith.constant dense<0.000000e+00> : vector<512x64xf32>
    %86 = tpu.matmul %83, %85, %cst_74 {dimension_numbers = #tpu.dot_dimension_numbers<[1], [0], [0], [1], [0, 0, 1, 1], [], []>} : vector<512x32xbf16>, vector<32x64xbf16>, vector<512x64xf32> -> vector<512x64xf32>
    %87 = arith.addf %80, %86 : vector<512x64xf32>
    %c0_75 = arith.constant 0 : index
    %c0_76 = arith.constant 0 : index
    %88 = vector.load %arg5[%c0_75, %c0_76] : memref<1x64xf32, #tpu.memory_space<vmem>>, vector<1x64xf32>
    %89 = vector.broadcast %88 : vector<1x64xf32> to vector<512x64xf32>
    %90 = arith.addf %87, %89 : vector<512x64xf32>
    %cst_77 = arith.constant 0.000000e+00 : f32
    %91 = vector.broadcast %cst_77 : f32 to vector<512x64xf32>
    %92 = arith.maximumf %90, %91 : vector<512x64xf32>
    %93 = vector.shape_cast %92 : vector<512x64xf32> to vector<4x2x64x64xf32>
    %94 = vector.extract_strided_slice %93 {offsets = [0, 0, 0, 0], sizes = [4, 1, 64, 64], strides = [1, 1, 1, 1]} : vector<4x2x64x64xf32> to vector<4x1x64x64xf32>
    %95 = vector.shape_cast %94 : vector<4x1x64x64xf32> to vector<4x64x64xf32>
    %96 = vector.extract_strided_slice %93 {offsets = [0, 1, 0, 0], sizes = [4, 1, 64, 64], strides = [1, 1, 1, 1]} : vector<4x2x64x64xf32> to vector<4x1x64x64xf32>
    %97 = vector.shape_cast %96 : vector<4x1x64x64xf32> to vector<4x64x64xf32>
    %98 = arith.maximumf %95, %97 : vector<4x64x64xf32>
    %99 = vector.shape_cast %98 : vector<4x64x64xf32> to vector<4x4x16x64xf32>
    %100 = vector.extract_strided_slice %99 {offsets = [0, 0, 0, 0], sizes = [4, 4, 8, 64], strides = [1, 1, 1, 1]} : vector<4x4x16x64xf32> to vector<4x4x8x64xf32>
    %101 = vector.extract_strided_slice %99 {offsets = [0, 0, 8, 0], sizes = [4, 4, 8, 64], strides = [1, 1, 1, 1]} : vector<4x4x16x64xf32> to vector<4x4x8x64xf32>
    %102 = arith.maximumf %100, %101 : vector<4x4x8x64xf32>
    %103 = vector.shape_cast %102 : vector<4x4x8x64xf32> to vector<4x32x64xf32>
    %cst_78 = arith.constant 0.000000e+00 : f32
    %104 = vector.broadcast %cst_78 : f32 to vector<1x48x64xf32>
    %c0_79 = arith.constant 0 : index
    %c0_80 = arith.constant 0 : index
    %c0_81 = arith.constant 0 : index
    %105 = vector.load %arg16[%c0_79, %c0_80, %c0_81] : memref<6x48x64xf32, #tpu.memory_space<vmem>>, vector<1x48x64xf32>
    tpu.vector_store %arg16[%c0_79, %c0_80, %c0_81], %104 {strides = array<i32>} : memref<6x48x64xf32, #tpu.memory_space<vmem>>, vector<1x48x64xf32>,
    %c5_82 = arith.constant 5 : index
    %c0_83 = arith.constant 0 : index
    %c0_84 = arith.constant 0 : index
    %106 = vector.load %arg16[%c5_82, %c0_83, %c0_84] : memref<6x48x64xf32, #tpu.memory_space<vmem>>, vector<1x48x64xf32>
    tpu.vector_store %arg16[%c5_82, %c0_83, %c0_84], %104 {strides = array<i32>} : memref<6x48x64xf32, #tpu.memory_space<vmem>>, vector<1x48x64xf32>,
    %cst_85 = arith.constant 0.000000e+00 : f32
    %107 = vector.broadcast %cst_85 : f32 to vector<4x8x64xf32>
    %c1_86 = arith.constant 1 : index
    %c0_87 = arith.constant 0 : index
    %c0_88 = arith.constant 0 : index
    %108 = vector.load %arg16[%c1_86, %c0_87, %c0_88] : memref<6x48x64xf32, #tpu.memory_space<vmem>>, vector<4x8x64xf32>
    tpu.vector_store %arg16[%c1_86, %c0_87, %c0_88], %107 {strides = array<i32>} : memref<6x48x64xf32, #tpu.memory_space<vmem>>, vector<4x8x64xf32>,
    %c1_89 = arith.constant 1 : index
    %c40 = arith.constant 40 : index
    %c0_90 = arith.constant 0 : index
    %109 = vector.load %arg16[%c1_89, %c40, %c0_90] : memref<6x48x64xf32, #tpu.memory_space<vmem>>, vector<4x8x64xf32>
    tpu.vector_store %arg16[%c1_89, %c40, %c0_90], %107 {strides = array<i32>} : memref<6x48x64xf32, #tpu.memory_space<vmem>>, vector<4x8x64xf32>,
    %c1_91 = arith.constant 1 : index
    %c8_92 = arith.constant 8 : index
    %c0_93 = arith.constant 0 : index
    %110 = vector.load %arg16[%c1_91, %c8_92, %c0_93] : memref<6x48x64xf32, #tpu.memory_space<vmem>>, vector<4x32x64xf32>
    tpu.vector_store %arg16[%c1_91, %c8_92, %c0_93], %103 {strides = array<i32>} : memref<6x48x64xf32, #tpu.memory_space<vmem>>, vector<4x32x64xf32>,
    %c0_94 = arith.constant 0 : index
    %c0_95 = arith.constant 0 : index
    %c0_96 = arith.constant 0 : index
    %111 = vector.load %arg16[%c0_94, %c0_95, %c0_96] : memref<6x48x64xf32, #tpu.memory_space<vmem>>, vector<4x32x64xf32>
    %112 = vector.shape_cast %111 : vector<4x32x64xf32> to vector<128x64xf32>
    %113 = arith.truncf %112 : vector<128x64xf32> to vector<128x64xbf16>
    %c0_97 = arith.constant 0 : index
    %c0_98 = arith.constant 0 : index
    %c0_99 = arith.constant 0 : index
    %114 = vector.load %arg6[%c0_97, %c0_98, %c0_99] : memref<9x64x128xbf16, #tpu.memory_space<vmem>>, vector<1x64x128xbf16>
    %115 = vector.shape_cast %114 : vector<1x64x128xbf16> to vector<64x128xbf16>
    %cst_100 = arith.constant dense<0.000000e+00> : vector<128x128xf32>
    %116 = tpu.matmul %113, %115, %cst_100 {dimension_numbers = #tpu.dot_dimension_numbers<[1], [0], [0], [1], [0, 0, 1, 1], [], []>} : vector<128x64xbf16>, vector<64x128xbf16>, vector<128x128xf32> -> vector<128x128xf32>
    %c0_101 = arith.constant 0 : index
    %c8_102 = arith.constant 8 : index
    %c0_103 = arith.constant 0 : index
    %117 = vector.load %arg16[%c0_101, %c8_102, %c0_103] : memref<6x48x64xf32, #tpu.memory_space<vmem>>, vector<4x32x64xf32>
    %118 = vector.shape_cast %117 : vector<4x32x64xf32> to vector<128x64xf32>
    %119 = arith.truncf %118 : vector<128x64xf32> to vector<128x64xbf16>
    %c1_104 = arith.constant 1 : index
    %c0_105 = arith.constant 0 : index
    %c0_106 = arith.constant 0 : index
    %120 = vector.load %arg6[%c1_104, %c0_105, %c0_106] : memref<9x64x128xbf16, #tpu.memory_space<vmem>>, vector<1x64x128xbf16>
    %121 = vector.shape_cast %120 : vector<1x64x128xbf16> to vector<64x128xbf16>
    %cst_107 = arith.constant dense<0.000000e+00> : vector<128x128xf32>
    %122 = tpu.matmul %119, %121, %cst_107 {dimension_numbers = #tpu.dot_dimension_numbers<[1], [0], [0], [1], [0, 0, 1, 1], [], []>} : vector<128x64xbf16>, vector<64x128xbf16>, vector<128x128xf32> -> vector<128x128xf32>
    %123 = arith.addf %116, %122 : vector<128x128xf32>
    %c0_108 = arith.constant 0 : index
    %c16_109 = arith.constant 16 : index
    %c0_110 = arith.constant 0 : index
    %124 = vector.load %arg16[%c0_108, %c16_109, %c0_110] : memref<6x48x64xf32, #tpu.memory_space<vmem>>, vector<4x32x64xf32>
    %125 = vector.shape_cast %124 : vector<4x32x64xf32> to vector<128x64xf32>
    %126 = arith.truncf %125 : vector<128x64xf32> to vector<128x64xbf16>
    %c2_111 = arith.constant 2 : index
    %c0_112 = arith.constant 0 : index
    %c0_113 = arith.constant 0 : index
    %127 = vector.load %arg6[%c2_111, %c0_112, %c0_113] : memref<9x64x128xbf16, #tpu.memory_space<vmem>>, vector<1x64x128xbf16>
    %128 = vector.shape_cast %127 : vector<1x64x128xbf16> to vector<64x128xbf16>
    %cst_114 = arith.constant dense<0.000000e+00> : vector<128x128xf32>
    %129 = tpu.matmul %126, %128, %cst_114 {dimension_numbers = #tpu.dot_dimension_numbers<[1], [0], [0], [1], [0, 0, 1, 1], [], []>} : vector<128x64xbf16>, vector<64x128xbf16>, vector<128x128xf32> -> vector<128x128xf32>
    %130 = arith.addf %123, %129 : vector<128x128xf32>
    %c1_115 = arith.constant 1 : index
    %c0_116 = arith.constant 0 : index
    %c0_117 = arith.constant 0 : index
    %131 = vector.load %arg16[%c1_115, %c0_116, %c0_117] : memref<6x48x64xf32, #tpu.memory_space<vmem>>, vector<4x32x64xf32>
    %132 = vector.shape_cast %131 : vector<4x32x64xf32> to vector<128x64xf32>
    %133 = arith.truncf %132 : vector<128x64xf32> to vector<128x64xbf16>
    %c3_118 = arith.constant 3 : index
    %c0_119 = arith.constant 0 : index
    %c0_120 = arith.constant 0 : index
    %134 = vector.load %arg6[%c3_118, %c0_119, %c0_120] : memref<9x64x128xbf16, #tpu.memory_space<vmem>>, vector<1x64x128xbf16>
    %135 = vector.shape_cast %134 : vector<1x64x128xbf16> to vector<64x128xbf16>
    %cst_121 = arith.constant dense<0.000000e+00> : vector<128x128xf32>
    %136 = tpu.matmul %133, %135, %cst_121 {dimension_numbers = #tpu.dot_dimension_numbers<[1], [0], [0], [1], [0, 0, 1, 1], [], []>} : vector<128x64xbf16>, vector<64x128xbf16>, vector<128x128xf32> -> vector<128x128xf32>
    %137 = arith.addf %130, %136 : vector<128x128xf32>
    %c1_122 = arith.constant 1 : index
    %c8_123 = arith.constant 8 : index
    %c0_124 = arith.constant 0 : index
    %138 = vector.load %arg16[%c1_122, %c8_123, %c0_124] : memref<6x48x64xf32, #tpu.memory_space<vmem>>, vector<4x32x64xf32>
    %139 = vector.shape_cast %138 : vector<4x32x64xf32> to vector<128x64xf32>
    %140 = arith.truncf %139 : vector<128x64xf32> to vector<128x64xbf16>
    %c4_125 = arith.constant 4 : index
    %c0_126 = arith.constant 0 : index
    %c0_127 = arith.constant 0 : index
    %141 = vector.load %arg6[%c4_125, %c0_126, %c0_127] : memref<9x64x128xbf16, #tpu.memory_space<vmem>>, vector<1x64x128xbf16>
    %142 = vector.shape_cast %141 : vector<1x64x128xbf16> to vector<64x128xbf16>
    %cst_128 = arith.constant dense<0.000000e+00> : vector<128x128xf32>
    %143 = tpu.matmul %140, %142, %cst_128 {dimension_numbers = #tpu.dot_dimension_numbers<[1], [0], [0], [1], [0, 0, 1, 1], [], []>} : vector<128x64xbf16>, vector<64x128xbf16>, vector<128x128xf32> -> vector<128x128xf32>
    %144 = arith.addf %137, %143 : vector<128x128xf32>
    %c1_129 = arith.constant 1 : index
    %c16_130 = arith.constant 16 : index
    %c0_131 = arith.constant 0 : index
    %145 = vector.load %arg16[%c1_129, %c16_130, %c0_131] : memref<6x48x64xf32, #tpu.memory_space<vmem>>, vector<4x32x64xf32>
    %146 = vector.shape_cast %145 : vector<4x32x64xf32> to vector<128x64xf32>
    %147 = arith.truncf %146 : vector<128x64xf32> to vector<128x64xbf16>
    %c5_132 = arith.constant 5 : index
    %c0_133 = arith.constant 0 : index
    %c0_134 = arith.constant 0 : index
    %148 = vector.load %arg6[%c5_132, %c0_133, %c0_134] : memref<9x64x128xbf16, #tpu.memory_space<vmem>>, vector<1x64x128xbf16>
    %149 = vector.shape_cast %148 : vector<1x64x128xbf16> to vector<64x128xbf16>
    %cst_135 = arith.constant dense<0.000000e+00> : vector<128x128xf32>
    %150 = tpu.matmul %147, %149, %cst_135 {dimension_numbers = #tpu.dot_dimension_numbers<[1], [0], [0], [1], [0, 0, 1, 1], [], []>} : vector<128x64xbf16>, vector<64x128xbf16>, vector<128x128xf32> -> vector<128x128xf32>
    %151 = arith.addf %144, %150 : vector<128x128xf32>
    %c2_136 = arith.constant 2 : index
    %c0_137 = arith.constant 0 : index
    %c0_138 = arith.constant 0 : index
    %152 = vector.load %arg16[%c2_136, %c0_137, %c0_138] : memref<6x48x64xf32, #tpu.memory_space<vmem>>, vector<4x32x64xf32>
    %153 = vector.shape_cast %152 : vector<4x32x64xf32> to vector<128x64xf32>
    %154 = arith.truncf %153 : vector<128x64xf32> to vector<128x64xbf16>
    %c6_139 = arith.constant 6 : index
    %c0_140 = arith.constant 0 : index
    %c0_141 = arith.constant 0 : index
    %155 = vector.load %arg6[%c6_139, %c0_140, %c0_141] : memref<9x64x128xbf16, #tpu.memory_space<vmem>>, vector<1x64x128xbf16>
    %156 = vector.shape_cast %155 : vector<1x64x128xbf16> to vector<64x128xbf16>
    %cst_142 = arith.constant dense<0.000000e+00> : vector<128x128xf32>
    %157 = tpu.matmul %154, %156, %cst_142 {dimension_numbers = #tpu.dot_dimension_numbers<[1], [0], [0], [1], [0, 0, 1, 1], [], []>} : vector<128x64xbf16>, vector<64x128xbf16>, vector<128x128xf32> -> vector<128x128xf32>
    %158 = arith.addf %151, %157 : vector<128x128xf32>
    %c2_143 = arith.constant 2 : index
    %c8_144 = arith.constant 8 : index
    %c0_145 = arith.constant 0 : index
    %159 = vector.load %arg16[%c2_143, %c8_144, %c0_145] : memref<6x48x64xf32, #tpu.memory_space<vmem>>, vector<4x32x64xf32>
    %160 = vector.shape_cast %159 : vector<4x32x64xf32> to vector<128x64xf32>
    %161 = arith.truncf %160 : vector<128x64xf32> to vector<128x64xbf16>
    %c7_146 = arith.constant 7 : index
    %c0_147 = arith.constant 0 : index
    %c0_148 = arith.constant 0 : index
    %162 = vector.load %arg6[%c7_146, %c0_147, %c0_148] : memref<9x64x128xbf16, #tpu.memory_space<vmem>>, vector<1x64x128xbf16>
    %163 = vector.shape_cast %162 : vector<1x64x128xbf16> to vector<64x128xbf16>
    %cst_149 = arith.constant dense<0.000000e+00> : vector<128x128xf32>
    %164 = tpu.matmul %161, %163, %cst_149 {dimension_numbers = #tpu.dot_dimension_numbers<[1], [0], [0], [1], [0, 0, 1, 1], [], []>} : vector<128x64xbf16>, vector<64x128xbf16>, vector<128x128xf32> -> vector<128x128xf32>
    %165 = arith.addf %158, %164 : vector<128x128xf32>
    %c2_150 = arith.constant 2 : index
    %c16_151 = arith.constant 16 : index
    %c0_152 = arith.constant 0 : index
    %166 = vector.load %arg16[%c2_150, %c16_151, %c0_152] : memref<6x48x64xf32, #tpu.memory_space<vmem>>, vector<4x32x64xf32>
    %167 = vector.shape_cast %166 : vector<4x32x64xf32> to vector<128x64xf32>
    %168 = arith.truncf %167 : vector<128x64xf32> to vector<128x64xbf16>
    %c8_153 = arith.constant 8 : index
    %c0_154 = arith.constant 0 : index
    %c0_155 = arith.constant 0 : index
    %169 = vector.load %arg6[%c8_153, %c0_154, %c0_155] : memref<9x64x128xbf16, #tpu.memory_space<vmem>>, vector<1x64x128xbf16>
    %170 = vector.shape_cast %169 : vector<1x64x128xbf16> to vector<64x128xbf16>
    %cst_156 = arith.constant dense<0.000000e+00> : vector<128x128xf32>
    %171 = tpu.matmul %168, %170, %cst_156 {dimension_numbers = #tpu.dot_dimension_numbers<[1], [0], [0], [1], [0, 0, 1, 1], [], []>} : vector<128x64xbf16>, vector<64x128xbf16>, vector<128x128xf32> -> vector<128x128xf32>
    %172 = arith.addf %165, %171 : vector<128x128xf32>
    %c0_157 = arith.constant 0 : index
    %c0_158 = arith.constant 0 : index
    %173 = vector.load %arg7[%c0_157, %c0_158] : memref<1x128xf32, #tpu.memory_space<vmem>>, vector<1x128xf32>
    %174 = vector.broadcast %173 : vector<1x128xf32> to vector<128x128xf32>
    %175 = arith.addf %172, %174 : vector<128x128xf32>
    %cst_159 = arith.constant 0.000000e+00 : f32
    %176 = vector.broadcast %cst_159 : f32 to vector<128x128xf32>
    %177 = arith.maximumf %175, %176 : vector<128x128xf32>
    %178 = vector.shape_cast %177 : vector<128x128xf32> to vector<2x2x32x128xf32>
    %179 = vector.extract_strided_slice %178 {offsets = [0, 0, 0, 0], sizes = [2, 1, 32, 128], strides = [1, 1, 1, 1]} : vector<2x2x32x128xf32> to vector<2x1x32x128xf32>
    %180 = vector.shape_cast %179 : vector<2x1x32x128xf32> to vector<2x32x128xf32>
    %181 = vector.extract_strided_slice %178 {offsets = [0, 1, 0, 0], sizes = [2, 1, 32, 128], strides = [1, 1, 1, 1]} : vector<2x2x32x128xf32> to vector<2x1x32x128xf32>
    %182 = vector.shape_cast %181 : vector<2x1x32x128xf32> to vector<2x32x128xf32>
    %183 = arith.maximumf %180, %182 : vector<2x32x128xf32>
    %184 = vector.shape_cast %183 : vector<2x32x128xf32> to vector<2x2x16x128xf32>
    %185 = vector.extract_strided_slice %184 {offsets = [0, 0, 0, 0], sizes = [2, 2, 8, 128], strides = [1, 1, 1, 1]} : vector<2x2x16x128xf32> to vector<2x2x8x128xf32>
    %186 = vector.extract_strided_slice %184 {offsets = [0, 0, 8, 0], sizes = [2, 2, 8, 128], strides = [1, 1, 1, 1]} : vector<2x2x16x128xf32> to vector<2x2x8x128xf32>
    %187 = arith.maximumf %185, %186 : vector<2x2x8x128xf32>
    %188 = vector.shape_cast %187 : vector<2x2x8x128xf32> to vector<2x16x128xf32>
    %cst_160 = arith.constant 0.000000e+00 : f32
    %189 = vector.broadcast %cst_160 : f32 to vector<1x32x128xf32>
    %c0_161 = arith.constant 0 : index
    %c0_162 = arith.constant 0 : index
    %c0_163 = arith.constant 0 : index
    %190 = vector.load %arg17[%c0_161, %c0_162, %c0_163] : memref<4x32x128xf32, #tpu.memory_space<vmem>>, vector<1x32x128xf32>
    tpu.vector_store %arg17[%c0_161, %c0_162, %c0_163], %189 {strides = array<i32>} : memref<4x32x128xf32, #tpu.memory_space<vmem>>, vector<1x32x128xf32>,
    %c3_164 = arith.constant 3 : index
    %c0_165 = arith.constant 0 : index
    %c0_166 = arith.constant 0 : index
    %191 = vector.load %arg17[%c3_164, %c0_165, %c0_166] : memref<4x32x128xf32, #tpu.memory_space<vmem>>, vector<1x32x128xf32>
    tpu.vector_store %arg17[%c3_164, %c0_165, %c0_166], %189 {strides = array<i32>} : memref<4x32x128xf32, #tpu.memory_space<vmem>>, vector<1x32x128xf32>,
    %cst_167 = arith.constant 0.000000e+00 : f32
    %192 = vector.broadcast %cst_167 : f32 to vector<2x8x128xf32>
    %c1_168 = arith.constant 1 : index
    %c0_169 = arith.constant 0 : index
    %c0_170 = arith.constant 0 : index
    %193 = vector.load %arg17[%c1_168, %c0_169, %c0_170] : memref<4x32x128xf32, #tpu.memory_space<vmem>>, vector<2x8x128xf32>
    tpu.vector_store %arg17[%c1_168, %c0_169, %c0_170], %192 {strides = array<i32>} : memref<4x32x128xf32, #tpu.memory_space<vmem>>, vector<2x8x128xf32>,
    %c1_171 = arith.constant 1 : index
    %c24 = arith.constant 24 : index
    %c0_172 = arith.constant 0 : index
    %194 = vector.load %arg17[%c1_171, %c24, %c0_172] : memref<4x32x128xf32, #tpu.memory_space<vmem>>, vector<2x8x128xf32>
    tpu.vector_store %arg17[%c1_171, %c24, %c0_172], %192 {strides = array<i32>} : memref<4x32x128xf32, #tpu.memory_space<vmem>>, vector<2x8x128xf32>,
    %c1_173 = arith.constant 1 : index
    %c8_174 = arith.constant 8 : index
    %c0_175 = arith.constant 0 : index
    %195 = vector.load %arg17[%c1_173, %c8_174, %c0_175] : memref<4x32x128xf32, #tpu.memory_space<vmem>>, vector<2x16x128xf32>
    tpu.vector_store %arg17[%c1_173, %c8_174, %c0_175], %188 {strides = array<i32>} : memref<4x32x128xf32, #tpu.memory_space<vmem>>, vector<2x16x128xf32>,
    %c0_176 = arith.constant 0 : index
    %c0_177 = arith.constant 0 : index
    %c0_178 = arith.constant 0 : index
    %196 = vector.load %arg17[%c0_176, %c0_177, %c0_178] : memref<4x32x128xf32, #tpu.memory_space<vmem>>, vector<2x16x128xf32>
    %197 = vector.shape_cast %196 : vector<2x16x128xf32> to vector<32x128xf32>
    %198 = arith.truncf %197 : vector<32x128xf32> to vector<32x128xbf16>
    %c0_179 = arith.constant 0 : index
    %c0_180 = arith.constant 0 : index
    %c0_181 = arith.constant 0 : index
    %199 = vector.load %arg8[%c0_179, %c0_180, %c0_181] : memref<9x128x256xbf16, #tpu.memory_space<vmem>>, vector<1x128x256xbf16>
    %200 = vector.shape_cast %199 : vector<1x128x256xbf16> to vector<128x256xbf16>
    %cst_182 = arith.constant dense<0.000000e+00> : vector<32x256xf32>
    %201 = tpu.matmul %198, %200, %cst_182 {dimension_numbers = #tpu.dot_dimension_numbers<[1], [0], [0], [1], [0, 0, 1, 1], [], []>} : vector<32x128xbf16>, vector<128x256xbf16>, vector<32x256xf32> -> vector<32x256xf32>
    %c0_183 = arith.constant 0 : index
    %c8_184 = arith.constant 8 : index
    %c0_185 = arith.constant 0 : index
    %202 = vector.load %arg17[%c0_183, %c8_184, %c0_185] : memref<4x32x128xf32, #tpu.memory_space<vmem>>, vector<2x16x128xf32>
    %203 = vector.shape_cast %202 : vector<2x16x128xf32> to vector<32x128xf32>
    %204 = arith.truncf %203 : vector<32x128xf32> to vector<32x128xbf16>
    %c1_186 = arith.constant 1 : index
    %c0_187 = arith.constant 0 : index
    %c0_188 = arith.constant 0 : index
    %205 = vector.load %arg8[%c1_186, %c0_187, %c0_188] : memref<9x128x256xbf16, #tpu.memory_space<vmem>>, vector<1x128x256xbf16>
    %206 = vector.shape_cast %205 : vector<1x128x256xbf16> to vector<128x256xbf16>
    %cst_189 = arith.constant dense<0.000000e+00> : vector<32x256xf32>
    %207 = tpu.matmul %204, %206, %cst_189 {dimension_numbers = #tpu.dot_dimension_numbers<[1], [0], [0], [1], [0, 0, 1, 1], [], []>} : vector<32x128xbf16>, vector<128x256xbf16>, vector<32x256xf32> -> vector<32x256xf32>
    %208 = arith.addf %201, %207 : vector<32x256xf32>
    %c0_190 = arith.constant 0 : index
    %c16_191 = arith.constant 16 : index
    %c0_192 = arith.constant 0 : index
    %209 = vector.load %arg17[%c0_190, %c16_191, %c0_192] : memref<4x32x128xf32, #tpu.memory_space<vmem>>, vector<2x16x128xf32>
    %210 = vector.shape_cast %209 : vector<2x16x128xf32> to vector<32x128xf32>
    %211 = arith.truncf %210 : vector<32x128xf32> to vector<32x128xbf16>
    %c2_193 = arith.constant 2 : index
    %c0_194 = arith.constant 0 : index
    %c0_195 = arith.constant 0 : index
    %212 = vector.load %arg8[%c2_193, %c0_194, %c0_195] : memref<9x128x256xbf16, #tpu.memory_space<vmem>>, vector<1x128x256xbf16>
    %213 = vector.shape_cast %212 : vector<1x128x256xbf16> to vector<128x256xbf16>
    %cst_196 = arith.constant dense<0.000000e+00> : vector<32x256xf32>
    %214 = tpu.matmul %211, %213, %cst_196 {dimension_numbers = #tpu.dot_dimension_numbers<[1], [0], [0], [1], [0, 0, 1, 1], [], []>} : vector<32x128xbf16>, vector<128x256xbf16>, vector<32x256xf32> -> vector<32x256xf32>
    %215 = arith.addf %208, %214 : vector<32x256xf32>
    %c1_197 = arith.constant 1 : index
    %c0_198 = arith.constant 0 : index
    %c0_199 = arith.constant 0 : index
    %216 = vector.load %arg17[%c1_197, %c0_198, %c0_199] : memref<4x32x128xf32, #tpu.memory_space<vmem>>, vector<2x16x128xf32>
    %217 = vector.shape_cast %216 : vector<2x16x128xf32> to vector<32x128xf32>
    %218 = arith.truncf %217 : vector<32x128xf32> to vector<32x128xbf16>
    %c3_200 = arith.constant 3 : index
    %c0_201 = arith.constant 0 : index
    %c0_202 = arith.constant 0 : index
    %219 = vector.load %arg8[%c3_200, %c0_201, %c0_202] : memref<9x128x256xbf16, #tpu.memory_space<vmem>>, vector<1x128x256xbf16>
    %220 = vector.shape_cast %219 : vector<1x128x256xbf16> to vector<128x256xbf16>
    %cst_203 = arith.constant dense<0.000000e+00> : vector<32x256xf32>
    %221 = tpu.matmul %218, %220, %cst_203 {dimension_numbers = #tpu.dot_dimension_numbers<[1], [0], [0], [1], [0, 0, 1, 1], [], []>} : vector<32x128xbf16>, vector<128x256xbf16>, vector<32x256xf32> -> vector<32x256xf32>
    %222 = arith.addf %215, %221 : vector<32x256xf32>
    %c1_204 = arith.constant 1 : index
    %c8_205 = arith.constant 8 : index
    %c0_206 = arith.constant 0 : index
    %223 = vector.load %arg17[%c1_204, %c8_205, %c0_206] : memref<4x32x128xf32, #tpu.memory_space<vmem>>, vector<2x16x128xf32>
    %224 = vector.shape_cast %223 : vector<2x16x128xf32> to vector<32x128xf32>
    %225 = arith.truncf %224 : vector<32x128xf32> to vector<32x128xbf16>
    %c4_207 = arith.constant 4 : index
    %c0_208 = arith.constant 0 : index
    %c0_209 = arith.constant 0 : index
    %226 = vector.load %arg8[%c4_207, %c0_208, %c0_209] : memref<9x128x256xbf16, #tpu.memory_space<vmem>>, vector<1x128x256xbf16>
    %227 = vector.shape_cast %226 : vector<1x128x256xbf16> to vector<128x256xbf16>
    %cst_210 = arith.constant dense<0.000000e+00> : vector<32x256xf32>
    %228 = tpu.matmul %225, %227, %cst_210 {dimension_numbers = #tpu.dot_dimension_numbers<[1], [0], [0], [1], [0, 0, 1, 1], [], []>} : vector<32x128xbf16>, vector<128x256xbf16>, vector<32x256xf32> -> vector<32x256xf32>
    %229 = arith.addf %222, %228 : vector<32x256xf32>
    %c1_211 = arith.constant 1 : index
    %c16_212 = arith.constant 16 : index
    %c0_213 = arith.constant 0 : index
    %230 = vector.load %arg17[%c1_211, %c16_212, %c0_213] : memref<4x32x128xf32, #tpu.memory_space<vmem>>, vector<2x16x128xf32>
    %231 = vector.shape_cast %230 : vector<2x16x128xf32> to vector<32x128xf32>
    %232 = arith.truncf %231 : vector<32x128xf32> to vector<32x128xbf16>
    %c5_214 = arith.constant 5 : index
    %c0_215 = arith.constant 0 : index
    %c0_216 = arith.constant 0 : index
    %233 = vector.load %arg8[%c5_214, %c0_215, %c0_216] : memref<9x128x256xbf16, #tpu.memory_space<vmem>>, vector<1x128x256xbf16>
    %234 = vector.shape_cast %233 : vector<1x128x256xbf16> to vector<128x256xbf16>
    %cst_217 = arith.constant dense<0.000000e+00> : vector<32x256xf32>
    %235 = tpu.matmul %232, %234, %cst_217 {dimension_numbers = #tpu.dot_dimension_numbers<[1], [0], [0], [1], [0, 0, 1, 1], [], []>} : vector<32x128xbf16>, vector<128x256xbf16>, vector<32x256xf32> -> vector<32x256xf32>
    %236 = arith.addf %229, %235 : vector<32x256xf32>
    %c2_218 = arith.constant 2 : index
    %c0_219 = arith.constant 0 : index
    %c0_220 = arith.constant 0 : index
    %237 = vector.load %arg17[%c2_218, %c0_219, %c0_220] : memref<4x32x128xf32, #tpu.memory_space<vmem>>, vector<2x16x128xf32>
    %238 = vector.shape_cast %237 : vector<2x16x128xf32> to vector<32x128xf32>
    %239 = arith.truncf %238 : vector<32x128xf32> to vector<32x128xbf16>
    %c6_221 = arith.constant 6 : index
    %c0_222 = arith.constant 0 : index
    %c0_223 = arith.constant 0 : index
    %240 = vector.load %arg8[%c6_221, %c0_222, %c0_223] : memref<9x128x256xbf16, #tpu.memory_space<vmem>>, vector<1x128x256xbf16>
    %241 = vector.shape_cast %240 : vector<1x128x256xbf16> to vector<128x256xbf16>
    %cst_224 = arith.constant dense<0.000000e+00> : vector<32x256xf32>
    %242 = tpu.matmul %239, %241, %cst_224 {dimension_numbers = #tpu.dot_dimension_numbers<[1], [0], [0], [1], [0, 0, 1, 1], [], []>} : vector<32x128xbf16>, vector<128x256xbf16>, vector<32x256xf32> -> vector<32x256xf32>
    %243 = arith.addf %236, %242 : vector<32x256xf32>
    %c2_225 = arith.constant 2 : index
    %c8_226 = arith.constant 8 : index
    %c0_227 = arith.constant 0 : index
    %244 = vector.load %arg17[%c2_225, %c8_226, %c0_227] : memref<4x32x128xf32, #tpu.memory_space<vmem>>, vector<2x16x128xf32>
    %245 = vector.shape_cast %244 : vector<2x16x128xf32> to vector<32x128xf32>
    %246 = arith.truncf %245 : vector<32x128xf32> to vector<32x128xbf16>
    %c7_228 = arith.constant 7 : index
    %c0_229 = arith.constant 0 : index
    %c0_230 = arith.constant 0 : index
    %247 = vector.load %arg8[%c7_228, %c0_229, %c0_230] : memref<9x128x256xbf16, #tpu.memory_space<vmem>>, vector<1x128x256xbf16>
    %248 = vector.shape_cast %247 : vector<1x128x256xbf16> to vector<128x256xbf16>
    %cst_231 = arith.constant dense<0.000000e+00> : vector<32x256xf32>
    %249 = tpu.matmul %246, %248, %cst_231 {dimension_numbers = #tpu.dot_dimension_numbers<[1], [0], [0], [1], [0, 0, 1, 1], [], []>} : vector<32x128xbf16>, vector<128x256xbf16>, vector<32x256xf32> -> vector<32x256xf32>
    %250 = arith.addf %243, %249 : vector<32x256xf32>
    %c2_232 = arith.constant 2 : index
    %c16_233 = arith.constant 16 : index
    %c0_234 = arith.constant 0 : index
    %251 = vector.load %arg17[%c2_232, %c16_233, %c0_234] : memref<4x32x128xf32, #tpu.memory_space<vmem>>, vector<2x16x128xf32>
    %252 = vector.shape_cast %251 : vector<2x16x128xf32> to vector<32x128xf32>
    %253 = arith.truncf %252 : vector<32x128xf32> to vector<32x128xbf16>
    %c8_235 = arith.constant 8 : index
    %c0_236 = arith.constant 0 : index
    %c0_237 = arith.constant 0 : index
    %254 = vector.load %arg8[%c8_235, %c0_236, %c0_237] : memref<9x128x256xbf16, #tpu.memory_space<vmem>>, vector<1x128x256xbf16>
    %255 = vector.shape_cast %254 : vector<1x128x256xbf16> to vector<128x256xbf16>
    %cst_238 = arith.constant dense<0.000000e+00> : vector<32x256xf32>
    %256 = tpu.matmul %253, %255, %cst_238 {dimension_numbers = #tpu.dot_dimension_numbers<[1], [0], [0], [1], [0, 0, 1, 1], [], []>} : vector<32x128xbf16>, vector<128x256xbf16>, vector<32x256xf32> -> vector<32x256xf32>
    %257 = arith.addf %250, %256 : vector<32x256xf32>
    %c0_239 = arith.constant 0 : index
    %c0_240 = arith.constant 0 : index
    %258 = vector.load %arg9[%c0_239, %c0_240] : memref<1x256xf32, #tpu.memory_space<vmem>>, vector<1x256xf32>
    %259 = vector.broadcast %258 : vector<1x256xf32> to vector<32x256xf32>
    %260 = arith.addf %257, %259 : vector<32x256xf32>
    %cst_241 = arith.constant 0.000000e+00 : f32
    %261 = vector.broadcast %cst_241 : f32 to vector<32x256xf32>
    %262 = arith.maximumf %260, %261 : vector<32x256xf32>
    %263 = vector.shape_cast %262 : vector<32x256xf32> to vector<1x2x16x256xf32>
    %264 = vector.extract_strided_slice %263 {offsets = [0, 0, 0, 0], sizes = [1, 1, 16, 256], strides = [1, 1, 1, 1]} : vector<1x2x16x256xf32> to vector<1x1x16x256xf32>
    %265 = vector.shape_cast %264 : vector<1x1x16x256xf32> to vector<1x16x256xf32>
    %266 = vector.extract_strided_slice %263 {offsets = [0, 1, 0, 0], sizes = [1, 1, 16, 256], strides = [1, 1, 1, 1]} : vector<1x2x16x256xf32> to vector<1x1x16x256xf32>
    %267 = vector.shape_cast %266 : vector<1x1x16x256xf32> to vector<1x16x256xf32>
    %268 = arith.maximumf %265, %267 : vector<1x16x256xf32>
    %269 = vector.shape_cast %268 : vector<1x16x256xf32> to vector<1x1x16x256xf32>
    %270 = vector.extract_strided_slice %269 {offsets = [0, 0, 0, 0], sizes = [1, 1, 8, 256], strides = [1, 1, 1, 1]} : vector<1x1x16x256xf32> to vector<1x1x8x256xf32>
    %271 = vector.extract_strided_slice %269 {offsets = [0, 0, 8, 0], sizes = [1, 1, 8, 256], strides = [1, 1, 1, 1]} : vector<1x1x16x256xf32> to vector<1x1x8x256xf32>
    %272 = arith.maximumf %270, %271 : vector<1x1x8x256xf32>
    %273 = vector.shape_cast %272 : vector<1x1x8x256xf32> to vector<1x8x256xf32>
    %274 = vector.shape_cast %273 : vector<1x8x256xf32> to vector<8x256xf32>
    %275 = arith.truncf %274 : vector<8x256xf32> to vector<8x256xbf16>
    %c0_242 = arith.constant 0 : index
    %c0_243 = arith.constant 0 : index
    %276 = vector.load %arg10[%c0_242, %c0_243] : memref<256x512xbf16, #tpu.memory_space<vmem>>, vector<256x512xbf16>
    %cst_244 = arith.constant dense<0.000000e+00> : vector<8x512xf32>
    %277 = tpu.matmul %275, %276, %cst_244 {dimension_numbers = #tpu.dot_dimension_numbers<[1], [0], [0], [1], [0, 0, 1, 1], [], []>} : vector<8x256xbf16>, vector<256x512xbf16>, vector<8x512xf32> -> vector<8x512xf32>
    %c0_245 = arith.constant 0 : index
    %c0_246 = arith.constant 0 : index
    %278 = vector.load %arg11[%c0_245, %c0_246] : memref<1x512xf32, #tpu.memory_space<vmem>>, vector<1x512xf32>
    %279 = vector.broadcast %278 : vector<1x512xf32> to vector<8x512xf32>
    %280 = arith.addf %277, %279 : vector<8x512xf32>
    %cst_247 = arith.constant 0.000000e+00 : f32
    %281 = vector.broadcast %cst_247 : f32 to vector<8x512xf32>
    %282 = arith.maximumf %280, %281 : vector<8x512xf32>
    %283 = arith.truncf %282 : vector<8x512xf32> to vector<8x512xbf16>
    %c0_248 = arith.constant 0 : index
    %c0_249 = arith.constant 0 : index
    %284 = vector.load %arg12[%c0_248, %c0_249] : memref<512x10xbf16, #tpu.memory_space<vmem>>, vector<512x10xbf16>
    %cst_250 = arith.constant dense<0.000000e+00> : vector<8x10xf32>
    %285 = tpu.matmul %283, %284, %cst_250 {dimension_numbers = #tpu.dot_dimension_numbers<[1], [0], [0], [1], [0, 0, 1, 1], [], []>} : vector<8x512xbf16>, vector<512x10xbf16>, vector<8x10xf32> -> vector<8x10xf32>
    %c0_251 = arith.constant 0 : index
    %c0_252 = arith.constant 0 : index
    %286 = vector.load %arg13[%c0_251, %c0_252] : memref<1x10xf32, #tpu.memory_space<vmem>>, vector<1x10xf32>
    %287 = vector.broadcast %286 : vector<1x10xf32> to vector<8x10xf32>
    %288 = arith.addf %285, %287 : vector<8x10xf32>
    %c0_253 = arith.constant 0 : index
    %c0_254 = arith.constant 0 : index
    %289 = vector.load %arg14[%c0_253, %c0_254] : memref<8x10xf32, #tpu.memory_space<vmem>>, vector<8x10xf32>
    tpu.vector_store %arg14[%c0_253, %c0_254], %288 {strides = array<i32>} : memref<8x10xf32, #tpu.memory_space<vmem>>, vector<8x10xf32>,
    return
  }
  func.func @transform_0(%arg0: i32) -> (i32, i32) {
    %c0_i32 = arith.constant 0 : i32
    %c0_i32_0 = arith.constant 0 : i32
    return %arg0, %c0_i32 : i32, i32
  }
  func.func @transform_1(%arg0: i32) -> (i32, i32) {
    %c0_i32 = arith.constant 0 : i32
    %c0_i32_0 = arith.constant 0 : i32
    %c0_i32_1 = arith.constant 0 : i32
    return %c0_i32, %c0_i32_0 : i32, i32
  }
  func.func @transform_2(%arg0: i32) -> (i32, i32) {
    %c0_i32 = arith.constant 0 : i32
    %c0_i32_0 = arith.constant 0 : i32
    %c0_i32_1 = arith.constant 0 : i32
    return %c0_i32, %c0_i32_0 : i32, i32
  }
  func.func @transform_3(%arg0: i32) -> (i32, i32, i32) {
    %c0_i32 = arith.constant 0 : i32
    %c0_i32_0 = arith.constant 0 : i32
    %c0_i32_1 = arith.constant 0 : i32
    %c0_i32_2 = arith.constant 0 : i32
    return %c0_i32, %c0_i32_0, %c0_i32_1 : i32, i32, i32
  }
  func.func @transform_4(%arg0: i32) -> (i32, i32) {
    %c0_i32 = arith.constant 0 : i32
    %c0_i32_0 = arith.constant 0 : i32
    %c0_i32_1 = arith.constant 0 : i32
    return %c0_i32, %c0_i32_0 : i32, i32
  }
  func.func @transform_5(%arg0: i32) -> (i32, i32, i32) {
    %c0_i32 = arith.constant 0 : i32
    %c0_i32_0 = arith.constant 0 : i32
    %c0_i32_1 = arith.constant 0 : i32
    %c0_i32_2 = arith.constant 0 : i32
    return %c0_i32, %c0_i32_0, %c0_i32_1 : i32, i32, i32
  }
  func.func @transform_6(%arg0: i32) -> (i32, i32) {
    %c0_i32 = arith.constant 0 : i32
    %c0_i32_0 = arith.constant 0 : i32
    %c0_i32_1 = arith.constant 0 : i32
    return %c0_i32, %c0_i32_0 : i32, i32
  }
  func.func @transform_7(%arg0: i32) -> (i32, i32, i32) {
    %c0_i32 = arith.constant 0 : i32
    %c0_i32_0 = arith.constant 0 : i32
    %c0_i32_1 = arith.constant 0 : i32
    %c0_i32_2 = arith.constant 0 : i32
    return %c0_i32, %c0_i32_0, %c0_i32_1 : i32, i32, i32
  }
  func.func @transform_8(%arg0: i32) -> (i32, i32) {
    %c0_i32 = arith.constant 0 : i32
    %c0_i32_0 = arith.constant 0 : i32
    %c0_i32_1 = arith.constant 0 : i32
    return %c0_i32, %c0_i32_0 : i32, i32
  }
  func.func @transform_9(%arg0: i32) -> (i32, i32) {
    %c0_i32 = arith.constant 0 : i32
    %c0_i32_0 = arith.constant 0 : i32
    %c0_i32_1 = arith.constant 0 : i32
    return %c0_i32, %c0_i32_0 : i32, i32
  }
  func.func @transform_10(%arg0: i32) -> (i32, i32) {
    %c0_i32 = arith.constant 0 : i32
    %c0_i32_0 = arith.constant 0 : i32
    %c0_i32_1 = arith.constant 0 : i32
    return %c0_i32, %c0_i32_0 : i32, i32
  }
  func.func @transform_11(%arg0: i32) -> (i32, i32) {
    %c0_i32 = arith.constant 0 : i32
    %c0_i32_0 = arith.constant 0 : i32
    %c0_i32_1 = arith.constant 0 : i32
    return %c0_i32, %c0_i32_0 : i32, i32
  }
  func.func @transform_12(%arg0: i32) -> (i32, i32) {
    %c0_i32 = arith.constant 0 : i32
    %c0_i32_0 = arith.constant 0 : i32
    %c0_i32_1 = arith.constant 0 : i32
    return %c0_i32, %c0_i32_0 : i32, i32
  }
  func.func @transform_13(%arg0: i32) -> (i32, i32) {
    %c0_i32 = arith.constant 0 : i32
    %c0_i32_0 = arith.constant 0 : i32
    return %arg0, %c0_i32 : i32, i32
  }
}

</mosaic_0001>

<llo_original>
// kernel: cnn_forward.1
$region0: #{cnn_forward.1}
  #allocation0 [shape = 'u32[]', space=smem, size = 0x4, offset = 0x4, fixed_abs, tag = 'smem constant byte address 0x4 - core index']
  #allocation1 [shape = 'u32[144,128]{1,0:T(1,128)}', space=vmem, size = 0x12000, scoped, tag = 'internal scratch']
  #allocation2 [shape = 'f32[10,80,32]{2,1,0:T(8,128)}', space=vmem, size = 0x64000, scoped, tag = 'scratch operand']
  #allocation3 [shape = 'f32[6,48,64]{2,1,0:T(8,128)}', space=vmem, size = 0x24000, scoped, tag = 'scratch operand']
  #allocation4 [shape = 'f32[4,32,128]{2,1,0:T(8,128)}', space=vmem, size = 0x10000, scoped, tag = 'scratch operand']
  %s0 = inlined_call_operand.vmem [shape: bf16[2048,16], index: 0, kind: input, shape index: {}]
  %s1 = inlined_call_operand.vmem [shape: bf16[16,32], index: 1, kind: input, shape index: {}]
  %s2 = inlined_call_operand.vmem [shape: f32[1,32], index: 2, kind: input, shape index: {}]
  %s3 = inlined_call_operand.vmem [shape: bf16[9,32,64], index: 3, kind: input, shape index: {}]
  %s4 = inlined_call_operand.vmem [shape: f32[1,64], index: 4, kind: input, shape index: {}]
  %s5 = inlined_call_operand.vmem [shape: bf16[9,64,128], index: 5, kind: input, shape index: {}]
  %s6 = inlined_call_operand.vmem [shape: f32[1,128], index: 6, kind: input, shape index: {}]
  %s7 = inlined_call_operand.vmem [shape: bf16[9,128,256], index: 7, kind: input, shape index: {}]
  %s8 = inlined_call_operand.vmem [shape: f32[1,256], index: 8, kind: input, shape index: {}]
  %s9 = inlined_call_operand.vmem [shape: bf16[256,512], index: 9, kind: input, shape index: {}]
  %s10 = inlined_call_operand.vmem [shape: f32[1,512], index: 10, kind: input, shape index: {}]
  %s11 = inlined_call_operand.vmem [shape: bf16[512,10], index: 11, kind: input, shape index: {}]
  %s12 = inlined_call_operand.vmem [shape: f32[1,10], index: 12, kind: input, shape index: {}]
  %s13 = inlined_call_operand.vmem [shape: f32[8,10], index: 13, kind: output, shape index: {}]
  %s14 = sld [smem:[#allocation0]]
  $region62: #{cnn_forward.1} parent=0
    _
  %s16 = ssub.s32 1, %s14
  %s17 = scalar_select 0, %s16, %s14
  // Predicated region
  $region2: #{cnn_forward.1} parent=0 // pred_check
    _
  $region3: #{cnn_forward.1} parent=0 // pred_check_branch
    %19 = sbr.rel (0) target = $region5
  $region4: #{cnn_forward.1} parent=0 // pred_region
    _
  $region5: #{cnn_forward.1} parent=0 // pred_fallthru
    _
  // Predicated region
  $region6: #{cnn_forward.1} parent=0 // pred_check
    _
  $region7: #{cnn_forward.1} parent=0 // pred_check_branch
    %21 = sbr.rel (0) target = $region9
  $region8: #{cnn_forward.1} parent=0 // pred_region
    _
  $region9: #{cnn_forward.1} parent=0 // pred_fallthru
    _
  // Predicated region
  $region10: #{cnn_forward.1} parent=0 // pred_check
    _
  $region11: #{cnn_forward.1} parent=0 // pred_check_branch
    %23 = sbr.rel (0) target = $region13
  $region12: #{cnn_forward.1} parent=0 // pred_region
    _
  $region13: #{cnn_forward.1} parent=0 // pred_fallthru
    _
  // Predicated region
  $region14: #{cnn_forward.1} parent=0 // pred_check
    _
  $region15: #{cnn_forward.1} parent=0 // pred_check_branch
    %25 = sbr.rel (0) target = $region17
  $region16: #{cnn_forward.1} parent=0 // pred_region
    _
  $region17: #{cnn_forward.1} parent=0 // pred_fallthru
    _
  // Predicated region
  $region18: #{cnn_forward.1} parent=0 // pred_check
    _
  $region19: #{cnn_forward.1} parent=0 // pred_check_branch
    %27 = sbr.rel (0) target = $region21
  $region20: #{cnn_forward.1} parent=0 // pred_region
    _
  $region21: #{cnn_forward.1} parent=0 // pred_fallthru
    _
  // Predicated region
  $region22: #{cnn_forward.1} parent=0 // pred_check
    _
  $region23: #{cnn_forward.1} parent=0 // pred_check_branch
    %29 = sbr.rel (0) target = $region25
  $region24: #{cnn_forward.1} parent=0 // pred_region
    _
  $region25: #{cnn_forward.1} parent=0 // pred_fallthru
    _
  // Predicated region
  $region26: #{cnn_forward.1} parent=0 // pred_check
    _
  $region27: #{cnn_forward.1} parent=0 // pred_check_branch
    %31 = sbr.rel (0) target = $region29
  $region28: #{cnn_forward.1} parent=0 // pred_region
    _
  $region29: #{cnn_forward.1} parent=0 // pred_fallthru
    _
  // Predicated region
  $region30: #{cnn_forward.1} parent=0 // pred_check
    _
  $region31: #{cnn_forward.1} parent=0 // pred_check_branch
    %33 = sbr.rel (0) target = $region33
  $region32: #{cnn_forward.1} parent=0 // pred_region
    _
  $region33: #{cnn_forward.1} parent=0 // pred_fallthru
    _
  // Predicated region
  $region34: #{cnn_forward.1} parent=0 // pred_check
    _
  $region35: #{cnn_forward.1} parent=0 // pred_check_branch
    %35 = sbr.rel (0) target = $region37
  $region36: #{cnn_forward.1} parent=0 // pred_region
    _
  $region37: #{cnn_forward.1} parent=0 // pred_fallthru
    _
  // Predicated region
  $region38: #{cnn_forward.1} parent=0 // pred_check
    _
  $region39: #{cnn_forward.1} parent=0 // pred_check_branch
    %37 = sbr.rel (0) target = $region41
  $region40: #{cnn_forward.1} parent=0 // pred_region
    _
  $region41: #{cnn_forward.1} parent=0 // pred_fallthru
    _
  // Predicated region
  $region42: #{cnn_forward.1} parent=0 // pred_check
    _
  $region43: #{cnn_forward.1} parent=0 // pred_check_branch
    %39 = sbr.rel (0) target = $region45
  $region44: #{cnn_forward.1} parent=0 // pred_region
    _
  $region45: #{cnn_forward.1} parent=0 // pred_fallthru
    _
  // Predicated region
  $region46: #{cnn_forward.1} parent=0 // pred_check
    _
  $region47: #{cnn_forward.1} parent=0 // pred_check_branch
    %41 = sbr.rel (0) target = $region49
  $region48: #{cnn_forward.1} parent=0 // pred_region
    _
  $region49: #{cnn_forward.1} parent=0 // pred_fallthru
    _
  // Predicated region
  $region50: #{cnn_forward.1} parent=0 // pred_check
    _
  $region51: #{cnn_forward.1} parent=0 // pred_check_branch
    %43 = sbr.rel (0) target = $region53
  $region52: #{cnn_forward.1} parent=0 // pred_region
    _
  $region53: #{cnn_forward.1} parent=0 // pred_fallthru
    _
  %v45 = vld [vmem:[%s0] sm:$0xf]
  %v46 = vld [vmem:[%s0 + $0x4] sm:$0xf]
  %v47 = vld [vmem:[%s0 + $0x8] sm:$0xf]
  %v48 = vld [vmem:[%s0 + $0xc] sm:$0xf]
  %v49 = vld [vmem:[%s0 + $0x10] sm:$0xf]
  %v50 = vld [vmem:[%s0 + $0x14] sm:$0xf]
  %v51 = vld [vmem:[%s0 + $0x18] sm:$0xf]
  %v52 = vld [vmem:[%s0 + $0x1c] sm:$0xf]
  %v53 = vld [vmem:[%s0 + $0x20] sm:$0xf]
  %v54 = vld [vmem:[%s0 + $0x24] sm:$0xf]
  %v55 = vld [vmem:[%s0 + $0x28] sm:$0xf]
  %v56 = vld [vmem:[%s0 + $0x2c] sm:$0xf]
  %v57 = vld [vmem:[%s0 + $0x30] sm:$0xf]
  %v58 = vld [vmem:[%s0 + $0x34] sm:$0xf]
  %v59 = vld [vmem:[%s0 + $0x38] sm:$0xf]
  %v60 = vld [vmem:[%s0 + $0x3c] sm:$0xf]
  %v61 = vld [vmem:[%s0 + $0x40] sm:$0xf]
  %v62 = vld [vmem:[%s0 + $0x44] sm:$0xf]
  %v63 = vld [vmem:[%s0 + $0x48] sm:$0xf]
  %v64 = vld [vmem:[%s0 + $0x4c] sm:$0xf]
  %v65 = vld [vmem:[%s0 + $0x50] sm:$0xf]
  %v66 = vld [vmem:[%s0 + $0x54] sm:$0xf]
  %v67 = vld [vmem:[%s0 + $0x58] sm:$0xf]
  %v68 = vld [vmem:[%s0 + $0x5c] sm:$0xf]
  %v69 = vld [vmem:[%s0 + $0x60] sm:$0xf]
  %v70 = vld [vmem:[%s0 + $0x64] sm:$0xf]
  %v71 = vld [vmem:[%s0 + $0x68] sm:$0xf]
  %v72 = vld [vmem:[%s0 + $0x6c] sm:$0xf]
  %v73 = vld [vmem:[%s0 + $0x70] sm:$0xf]
  %v74 = vld [vmem:[%s0 + $0x74] sm:$0xf]
  %v75 = vld [vmem:[%s0 + $0x78] sm:$0xf]
  %v76 = vld [vmem:[%s0 + $0x7c] sm:$0xf]
  %v77 = vld [vmem:[%s0 + $0x80] sm:$0xf]
  %v78 = vld [vmem:[%s0 + $0x84] sm:$0xf]
  %v79 = vld [vmem:[%s0 + $0x88] sm:$0xf]
  %v80 = vld [vmem:[%s0 + $0x8c] sm:$0xf]
  %v81 = vld [vmem:[%s0 + $0x90] sm:$0xf]
  %v82 = vld [vmem:[%s0 + $0x94] sm:$0xf]
  %v83 = vld [vmem:[%s0 + $0x98] sm:$0xf]
  %v84 = vld [vmem:[%s0 + $0x9c] sm:$0xf]
  %v85 = vld [vmem:[%s0 + $0xa0] sm:$0xf]
  %v86 = vld [vmem:[%s0 + $0xa4] sm:$0xf]
  %v87 = vld [vmem:[%s0 + $0xa8] sm:$0xf]
  %v88 = vld [vmem:[%s0 + $0xac] sm:$0xf]
  %v89 = vld [vmem:[%s0 + $0xb0] sm:$0xf]
  %v90 = vld [vmem:[%s0 + $0xb4] sm:$0xf]
  %v91 = vld [vmem:[%s0 + $0xb8] sm:$0xf]
  %v92 = vld [vmem:[%s0 + $0xbc] sm:$0xf]
  %v93 = vld [vmem:[%s0 + $0xc0] sm:$0xf]
  %v94 = vld [vmem:[%s0 + $0xc4] sm:$0xf]
  %v95 = vld [vmem:[%s0 + $0xc8] sm:$0xf]
  %v96 = vld [vmem:[%s0 + $0xcc] sm:$0xf]
  %v97 = vld [vmem:[%s0 + $0xd0] sm:$0xf]
  %v98 = vld [vmem:[%s0 + $0xd4] sm:$0xf]
  %v99 = vld [vmem:[%s0 + $0xd8] sm:$0xf]
  %v100 = vld [vmem:[%s0 + $0xdc] sm:$0xf]
  %v101 = vld [vmem:[%s0 + $0xe0] sm:$0xf]
  %v102 = vld [vmem:[%s0 + $0xe4] sm:$0xf]
  %v103 = vld [vmem:[%s0 + $0xe8] sm:$0xf]
  %v104 = vld [vmem:[%s0 + $0xec] sm:$0xf]
  %v105 = vld [vmem:[%s0 + $0xf0] sm:$0xf]
  %v106 = vld [vmem:[%s0 + $0xf4] sm:$0xf]
  %v107 = vld [vmem:[%s0 + $0xf8] sm:$0xf]
  %v108 = vld [vmem:[%s0 + $0xfc] sm:$0xf]
  %v109 = vld [vmem:[%s0 + $0x100] sm:$0xf]
  %v110 = vld [vmem:[%s0 + $0x104] sm:$0xf]
  %v111 = vld [vmem:[%s0 + $0x108] sm:$0xf]
  %v112 = vld [vmem:[%s0 + $0x10c] sm:$0xf]
  %v113 = vld [vmem:[%s0 + $0x110] sm:$0xf]
  %v114 = vld [vmem:[%s0 + $0x114] sm:$0xf]
  %v115 = vld [vmem:[%s0 + $0x118] sm:$0xf]
  %v116 = vld [vmem:[%s0 + $0x11c] sm:$0xf]
  %v117 = vld [vmem:[%s0 + $0x120] sm:$0xf]
  %v118 = vld [vmem:[%s0 + $0x124] sm:$0xf]
  %v119 = vld [vmem:[%s0 + $0x128] sm:$0xf]
  %v120 = vld [vmem:[%s0 + $0x12c] sm:$0xf]
  %v121 = vld [vmem:[%s0 + $0x130] sm:$0xf]
  %v122 = vld [vmem:[%s0 + $0x134] sm:$0xf]
  %v123 = vld [vmem:[%s0 + $0x138] sm:$0xf]
  %v124 = vld [vmem:[%s0 + $0x13c] sm:$0xf]
  %v125 = vld [vmem:[%s0 + $0x140] sm:$0xf]
  %v126 = vld [vmem:[%s0 + $0x144] sm:$0xf]
  %v127 = vld [vmem:[%s0 + $0x148] sm:$0xf]
  %v128 = vld [vmem:[%s0 + $0x14c] sm:$0xf]
  %v129 = vld [vmem:[%s0 + $0x150] sm:$0xf]
  %v130 = vld [vmem:[%s0 + $0x154] sm:$0xf]
  %v131 = vld [vmem:[%s0 + $0x158] sm:$0xf]
  %v132 = vld [vmem:[%s0 + $0x15c] sm:$0xf]
  %v133 = vld [vmem:[%s0 + $0x160] sm:$0xf]
  %v134 = vld [vmem:[%s0 + $0x164] sm:$0xf]
  %v135 = vld [vmem:[%s0 + $0x168] sm:$0xf]
  %v136 = vld [vmem:[%s0 + $0x16c] sm:$0xf]
  %v137 = vld [vmem:[%s0 + $0x170] sm:$0xf]
  %v138 = vld [vmem:[%s0 + $0x174] sm:$0xf]
  %v139 = vld [vmem:[%s0 + $0x178] sm:$0xf]
  %v140 = vld [vmem:[%s0 + $0x17c] sm:$0xf]
  %v141 = vld [vmem:[%s0 + $0x180] sm:$0xf]
  %v142 = vld [vmem:[%s0 + $0x184] sm:$0xf]
  %v143 = vld [vmem:[%s0 + $0x188] sm:$0xf]
  %v144 = vld [vmem:[%s0 + $0x18c] sm:$0xf]
  %v145 = vld [vmem:[%s0 + $0x190] sm:$0xf]
  %v146 = vld [vmem:[%s0 + $0x194] sm:$0xf]
  %v147 = vld [vmem:[%s0 + $0x198] sm:$0xf]
  %v148 = vld [vmem:[%s0 + $0x19c] sm:$0xf]
  %v149 = vld [vmem:[%s0 + $0x1a0] sm:$0xf]
  %v150 = vld [vmem:[%s0 + $0x1a4] sm:$0xf]
  %v151 = vld [vmem:[%s0 + $0x1a8] sm:$0xf]
  %v152 = vld [vmem:[%s0 + $0x1ac] sm:$0xf]
  %v153 = vld [vmem:[%s0 + $0x1b0] sm:$0xf]
  %v154 = vld [vmem:[%s0 + $0x1b4] sm:$0xf]
  %v155 = vld [vmem:[%s0 + $0x1b8] sm:$0xf]
  %v156 = vld [vmem:[%s0 + $0x1bc] sm:$0xf]
  %v157 = vld [vmem:[%s0 + $0x1c0] sm:$0xf]
  %v158 = vld [vmem:[%s0 + $0x1c4] sm:$0xf]
  %v159 = vld [vmem:[%s0 + $0x1c8] sm:$0xf]
  %v160 = vld [vmem:[%s0 + $0x1cc] sm:$0xf]
  %v161 = vld [vmem:[%s0 + $0x1d0] sm:$0xf]
  %v162 = vld [vmem:[%s0 + $0x1d4] sm:$0xf]
  %v163 = vld [vmem:[%s0 + $0x1d8] sm:$0xf]
  %v164 = vld [vmem:[%s0 + $0x1dc] sm:$0xf]
  %v165 = vld [vmem:[%s0 + $0x1e0] sm:$0xf]
  %v166 = vld [vmem:[%s0 + $0x1e4] sm:$0xf]
  %v167 = vld [vmem:[%s0 + $0x1e8] sm:$0xf]
  %v168 = vld [vmem:[%s0 + $0x1ec] sm:$0xf]
  %v169 = vld [vmem:[%s0 + $0x1f0] sm:$0xf]
  %v170 = vld [vmem:[%s0 + $0x1f4] sm:$0xf]
  %v171 = vld [vmem:[%s0 + $0x1f8] sm:$0xf]
  %v172 = vld [vmem:[%s0 + $0x1fc] sm:$0xf]
  %v173 = vld [vmem:[%s0 + $0x200] sm:$0xf]
  %v174 = vld [vmem:[%s0 + $0x204] sm:$0xf]
  %v175 = vld [vmem:[%s0 + $0x208] sm:$0xf]
  %v176 = vld [vmem:[%s0 + $0x20c] sm:$0xf]
  %v177 = vld [vmem:[%s0 + $0x210] sm:$0xf]
  %v178 = vld [vmem:[%s0 + $0x214] sm:$0xf]
  %v179 = vld [vmem:[%s0 + $0x218] sm:$0xf]
  %v180 = vld [vmem:[%s0 + $0x21c] sm:$0xf]
  %v181 = vld [vmem:[%s0 + $0x220] sm:$0xf]
  %v182 = vld [vmem:[%s0 + $0x224] sm:$0xf]
  %v183 = vld [vmem:[%s0 + $0x228] sm:$0xf]
  %v184 = vld [vmem:[%s0 + $0x22c] sm:$0xf]
  %v185 = vld [vmem:[%s0 + $0x230] sm:$0xf]
  %v186 = vld [vmem:[%s0 + $0x234] sm:$0xf]
  %v187 = vld [vmem:[%s0 + $0x238] sm:$0xf]
  %v188 = vld [vmem:[%s0 + $0x23c] sm:$0xf]
  %v189 = vld [vmem:[%s0 + $0x240] sm:$0xf]
  %v190 = vld [vmem:[%s0 + $0x244] sm:$0xf]
  %v191 = vld [vmem:[%s0 + $0x248] sm:$0xf]
  %v192 = vld [vmem:[%s0 + $0x24c] sm:$0xf]
  %v193 = vld [vmem:[%s0 + $0x250] sm:$0xf]
  %v194 = vld [vmem:[%s0 + $0x254] sm:$0xf]
  %v195 = vld [vmem:[%s0 + $0x258] sm:$0xf]
  %v196 = vld [vmem:[%s0 + $0x25c] sm:$0xf]
  %v197 = vld [vmem:[%s0 + $0x260] sm:$0xf]
  %v198 = vld [vmem:[%s0 + $0x264] sm:$0xf]
  %v199 = vld [vmem:[%s0 + $0x268] sm:$0xf]
  %v200 = vld [vmem:[%s0 + $0x26c] sm:$0xf]
  %v201 = vld [vmem:[%s0 + $0x270] sm:$0xf]
  %v202 = vld [vmem:[%s0 + $0x274] sm:$0xf]
  %v203 = vld [vmem:[%s0 + $0x278] sm:$0xf]
  %v204 = vld [vmem:[%s0 + $0x27c] sm:$0xf]
  %v205 = vld [vmem:[%s0 + $0x280] sm:$0xf]
  %v206 = vld [vmem:[%s0 + $0x284] sm:$0xf]
  %v207 = vld [vmem:[%s0 + $0x288] sm:$0xf]
  %v208 = vld [vmem:[%s0 + $0x28c] sm:$0xf]
  %v209 = vld [vmem:[%s0 + $0x290] sm:$0xf]
  %v210 = vld [vmem:[%s0 + $0x294] sm:$0xf]
  %v211 = vld [vmem:[%s0 + $0x298] sm:$0xf]
  %v212 = vld [vmem:[%s0 + $0x29c] sm:$0xf]
  %v213 = vld [vmem:[%s0 + $0x2a0] sm:$0xf]
  %v214 = vld [vmem:[%s0 + $0x2a4] sm:$0xf]
  %v215 = vld [vmem:[%s0 + $0x2a8] sm:$0xf]
  %v216 = vld [vmem:[%s0 + $0x2ac] sm:$0xf]
  %v217 = vld [vmem:[%s0 + $0x2b0] sm:$0xf]
  %v218 = vld [vmem:[%s0 + $0x2b4] sm:$0xf]
  %v219 = vld [vmem:[%s0 + $0x2b8] sm:$0xf]
  %v220 = vld [vmem:[%s0 + $0x2bc] sm:$0xf]
  %v221 = vld [vmem:[%s0 + $0x2c0] sm:$0xf]
  %v222 = vld [vmem:[%s0 + $0x2c4] sm:$0xf]
  %v223 = vld [vmem:[%s0 + $0x2c8] sm:$0xf]
  %v224 = vld [vmem:[%s0 + $0x2cc] sm:$0xf]
  %v225 = vld [vmem:[%s0 + $0x2d0] sm:$0xf]
  %v226 = vld [vmem:[%s0 + $0x2d4] sm:$0xf]
  %v227 = vld [vmem:[%s0 + $0x2d8] sm:$0xf]
  %v228 = vld [vmem:[%s0 + $0x2dc] sm:$0xf]
  %v229 = vld [vmem:[%s0 + $0x2e0] sm:$0xf]
  %v230 = vld [vmem:[%s0 + $0x2e4] sm:$0xf]
  %v231 = vld [vmem:[%s0 + $0x2e8] sm:$0xf]
  %v232 = vld [vmem:[%s0 + $0x2ec] sm:$0xf]
  %v233 = vld [vmem:[%s0 + $0x2f0] sm:$0xf]
  %v234 = vld [vmem:[%s0 + $0x2f4] sm:$0xf]
  %v235 = vld [vmem:[%s0 + $0x2f8] sm:$0xf]
  %v236 = vld [vmem:[%s0 + $0x2fc] sm:$0xf]
  %v237 = vld [vmem:[%s0 + $0x300] sm:$0xf]
  %v238 = vld [vmem:[%s0 + $0x304] sm:$0xf]
  %v239 = vld [vmem:[%s0 + $0x308] sm:$0xf]
  %v240 = vld [vmem:[%s0 + $0x30c] sm:$0xf]
  %v241 = vld [vmem:[%s0 + $0x310] sm:$0xf]
  %v242 = vld [vmem:[%s0 + $0x314] sm:$0xf]
  %v243 = vld [vmem:[%s0 + $0x318] sm:$0xf]
  %v244 = vld [vmem:[%s0 + $0x31c] sm:$0xf]
  %v245 = vld [vmem:[%s0 + $0x320] sm:$0xf]
  %v246 = vld [vmem:[%s0 + $0x324] sm:$0xf]
  %v247 = vld [vmem:[%s0 + $0x328] sm:$0xf]
  %v248 = vld [vmem:[%s0 + $0x32c] sm:$0xf]
  %v249 = vld [vmem:[%s0 + $0x330] sm:$0xf]
  %v250 = vld [vmem:[%s0 + $0x334] sm:$0xf]
  %v251 = vld [vmem:[%s0 + $0x338] sm:$0xf]
  %v252 = vld [vmem:[%s0 + $0x33c] sm:$0xf]
  %v253 = vld [vmem:[%s0 + $0x340] sm:$0xf]
  %v254 = vld [vmem:[%s0 + $0x344] sm:$0xf]
  %v255 = vld [vmem:[%s0 + $0x348] sm:$0xf]
  %v256 = vld [vmem:[%s0 + $0x34c] sm:$0xf]
  %v257 = vld [vmem:[%s0 + $0x350] sm:$0xf]
  %v258 = vld [vmem:[%s0 + $0x354] sm:$0xf]
  %v259 = vld [vmem:[%s0 + $0x358] sm:$0xf]
  %v260 = vld [vmem:[%s0 + $0x35c] sm:$0xf]
  %v261 = vld [vmem:[%s0 + $0x360] sm:$0xf]
  %v262 = vld [vmem:[%s0 + $0x364] sm:$0xf]
  %v263 = vld [vmem:[%s0 + $0x368] sm:$0xf]
  %v264 = vld [vmem:[%s0 + $0x36c] sm:$0xf]
  %v265 = vld [vmem:[%s0 + $0x370] sm:$0xf]
  %v266 = vld [vmem:[%s0 + $0x374] sm:$0xf]
  %v267 = vld [vmem:[%s0 + $0x378] sm:$0xf]
  %v268 = vld [vmem:[%s0 + $0x37c] sm:$0xf]
  %v269 = vld [vmem:[%s0 + $0x380] sm:$0xf]
  %v270 = vld [vmem:[%s0 + $0x384] sm:$0xf]
  %v271 = vld [vmem:[%s0 + $0x388] sm:$0xf]
  %v272 = vld [vmem:[%s0 + $0x38c] sm:$0xf]
  %v273 = vld [vmem:[%s0 + $0x390] sm:$0xf]
  %v274 = vld [vmem:[%s0 + $0x394] sm:$0xf]
  %v275 = vld [vmem:[%s0 + $0x398] sm:$0xf]
  %v276 = vld [vmem:[%s0 + $0x39c] sm:$0xf]
  %v277 = vld [vmem:[%s0 + $0x3a0] sm:$0xf]
  %v278 = vld [vmem:[%s0 + $0x3a4] sm:$0xf]
  %v279 = vld [vmem:[%s0 + $0x3a8] sm:$0xf]
  %v280 = vld [vmem:[%s0 + $0x3ac] sm:$0xf]
  %v281 = vld [vmem:[%s0 + $0x3b0] sm:$0xf]
  %v282 = vld [vmem:[%s0 + $0x3b4] sm:$0xf]
  %v283 = vld [vmem:[%s0 + $0x3b8] sm:$0xf]
  %v284 = vld [vmem:[%s0 + $0x3bc] sm:$0xf]
  %v285 = vld [vmem:[%s0 + $0x3c0] sm:$0xf]
  %v286 = vld [vmem:[%s0 + $0x3c4] sm:$0xf]
  %v287 = vld [vmem:[%s0 + $0x3c8] sm:$0xf]
  %v288 = vld [vmem:[%s0 + $0x3cc] sm:$0xf]
  %v289 = vld [vmem:[%s0 + $0x3d0] sm:$0xf]
  %v290 = vld [vmem:[%s0 + $0x3d4] sm:$0xf]
  %v291 = vld [vmem:[%s0 + $0x3d8] sm:$0xf]
  %v292 = vld [vmem:[%s0 + $0x3dc] sm:$0xf]
  %v293 = vld [vmem:[%s0 + $0x3e0] sm:$0xf]
  %v294 = vld [vmem:[%s0 + $0x3e4] sm:$0xf]
  %v295 = vld [vmem:[%s0 + $0x3e8] sm:$0xf]
  %v296 = vld [vmem:[%s0 + $0x3ec] sm:$0xf]
  %v297 = vld [vmem:[%s0 + $0x3f0] sm:$0xf]
  %v298 = vld [vmem:[%s0 + $0x3f4] sm:$0xf]
  %v299 = vld [vmem:[%s0 + $0x3f8] sm:$0xf]
  %v300 = vld [vmem:[%s0 + $0x3fc] sm:$0xf]
  %v301 = vld [vmem:[%s1] sm:$0xf]
  %v302 = vld [vmem:[%s1 + $0x4] sm:$0xf]
  %v303 = vld [vmem:[%s2] sm:$0x1]
  %v305 = vlaneseq
  %v306 = vshrl.u32 %v305, 7
  %v307 = vsub.s32 0, %v306
  %v308 = vrot.slane %v303, %v307
  %v566 = vunpack.c.l.b16 %v45
  %v567 = vunpack.c.l.b16 %v46
  %v568 = vunpack.c.l.b16 %v47
  %v569 = vunpack.c.l.b16 %v48
  %v570 = vunpack.c.l.b16 %v49
  %v571 = vunpack.c.l.b16 %v50
  %v572 = vunpack.c.l.b16 %v51
  %v573 = vunpack.c.l.b16 %v52
  %v574 = vunpack.c.l.b16 %v53
  %v575 = vunpack.c.l.b16 %v54
  %v576 = vunpack.c.l.b16 %v55
  %v577 = vunpack.c.l.b16 %v56
  %v578 = vunpack.c.l.b16 %v57
  %v579 = vunpack.c.l.b16 %v58
  %v580 = vunpack.c.l.b16 %v59
  %v581 = vunpack.c.l.b16 %v60
  %v582 = vunpack.c.l.b16 %v61
  %v583 = vunpack.c.l.b16 %v62
  %v584 = vunpack.c.l.b16 %v63
  %v585 = vunpack.c.l.b16 %v64
  %v586 = vunpack.c.l.b16 %v65
  %v587 = vunpack.c.l.b16 %v66
  %v588 = vunpack.c.l.b16 %v67
  %v589 = vunpack.c.l.b16 %v68
  %v590 = vunpack.c.l.b16 %v69
  %v591 = vunpack.c.l.b16 %v70
  %v592 = vunpack.c.l.b16 %v71
  %v593 = vunpack.c.l.b16 %v72
  %v594 = vunpack.c.l.b16 %v73
  %v595 = vunpack.c.l.b16 %v74
  %v596 = vunpack.c.l.b16 %v75
  %v597 = vunpack.c.l.b16 %v76
  %v598 = vunpack.c.l.b16 %v77
  %v599 = vunpack.c.l.b16 %v78
  %v600 = vunpack.c.l.b16 %v79
  %v601 = vunpack.c.l.b16 %v80
  %v602 = vunpack.c.l.b16 %v81
  %v603 = vunpack.c.l.b16 %v82
  %v604 = vunpack.c.l.b16 %v83
  %v605 = vunpack.c.l.b16 %v84
  %v606 = vunpack.c.l.b16 %v85
  %v607 = vunpack.c.l.b16 %v86
  %v608 = vunpack.c.l.b16 %v87
  %v609 = vunpack.c.l.b16 %v88
  %v610 = vunpack.c.l.b16 %v89
  %v611 = vunpack.c.l.b16 %v90
  %v612 = vunpack.c.l.b16 %v91
  %v613 = vunpack.c.l.b16 %v92
  %v614 = vunpack.c.l.b16 %v93
  %v615 = vunpack.c.l.b16 %v94
  %v616 = vunpack.c.l.b16 %v95
  %v617 = vunpack.c.l.b16 %v96
  %v618 = vunpack.c.l.b16 %v97
  %v619 = vunpack.c.l.b16 %v98
  %v620 = vunpack.c.l.b16 %v99
  %v621 = vunpack.c.l.b16 %v100
  %v622 = vunpack.c.l.b16 %v101
  %v623 = vunpack.c.l.b16 %v102
  %v624 = vunpack.c.l.b16 %v103
  %v625 = vunpack.c.l.b16 %v104
  %v626 = vunpack.c.l.b16 %v105
  %v627 = vunpack.c.l.b16 %v106
  %v628 = vunpack.c.l.b16 %v107
  %v629 = vunpack.c.l.b16 %v108
  %v630 = vunpack.c.l.b16 %v109
  %v631 = vunpack.c.l.b16 %v110
  %v632 = vunpack.c.l.b16 %v111
  %v633 = vunpack.c.l.b16 %v112
  %v634 = vunpack.c.l.b16 %v113
  %v635 = vunpack.c.l.b16 %v114
  %v636 = vunpack.c.l.b16 %v115
  %v637 = vunpack.c.l.b16 %v116
  %v638 = vunpack.c.l.b16 %v117
  %v639 = vunpack.c.l.b16 %v118
  %v640 = vunpack.c.l.b16 %v119
  %v641 = vunpack.c.l.b16 %v120
  %v642 = vunpack.c.l.b16 %v121
  %v643 = vunpack.c.l.b16 %v122
  %v644 = vunpack.c.l.b16 %v123
  %v645 = vunpack.c.l.b16 %v124
  %v646 = vunpack.c.l.b16 %v125
  %v647 = vunpack.c.l.b16 %v126
  %v648 = vunpack.c.l.b16 %v127
  %v649 = vunpack.c.l.b16 %v128
  %v650 = vunpack.c.l.b16 %v129
  %v651 = vunpack.c.l.b16 %v130
  %v652 = vunpack.c.l.b16 %v131
  %v653 = vunpack.c.l.b16 %v132
  %v654 = vunpack.c.l.b16 %v133
  %v655 = vunpack.c.l.b16 %v134
  %v656 = vunpack.c.l.b16 %v135
  %v657 = vunpack.c.l.b16 %v136
  %v658 = vunpack.c.l.b16 %v137
  %v659 = vunpack.c.l.b16 %v138
  %v660 = vunpack.c.l.b16 %v139
  %v661 = vunpack.c.l.b16 %v140
  %v662 = vunpack.c.l.b16 %v141
  %v663 = vunpack.c.l.b16 %v142
  %v664 = vunpack.c.l.b16 %v143
  %v665 = vunpack.c.l.b16 %v144
  %v666 = vunpack.c.l.b16 %v145
  %v667 = vunpack.c.l.b16 %v146
  %v668 = vunpack.c.l.b16 %v147
  %v669 = vunpack.c.l.b16 %v148
  %v670 = vunpack.c.l.b16 %v149
  %v671 = vunpack.c.l.b16 %v150
  %v672 = vunpack.c.l.b16 %v151
  %v673 = vunpack.c.l.b16 %v152
  %v674 = vunpack.c.l.b16 %v153
  %v675 = vunpack.c.l.b16 %v154
  %v676 = vunpack.c.l.b16 %v155
  %v677 = vunpack.c.l.b16 %v156
  %v678 = vunpack.c.l.b16 %v157
  %v679 = vunpack.c.l.b16 %v158
  %v680 = vunpack.c.l.b16 %v159
  %v681 = vunpack.c.l.b16 %v160
  %v682 = vunpack.c.l.b16 %v161
  %v683 = vunpack.c.l.b16 %v162
  %v684 = vunpack.c.l.b16 %v163
  %v685 = vunpack.c.l.b16 %v164
  %v686 = vunpack.c.l.b16 %v165
  %v687 = vunpack.c.l.b16 %v166
  %v688 = vunpack.c.l.b16 %v167
  %v689 = vunpack.c.l.b16 %v168
  %v690 = vunpack.c.l.b16 %v169
  %v691 = vunpack.c.l.b16 %v170
  %v692 = vunpack.c.l.b16 %v171
  %v693 = vunpack.c.l.b16 %v172
  %v694 = vunpack.c.l.b16 %v173
  %v695 = vunpack.c.l.b16 %v174
  %v696 = vunpack.c.l.b16 %v175
  %v697 = vunpack.c.l.b16 %v176
  %v698 = vunpack.c.l.b16 %v177
  %v699 = vunpack.c.l.b16 %v178
  %v700 = vunpack.c.l.b16 %v179
  %v701 = vunpack.c.l.b16 %v180
  %v702 = vunpack.c.l.b16 %v181
  %v703 = vunpack.c.l.b16 %v182
  %v704 = vunpack.c.l.b16 %v183
  %v705 = vunpack.c.l.b16 %v184
  %v706 = vunpack.c.l.b16 %v185
  %v707 = vunpack.c.l.b16 %v186
  %v708 = vunpack.c.l.b16 %v187
  %v709 = vunpack.c.l.b16 %v188
  %v710 = vunpack.c.l.b16 %v189
  %v711 = vunpack.c.l.b16 %v190
  %v712 = vunpack.c.l.b16 %v191
  %v713 = vunpack.c.l.b16 %v192
  %v714 = vunpack.c.l.b16 %v193
  %v715 = vunpack.c.l.b16 %v194
  %v716 = vunpack.c.l.b16 %v195
  %v717 = vunpack.c.l.b16 %v196
  %v718 = vunpack.c.l.b16 %v197
  %v719 = vunpack.c.l.b16 %v198
  %v720 = vunpack.c.l.b16 %v199
  %v721 = vunpack.c.l.b16 %v200
  %v722 = vunpack.c.l.b16 %v201
  %v723 = vunpack.c.l.b16 %v202
  %v724 = vunpack.c.l.b16 %v203
  %v725 = vunpack.c.l.b16 %v204
  %v726 = vunpack.c.l.b16 %v205
  %v727 = vunpack.c.l.b16 %v206
  %v728 = vunpack.c.l.b16 %v207
  %v729 = vunpack.c.l.b16 %v208
  %v730 = vunpack.c.l.b16 %v209
  %v731 = vunpack.c.l.b16 %v210
  %v732 = vunpack.c.l.b16 %v211
  %v733 = vunpack.c.l.b16 %v212
  %v734 = vunpack.c.l.b16 %v213
  %v735 = vunpack.c.l.b16 %v214
  %v736 = vunpack.c.l.b16 %v215
  %v737 = vunpack.c.l.b16 %v216
  %v738 = vunpack.c.l.b16 %v217
  %v739 = vunpack.c.l.b16 %v218
  %v740 = vunpack.c.l.b16 %v219
  %v741 = vunpack.c.l.b16 %v220
  %v742 = vunpack.c.l.b16 %v221
  %v743 = vunpack.c.l.b16 %v222
  %v744 = vunpack.c.l.b16 %v223
  %v745 = vunpack.c.l.b16 %v224
  %v746 = vunpack.c.l.b16 %v225
  %v747 = vunpack.c.l.b16 %v226
  %v748 = vunpack.c.l.b16 %v227
  %v749 = vunpack.c.l.b16 %v228
  %v750 = vunpack.c.l.b16 %v229
  %v751 = vunpack.c.l.b16 %v230
  %v752 = vunpack.c.l.b16 %v231
  %v753 = vunpack.c.l.b16 %v232
  %v754 = vunpack.c.l.b16 %v233
  %v755 = vunpack.c.l.b16 %v234
  %v756 = vunpack.c.l.b16 %v235
  %v757 = vunpack.c.l.b16 %v236
  %v758 = vunpack.c.l.b16 %v237
  %v759 = vunpack.c.l.b16 %v238
  %v760 = vunpack.c.l.b16 %v239
  %v761 = vunpack.c.l.b16 %v240
  %v762 = vunpack.c.l.b16 %v241
  %v763 = vunpack.c.l.b16 %v242
  %v764 = vunpack.c.l.b16 %v243
  %v765 = vunpack.c.l.b16 %v244
  %v766 = vunpack.c.l.b16 %v245
  %v767 = vunpack.c.l.b16 %v246
  %v768 = vunpack.c.l.b16 %v247
  %v769 = vunpack.c.l.b16 %v248
  %v770 = vunpack.c.l.b16 %v249
  %v771 = vunpack.c.l.b16 %v250
  %v772 = vunpack.c.l.b16 %v251
  %v773 = vunpack.c.l.b16 %v252
  %v774 = vunpack.c.l.b16 %v253
  %v775 = vunpack.c.l.b16 %v254
  %v776 = vunpack.c.l.b16 %v255
  %v777 = vunpack.c.l.b16 %v256
  %v778 = vunpack.c.l.b16 %v257
  %v779 = vunpack.c.l.b16 %v258
  %v780 = vunpack.c.l.b16 %v259
  %v781 = vunpack.c.l.b16 %v260
  %v782 = vunpack.c.l.b16 %v261
  %v783 = vunpack.c.l.b16 %v262
  %v784 = vunpack.c.l.b16 %v263
  %v785 = vunpack.c.l.b16 %v264
  %v786 = vunpack.c.l.b16 %v265
  %v787 = vunpack.c.l.b16 %v266
  %v788 = vunpack.c.l.b16 %v267
  %v789 = vunpack.c.l.b16 %v268
  %v790 = vunpack.c.l.b16 %v269
  %v791 = vunpack.c.l.b16 %v270
  %v792 = vunpack.c.l.b16 %v271
  %v793 = vunpack.c.l.b16 %v272
  %v794 = vunpack.c.l.b16 %v273
  %v795 = vunpack.c.l.b16 %v274
  %v796 = vunpack.c.l.b16 %v275
  %v797 = vunpack.c.l.b16 %v276
  %v798 = vunpack.c.l.b16 %v277
  %v799 = vunpack.c.l.b16 %v278
  %v800 = vunpack.c.l.b16 %v279
  %v801 = vunpack.c.l.b16 %v280
  %v802 = vunpack.c.l.b16 %v281
  %v803 = vunpack.c.l.b16 %v282
  %v804 = vunpack.c.l.b16 %v283
  %v805 = vunpack.c.l.b16 %v284
  %v806 = vunpack.c.l.b16 %v285
  %v807 = vunpack.c.l.b16 %v286
  %v808 = vunpack.c.l.b16 %v287
  %v809 = vunpack.c.l.b16 %v288
  %v810 = vunpack.c.l.b16 %v289
  %v811 = vunpack.c.l.b16 %v290
  %v812 = vunpack.c.l.b16 %v291
  %v813 = vunpack.c.l.b16 %v292
  %v814 = vunpack.c.l.b16 %v293
  %v815 = vunpack.c.l.b16 %v294
  %v816 = vunpack.c.l.b16 %v295
  %v817 = vunpack.c.l.b16 %v296
  %v818 = vunpack.c.l.b16 %v297
  %v819 = vunpack.c.l.b16 %v298
  %v820 = vunpack.c.l.b16 %v299
  %v821 = vunpack.c.l.b16 %v300
  %v822 = vpack.c.b16 %v567, %v566
  %v823 = vpack.c.b16 %v569, %v568
  %v824 = vpack.c.b16 %v571, %v570
  %v825 = vpack.c.b16 %v573, %v572
  %v826 = vpack.c.b16 %v575, %v574
  %v827 = vpack.c.b16 %v577, %v576
  %v828 = vpack.c.b16 %v579, %v578
  %v829 = vpack.c.b16 %v581, %v580
  %v830 = vpack.c.b16 %v583, %v582
  %v831 = vpack.c.b16 %v585, %v584
  %v832 = vpack.c.b16 %v587, %v586
  %v833 = vpack.c.b16 %v589, %v588
  %v834 = vpack.c.b16 %v591, %v590
  %v835 = vpack.c.b16 %v593, %v592
  %v836 = vpack.c.b16 %v595, %v594
  %v837 = vpack.c.b16 %v597, %v596
  %v838 = vpack.c.b16 %v599, %v598
  %v839 = vpack.c.b16 %v601, %v600
  %v840 = vpack.c.b16 %v603, %v602
  %v841 = vpack.c.b16 %v605, %v604
  %v842 = vpack.c.b16 %v607, %v606
  %v843 = vpack.c.b16 %v609, %v608
  %v844 = vpack.c.b16 %v611, %v610
  %v845 = vpack.c.b16 %v613, %v612
  %v846 = vpack.c.b16 %v615, %v614
  %v847 = vpack.c.b16 %v617, %v616
  %v848 = vpack.c.b16 %v619, %v618
  %v849 = vpack.c.b16 %v621, %v620
  %v850 = vpack.c.b16 %v623, %v622
  %v851 = vpack.c.b16 %v625, %v624
  %v852 = vpack.c.b16 %v627, %v626
  %v853 = vpack.c.b16 %v629, %v628
  %v854 = vpack.c.b16 %v631, %v630
  %v855 = vpack.c.b16 %v633, %v632
  %v856 = vpack.c.b16 %v635, %v634
  %v857 = vpack.c.b16 %v637, %v636
  %v858 = vpack.c.b16 %v639, %v638
  %v859 = vpack.c.b16 %v641, %v640
  %v860 = vpack.c.b16 %v643, %v642
  %v861 = vpack.c.b16 %v645, %v644
  %v862 = vpack.c.b16 %v647, %v646
  %v863 = vpack.c.b16 %v649, %v648
  %v864 = vpack.c.b16 %v651, %v650
  %v865 = vpack.c.b16 %v653, %v652
  %v866 = vpack.c.b16 %v655, %v654
  %v867 = vpack.c.b16 %v657, %v656
  %v868 = vpack.c.b16 %v659, %v658
  %v869 = vpack.c.b16 %v661, %v660
  %v870 = vpack.c.b16 %v663, %v662
  %v871 = vpack.c.b16 %v665, %v664
  %v872 = vpack.c.b16 %v667, %v666
  %v873 = vpack.c.b16 %v669, %v668
  %v874 = vpack.c.b16 %v671, %v670
  %v875 = vpack.c.b16 %v673, %v672
  %v876 = vpack.c.b16 %v675, %v674
  %v877 = vpack.c.b16 %v677, %v676
  %v878 = vpack.c.b16 %v679, %v678
  %v879 = vpack.c.b16 %v681, %v680
  %v880 = vpack.c.b16 %v683, %v682
  %v881 = vpack.c.b16 %v685, %v684
  %v882 = vpack.c.b16 %v687, %v686
  %v883 = vpack.c.b16 %v689, %v688
  %v884 = vpack.c.b16 %v691, %v690
  %v885 = vpack.c.b16 %v693, %v692
  %v886 = vpack.c.b16 %v695, %v694
  %v887 = vpack.c.b16 %v697, %v696
  %v888 = vpack.c.b16 %v699, %v698
  %v889 = vpack.c.b16 %v701, %v700
  %v890 = vpack.c.b16 %v703, %v702
  %v891 = vpack.c.b16 %v705, %v704
  %v892 = vpack.c.b16 %v707, %v706
  %v893 = vpack.c.b16 %v709, %v708
  %v894 = vpack.c.b16 %v711, %v710
  %v895 = vpack.c.b16 %v713, %v712
  %v896 = vpack.c.b16 %v715, %v714
  %v897 = vpack.c.b16 %v717, %v716
  %v898 = vpack.c.b16 %v719, %v718
  %v899 = vpack.c.b16 %v721, %v720
  %v900 = vpack.c.b16 %v723, %v722
  %v901 = vpack.c.b16 %v725, %v724
  %v902 = vpack.c.b16 %v727, %v726
  %v903 = vpack.c.b16 %v729, %v728
  %v904 = vpack.c.b16 %v731, %v730
  %v905 = vpack.c.b16 %v733, %v732
  %v906 = vpack.c.b16 %v735, %v734
  %v907 = vpack.c.b16 %v737, %v736
  %v908 = vpack.c.b16 %v739, %v738
  %v909 = vpack.c.b16 %v741, %v740
  %v910 = vpack.c.b16 %v743, %v742
  %v911 = vpack.c.b16 %v745, %v744
  %v912 = vpack.c.b16 %v747, %v746
  %v913 = vpack.c.b16 %v749, %v748
  %v914 = vpack.c.b16 %v751, %v750
  %v915 = vpack.c.b16 %v753, %v752
  %v916 = vpack.c.b16 %v755, %v754
  %v917 = vpack.c.b16 %v757, %v756
  %v918 = vpack.c.b16 %v759, %v758
  %v919 = vpack.c.b16 %v761, %v760
  %v920 = vpack.c.b16 %v763, %v762
  %v921 = vpack.c.b16 %v765, %v764
  %v922 = vpack.c.b16 %v767, %v766
  %v923 = vpack.c.b16 %v769, %v768
  %v924 = vpack.c.b16 %v771, %v770
  %v925 = vpack.c.b16 %v773, %v772
  %v926 = vpack.c.b16 %v775, %v774
  %v927 = vpack.c.b16 %v777, %v776
  %v928 = vpack.c.b16 %v779, %v778
  %v929 = vpack.c.b16 %v781, %v780
  %v930 = vpack.c.b16 %v783, %v782
  %v931 = vpack.c.b16 %v785, %v784
  %v932 = vpack.c.b16 %v787, %v786
  %v933 = vpack.c.b16 %v789, %v788
  %v934 = vpack.c.b16 %v791, %v790
  %v935 = vpack.c.b16 %v793, %v792
  %v936 = vpack.c.b16 %v795, %v794
  %v937 = vpack.c.b16 %v797, %v796
  %v938 = vpack.c.b16 %v799, %v798
  %v939 = vpack.c.b16 %v801, %v800
  %v940 = vpack.c.b16 %v803, %v802
  %v941 = vpack.c.b16 %v805, %v804
  %v942 = vpack.c.b16 %v807, %v806
  %v943 = vpack.c.b16 %v809, %v808
  %v944 = vpack.c.b16 %v811, %v810
  %v945 = vpack.c.b16 %v813, %v812
  %v946 = vpack.c.b16 %v815, %v814
  %v947 = vpack.c.b16 %v817, %v816
  %v948 = vpack.c.b16 %v819, %v818
  %v949 = vpack.c.b16 %v821, %v820
  %v952 = vunpack.c.l.b16 %v301
  %v953 = vunpack.c.l.b16 %v302
  %v954 = vpack.c.b16 %v953, %v952
  %vm956 = vcmask 130048
  %v958 = vsel %vm956, %v822, 0
  %v961 = vsel %vm956, %v823, 0
  %v964 = vsel %vm956, %v824, 0
  %v967 = vsel %vm956, %v825, 0
  %v970 = vsel %vm956, %v826, 0
  %v973 = vsel %vm956, %v827, 0
  %v976 = vsel %vm956, %v828, 0
  %v979 = vsel %vm956, %v829, 0
  %v982 = vsel %vm956, %v830, 0
  %v985 = vsel %vm956, %v831, 0
  %v988 = vsel %vm956, %v832, 0
  %v991 = vsel %vm956, %v833, 0
  %v994 = vsel %vm956, %v834, 0
  %v997 = vsel %vm956, %v835, 0
  %v1000 = vsel %vm956, %v836, 0
  %v1003 = vsel %vm956, %v837, 0
  %v1006 = vsel %vm956, %v838, 0
  %v1009 = vsel %vm956, %v839, 0
  %v1012 = vsel %vm956, %v840, 0
  %v1015 = vsel %vm956, %v841, 0
  %v1018 = vsel %vm956, %v842, 0
  %v1021 = vsel %vm956, %v843, 0
  %v1024 = vsel %vm956, %v844, 0
  %v1027 = vsel %vm956, %v845, 0
  %v1030 = vsel %vm956, %v846, 0
  %v1033 = vsel %vm956, %v847, 0
  %v1036 = vsel %vm956, %v848, 0
  %v1039 = vsel %vm956, %v849, 0
  %v1042 = vsel %vm956, %v850, 0
  %v1045 = vsel %vm956, %v851, 0
  %v1048 = vsel %vm956, %v852, 0
  %v1051 = vsel %vm956, %v853, 0
  %v1054 = vsel %vm956, %v854, 0
  %v1057 = vsel %vm956, %v855, 0
  %v1060 = vsel %vm956, %v856, 0
  %v1063 = vsel %vm956, %v857, 0
  %v1066 = vsel %vm956, %v858, 0
  %v1069 = vsel %vm956, %v859, 0
  %v1072 = vsel %vm956, %v860, 0
  %v1075 = vsel %vm956, %v861, 0
  %v1078 = vsel %vm956, %v862, 0
  %v1081 = vsel %vm956, %v863, 0
  %v1084 = vsel %vm956, %v864, 0
  %v1087 = vsel %vm956, %v865, 0
  %v1090 = vsel %vm956, %v866, 0
  %v1093 = vsel %vm956, %v867, 0
  %v1096 = vsel %vm956, %v868, 0
  %v1099 = vsel %vm956, %v869, 0
  %v1102 = vsel %vm956, %v870, 0
  %v1105 = vsel %vm956, %v871, 0
  %v1108 = vsel %vm956, %v872, 0
  %v1111 = vsel %vm956, %v873, 0
  %v1114 = vsel %vm956, %v874, 0
  %v1117 = vsel %vm956, %v875, 0
  %v1120 = vsel %vm956, %v876, 0
  %v1123 = vsel %vm956, %v877, 0
  %v1126 = vsel %vm956, %v878, 0
  %v1129 = vsel %vm956, %v879, 0
  %v1132 = vsel %vm956, %v880, 0
  %v1135 = vsel %vm956, %v881, 0
  %v1138 = vsel %vm956, %v882, 0
  %v1141 = vsel %vm956, %v883, 0
  %v1144 = vsel %vm956, %v884, 0
  %v1147 = vsel %vm956, %v885, 0
  %v1150 = vsel %vm956, %v886, 0
  %v1153 = vsel %vm956, %v887, 0
  %v1156 = vsel %vm956, %v888, 0
  %v1159 = vsel %vm956, %v889, 0
  %v1162 = vsel %vm956, %v890, 0
  %v1165 = vsel %vm956, %v891, 0
  %v1168 = vsel %vm956, %v892, 0
  %v1171 = vsel %vm956, %v893, 0
  %v1174 = vsel %vm956, %v894, 0
  %v1177 = vsel %vm956, %v895, 0
  %v1180 = vsel %vm956, %v896, 0
  %v1183 = vsel %vm956, %v897, 0
  %v1186 = vsel %vm956, %v898, 0
  %v1189 = vsel %vm956, %v899, 0
  %v1192 = vsel %vm956, %v900, 0
  %v1195 = vsel %vm956, %v901, 0
  %v1198 = vsel %vm956, %v902, 0
  %v1201 = vsel %vm956, %v903, 0
  %v1204 = vsel %vm956, %v904, 0
  %v1207 = vsel %vm956, %v905, 0
  %v1210 = vsel %vm956, %v906, 0
  %v1213 = vsel %vm956, %v907, 0
  %v1216 = vsel %vm956, %v908, 0
  %v1219 = vsel %vm956, %v909, 0
  %v1222 = vsel %vm956, %v910, 0
  %v1225 = vsel %vm956, %v911, 0
  %v1228 = vsel %vm956, %v912, 0
  %v1231 = vsel %vm956, %v913, 0
  %v1234 = vsel %vm956, %v914, 0
  %v1237 = vsel %vm956, %v915, 0
  %v1240 = vsel %vm956, %v916, 0
  %v1243 = vsel %vm956, %v917, 0
  %v1246 = vsel %vm956, %v918, 0
  %v1249 = vsel %vm956, %v919, 0
  %v1252 = vsel %vm956, %v920, 0
  %v1255 = vsel %vm956, %v921, 0
  %v1258 = vsel %vm956, %v922, 0
  %v1261 = vsel %vm956, %v923, 0
  %v1264 = vsel %vm956, %v924, 0
  %v1267 = vsel %vm956, %v925, 0
  %v1270 = vsel %vm956, %v926, 0
  %v1273 = vsel %vm956, %v927, 0
  %v1276 = vsel %vm956, %v928, 0
  %v1279 = vsel %vm956, %v929, 0
  %v1282 = vsel %vm956, %v930, 0
  %v1285 = vsel %vm956, %v931, 0
  %v1288 = vsel %vm956, %v932, 0
  %v1291 = vsel %vm956, %v933, 0
  %v1294 = vsel %vm956, %v934, 0
  %v1297 = vsel %vm956, %v935, 0
  %v1300 = vsel %vm956, %v936, 0
  %v1303 = vsel %vm956, %v937, 0
  %v1306 = vsel %vm956, %v938, 0
  %v1309 = vsel %vm956, %v939, 0
  %v1312 = vsel %vm956, %v940, 0
  %v1315 = vsel %vm956, %v941, 0
  %v1318 = vsel %vm956, %v942, 0
  %v1321 = vsel %vm956, %v943, 0
  %v1324 = vsel %vm956, %v944, 0
  %v1327 = vsel %vm956, %v945, 0
  %v1330 = vsel %vm956, %v946, 0
  %v1333 = vsel %vm956, %v947, 0
  %v1336 = vsel %vm956, %v948, 0
  %v1339 = vsel %vm956, %v949, 0
  %1341 = vmatprep.subr.bf16.mxu0 0
  %1342 = vmatpush1.bf16.msra.mxu0 %v954
  %1343 = vmatprep.subr.bf16.mxu0 0
  %1344 = vmatpush1.bf16.msra.mxu0 0
  %1345 = vmatprep.subr.bf16.mxu0 0
  %1346 = vmatpush1.bf16.msra.mxu0 0
  %1347 = vmatprep.subr.bf16.mxu0 0
  %1348 = vmatpush1.bf16.msra.mxu0 0
  %1349 = vmatprep.subr.bf16.mxu0 0
  %1350 = vmatpush1.bf16.msra.mxu0 0
  %1351 = vmatprep.subr.bf16.mxu0 0
  %1352 = vmatpush1.bf16.msra.mxu0 0
  %1353 = vmatprep.subr.bf16.mxu0 0
  %1354 = vmatpush1.bf16.msra.mxu0 0
  %1355 = vmatprep.subr.bf16.mxu0 0
  %1356 = vmatpush1.bf16.msra.mxu0 0
  %1357 = vmatprep.subr.bf16.mxu0 0
  %1358 = vmatpush1.bf16.msra.mxu0 0
  %1359 = vmatprep.subr.bf16.mxu0 0
  %1360 = vmatpush1.bf16.msra.mxu0 0
  %1361 = vmatprep.subr.bf16.mxu0 0
  %1362 = vmatpush1.bf16.msra.mxu0 0
  %1363 = vmatprep.subr.bf16.mxu0 0
  %1364 = vmatpush1.bf16.msra.mxu0 0
  %1365 = vmatprep.subr.bf16.mxu0 0
  %1366 = vmatpush1.bf16.msra.mxu0 0
  %1367 = vmatprep.subr.bf16.mxu0 0
  %1368 = vmatpush1.bf16.msra.mxu0 0
  %1369 = vmatprep.subr.bf16.mxu0 0
  %1370 = vmatpush1.bf16.msra.mxu0 0
  %1371 = vmatprep.subr.bf16.mxu0 0
  %1372 = vmatpush1.bf16.msra.mxu0 0
  %1373 = vmatprep.mubr.bf16.mxu0 0
  %1374 = vmatmul.mubr.bf16.gmra.mrb[0].mxu0 %v958
  %v1375 = vpop.f32.mrb[0].mxu0
  %v1376 = vadd.f32 %v308, %v1375
  %v1377 = vpop.f32.mrb[0].mxu0
  %v1378 = vpop.f32.mrb[0].mxu0
  %v1379 = vadd.f32 %v308, %v1378
  %v1380 = vpop.f32.mrb[0].mxu0
  %1381 = vmatprep.mubr.bf16.mxu0 0
  %1382 = vmatmul.mubr.bf16.gmra.mrb[0].mxu0 %v961
  %v1383 = vpop.f32.mrb[0].mxu0
  %v1384 = vadd.f32 %v308, %v1383
  %v1385 = vpop.f32.mrb[0].mxu0
  %v1386 = vpop.f32.mrb[0].mxu0
  %v1387 = vadd.f32 %v308, %v1386
  %v1388 = vpop.f32.mrb[0].mxu0
  %1389 = vmatprep.mubr.bf16.mxu0 0
  %1390 = vmatmul.mubr.bf16.gmra.mrb[0].mxu0 %v964
  %v1391 = vpop.f32.mrb[0].mxu0
  %v1392 = vadd.f32 %v308, %v1391
  %v1393 = vpop.f32.mrb[0].mxu0
  %v1394 = vpop.f32.mrb[0].mxu0
  %v1395 = vadd.f32 %v308, %v1394
  %v1396 = vpop.f32.mrb[0].mxu0
  %1397 = vmatprep.mubr.bf16.mxu0 0
  %1398 = vmatmul.mubr.bf16.gmra.mrb[0].mxu0 %v967
  %v1399 = vpop.f32.mrb[0].mxu0
  %v1400 = vadd.f32 %v308, %v1399
  %v1401 = vpop.f32.mrb[0].mxu0
  %v1402 = vpop.f32.mrb[0].mxu0
  %v1403 = vadd.f32 %v308, %v1402
  %v1404 = vpop.f32.mrb[0].mxu0
  %1405 = vmatprep.mubr.bf16.mxu0 0
  %1406 = vmatmul.mubr.bf16.gmra.mrb[0].mxu0 %v970
  %v1407 = vpop.f32.mrb[0].mxu0
  %v1408 = vadd.f32 %v308, %v1407
  %v1409 = vpop.f32.mrb[0].mxu0
  %v1410 = vpop.f32.mrb[0].mxu0
  %v1411 = vadd.f32 %v308, %v1410
  %v1412 = vpop.f32.mrb[0].mxu0
  %1413 = vmatprep.mubr.bf16.mxu0 0
  %1414 = vmatmul.mubr.bf16.gmra.mrb[0].mxu0 %v973
  %v1415 = vpop.f32.mrb[0].mxu0
  %v1416 = vadd.f32 %v308, %v1415
  %v1417 = vpop.f32.mrb[0].mxu0
  %v1418 = vpop.f32.mrb[0].mxu0
  %v1419 = vadd.f32 %v308, %v1418
  %v1420 = vpop.f32.mrb[0].mxu0
  %1421 = vmatprep.mubr.bf16.mxu0 0
  %1422 = vmatmul.mubr.bf16.gmra.mrb[0].mxu0 %v976
  %v1423 = vpop.f32.mrb[0].mxu0
  %v1424 = vadd.f32 %v308, %v1423
  %v1425 = vpop.f32.mrb[0].mxu0
  %v1426 = vpop.f32.mrb[0].mxu0
  %v1427 = vadd.f32 %v308, %v1426
  %v1428 = vpop.f32.mrb[0].mxu0
  %1429 = vmatprep.mubr.bf16.mxu0 0
  %1430 = vmatmul.mubr.bf16.gmra.mrb[0].mxu0 %v979
  %v1431 = vpop.f32.mrb[0].mxu0
  %v1432 = vadd.f32 %v308, %v1431
  %v1433 = vpop.f32.mrb[0].mxu0
  %v1434 = vpop.f32.mrb[0].mxu0
  %v1435 = vadd.f32 %v308, %v1434
  %v1436 = vpop.f32.mrb[0].mxu0
  %1437 = vmatprep.mubr.bf16.mxu0 0
  %1438 = vmatmul.mubr.bf16.gmra.mrb[0].mxu0 %v982
  %v1439 = vpop.f32.mrb[0].mxu0
  %v1440 = vadd.f32 %v308, %v1439
  %v1441 = vpop.f32.mrb[0].mxu0
  %v1442 = vpop.f32.mrb[0].mxu0
  %v1443 = vadd.f32 %v308, %v1442
  %v1444 = vpop.f32.mrb[0].mxu0
  %1445 = vmatprep.mubr.bf16.mxu0 0
  %1446 = vmatmul.mubr.bf16.gmra.mrb[0].mxu0 %v985
  %v1447 = vpop.f32.mrb[0].mxu0
  %v1448 = vadd.f32 %v308, %v1447
  %v1449 = vpop.f32.mrb[0].mxu0
  %v1450 = vpop.f32.mrb[0].mxu0
  %v1451 = vadd.f32 %v308, %v1450
  %v1452 = vpop.f32.mrb[0].mxu0
  %1453 = vmatprep.mubr.bf16.mxu0 0
  %1454 = vmatmul.mubr.bf16.gmra.mrb[0].mxu0 %v988
  %v1455 = vpop.f32.mrb[0].mxu0
  %v1456 = vadd.f32 %v308, %v1455
  %v1457 = vpop.f32.mrb[0].mxu0
  %v1458 = vpop.f32.mrb[0].mxu0
  %v1459 = vadd.f32 %v308, %v1458
  %v1460 = vpop.f32.mrb[0].mxu0
  %1461 = vmatprep.mubr.bf16.mxu0 0
  %1462 = vmatmul.mubr.bf16.gmra.mrb[0].mxu0 %v991
  %v1463 = vpop.f32.mrb[0].mxu0
  %v1464 = vadd.f32 %v308, %v1463
  %v1465 = vpop.f32.mrb[0].mxu0
  %v1466 = vpop.f32.mrb[0].mxu0
  %v1467 = vadd.f32 %v308, %v1466
  %v1468 = vpop.f32.mrb[0].mxu0
  %1469 = vmatprep.mubr.bf16.mxu0 0
  %1470 = vmatmul.mubr.bf16.gmra.mrb[0].mxu0 %v994
  %v1471 = vpop.f32.mrb[0].mxu0
  %v1472 = vadd.f32 %v308, %v1471
  %v1473 = vpop.f32.mrb[0].mxu0
  %v1474 = vpop.f32.mrb[0].mxu0
  %v1475 = vadd.f32 %v308, %v1474
  %v1476 = vpop.f32.mrb[0].mxu0
  %1477 = vmatprep.mubr.bf16.mxu0 0
  %1478 = vmatmul.mubr.bf16.gmra.mrb[0].mxu0 %v997
  %v1479 = vpop.f32.mrb[0].mxu0
  %v1480 = vadd.f32 %v308, %v1479
  %v1481 = vpop.f32.mrb[0].mxu0
  %v1482 = vpop.f32.mrb[0].mxu0
  %v1483 = vadd.f32 %v308, %v1482
  %v1484 = vpop.f32.mrb[0].mxu0
  %1485 = vmatprep.mubr.bf16.mxu0 0
  %1486 = vmatmul.mubr.bf16.gmra.mrb[0].mxu0 %v1000
  %v1487 = vpop.f32.mrb[0].mxu0
  %v1488 = vadd.f32 %v308, %v1487
  %v1489 = vpop.f32.mrb[0].mxu0
  %v1490 = vpop.f32.mrb[0].mxu0
  %v1491 = vadd.f32 %v308, %v1490
  %v1492 = vpop.f32.mrb[0].mxu0
  %1493 = vmatprep.mubr.bf16.mxu0 0
  %1494 = vmatmul.mubr.bf16.gmra.mrb[0].mxu0 %v1003
  %v1495 = vpop.f32.mrb[0].mxu0
  %v1496 = vadd.f32 %v308, %v1495
  %v1497 = vpop.f32.mrb[0].mxu0
  %v1498 = vpop.f32.mrb[0].mxu0
  %v1499 = vadd.f32 %v308, %v1498
  %v1500 = vpop.f32.mrb[0].mxu0
  %1501 = vmatprep.mubr.bf16.mxu0 0
  %1502 = vmatmul.mubr.bf16.gmra.mrb[0].mxu0 %v1006
  %v1503 = vpop.f32.mrb[0].mxu0
  %v1504 = vadd.f32 %v308, %v1503
  %v1505 = vpop.f32.mrb[0].mxu0
  %v1506 = vpop.f32.mrb[0].mxu0
  %v1507 = vadd.f32 %v308, %v1506
  %v1508 = vpop.f32.mrb[0].mxu0
  %1509 = vmatprep.mubr.bf16.mxu0 0
  %1510 = vmatmul.mubr.bf16.gmra.mrb[0].mxu0 %v1009
  %v1511 = vpop.f32.mrb[0].mxu0
  %v1512 = vadd.f32 %v308, %v1511
  %v1513 = vpop.f32.mrb[0].mxu0
  %v1514 = vpop.f32.mrb[0].mxu0
  %v1515 = vadd.f32 %v308, %v1514
  %v1516 = vpop.f32.mrb[0].mxu0
  %1517 = vmatprep.mubr.bf16.mxu0 0
  %1518 = vmatmul.mubr.bf16.gmra.mrb[0].mxu0 %v1012
  %v1519 = vpop.f32.mrb[0].mxu0
  %v1520 = vadd.f32 %v308, %v1519
  %v1521 = vpop.f32.mrb[0].mxu0
  %v1522 = vpop.f32.mrb[0].mxu0
  %v1523 = vadd.f32 %v308, %v1522
  %v1524 = vpop.f32.mrb[0].mxu0
  %1525 = vmatprep.mubr.bf16.mxu0 0
  %1526 = vmatmul.mubr.bf16.gmra.mrb[0].mxu0 %v1015
  %v1527 = vpop.f32.mrb[0].mxu0
  %v1528 = vadd.f32 %v308, %v1527
  %v1529 = vpop.f32.mrb[0].mxu0
  %v1530 = vpop.f32.mrb[0].mxu0
  %v1531 = vadd.f32 %v308, %v1530
  %v1532 = vpop.f32.mrb[0].mxu0
  %1533 = vmatprep.mubr.bf16.mxu0 0
  %1534 = vmatmul.mubr.bf16.gmra.mrb[0].mxu0 %v1018
  %v1535 = vpop.f32.mrb[0].mxu0
  %v1536 = vadd.f32 %v308, %v1535
  %v1537 = vpop.f32.mrb[0].mxu0
  %v1538 = vpop.f32.mrb[0].mxu0
  %v1539 = vadd.f32 %v308, %v1538
  %v1540 = vpop.f32.mrb[0].mxu0
  %1541 = vmatprep.mubr.bf16.mxu0 0
  %1542 = vmatmul.mubr.bf16.gmra.mrb[0].mxu0 %v1021
  %v1543 = vpop.f32.mrb[0].mxu0
  %v1544 = vadd.f32 %v308, %v1543
  %v1545 = vpop.f32.mrb[0].mxu0
  %v1546 = vpop.f32.mrb[0].mxu0
  %v1547 = vadd.f32 %v308, %v1546
  %v1548 = vpop.f32.mrb[0].mxu0
  %1549 = vmatprep.mubr.bf16.mxu0 0
  %1550 = vmatmul.mubr.bf16.gmra.mrb[0].mxu0 %v1024
  %v1551 = vpop.f32.mrb[0].mxu0
  %v1552 = vadd.f32 %v308, %v1551
  %v1553 = vpop.f32.mrb[0].mxu0
  %v1554 = vpop.f32.mrb[0].mxu0
  %v1555 = vadd.f32 %v308, %v1554
  %v1556 = vpop.f32.mrb[0].mxu0
  %1557 = vmatprep.mubr.bf16.mxu0 0
  %1558 = vmatmul.mubr.bf16.gmra.mrb[0].mxu0 %v1027
  %v1559 = vpop.f32.mrb[0].mxu0
  %v1560 = vadd.f32 %v308, %v1559
  %v1561 = vpop.f32.mrb[0].mxu0
  %v1562 = vpop.f32.mrb[0].mxu0
  %v1563 = vadd.f32 %v308, %v1562
  %v1564 = vpop.f32.mrb[0].mxu0
  %1565 = vmatprep.mubr.bf16.mxu0 0
  %1566 = vmatmul.mubr.bf16.gmra.mrb[0].mxu0 %v1030
  %v1567 = vpop.f32.mrb[0].mxu0
  %v1568 = vadd.f32 %v308, %v1567
  %v1569 = vpop.f32.mrb[0].mxu0
  %v1570 = vpop.f32.mrb[0].mxu0
  %v1571 = vadd.f32 %v308, %v1570
  %v1572 = vpop.f32.mrb[0].mxu0
  %1573 = vmatprep.mubr.bf16.mxu0 0
  %1574 = vmatmul.mubr.bf16.gmra.mrb[0].mxu0 %v1033
  %v1575 = vpop.f32.mrb[0].mxu0
  %v1576 = vadd.f32 %v308, %v1575
  %v1577 = vpop.f32.mrb[0].mxu0
  %v1578 = vpop.f32.mrb[0].mxu0
  %v1579 = vadd.f32 %v308, %v1578
  %v1580 = vpop.f32.mrb[0].mxu0
  %1581 = vmatprep.mubr.bf16.mxu0 0
  %1582 = vmatmul.mubr.bf16.gmra.mrb[0].mxu0 %v1036
  %v1583 = vpop.f32.mrb[0].mxu0
  %v1584 = vadd.f32 %v308, %v1583
  %v1585 = vpop.f32.mrb[0].mxu0
  %v1586 = vpop.f32.mrb[0].mxu0
  %v1587 = vadd.f32 %v308, %v1586
  %v1588 = vpop.f32.mrb[0].mxu0
  %1589 = vmatprep.mubr.bf16.mxu0 0
  %1590 = vmatmul.mubr.bf16.gmra.mrb[0].mxu0 %v1039
  %v1591 = vpop.f32.mrb[0].mxu0
  %v1592 = vadd.f32 %v308, %v1591
  %v1593 = vpop.f32.mrb[0].mxu0
  %v1594 = vpop.f32.mrb[0].mxu0
  %v1595 = vadd.f32 %v308, %v1594
  %v1596 = vpop.f32.mrb[0].mxu0
  %1597 = vmatprep.mubr.bf16.mxu0 0
  %1598 = vmatmul.mubr.bf16.gmra.mrb[0].mxu0 %v1042
  %v1599 = vpop.f32.mrb[0].mxu0
  %v1600 = vadd.f32 %v308, %v1599
  %v1601 = vpop.f32.mrb[0].mxu0
  %v1602 = vpop.f32.mrb[0].mxu0
  %v1603 = vadd.f32 %v308, %v1602
  %v1604 = vpop.f32.mrb[0].mxu0
  %1605 = vmatprep.mubr.bf16.mxu0 0
  %1606 = vmatmul.mubr.bf16.gmra.mrb[0].mxu0 %v1045
  %v1607 = vpop.f32.mrb[0].mxu0
  %v1608 = vadd.f32 %v308, %v1607
  %v1609 = vpop.f32.mrb[0].mxu0
  %v1610 = vpop.f32.mrb[0].mxu0
  %v1611 = vadd.f32 %v308, %v1610
  %v1612 = vpop.f32.mrb[0].mxu0
  %1613 = vmatprep.mubr.bf16.mxu0 0
  %1614 = vmatmul.mubr.bf16.gmra.mrb[0].mxu0 %v1048
  %v1615 = vpop.f32.mrb[0].mxu0
  %v1616 = vadd.f32 %v308, %v1615
  %v1617 = vpop.f32.mrb[0].mxu0
  %v1618 = vpop.f32.mrb[0].mxu0
  %v1619 = vadd.f32 %v308, %v1618
  %v1620 = vpop.f32.mrb[0].mxu0
  %1621 = vmatprep.mubr.bf16.mxu0 0
  %1622 = vmatmul.mubr.bf16.gmra.mrb[0].mxu0 %v1051
  %v1623 = vpop.f32.mrb[0].mxu0
  %v1624 = vadd.f32 %v308, %v1623
  %v1625 = vpop.f32.mrb[0].mxu0
  %v1626 = vpop.f32.mrb[0].mxu0
  %v1627 = vadd.f32 %v308, %v1626
  %v1628 = vpop.f32.mrb[0].mxu0
  %1629 = vmatprep.mubr.bf16.mxu0 0
  %1630 = vmatmul.mubr.bf16.gmra.mrb[0].mxu0 %v1054
  %v1631 = vpop.f32.mrb[0].mxu0
  %v1632 = vadd.f32 %v308, %v1631
  %v1633 = vpop.f32.mrb[0].mxu0
  %v1634 = vpop.f32.mrb[0].mxu0
  %v1635 = vadd.f32 %v308, %v1634
  %v1636 = vpop.f32.mrb[0].mxu0
  %1637 = vmatprep.mubr.bf16.mxu0 0
  %1638 = vmatmul.mubr.bf16.gmra.mrb[0].mxu0 %v1057
  %v1639 = vpop.f32.mrb[0].mxu0
  %v1640 = vadd.f32 %v308, %v1639
  %v1641 = vpop.f32.mrb[0].mxu0
  %v1642 = vpop.f32.mrb[0].mxu0
  %v1643 = vadd.f32 %v308, %v1642
  %v1644 = vpop.f32.mrb[0].mxu0
  %1645 = vmatprep.mubr.bf16.mxu0 0
  %1646 = vmatmul.mubr.bf16.gmra.mrb[0].mxu0 %v1060
  %v1647 = vpop.f32.mrb[0].mxu0
  %v1648 = vadd.f32 %v308, %v1647
  %v1649 = vpop.f32.mrb[0].mxu0
  %v1650 = vpop.f32.mrb[0].mxu0
  %v1651 = vadd.f32 %v308, %v1650
  %v1652 = vpop.f32.mrb[0].mxu0
  %1653 = vmatprep.mubr.bf16.mxu0 0
  %1654 = vmatmul.mubr.bf16.gmra.mrb[0].mxu0 %v1063
  %v1655 = vpop.f32.mrb[0].mxu0
  %v1656 = vadd.f32 %v308, %v1655
  %v1657 = vpop.f32.mrb[0].mxu0
  %v1658 = vpop.f32.mrb[0].mxu0
  %v1659 = vadd.f32 %v308, %v1658
  %v1660 = vpop.f32.mrb[0].mxu0
  %1661 = vmatprep.mubr.bf16.mxu0 0
  %1662 = vmatmul.mubr.bf16.gmra.mrb[0].mxu0 %v1066
  %v1663 = vpop.f32.mrb[0].mxu0
  %v1664 = vadd.f32 %v308, %v1663
  %v1665 = vpop.f32.mrb[0].mxu0
  %v1666 = vpop.f32.mrb[0].mxu0
  %v1667 = vadd.f32 %v308, %v1666
  %v1668 = vpop.f32.mrb[0].mxu0
  %1669 = vmatprep.mubr.bf16.mxu0 0
  %1670 = vmatmul.mubr.bf16.gmra.mrb[0].mxu0 %v1069
  %v1671 = vpop.f32.mrb[0].mxu0
  %v1672 = vadd.f32 %v308, %v1671
  %v1673 = vpop.f32.mrb[0].mxu0
  %v1674 = vpop.f32.mrb[0].mxu0
  %v1675 = vadd.f32 %v308, %v1674
  %v1676 = vpop.f32.mrb[0].mxu0
  %1677 = vmatprep.mubr.bf16.mxu0 0
  %1678 = vmatmul.mubr.bf16.gmra.mrb[0].mxu0 %v1072
  %v1679 = vpop.f32.mrb[0].mxu0
  %v1680 = vadd.f32 %v308, %v1679
  %v1681 = vpop.f32.mrb[0].mxu0
  %v1682 = vpop.f32.mrb[0].mxu0
  %v1683 = vadd.f32 %v308, %v1682
  %v1684 = vpop.f32.mrb[0].mxu0
  %1685 = vmatprep.mubr.bf16.mxu0 0
  %1686 = vmatmul.mubr.bf16.gmra.mrb[0].mxu0 %v1075
  %v1687 = vpop.f32.mrb[0].mxu0
  %v1688 = vadd.f32 %v308, %v1687
  %v1689 = vpop.f32.mrb[0].mxu0
  %v1690 = vpop.f32.mrb[0].mxu0
  %v1691 = vadd.f32 %v308, %v1690
  %v1692 = vpop.f32.mrb[0].mxu0
  %1693 = vmatprep.mubr.bf16.mxu0 0
  %1694 = vmatmul.mubr.bf16.gmra.mrb[0].mxu0 %v1078
  %v1695 = vpop.f32.mrb[0].mxu0
  %v1696 = vadd.f32 %v308, %v1695
  %v1697 = vpop.f32.mrb[0].mxu0
  %v1698 = vpop.f32.mrb[0].mxu0
  %v1699 = vadd.f32 %v308, %v1698
  %v1700 = vpop.f32.mrb[0].mxu0
  %1701 = vmatprep.mubr.bf16.mxu0 0
  %1702 = vmatmul.mubr.bf16.gmra.mrb[0].mxu0 %v1081
  %v1703 = vpop.f32.mrb[0].mxu0
  %v1704 = vadd.f32 %v308, %v1703
  %v1705 = vpop.f32.mrb[0].mxu0
  %v1706 = vpop.f32.mrb[0].mxu0
  %v1707 = vadd.f32 %v308, %v1706
  %v1708 = vpop.f32.mrb[0].mxu0
  %1709 = vmatprep.mubr.bf16.mxu0 0
  %1710 = vmatmul.mubr.bf16.gmra.mrb[0].mxu0 %v1084
  %v1711 = vpop.f32.mrb[0].mxu0
  %v1712 = vadd.f32 %v308, %v1711
  %v1713 = vpop.f32.mrb[0].mxu0
  %v1714 = vpop.f32.mrb[0].mxu0
  %v1715 = vadd.f32 %v308, %v1714
  %v1716 = vpop.f32.mrb[0].mxu0
  %1717 = vmatprep.mubr.bf16.mxu0 0
  %1718 = vmatmul.mubr.bf16.gmra.mrb[0].mxu0 %v1087
  %v1719 = vpop.f32.mrb[0].mxu0
  %v1720 = vadd.f32 %v308, %v1719
  %v1721 = vpop.f32.mrb[0].mxu0
  %v1722 = vpop.f32.mrb[0].mxu0
  %v1723 = vadd.f32 %v308, %v1722
  %v1724 = vpop.f32.mrb[0].mxu0
  %1725 = vmatprep.mubr.bf16.mxu0 0
  %1726 = vmatmul.mubr.bf16.gmra.mrb[0].mxu0 %v1090
  %v1727 = vpop.f32.mrb[0].mxu0
  %v1728 = vadd.f32 %v308, %v1727
  %v1729 = vpop.f32.mrb[0].mxu0
  %v1730 = vpop.f32.mrb[0].mxu0
  %v1731 = vadd.f32 %v308, %v1730
  %v1732 = vpop.f32.mrb[0].mxu0
  %1733 = vmatprep.mubr.bf16.mxu0 0
  %1734 = vmatmul.mubr.bf16.gmra.mrb[0].mxu0 %v1093
  %v1735 = vpop.f32.mrb[0].mxu0
  %v1736 = vadd.f32 %v308, %v1735
  %v1737 = vpop.f32.mrb[0].mxu0
  %v1738 = vpop.f32.mrb[0].mxu0
  %v1739 = vadd.f32 %v308, %v1738
  %v1740 = vpop.f32.mrb[0].mxu0
  %1741 = vmatprep.mubr.bf16.mxu0 0
  %1742 = vmatmul.mubr.bf16.gmra.mrb[0].mxu0 %v1096
  %v1743 = vpop.f32.mrb[0].mxu0
  %v1744 = vadd.f32 %v308, %v1743
  %v1745 = vpop.f32.mrb[0].mxu0
  %v1746 = vpop.f32.mrb[0].mxu0
  %v1747 = vadd.f32 %v308, %v1746
  %v1748 = vpop.f32.mrb[0].mxu0
  %1749 = vmatprep.mubr.bf16.mxu0 0
  %1750 = vmatmul.mubr.bf16.gmra.mrb[0].mxu0 %v1099
  %v1751 = vpop.f32.mrb[0].mxu0
  %v1752 = vadd.f32 %v308, %v1751
  %v1753 = vpop.f32.mrb[0].mxu0
  %v1754 = vpop.f32.mrb[0].mxu0
  %v1755 = vadd.f32 %v308, %v1754
  %v1756 = vpop.f32.mrb[0].mxu0
  %1757 = vmatprep.mubr.bf16.mxu0 0
  %1758 = vmatmul.mubr.bf16.gmra.mrb[0].mxu0 %v1102
  %v1759 = vpop.f32.mrb[0].mxu0
  %v1760 = vadd.f32 %v308, %v1759
  %v1761 = vpop.f32.mrb[0].mxu0
  %v1762 = vpop.f32.mrb[0].mxu0
  %v1763 = vadd.f32 %v308, %v1762
  %v1764 = vpop.f32.mrb[0].mxu0
  %1765 = vmatprep.mubr.bf16.mxu0 0
  %1766 = vmatmul.mubr.bf16.gmra.mrb[0].mxu0 %v1105
  %v1767 = vpop.f32.mrb[0].mxu0
  %v1768 = vadd.f32 %v308, %v1767
  %v1769 = vpop.f32.mrb[0].mxu0
  %v1770 = vpop.f32.mrb[0].mxu0
  %v1771 = vadd.f32 %v308, %v1770
  %v1772 = vpop.f32.mrb[0].mxu0
  %1773 = vmatprep.mubr.bf16.mxu0 0
  %1774 = vmatmul.mubr.bf16.gmra.mrb[0].mxu0 %v1108
  %v1775 = vpop.f32.mrb[0].mxu0
  %v1776 = vadd.f32 %v308, %v1775
  %v1777 = vpop.f32.mrb[0].mxu0
  %v1778 = vpop.f32.mrb[0].mxu0
  %v1779 = vadd.f32 %v308, %v1778
  %v1780 = vpop.f32.mrb[0].mxu0
  %1781 = vmatprep.mubr.bf16.mxu0 0
  %1782 = vmatmul.mubr.bf16.gmra.mrb[0].mxu0 %v1111
  %v1783 = vpop.f32.mrb[0].mxu0
  %v1784 = vadd.f32 %v308, %v1783
  %v1785 = vpop.f32.mrb[0].mxu0
  %v1786 = vpop.f32.mrb[0].mxu0
  %v1787 = vadd.f32 %v308, %v1786
  %v1788 = vpop.f32.mrb[0].mxu0
  %1789 = vmatprep.mubr.bf16.mxu0 0
  %1790 = vmatmul.mubr.bf16.gmra.mrb[0].mxu0 %v1114
  %v1791 = vpop.f32.mrb[0].mxu0
  %v1792 = vadd.f32 %v308, %v1791
  %v1793 = vpop.f32.mrb[0].mxu0
  %v1794 = vpop.f32.mrb[0].mxu0
  %v1795 = vadd.f32 %v308, %v1794
  %v1796 = vpop.f32.mrb[0].mxu0
  %1797 = vmatprep.mubr.bf16.mxu0 0
  %1798 = vmatmul.mubr.bf16.gmra.mrb[0].mxu0 %v1117
  %v1799 = vpop.f32.mrb[0].mxu0
  %v1800 = vadd.f32 %v308, %v1799
  %v1801 = vpop.f32.mrb[0].mxu0
  %v1802 = vpop.f32.mrb[0].mxu0
  %v1803 = vadd.f32 %v308, %v1802
  %v1804 = vpop.f32.mrb[0].mxu0
  %1805 = vmatprep.mubr.bf16.mxu0 0
  %1806 = vmatmul.mubr.bf16.gmra.mrb[0].mxu0 %v1120
  %v1807 = vpop.f32.mrb[0].mxu0
  %v1808 = vadd.f32 %v308, %v1807
  %v1809 = vpop.f32.mrb[0].mxu0
  %v1810 = vpop.f32.mrb[0].mxu0
  %v1811 = vadd.f32 %v308, %v1810
  %v1812 = vpop.f32.mrb[0].mxu0
  %1813 = vmatprep.mubr.bf16.mxu0 0
  %1814 = vmatmul.mubr.bf16.gmra.mrb[0].mxu0 %v1123
  %v1815 = vpop.f32.mrb[0].mxu0
  %v1816 = vadd.f32 %v308, %v1815
  %v1817 = vpop.f32.mrb[0].mxu0
  %v1818 = vpop.f32.mrb[0].mxu0
  %v1819 = vadd.f32 %v308, %v1818
  %v1820 = vpop.f32.mrb[0].mxu0
  %1821 = vmatprep.mubr.bf16.mxu0 0
  %1822 = vmatmul.mubr.bf16.gmra.mrb[0].mxu0 %v1126
  %v1823 = vpop.f32.mrb[0].mxu0
  %v1824 = vadd.f32 %v308, %v1823
  %v1825 = vpop.f32.mrb[0].mxu0
  %v1826 = vpop.f32.mrb[0].mxu0
  %v1827 = vadd.f32 %v308, %v1826
  %v1828 = vpop.f32.mrb[0].mxu0
  %1829 = vmatprep.mubr.bf16.mxu0 0
  %1830 = vmatmul.mubr.bf16.gmra.mrb[0].mxu0 %v1129
  %v1831 = vpop.f32.mrb[0].mxu0
  %v1832 = vadd.f32 %v308, %v1831
  %v1833 = vpop.f32.mrb[0].mxu0
  %v1834 = vpop.f32.mrb[0].mxu0
  %v1835 = vadd.f32 %v308, %v1834
  %v1836 = vpop.f32.mrb[0].mxu0
  %1837 = vmatprep.mubr.bf16.mxu0 0
  %1838 = vmatmul.mubr.bf16.gmra.mrb[0].mxu0 %v1132
  %v1839 = vpop.f32.mrb[0].mxu0
  %v1840 = vadd.f32 %v308, %v1839
  %v1841 = vpop.f32.mrb[0].mxu0
  %v1842 = vpop.f32.mrb[0].mxu0
  %v1843 = vadd.f32 %v308, %v1842
  %v1844 = vpop.f32.mrb[0].mxu0
  %1845 = vmatprep.mubr.bf16.mxu0 0
  %1846 = vmatmul.mubr.bf16.gmra.mrb[0].mxu0 %v1135
  %v1847 = vpop.f32.mrb[0].mxu0
  %v1848 = vadd.f32 %v308, %v1847
  %v1849 = vpop.f32.mrb[0].mxu0
  %v1850 = vpop.f32.mrb[0].mxu0
  %v1851 = vadd.f32 %v308, %v1850
  %v1852 = vpop.f32.mrb[0].mxu0
  %1853 = vmatprep.mubr.bf16.mxu0 0
  %1854 = vmatmul.mubr.bf16.gmra.mrb[0].mxu0 %v1138
  %v1855 = vpop.f32.mrb[0].mxu0
  %v1856 = vadd.f32 %v308, %v1855
  %v1857 = vpop.f32.mrb[0].mxu0
  %v1858 = vpop.f32.mrb[0].mxu0
  %v1859 = vadd.f32 %v308, %v1858
  %v1860 = vpop.f32.mrb[0].mxu0
  %1861 = vmatprep.mubr.bf16.mxu0 0
  %1862 = vmatmul.mubr.bf16.gmra.mrb[0].mxu0 %v1141
  %v1863 = vpop.f32.mrb[0].mxu0
  %v1864 = vadd.f32 %v308, %v1863
  %v1865 = vpop.f32.mrb[0].mxu0
  %v1866 = vpop.f32.mrb[0].mxu0
  %v1867 = vadd.f32 %v308, %v1866
  %v1868 = vpop.f32.mrb[0].mxu0
  %1869 = vmatprep.mubr.bf16.mxu0 0
  %1870 = vmatmul.mubr.bf16.gmra.mrb[0].mxu0 %v1144
  %v1871 = vpop.f32.mrb[0].mxu0
  %v1872 = vadd.f32 %v308, %v1871
  %v1873 = vpop.f32.mrb[0].mxu0
  %v1874 = vpop.f32.mrb[0].mxu0
  %v1875 = vadd.f32 %v308, %v1874
  %v1876 = vpop.f32.mrb[0].mxu0
  %1877 = vmatprep.mubr.bf16.mxu0 0
  %1878 = vmatmul.mubr.bf16.gmra.mrb[0].mxu0 %v1147
  %v1879 = vpop.f32.mrb[0].mxu0
  %v1880 = vadd.f32 %v308, %v1879
  %v1881 = vpop.f32.mrb[0].mxu0
  %v1882 = vpop.f32.mrb[0].mxu0
  %v1883 = vadd.f32 %v308, %v1882
  %v1884 = vpop.f32.mrb[0].mxu0
  %1885 = vmatprep.mubr.bf16.mxu0 0
  %1886 = vmatmul.mubr.bf16.gmra.mrb[0].mxu0 %v1150
  %v1887 = vpop.f32.mrb[0].mxu0
  %v1888 = vadd.f32 %v308, %v1887
  %v1889 = vpop.f32.mrb[0].mxu0
  %v1890 = vpop.f32.mrb[0].mxu0
  %v1891 = vadd.f32 %v308, %v1890
  %v1892 = vpop.f32.mrb[0].mxu0
  %1893 = vmatprep.mubr.bf16.mxu0 0
  %1894 = vmatmul.mubr.bf16.gmra.mrb[0].mxu0 %v1153
  %v1895 = vpop.f32.mrb[0].mxu0
  %v1896 = vadd.f32 %v308, %v1895
  %v1897 = vpop.f32.mrb[0].mxu0
  %v1898 = vpop.f32.mrb[0].mxu0
  %v1899 = vadd.f32 %v308, %v1898
  %v1900 = vpop.f32.mrb[0].mxu0
  %1901 = vmatprep.mubr.bf16.mxu0 0
  %1902 = vmatmul.mubr.bf16.gmra.mrb[0].mxu0 %v1156
  %v1903 = vpop.f32.mrb[0].mxu0
  %v1904 = vadd.f32 %v308, %v1903
  %v1905 = vpop.f32.mrb[0].mxu0
  %v1906 = vpop.f32.mrb[0].mxu0
  %v1907 = vadd.f32 %v308, %v1906
  %v1908 = vpop.f32.mrb[0].mxu0
  %1909 = vmatprep.mubr.bf16.mxu0 0
  %1910 = vmatmul.mubr.bf16.gmra.mrb[0].mxu0 %v1159
  %v1911 = vpop.f32.mrb[0].mxu0
  %v1912 = vadd.f32 %v308, %v1911
  %v1913 = vpop.f32.mrb[0].mxu0
  %v1914 = vpop.f32.mrb[0].mxu0
  %v1915 = vadd.f32 %v308, %v1914
  %v1916 = vpop.f32.mrb[0].mxu0
  %1917 = vmatprep.mubr.bf16.mxu0 0
  %1918 = vmatmul.mubr.bf16.gmra.mrb[0].mxu0 %v1162
  %v1919 = vpop.f32.mrb[0].mxu0
  %v1920 = vadd.f32 %v308, %v1919
  %v1921 = vpop.f32.mrb[0].mxu0
  %v1922 = vpop.f32.mrb[0].mxu0
  %v1923 = vadd.f32 %v308, %v1922
  %v1924 = vpop.f32.mrb[0].mxu0
  %1925 = vmatprep.mubr.bf16.mxu0 0
  %1926 = vmatmul.mubr.bf16.gmra.mrb[0].mxu0 %v1165
  %v1927 = vpop.f32.mrb[0].mxu0
  %v1928 = vadd.f32 %v308, %v1927
  %v1929 = vpop.f32.mrb[0].mxu0
  %v1930 = vpop.f32.mrb[0].mxu0
  %v1931 = vadd.f32 %v308, %v1930
  %v1932 = vpop.f32.mrb[0].mxu0
  %1933 = vmatprep.mubr.bf16.mxu0 0
  %1934 = vmatmul.mubr.bf16.gmra.mrb[0].mxu0 %v1168
  %v1935 = vpop.f32.mrb[0].mxu0
  %v1936 = vadd.f32 %v308, %v1935
  %v1937 = vpop.f32.mrb[0].mxu0
  %v1938 = vpop.f32.mrb[0].mxu0
  %v1939 = vadd.f32 %v308, %v1938
  %v1940 = vpop.f32.mrb[0].mxu0
  %1941 = vmatprep.mubr.bf16.mxu0 0
  %1942 = vmatmul.mubr.bf16.gmra.mrb[0].mxu0 %v1171
  %v1943 = vpop.f32.mrb[0].mxu0
  %v1944 = vadd.f32 %v308, %v1943
  %v1945 = vpop.f32.mrb[0].mxu0
  %v1946 = vpop.f32.mrb[0].mxu0
  %v1947 = vadd.f32 %v308, %v1946
  %v1948 = vpop.f32.mrb[0].mxu0
  %1949 = vmatprep.mubr.bf16.mxu0 0
  %1950 = vmatmul.mubr.bf16.gmra.mrb[0].mxu0 %v1174
  %v1951 = vpop.f32.mrb[0].mxu0
  %v1952 = vadd.f32 %v308, %v1951
  %v1953 = vpop.f32.mrb[0].mxu0
  %v1954 = vpop.f32.mrb[0].mxu0
  %v1955 = vadd.f32 %v308, %v1954
  %v1956 = vpop.f32.mrb[0].mxu0
  %1957 = vmatprep.mubr.bf16.mxu0 0
  %1958 = vmatmul.mubr.bf16.gmra.mrb[0].mxu0 %v1177
  %v1959 = vpop.f32.mrb[0].mxu0
  %v1960 = vadd.f32 %v308, %v1959
  %v1961 = vpop.f32.mrb[0].mxu0
  %v1962 = vpop.f32.mrb[0].mxu0
  %v1963 = vadd.f32 %v308, %v1962
  %v1964 = vpop.f32.mrb[0].mxu0
  %1965 = vmatprep.mubr.bf16.mxu0 0
  %1966 = vmatmul.mubr.bf16.gmra.mrb[0].mxu0 %v1180
  %v1967 = vpop.f32.mrb[0].mxu0
  %v1968 = vadd.f32 %v308, %v1967
  %v1969 = vpop.f32.mrb[0].mxu0
  %v1970 = vpop.f32.mrb[0].mxu0
  %v1971 = vadd.f32 %v308, %v1970
  %v1972 = vpop.f32.mrb[0].mxu0
  %1973 = vmatprep.mubr.bf16.mxu0 0
  %1974 = vmatmul.mubr.bf16.gmra.mrb[0].mxu0 %v1183
  %v1975 = vpop.f32.mrb[0].mxu0
  %v1976 = vadd.f32 %v308, %v1975
  %v1977 = vpop.f32.mrb[0].mxu0
  %v1978 = vpop.f32.mrb[0].mxu0
  %v1979 = vadd.f32 %v308, %v1978
  %v1980 = vpop.f32.mrb[0].mxu0
  %1981 = vmatprep.mubr.bf16.mxu0 0
  %1982 = vmatmul.mubr.bf16.gmra.mrb[0].mxu0 %v1186
  %v1983 = vpop.f32.mrb[0].mxu0
  %v1984 = vadd.f32 %v308, %v1983
  %v1985 = vpop.f32.mrb[0].mxu0
  %v1986 = vpop.f32.mrb[0].mxu0
  %v1987 = vadd.f32 %v308, %v1986
  %v1988 = vpop.f32.mrb[0].mxu0
  %1989 = vmatprep.mubr.bf16.mxu0 0
  %1990 = vmatmul.mubr.bf16.gmra.mrb[0].mxu0 %v1189
  %v1991 = vpop.f32.mrb[0].mxu0
  %v1992 = vadd.f32 %v308, %v1991
  %v1993 = vpop.f32.mrb[0].mxu0
  %v1994 = vpop.f32.mrb[0].mxu0
  %v1995 = vadd.f32 %v308, %v1994
  %v1996 = vpop.f32.mrb[0].mxu0
  %1997 = vmatprep.mubr.bf16.mxu0 0
  %1998 = vmatmul.mubr.bf16.gmra.mrb[0].mxu0 %v1192
  %v1999 = vpop.f32.mrb[0].mxu0
  %v2000 = vadd.f32 %v308, %v1999
  %v2001 = vpop.f32.mrb[0].mxu0
  %v2002 = vpop.f32.mrb[0].mxu0
  %v2003 = vadd.f32 %v308, %v2002
  %v2004 = vpop.f32.mrb[0].mxu0
  %2005 = vmatprep.mubr.bf16.mxu0 0
  %2006 = vmatmul.mubr.bf16.gmra.mrb[0].mxu0 %v1195
  %v2007 = vpop.f32.mrb[0].mxu0
  %v2008 = vadd.f32 %v308, %v2007
  %v2009 = vpop.f32.mrb[0].mxu0
  %v2010 = vpop.f32.mrb[0].mxu0
  %v2011 = vadd.f32 %v308, %v2010
  %v2012 = vpop.f32.mrb[0].mxu0
  %2013 = vmatprep.mubr.bf16.mxu0 0
  %2014 = vmatmul.mubr.bf16.gmra.mrb[0].mxu0 %v1198
  %v2015 = vpop.f32.mrb[0].mxu0
  %v2016 = vadd.f32 %v308, %v2015
  %v2017 = vpop.f32.mrb[0].mxu0
  %v2018 = vpop.f32.mrb[0].mxu0
  %v2019 = vadd.f32 %v308, %v2018
  %v2020 = vpop.f32.mrb[0].mxu0
  %2021 = vmatprep.mubr.bf16.mxu0 0
  %2022 = vmatmul.mubr.bf16.gmra.mrb[0].mxu0 %v1201
  %v2023 = vpop.f32.mrb[0].mxu0
  %v2024 = vadd.f32 %v308, %v2023
  %v2025 = vpop.f32.mrb[0].mxu0
  %v2026 = vpop.f32.mrb[0].mxu0
  %v2027 = vadd.f32 %v308, %v2026
  %v2028 = vpop.f32.mrb[0].mxu0
  %2029 = vmatprep.mubr.bf16.mxu0 0
  %2030 = vmatmul.mubr.bf16.gmra.mrb[0].mxu0 %v1204
  %v2031 = vpop.f32.mrb[0].mxu0
  %v2032 = vadd.f32 %v308, %v2031
  %v2033 = vpop.f32.mrb[0].mxu0
  %v2034 = vpop.f32.mrb[0].mxu0
  %v2035 = vadd.f32 %v308, %v2034
  %v2036 = vpop.f32.mrb[0].mxu0
  %2037 = vmatprep.mubr.bf16.mxu0 0
  %2038 = vmatmul.mubr.bf16.gmra.mrb[0].mxu0 %v1207
  %v2039 = vpop.f32.mrb[0].mxu0
  %v2040 = vadd.f32 %v308, %v2039
  %v2041 = vpop.f32.mrb[0].mxu0
  %v2042 = vpop.f32.mrb[0].mxu0
  %v2043 = vadd.f32 %v308, %v2042
  %v2044 = vpop.f32.mrb[0].mxu0
  %2045 = vmatprep.mubr.bf16.mxu0 0
  %2046 = vmatmul.mubr.bf16.gmra.mrb[0].mxu0 %v1210
  %v2047 = vpop.f32.mrb[0].mxu0
  %v2048 = vadd.f32 %v308, %v2047
  %v2049 = vpop.f32.mrb[0].mxu0
  %v2050 = vpop.f32.mrb[0].mxu0
  %v2051 = vadd.f32 %v308, %v2050
  %v2052 = vpop.f32.mrb[0].mxu0
  %2053 = vmatprep.mubr.bf16.mxu0 0
  %2054 = vmatmul.mubr.bf16.gmra.mrb[0].mxu0 %v1213
  %v2055 = vpop.f32.mrb[0].mxu0
  %v2056 = vadd.f32 %v308, %v2055
  %v2057 = vpop.f32.mrb[0].mxu0
  %v2058 = vpop.f32.mrb[0].mxu0
  %v2059 = vadd.f32 %v308, %v2058
  %v2060 = vpop.f32.mrb[0].mxu0
  %2061 = vmatprep.mubr.bf16.mxu0 0
  %2062 = vmatmul.mubr.bf16.gmra.mrb[0].mxu0 %v1216
  %v2063 = vpop.f32.mrb[0].mxu0
  %v2064 = vadd.f32 %v308, %v2063
  %v2065 = vpop.f32.mrb[0].mxu0
  %v2066 = vpop.f32.mrb[0].mxu0
  %v2067 = vadd.f32 %v308, %v2066
  %v2068 = vpop.f32.mrb[0].mxu0
  %2069 = vmatprep.mubr.bf16.mxu0 0
  %2070 = vmatmul.mubr.bf16.gmra.mrb[0].mxu0 %v1219
  %v2071 = vpop.f32.mrb[0].mxu0
  %v2072 = vadd.f32 %v308, %v2071
  %v2073 = vpop.f32.mrb[0].mxu0
  %v2074 = vpop.f32.mrb[0].mxu0
  %v2075 = vadd.f32 %v308, %v2074
  %v2076 = vpop.f32.mrb[0].mxu0
  %2077 = vmatprep.mubr.bf16.mxu0 0
  %2078 = vmatmul.mubr.bf16.gmra.mrb[0].mxu0 %v1222
  %v2079 = vpop.f32.mrb[0].mxu0
  %v2080 = vadd.f32 %v308, %v2079
  %v2081 = vpop.f32.mrb[0].mxu0
  %v2082 = vpop.f32.mrb[0].mxu0
  %v2083 = vadd.f32 %v308, %v2082
  %v2084 = vpop.f32.mrb[0].mxu0
  %2085 = vmatprep.mubr.bf16.mxu0 0
  %2086 = vmatmul.mubr.bf16.gmra.mrb[0].mxu0 %v1225
  %v2087 = vpop.f32.mrb[0].mxu0
  %v2088 = vadd.f32 %v308, %v2087
  %v2089 = vpop.f32.mrb[0].mxu0
  %v2090 = vpop.f32.mrb[0].mxu0
  %v2091 = vadd.f32 %v308, %v2090
  %v2092 = vpop.f32.mrb[0].mxu0
  %2093 = vmatprep.mubr.bf16.mxu0 0
  %2094 = vmatmul.mubr.bf16.gmra.mrb[0].mxu0 %v1228
  %v2095 = vpop.f32.mrb[0].mxu0
  %v2096 = vadd.f32 %v308, %v2095
  %v2097 = vpop.f32.mrb[0].mxu0
  %v2098 = vpop.f32.mrb[0].mxu0
  %v2099 = vadd.f32 %v308, %v2098
  %v2100 = vpop.f32.mrb[0].mxu0
  %2101 = vmatprep.mubr.bf16.mxu0 0
  %2102 = vmatmul.mubr.bf16.gmra.mrb[0].mxu0 %v1231
  %v2103 = vpop.f32.mrb[0].mxu0
  %v2104 = vadd.f32 %v308, %v2103
  %v2105 = vpop.f32.mrb[0].mxu0
  %v2106 = vpop.f32.mrb[0].mxu0
  %v2107 = vadd.f32 %v308, %v2106
  %v2108 = vpop.f32.mrb[0].mxu0
  %2109 = vmatprep.mubr.bf16.mxu0 0
  %2110 = vmatmul.mubr.bf16.gmra.mrb[0].mxu0 %v1234
  %v2111 = vpop.f32.mrb[0].mxu0
  %v2112 = vadd.f32 %v308, %v2111
  %v2113 = vpop.f32.mrb[0].mxu0
  %v2114 = vpop.f32.mrb[0].mxu0
  %v2115 = vadd.f32 %v308, %v2114
  %v2116 = vpop.f32.mrb[0].mxu0
  %2117 = vmatprep.mubr.bf16.mxu0 0
  %2118 = vmatmul.mubr.bf16.gmra.mrb[0].mxu0 %v1237
  %v2119 = vpop.f32.mrb[0].mxu0
  %v2120 = vadd.f32 %v308, %v2119
  %v2121 = vpop.f32.mrb[0].mxu0
  %v2122 = vpop.f32.mrb[0].mxu0
  %v2123 = vadd.f32 %v308, %v2122
  %v2124 = vpop.f32.mrb[0].mxu0
  %2125 = vmatprep.mubr.bf16.mxu0 0
  %2126 = vmatmul.mubr.bf16.gmra.mrb[0].mxu0 %v1240
  %v2127 = vpop.f32.mrb[0].mxu0
  %v2128 = vadd.f32 %v308, %v2127
  %v2129 = vpop.f32.mrb[0].mxu0
  %v2130 = vpop.f32.mrb[0].mxu0
  %v2131 = vadd.f32 %v308, %v2130
  %v2132 = vpop.f32.mrb[0].mxu0
  %2133 = vmatprep.mubr.bf16.mxu0 0
  %2134 = vmatmul.mubr.bf16.gmra.mrb[0].mxu0 %v1243
  %v2135 = vpop.f32.mrb[0].mxu0
  %v2136 = vadd.f32 %v308, %v2135
  %v2137 = vpop.f32.mrb[0].mxu0
  %v2138 = vpop.f32.mrb[0].mxu0
  %v2139 = vadd.f32 %v308, %v2138
  %v2140 = vpop.f32.mrb[0].mxu0
  %2141 = vmatprep.mubr.bf16.mxu0 0
  %2142 = vmatmul.mubr.bf16.gmra.mrb[0].mxu0 %v1246
  %v2143 = vpop.f32.mrb[0].mxu0
  %v2144 = vadd.f32 %v308, %v2143
  %v2145 = vpop.f32.mrb[0].mxu0
  %v2146 = vpop.f32.mrb[0].mxu0
  %v2147 = vadd.f32 %v308, %v2146
  %v2148 = vpop.f32.mrb[0].mxu0
  %2149 = vmatprep.mubr.bf16.mxu0 0
  %2150 = vmatmul.mubr.bf16.gmra.mrb[0].mxu0 %v1249
  %v2151 = vpop.f32.mrb[0].mxu0
  %v2152 = vadd.f32 %v308, %v2151
  %v2153 = vpop.f32.mrb[0].mxu0
  %v2154 = vpop.f32.mrb[0].mxu0
  %v2155 = vadd.f32 %v308, %v2154
  %v2156 = vpop.f32.mrb[0].mxu0
  %2157 = vmatprep.mubr.bf16.mxu0 0
  %2158 = vmatmul.mubr.bf16.gmra.mrb[0].mxu0 %v1252
  %v2159 = vpop.f32.mrb[0].mxu0
  %v2160 = vadd.f32 %v308, %v2159
  %v2161 = vpop.f32.mrb[0].mxu0
  %v2162 = vpop.f32.mrb[0].mxu0
  %v2163 = vadd.f32 %v308, %v2162
  %v2164 = vpop.f32.mrb[0].mxu0
  %2165 = vmatprep.mubr.bf16.mxu0 0
  %2166 = vmatmul.mubr.bf16.gmra.mrb[0].mxu0 %v1255
  %v2167 = vpop.f32.mrb[0].mxu0
  %v2168 = vadd.f32 %v308, %v2167
  %v2169 = vpop.f32.mrb[0].mxu0
  %v2170 = vpop.f32.mrb[0].mxu0
  %v2171 = vadd.f32 %v308, %v2170
  %v2172 = vpop.f32.mrb[0].mxu0
  %2173 = vmatprep.mubr.bf16.mxu0 0
  %2174 = vmatmul.mubr.bf16.gmra.mrb[0].mxu0 %v1258
  %v2175 = vpop.f32.mrb[0].mxu0
  %v2176 = vadd.f32 %v308, %v2175
  %v2177 = vpop.f32.mrb[0].mxu0
  %v2178 = vpop.f32.mrb[0].mxu0
  %v2179 = vadd.f32 %v308, %v2178
  %v2180 = vpop.f32.mrb[0].mxu0
  %2181 = vmatprep.mubr.bf16.mxu0 0
  %2182 = vmatmul.mubr.bf16.gmra.mrb[0].mxu0 %v1261
  %v2183 = vpop.f32.mrb[0].mxu0
  %v2184 = vadd.f32 %v308, %v2183
  %v2185 = vpop.f32.mrb[0].mxu0
  %v2186 = vpop.f32.mrb[0].mxu0
  %v2187 = vadd.f32 %v308, %v2186
  %v2188 = vpop.f32.mrb[0].mxu0
  %2189 = vmatprep.mubr.bf16.mxu0 0
  %2190 = vmatmul.mubr.bf16.gmra.mrb[0].mxu0 %v1264
  %v2191 = vpop.f32.mrb[0].mxu0
  %v2192 = vadd.f32 %v308, %v2191
  %v2193 = vpop.f32.mrb[0].mxu0
  %v2194 = vpop.f32.mrb[0].mxu0
  %v2195 = vadd.f32 %v308, %v2194
  %v2196 = vpop.f32.mrb[0].mxu0
  %2197 = vmatprep.mubr.bf16.mxu0 0
  %2198 = vmatmul.mubr.bf16.gmra.mrb[0].mxu0 %v1267
  %v2199 = vpop.f32.mrb[0].mxu0
  %v2200 = vadd.f32 %v308, %v2199
  %v2201 = vpop.f32.mrb[0].mxu0
  %v2202 = vpop.f32.mrb[0].mxu0
  %v2203 = vadd.f32 %v308, %v2202
  %v2204 = vpop.f32.mrb[0].mxu0
  %2205 = vmatprep.mubr.bf16.mxu0 0
  %2206 = vmatmul.mubr.bf16.gmra.mrb[0].mxu0 %v1270
  %v2207 = vpop.f32.mrb[0].mxu0
  %v2208 = vadd.f32 %v308, %v2207
  %v2209 = vpop.f32.mrb[0].mxu0
  %v2210 = vpop.f32.mrb[0].mxu0
  %v2211 = vadd.f32 %v308, %v2210
  %v2212 = vpop.f32.mrb[0].mxu0
  %2213 = vmatprep.mubr.bf16.mxu0 0
  %2214 = vmatmul.mubr.bf16.gmra.mrb[0].mxu0 %v1273
  %v2215 = vpop.f32.mrb[0].mxu0
  %v2216 = vadd.f32 %v308, %v2215
  %v2217 = vpop.f32.mrb[0].mxu0
  %v2218 = vpop.f32.mrb[0].mxu0
  %v2219 = vadd.f32 %v308, %v2218
  %v2220 = vpop.f32.mrb[0].mxu0
  %2221 = vmatprep.mubr.bf16.mxu0 0
  %2222 = vmatmul.mubr.bf16.gmra.mrb[0].mxu0 %v1276
  %v2223 = vpop.f32.mrb[0].mxu0
  %v2224 = vadd.f32 %v308, %v2223
  %v2225 = vpop.f32.mrb[0].mxu0
  %v2226 = vpop.f32.mrb[0].mxu0
  %v2227 = vadd.f32 %v308, %v2226
  %v2228 = vpop.f32.mrb[0].mxu0
  %2229 = vmatprep.mubr.bf16.mxu0 0
  %2230 = vmatmul.mubr.bf16.gmra.mrb[0].mxu0 %v1279
  %v2231 = vpop.f32.mrb[0].mxu0
  %v2232 = vadd.f32 %v308, %v2231
  %v2233 = vpop.f32.mrb[0].mxu0
  %v2234 = vpop.f32.mrb[0].mxu0
  %v2235 = vadd.f32 %v308, %v2234
  %v2236 = vpop.f32.mrb[0].mxu0
  %2237 = vmatprep.mubr.bf16.mxu0 0
  %2238 = vmatmul.mubr.bf16.gmra.mrb[0].mxu0 %v1282
  %v2239 = vpop.f32.mrb[0].mxu0
  %v2240 = vadd.f32 %v308, %v2239
  %v2241 = vpop.f32.mrb[0].mxu0
  %v2242 = vpop.f32.mrb[0].mxu0
  %v2243 = vadd.f32 %v308, %v2242
  %v2244 = vpop.f32.mrb[0].mxu0
  %2245 = vmatprep.mubr.bf16.mxu0 0
  %2246 = vmatmul.mubr.bf16.gmra.mrb[0].mxu0 %v1285
  %v2247 = vpop.f32.mrb[0].mxu0
  %v2248 = vadd.f32 %v308, %v2247
  %v2249 = vpop.f32.mrb[0].mxu0
  %v2250 = vpop.f32.mrb[0].mxu0
  %v2251 = vadd.f32 %v308, %v2250
  %v2252 = vpop.f32.mrb[0].mxu0
  %2253 = vmatprep.mubr.bf16.mxu0 0
  %2254 = vmatmul.mubr.bf16.gmra.mrb[0].mxu0 %v1288
  %v2255 = vpop.f32.mrb[0].mxu0
  %v2256 = vadd.f32 %v308, %v2255
  %v2257 = vpop.f32.mrb[0].mxu0
  %v2258 = vpop.f32.mrb[0].mxu0
  %v2259 = vadd.f32 %v308, %v2258
  %v2260 = vpop.f32.mrb[0].mxu0
  %2261 = vmatprep.mubr.bf16.mxu0 0
  %2262 = vmatmul.mubr.bf16.gmra.mrb[0].mxu0 %v1291
  %v2263 = vpop.f32.mrb[0].mxu0
  %v2264 = vadd.f32 %v308, %v2263
  %v2265 = vpop.f32.mrb[0].mxu0
  %v2266 = vpop.f32.mrb[0].mxu0
  %v2267 = vadd.f32 %v308, %v2266
  %v2268 = vpop.f32.mrb[0].mxu0
  %2269 = vmatprep.mubr.bf16.mxu0 0
  %2270 = vmatmul.mubr.bf16.gmra.mrb[0].mxu0 %v1294
  %v2271 = vpop.f32.mrb[0].mxu0
  %v2272 = vadd.f32 %v308, %v2271
  %v2273 = vpop.f32.mrb[0].mxu0
  %v2274 = vpop.f32.mrb[0].mxu0
  %v2275 = vadd.f32 %v308, %v2274
  %v2276 = vpop.f32.mrb[0].mxu0
  %2277 = vmatprep.mubr.bf16.mxu0 0
  %2278 = vmatmul.mubr.bf16.gmra.mrb[0].mxu0 %v1297
  %v2279 = vpop.f32.mrb[0].mxu0
  %v2280 = vadd.f32 %v308, %v2279
  %v2281 = vpop.f32.mrb[0].mxu0
  %v2282 = vpop.f32.mrb[0].mxu0
  %v2283 = vadd.f32 %v308, %v2282
  %v2284 = vpop.f32.mrb[0].mxu0
  %2285 = vmatprep.mubr.bf16.mxu0 0
  %2286 = vmatmul.mubr.bf16.gmra.mrb[0].mxu0 %v1300
  %v2287 = vpop.f32.mrb[0].mxu0
  %v2288 = vadd.f32 %v308, %v2287
  %v2289 = vpop.f32.mrb[0].mxu0
  %v2290 = vpop.f32.mrb[0].mxu0
  %v2291 = vadd.f32 %v308, %v2290
  %v2292 = vpop.f32.mrb[0].mxu0
  %2293 = vmatprep.mubr.bf16.mxu0 0
  %2294 = vmatmul.mubr.bf16.gmra.mrb[0].mxu0 %v1303
  %v2295 = vpop.f32.mrb[0].mxu0
  %v2296 = vadd.f32 %v308, %v2295
  %v2297 = vpop.f32.mrb[0].mxu0
  %v2298 = vpop.f32.mrb[0].mxu0
  %v2299 = vadd.f32 %v308, %v2298
  %v2300 = vpop.f32.mrb[0].mxu0
  %2301 = vmatprep.mubr.bf16.mxu0 0
  %2302 = vmatmul.mubr.bf16.gmra.mrb[0].mxu0 %v1306
  %v2303 = vpop.f32.mrb[0].mxu0
  %v2304 = vadd.f32 %v308, %v2303
  %v2305 = vpop.f32.mrb[0].mxu0
  %v2306 = vpop.f32.mrb[0].mxu0
  %v2307 = vadd.f32 %v308, %v2306
  %v2308 = vpop.f32.mrb[0].mxu0
  %2309 = vmatprep.mubr.bf16.mxu0 0
  %2310 = vmatmul.mubr.bf16.gmra.mrb[0].mxu0 %v1309
  %v2311 = vpop.f32.mrb[0].mxu0
  %v2312 = vadd.f32 %v308, %v2311
  %v2313 = vpop.f32.mrb[0].mxu0
  %v2314 = vpop.f32.mrb[0].mxu0
  %v2315 = vadd.f32 %v308, %v2314
  %v2316 = vpop.f32.mrb[0].mxu0
  %2317 = vmatprep.mubr.bf16.mxu0 0
  %2318 = vmatmul.mubr.bf16.gmra.mrb[0].mxu0 %v1312
  %v2319 = vpop.f32.mrb[0].mxu0
  %v2320 = vadd.f32 %v308, %v2319
  %v2321 = vpop.f32.mrb[0].mxu0
  %v2322 = vpop.f32.mrb[0].mxu0
  %v2323 = vadd.f32 %v308, %v2322
  %v2324 = vpop.f32.mrb[0].mxu0
  %2325 = vmatprep.mubr.bf16.mxu0 0
  %2326 = vmatmul.mubr.bf16.gmra.mrb[0].mxu0 %v1315
  %v2327 = vpop.f32.mrb[0].mxu0
  %v2328 = vadd.f32 %v308, %v2327
  %v2329 = vpop.f32.mrb[0].mxu0
  %v2330 = vpop.f32.mrb[0].mxu0
  %v2331 = vadd.f32 %v308, %v2330
  %v2332 = vpop.f32.mrb[0].mxu0
  %2333 = vmatprep.mubr.bf16.mxu0 0
  %2334 = vmatmul.mubr.bf16.gmra.mrb[0].mxu0 %v1318
  %v2335 = vpop.f32.mrb[0].mxu0
  %v2336 = vadd.f32 %v308, %v2335
  %v2337 = vpop.f32.mrb[0].mxu0
  %v2338 = vpop.f32.mrb[0].mxu0
  %v2339 = vadd.f32 %v308, %v2338
  %v2340 = vpop.f32.mrb[0].mxu0
  %2341 = vmatprep.mubr.bf16.mxu0 0
  %2342 = vmatmul.mubr.bf16.gmra.mrb[0].mxu0 %v1321
  %v2343 = vpop.f32.mrb[0].mxu0
  %v2344 = vadd.f32 %v308, %v2343
  %v2345 = vpop.f32.mrb[0].mxu0
  %v2346 = vpop.f32.mrb[0].mxu0
  %v2347 = vadd.f32 %v308, %v2346
  %v2348 = vpop.f32.mrb[0].mxu0
  %2349 = vmatprep.mubr.bf16.mxu0 0
  %2350 = vmatmul.mubr.bf16.gmra.mrb[0].mxu0 %v1324
  %v2351 = vpop.f32.mrb[0].mxu0
  %v2352 = vadd.f32 %v308, %v2351
  %v2353 = vpop.f32.mrb[0].mxu0
  %v2354 = vpop.f32.mrb[0].mxu0
  %v2355 = vadd.f32 %v308, %v2354
  %v2356 = vpop.f32.mrb[0].mxu0
  %2357 = vmatprep.mubr.bf16.mxu0 0
  %2358 = vmatmul.mubr.bf16.gmra.mrb[0].mxu0 %v1327
  %v2359 = vpop.f32.mrb[0].mxu0
  %v2360 = vadd.f32 %v308, %v2359
  %v2361 = vpop.f32.mrb[0].mxu0
  %v2362 = vpop.f32.mrb[0].mxu0
  %v2363 = vadd.f32 %v308, %v2362
  %v2364 = vpop.f32.mrb[0].mxu0
  %2365 = vmatprep.mubr.bf16.mxu0 0
  %2366 = vmatmul.mubr.bf16.gmra.mrb[0].mxu0 %v1330
  %v2367 = vpop.f32.mrb[0].mxu0
  %v2368 = vadd.f32 %v308, %v2367
  %v2369 = vpop.f32.mrb[0].mxu0
  %v2370 = vpop.f32.mrb[0].mxu0
  %v2371 = vadd.f32 %v308, %v2370
  %v2372 = vpop.f32.mrb[0].mxu0
  %2373 = vmatprep.mubr.bf16.mxu0 0
  %2374 = vmatmul.mubr.bf16.gmra.mrb[0].mxu0 %v1333
  %v2375 = vpop.f32.mrb[0].mxu0
  %v2376 = vadd.f32 %v308, %v2375
  %v2377 = vpop.f32.mrb[0].mxu0
  %v2378 = vpop.f32.mrb[0].mxu0
  %v2379 = vadd.f32 %v308, %v2378
  %v2380 = vpop.f32.mrb[0].mxu0
  %2381 = vmatprep.mubr.bf16.mxu0 0
  %2382 = vmatmul.mubr.bf16.gmra.mrb[0].mxu0 %v1336
  %v2383 = vpop.f32.mrb[0].mxu0
  %v2384 = vadd.f32 %v308, %v2383
  %v2385 = vpop.f32.mrb[0].mxu0
  %v2386 = vpop.f32.mrb[0].mxu0
  %v2387 = vadd.f32 %v308, %v2386
  %v2388 = vpop.f32.mrb[0].mxu0
  %2389 = vmatprep.mubr.bf16.mxu0 0
  %2390 = vmatmul.mubr.bf16.gmra.mrb[0].mxu0 %v1339
  %v2391 = vpop.f32.mrb[0].mxu0
  %v2392 = vadd.f32 %v308, %v2391
  %v2393 = vpop.f32.mrb[0].mxu0
  %v2394 = vpop.f32.mrb[0].mxu0
  %v2395 = vadd.f32 %v308, %v2394
  %v2396 = vpop.f32.mrb[0].mxu0
  %2397 = vdwg.mxu0
  %v2398 = vmax.f32 %v1376, 0.0
  %v2399 = vmax.f32 %v1379, 0.0
  %v2400 = vmax.f32 %v1384, 0.0
  %v2401 = vmax.f32 %v1387, 0.0
  %v2402 = vmax.f32 %v1392, 0.0
  %v2403 = vmax.f32 %v1395, 0.0
  %v2404 = vmax.f32 %v1400, 0.0
  %v2405 = vmax.f32 %v1403, 0.0
  %v2406 = vmax.f32 %v1408, 0.0
  %v2407 = vmax.f32 %v1411, 0.0
  %v2408 = vmax.f32 %v1416, 0.0
  %v2409 = vmax.f32 %v1419, 0.0
  %v2410 = vmax.f32 %v1424, 0.0
  %v2411 = vmax.f32 %v1427, 0.0
  %v2412 = vmax.f32 %v1432, 0.0
  %v2413 = vmax.f32 %v1435, 0.0
  %v2414 = vmax.f32 %v1440, 0.0
  %v2415 = vmax.f32 %v1443, 0.0
  %v2416 = vmax.f32 %v1448, 0.0
  %v2417 = vmax.f32 %v1451, 0.0
  %v2418 = vmax.f32 %v1456, 0.0
  %v2419 = vmax.f32 %v1459, 0.0
  %v2420 = vmax.f32 %v1464, 0.0
  %v2421 = vmax.f32 %v1467, 0.0
  %v2422 = vmax.f32 %v1472, 0.0
  %v2423 = vmax.f32 %v1475, 0.0
  %v2424 = vmax.f32 %v1480, 0.0
  %v2425 = vmax.f32 %v1483, 0.0
  %v2426 = vmax.f32 %v1488, 0.0
  %v2427 = vmax.f32 %v1491, 0.0
  %v2428 = vmax.f32 %v1496, 0.0
  %v2429 = vmax.f32 %v1499, 0.0
  %v2430 = vmax.f32 %v1504, 0.0
  %v2431 = vmax.f32 %v1507, 0.0
  %v2432 = vmax.f32 %v1512, 0.0
  %v2433 = vmax.f32 %v1515, 0.0
  %v2434 = vmax.f32 %v1520, 0.0
  %v2435 = vmax.f32 %v1523, 0.0
  %v2436 = vmax.f32 %v1528, 0.0
  %v2437 = vmax.f32 %v1531, 0.0
  %v2438 = vmax.f32 %v1536, 0.0
  %v2439 = vmax.f32 %v1539, 0.0
  %v2440 = vmax.f32 %v1544, 0.0
  %v2441 = vmax.f32 %v1547, 0.0
  %v2442 = vmax.f32 %v1552, 0.0
  %v2443 = vmax.f32 %v1555, 0.0
  %v2444 = vmax.f32 %v1560, 0.0
  %v2445 = vmax.f32 %v1563, 0.0
  %v2446 = vmax.f32 %v1568, 0.0
  %v2447 = vmax.f32 %v1571, 0.0
  %v2448 = vmax.f32 %v1576, 0.0
  %v2449 = vmax.f32 %v1579, 0.0
  %v2450 = vmax.f32 %v1584, 0.0
  %v2451 = vmax.f32 %v1587, 0.0
  %v2452 = vmax.f32 %v1592, 0.0
  %v2453 = vmax.f32 %v1595, 0.0
  %v2454 = vmax.f32 %v1600, 0.0
  %v2455 = vmax.f32 %v1603, 0.0
  %v2456 = vmax.f32 %v1608, 0.0
  %v2457 = vmax.f32 %v1611, 0.0
  %v2458 = vmax.f32 %v1616, 0.0
  %v2459 = vmax.f32 %v1619, 0.0
  %v2460 = vmax.f32 %v1624, 0.0
  %v2461 = vmax.f32 %v1627, 0.0
  %v2462 = vmax.f32 %v1632, 0.0
  %v2463 = vmax.f32 %v1635, 0.0
  %v2464 = vmax.f32 %v1640, 0.0
  %v2465 = vmax.f32 %v1643, 0.0
  %v2466 = vmax.f32 %v1648, 0.0
  %v2467 = vmax.f32 %v1651, 0.0
  %v2468 = vmax.f32 %v1656, 0.0
  %v2469 = vmax.f32 %v1659, 0.0
  %v2470 = vmax.f32 %v1664, 0.0
  %v2471 = vmax.f32 %v1667, 0.0
  %v2472 = vmax.f32 %v1672, 0.0
  %v2473 = vmax.f32 %v1675, 0.0
  %v2474 = vmax.f32 %v1680, 0.0
  %v2475 = vmax.f32 %v1683, 0.0
  %v2476 = vmax.f32 %v1688, 0.0
  %v2477 = vmax.f32 %v1691, 0.0
  %v2478 = vmax.f32 %v1696, 0.0
  %v2479 = vmax.f32 %v1699, 0.0
  %v2480 = vmax.f32 %v1704, 0.0
  %v2481 = vmax.f32 %v1707, 0.0
  %v2482 = vmax.f32 %v1712, 0.0
  %v2483 = vmax.f32 %v1715, 0.0
  %v2484 = vmax.f32 %v1720, 0.0
  %v2485 = vmax.f32 %v1723, 0.0
  %v2486 = vmax.f32 %v1728, 0.0
  %v2487 = vmax.f32 %v1731, 0.0
  %v2488 = vmax.f32 %v1736, 0.0
  %v2489 = vmax.f32 %v1739, 0.0
  %v2490 = vmax.f32 %v1744, 0.0
  %v2491 = vmax.f32 %v1747, 0.0
  %v2492 = vmax.f32 %v1752, 0.0
  %v2493 = vmax.f32 %v1755, 0.0
  %v2494 = vmax.f32 %v1760, 0.0
  %v2495 = vmax.f32 %v1763, 0.0
  %v2496 = vmax.f32 %v1768, 0.0
  %v2497 = vmax.f32 %v1771, 0.0
  %v2498 = vmax.f32 %v1776, 0.0
  %v2499 = vmax.f32 %v1779, 0.0
  %v2500 = vmax.f32 %v1784, 0.0
  %v2501 = vmax.f32 %v1787, 0.0
  %v2502 = vmax.f32 %v1792, 0.0
  %v2503 = vmax.f32 %v1795, 0.0
  %v2504 = vmax.f32 %v1800, 0.0
  %v2505 = vmax.f32 %v1803, 0.0
  %v2506 = vmax.f32 %v1808, 0.0
  %v2507 = vmax.f32 %v1811, 0.0
  %v2508 = vmax.f32 %v1816, 0.0
  %v2509 = vmax.f32 %v1819, 0.0
  %v2510 = vmax.f32 %v1824, 0.0
  %v2511 = vmax.f32 %v1827, 0.0
  %v2512 = vmax.f32 %v1832, 0.0
  %v2513 = vmax.f32 %v1835, 0.0
  %v2514 = vmax.f32 %v1840, 0.0
  %v2515 = vmax.f32 %v1843, 0.0
  %v2516 = vmax.f32 %v1848, 0.0
  %v2517 = vmax.f32 %v1851, 0.0
  %v2518 = vmax.f32 %v1856, 0.0
  %v2519 = vmax.f32 %v1859, 0.0
  %v2520 = vmax.f32 %v1864, 0.0
  %v2521 = vmax.f32 %v1867, 0.0
  %v2522 = vmax.f32 %v1872, 0.0
  %v2523 = vmax.f32 %v1875, 0.0
  %v2524 = vmax.f32 %v1880, 0.0
  %v2525 = vmax.f32 %v1883, 0.0
  %v2526 = vmax.f32 %v1888, 0.0
  %v2527 = vmax.f32 %v1891, 0.0
  %v2528 = vmax.f32 %v1896, 0.0
  %v2529 = vmax.f32 %v1899, 0.0
  %v2530 = vmax.f32 %v1904, 0.0
  %v2531 = vmax.f32 %v1907, 0.0
  %v2532 = vmax.f32 %v1912, 0.0
  %v2533 = vmax.f32 %v1915, 0.0
  %v2534 = vmax.f32 %v1920, 0.0
  %v2535 = vmax.f32 %v1923, 0.0
  %v2536 = vmax.f32 %v1928, 0.0
  %v2537 = vmax.f32 %v1931, 0.0
  %v2538 = vmax.f32 %v1936, 0.0
  %v2539 = vmax.f32 %v1939, 0.0
  %v2540 = vmax.f32 %v1944, 0.0
  %v2541 = vmax.f32 %v1947, 0.0
  %v2542 = vmax.f32 %v1952, 0.0
  %v2543 = vmax.f32 %v1955, 0.0
  %v2544 = vmax.f32 %v1960, 0.0
  %v2545 = vmax.f32 %v1963, 0.0
  %v2546 = vmax.f32 %v1968, 0.0
  %v2547 = vmax.f32 %v1971, 0.0
  %v2548 = vmax.f32 %v1976, 0.0
  %v2549 = vmax.f32 %v1979, 0.0
  %v2550 = vmax.f32 %v1984, 0.0
  %v2551 = vmax.f32 %v1987, 0.0
  %v2552 = vmax.f32 %v1992, 0.0
  %v2553 = vmax.f32 %v1995, 0.0
  %v2554 = vmax.f32 %v2000, 0.0
  %v2555 = vmax.f32 %v2003, 0.0
  %v2556 = vmax.f32 %v2008, 0.0
  %v2557 = vmax.f32 %v2011, 0.0
  %v2558 = vmax.f32 %v2016, 0.0
  %v2559 = vmax.f32 %v2019, 0.0
  %v2560 = vmax.f32 %v2024, 0.0
  %v2561 = vmax.f32 %v2027, 0.0
  %v2562 = vmax.f32 %v2032, 0.0
  %v2563 = vmax.f32 %v2035, 0.0
  %v2564 = vmax.f32 %v2040, 0.0
  %v2565 = vmax.f32 %v2043, 0.0
  %v2566 = vmax.f32 %v2048, 0.0
  %v2567 = vmax.f32 %v2051, 0.0
  %v2568 = vmax.f32 %v2056, 0.0
  %v2569 = vmax.f32 %v2059, 0.0
  %v2570 = vmax.f32 %v2064, 0.0
  %v2571 = vmax.f32 %v2067, 0.0
  %v2572 = vmax.f32 %v2072, 0.0
  %v2573 = vmax.f32 %v2075, 0.0
  %v2574 = vmax.f32 %v2080, 0.0
  %v2575 = vmax.f32 %v2083, 0.0
  %v2576 = vmax.f32 %v2088, 0.0
  %v2577 = vmax.f32 %v2091, 0.0
  %v2578 = vmax.f32 %v2096, 0.0
  %v2579 = vmax.f32 %v2099, 0.0
  %v2580 = vmax.f32 %v2104, 0.0
  %v2581 = vmax.f32 %v2107, 0.0
  %v2582 = vmax.f32 %v2112, 0.0
  %v2583 = vmax.f32 %v2115, 0.0
  %v2584 = vmax.f32 %v2120, 0.0
  %v2585 = vmax.f32 %v2123, 0.0
  %v2586 = vmax.f32 %v2128, 0.0
  %v2587 = vmax.f32 %v2131, 0.0
  %v2588 = vmax.f32 %v2136, 0.0
  %v2589 = vmax.f32 %v2139, 0.0
  %v2590 = vmax.f32 %v2144, 0.0
  %v2591 = vmax.f32 %v2147, 0.0
  %v2592 = vmax.f32 %v2152, 0.0
  %v2593 = vmax.f32 %v2155, 0.0
  %v2594 = vmax.f32 %v2160, 0.0
  %v2595 = vmax.f32 %v2163, 0.0
  %v2596 = vmax.f32 %v2168, 0.0
  %v2597 = vmax.f32 %v2171, 0.0
  %v2598 = vmax.f32 %v2176, 0.0
  %v2599 = vmax.f32 %v2179, 0.0
  %v2600 = vmax.f32 %v2184, 0.0
  %v2601 = vmax.f32 %v2187, 0.0
  %v2602 = vmax.f32 %v2192, 0.0
  %v2603 = vmax.f32 %v2195, 0.0
  %v2604 = vmax.f32 %v2200, 0.0
  %v2605 = vmax.f32 %v2203, 0.0
  %v2606 = vmax.f32 %v2208, 0.0
  %v2607 = vmax.f32 %v2211, 0.0
  %v2608 = vmax.f32 %v2216, 0.0
  %v2609 = vmax.f32 %v2219, 0.0
  %v2610 = vmax.f32 %v2224, 0.0
  %v2611 = vmax.f32 %v2227, 0.0
  %v2612 = vmax.f32 %v2232, 0.0
  %v2613 = vmax.f32 %v2235, 0.0
  %v2614 = vmax.f32 %v2240, 0.0
  %v2615 = vmax.f32 %v2243, 0.0
  %v2616 = vmax.f32 %v2248, 0.0
  %v2617 = vmax.f32 %v2251, 0.0
  %v2618 = vmax.f32 %v2256, 0.0
  %v2619 = vmax.f32 %v2259, 0.0
  %v2620 = vmax.f32 %v2264, 0.0
  %v2621 = vmax.f32 %v2267, 0.0
  %v2622 = vmax.f32 %v2272, 0.0
  %v2623 = vmax.f32 %v2275, 0.0
  %v2624 = vmax.f32 %v2280, 0.0
  %v2625 = vmax.f32 %v2283, 0.0
  %v2626 = vmax.f32 %v2288, 0.0
  %v2627 = vmax.f32 %v2291, 0.0
  %v2628 = vmax.f32 %v2296, 0.0
  %v2629 = vmax.f32 %v2299, 0.0
  %v2630 = vmax.f32 %v2304, 0.0
  %v2631 = vmax.f32 %v2307, 0.0
  %v2632 = vmax.f32 %v2312, 0.0
  %v2633 = vmax.f32 %v2315, 0.0
  %v2634 = vmax.f32 %v2320, 0.0
  %v2635 = vmax.f32 %v2323, 0.0
  %v2636 = vmax.f32 %v2328, 0.0
  %v2637 = vmax.f32 %v2331, 0.0
  %v2638 = vmax.f32 %v2336, 0.0
  %v2639 = vmax.f32 %v2339, 0.0
  %v2640 = vmax.f32 %v2344, 0.0
  %v2641 = vmax.f32 %v2347, 0.0
  %v2642 = vmax.f32 %v2352, 0.0
  %v2643 = vmax.f32 %v2355, 0.0
  %v2644 = vmax.f32 %v2360, 0.0
  %v2645 = vmax.f32 %v2363, 0.0
  %v2646 = vmax.f32 %v2368, 0.0
  %v2647 = vmax.f32 %v2371, 0.0
  %v2648 = vmax.f32 %v2376, 0.0
  %v2649 = vmax.f32 %v2379, 0.0
  %v2650 = vmax.f32 %v2384, 0.0
  %v2651 = vmax.f32 %v2387, 0.0
  %v2652 = vmax.f32 %v2392, 0.0
  %v2653 = vmax.f32 %v2395, 0.0
  %v2654 = vmax.f32 %v2398, %v2414
  %v2655 = vmax.f32 %v2399, %v2415
  %v2656 = vmax.f32 %v2400, %v2416
  %v2657 = vmax.f32 %v2401, %v2417
  %v2658 = vmax.f32 %v2402, %v2418
  %v2659 = vmax.f32 %v2403, %v2419
  %v2660 = vmax.f32 %v2404, %v2420
  %v2661 = vmax.f32 %v2405, %v2421
  %v2662 = vmax.f32 %v2406, %v2422
  %v2663 = vmax.f32 %v2407, %v2423
  %v2664 = vmax.f32 %v2408, %v2424
  %v2665 = vmax.f32 %v2409, %v2425
  %v2666 = vmax.f32 %v2410, %v2426
  %v2667 = vmax.f32 %v2411, %v2427
  %v2668 = vmax.f32 %v2412, %v2428
  %v2669 = vmax.f32 %v2413, %v2429
  %v2670 = vmax.f32 %v2430, %v2446
  %v2671 = vmax.f32 %v2431, %v2447
  %v2672 = vmax.f32 %v2432, %v2448
  %v2673 = vmax.f32 %v2433, %v2449
  %v2674 = vmax.f32 %v2434, %v2450
  %v2675 = vmax.f32 %v2435, %v2451
  %v2676 = vmax.f32 %v2436, %v2452
  %v2677 = vmax.f32 %v2437, %v2453
  %v2678 = vmax.f32 %v2438, %v2454
  %v2679 = vmax.f32 %v2439, %v2455
  %v2680 = vmax.f32 %v2440, %v2456
  %v2681 = vmax.f32 %v2441, %v2457
  %v2682 = vmax.f32 %v2442, %v2458
  %v2683 = vmax.f32 %v2443, %v2459
  %v2684 = vmax.f32 %v2444, %v2460
  %v2685 = vmax.f32 %v2445, %v2461
  %v2686 = vmax.f32 %v2462, %v2478
  %v2687 = vmax.f32 %v2463, %v2479
  %v2688 = vmax.f32 %v2464, %v2480
  %v2689 = vmax.f32 %v2465, %v2481
  %v2690 = vmax.f32 %v2466, %v2482
  %v2691 = vmax.f32 %v2467, %v2483
  %v2692 = vmax.f32 %v2468, %v2484
  %v2693 = vmax.f32 %v2469, %v2485
  %v2694 = vmax.f32 %v2470, %v2486
  %v2695 = vmax.f32 %v2471, %v2487
  %v2696 = vmax.f32 %v2472, %v2488
  %v2697 = vmax.f32 %v2473, %v2489
  %v2698 = vmax.f32 %v2474, %v2490
  %v2699 = vmax.f32 %v2475, %v2491
  %v2700 = vmax.f32 %v2476, %v2492
  %v2701 = vmax.f32 %v2477, %v2493
  %v2702 = vmax.f32 %v2494, %v2510
  %v2703 = vmax.f32 %v2495, %v2511
  %v2704 = vmax.f32 %v2496, %v2512
  %v2705 = vmax.f32 %v2497, %v2513
  %v2706 = vmax.f32 %v2498, %v2514
  %v2707 = vmax.f32 %v2499, %v2515
  %v2708 = vmax.f32 %v2500, %v2516
  %v2709 = vmax.f32 %v2501, %v2517
  %v2710 = vmax.f32 %v2502, %v2518
  %v2711 = vmax.f32 %v2503, %v2519
  %v2712 = vmax.f32 %v2504, %v2520
  %v2713 = vmax.f32 %v2505, %v2521
  %v2714 = vmax.f32 %v2506, %v2522
  %v2715 = vmax.f32 %v2507, %v2523
  %v2716 = vmax.f32 %v2508, %v2524
  %v2717 = vmax.f32 %v2509, %v2525
  %v2718 = vmax.f32 %v2526, %v2542
  %v2719 = vmax.f32 %v2527, %v2543
  %v2720 = vmax.f32 %v2528, %v2544
  %v2721 = vmax.f32 %v2529, %v2545
  %v2722 = vmax.f32 %v2530, %v2546
  %v2723 = vmax.f32 %v2531, %v2547
  %v2724 = vmax.f32 %v2532, %v2548
  %v2725 = vmax.f32 %v2533, %v2549
  %v2726 = vmax.f32 %v2534, %v2550
  %v2727 = vmax.f32 %v2535, %v2551
  %v2728 = vmax.f32 %v2536, %v2552
  %v2729 = vmax.f32 %v2537, %v2553
  %v2730 = vmax.f32 %v2538, %v2554
  %v2731 = vmax.f32 %v2539, %v2555
  %v2732 = vmax.f32 %v2540, %v2556
  %v2733 = vmax.f32 %v2541, %v2557
  %v2734 = vmax.f32 %v2558, %v2574
  %v2735 = vmax.f32 %v2559, %v2575
  %v2736 = vmax.f32 %v2560, %v2576
  %v2737 = vmax.f32 %v2561, %v2577
  %v2738 = vmax.f32 %v2562, %v2578
  %v2739 = vmax.f32 %v2563, %v2579
  %v2740 = vmax.f32 %v2564, %v2580
  %v2741 = vmax.f32 %v2565, %v2581
  %v2742 = vmax.f32 %v2566, %v2582
  %v2743 = vmax.f32 %v2567, %v2583
  %v2744 = vmax.f32 %v2568, %v2584
  %v2745 = vmax.f32 %v2569, %v2585
  %v2746 = vmax.f32 %v2570, %v2586
  %v2747 = vmax.f32 %v2571, %v2587
  %v2748 = vmax.f32 %v2572, %v2588
  %v2749 = vmax.f32 %v2573, %v2589
  %v2750 = vmax.f32 %v2590, %v2606
  %v2751 = vmax.f32 %v2591, %v2607
  %v2752 = vmax.f32 %v2592, %v2608
  %v2753 = vmax.f32 %v2593, %v2609
  %v2754 = vmax.f32 %v2594, %v2610
  %v2755 = vmax.f32 %v2595, %v2611
  %v2756 = vmax.f32 %v2596, %v2612
  %v2757 = vmax.f32 %v2597, %v2613
  %v2758 = vmax.f32 %v2598, %v2614
  %v2759 = vmax.f32 %v2599, %v2615
  %v2760 = vmax.f32 %v2600, %v2616
  %v2761 = vmax.f32 %v2601, %v2617
  %v2762 = vmax.f32 %v2602, %v2618
  %v2763 = vmax.f32 %v2603, %v2619
  %v2764 = vmax.f32 %v2604, %v2620
  %v2765 = vmax.f32 %v2605, %v2621
  %v2766 = vmax.f32 %v2622, %v2638
  %v2767 = vmax.f32 %v2623, %v2639
  %v2768 = vmax.f32 %v2624, %v2640
  %v2769 = vmax.f32 %v2625, %v2641
  %v2770 = vmax.f32 %v2626, %v2642
  %v2771 = vmax.f32 %v2627, %v2643
  %v2772 = vmax.f32 %v2628, %v2644
  %v2773 = vmax.f32 %v2629, %v2645
  %v2774 = vmax.f32 %v2630, %v2646
  %v2775 = vmax.f32 %v2631, %v2647
  %v2776 = vmax.f32 %v2632, %v2648
  %v2777 = vmax.f32 %v2633, %v2649
  %v2778 = vmax.f32 %v2634, %v2650
  %v2779 = vmax.f32 %v2635, %v2651
  %v2780 = vmax.f32 %v2636, %v2652
  %v2781 = vmax.f32 %v2637, %v2653
  %v2782 = vmax.f32 %v2654, %v2655
  %v2783 = vmax.f32 %v2656, %v2657
  %v2784 = vmax.f32 %v2658, %v2659
  %v2785 = vmax.f32 %v2660, %v2661
  %v2786 = vmax.f32 %v2662, %v2663
  %v2787 = vmax.f32 %v2664, %v2665
  %v2788 = vmax.f32 %v2666, %v2667
  %v2789 = vmax.f32 %v2668, %v2669
  %v2790 = vmax.f32 %v2670, %v2671
  %v2791 = vmax.f32 %v2672, %v2673
  %v2792 = vmax.f32 %v2674, %v2675
  %v2793 = vmax.f32 %v2676, %v2677
  %v2794 = vmax.f32 %v2678, %v2679
  %v2795 = vmax.f32 %v2680, %v2681
  %v2796 = vmax.f32 %v2682, %v2683
  %v2797 = vmax.f32 %v2684, %v2685
  %v2798 = vmax.f32 %v2686, %v2687
  %v2799 = vmax.f32 %v2688, %v2689
  %v2800 = vmax.f32 %v2690, %v2691
  %v2801 = vmax.f32 %v2692, %v2693
  %v2802 = vmax.f32 %v2694, %v2695
  %v2803 = vmax.f32 %v2696, %v2697
  %v2804 = vmax.f32 %v2698, %v2699
  %v2805 = vmax.f32 %v2700, %v2701
  %v2806 = vmax.f32 %v2702, %v2703
  %v2807 = vmax.f32 %v2704, %v2705
  %v2808 = vmax.f32 %v2706, %v2707
  %v2809 = vmax.f32 %v2708, %v2709
  %v2810 = vmax.f32 %v2710, %v2711
  %v2811 = vmax.f32 %v2712, %v2713
  %v2812 = vmax.f32 %v2714, %v2715
  %v2813 = vmax.f32 %v2716, %v2717
  %v2814 = vmax.f32 %v2718, %v2719
  %v2815 = vmax.f32 %v2720, %v2721
  %v2816 = vmax.f32 %v2722, %v2723
  %v2817 = vmax.f32 %v2724, %v2725
  %v2818 = vmax.f32 %v2726, %v2727
  %v2819 = vmax.f32 %v2728, %v2729
  %v2820 = vmax.f32 %v2730, %v2731
  %v2821 = vmax.f32 %v2732, %v2733
  %v2822 = vmax.f32 %v2734, %v2735
  %v2823 = vmax.f32 %v2736, %v2737
  %v2824 = vmax.f32 %v2738, %v2739
  %v2825 = vmax.f32 %v2740, %v2741
  %v2826 = vmax.f32 %v2742, %v2743
  %v2827 = vmax.f32 %v2744, %v2745
  %v2828 = vmax.f32 %v2746, %v2747
  %v2829 = vmax.f32 %v2748, %v2749
  %v2830 = vmax.f32 %v2750, %v2751
  %v2831 = vmax.f32 %v2752, %v2753
  %v2832 = vmax.f32 %v2754, %v2755
  %v2833 = vmax.f32 %v2756, %v2757
  %v2834 = vmax.f32 %v2758, %v2759
  %v2835 = vmax.f32 %v2760, %v2761
  %v2836 = vmax.f32 %v2762, %v2763
  %v2837 = vmax.f32 %v2764, %v2765
  %v2838 = vmax.f32 %v2766, %v2767
  %v2839 = vmax.f32 %v2768, %v2769
  %v2840 = vmax.f32 %v2770, %v2771
  %v2841 = vmax.f32 %v2772, %v2773
  %v2842 = vmax.f32 %v2774, %v2775
  %v2843 = vmax.f32 %v2776, %v2777
  %v2844 = vmax.f32 %v2778, %v2779
  %v2845 = vmax.f32 %v2780, %v2781
  %vm2846 = vcmask 261120
  %2847 = vst.msk [vmem:[#allocation2] sm:$0xff] %vm2846, 0.0
  %2848 = vst.msk [vmem:[#allocation2 + $0x8] sm:$0xff] %vm2846, 0.0
  %2849 = vst.msk [vmem:[#allocation2 + $0x10] sm:$0xff] %vm2846, 0.0
  %2850 = vst.msk [vmem:[#allocation2 + $0x18] sm:$0xff] %vm2846, 0.0
  %2851 = vst.msk [vmem:[#allocation2 + $0x20] sm:$0xff] %vm2846, 0.0
  %2852 = vst.msk [vmem:[#allocation2 + $0x28] sm:$0xff] %vm2846, 0.0
  %2853 = vst.msk [vmem:[#allocation2 + $0x30] sm:$0xff] %vm2846, 0.0
  %2854 = vst.msk [vmem:[#allocation2 + $0x38] sm:$0xff] %vm2846, 0.0
  %2855 = vst.msk [vmem:[#allocation2 + $0x40] sm:$0xff] %vm2846, 0.0
  %2856 = vst.msk [vmem:[#allocation2 + $0x48] sm:$0xff] %vm2846, 0.0
  %s2857 = scalar_lea.vmem [#allocation2], 720
  %2858 = vst.msk [vmem:[%s2857] sm:$0xff] %vm2846, 0.0
  %2859 = vst.msk [vmem:[%s2857 + $0x8] sm:$0xff] %vm2846, 0.0
  %2860 = vst.msk [vmem:[%s2857 + $0x10] sm:$0xff] %vm2846, 0.0
  %2861 = vst.msk [vmem:[%s2857 + $0x18] sm:$0xff] %vm2846, 0.0
  %2862 = vst.msk [vmem:[%s2857 + $0x20] sm:$0xff] %vm2846, 0.0
  %2863 = vst.msk [vmem:[%s2857 + $0x28] sm:$0xff] %vm2846, 0.0
  %2864 = vst.msk [vmem:[%s2857 + $0x30] sm:$0xff] %vm2846, 0.0
  %2865 = vst.msk [vmem:[%s2857 + $0x38] sm:$0xff] %vm2846, 0.0
  %2866 = vst.msk [vmem:[%s2857 + $0x40] sm:$0xff] %vm2846, 0.0
  %2867 = vst.msk [vmem:[%s2857 + $0x48] sm:$0xff] %vm2846, 0.0
  %s2868 = scalar_lea.vmem [#allocation2], 80
  %2869 = vst.msk [vmem:[%s2868] sm:$0xff] %vm2846, 0.0
  %2870 = vst.msk [vmem:[%s2868 + $0x50] sm:$0xff] %vm2846, 0.0
  %2871 = vst.msk [vmem:[%s2868 + $0xa0] sm:$0xff] %vm2846, 0.0
  %2872 = vst.msk [vmem:[%s2868 + $0xf0] sm:$0xff] %vm2846, 0.0
  %2873 = vst.msk [vmem:[%s2868 + $0x140] sm:$0xff] %vm2846, 0.0
  %2874 = vst.msk [vmem:[%s2868 + $0x190] sm:$0xff] %vm2846, 0.0
  %2875 = vst.msk [vmem:[%s2868 + $0x1e0] sm:$0xff] %vm2846, 0.0
  %2876 = vst.msk [vmem:[%s2868 + $0x230] sm:$0xff] %vm2846, 0.0
  %2877 = vst.msk [vmem:[%s2868 + $0x48] sm:$0xff] %vm2846, 0.0
  %2878 = vst.msk [vmem:[%s2868 + $0x98] sm:$0xff] %vm2846, 0.0
  %2879 = vst.msk [vmem:[%s2868 + $0xe8] sm:$0xff] %vm2846, 0.0
  %2880 = vst.msk [vmem:[%s2868 + $0x138] sm:$0xff] %vm2846, 0.0
  %2881 = vst.msk [vmem:[%s2868 + $0x188] sm:$0xff] %vm2846, 0.0
  %2882 = vst.msk [vmem:[%s2868 + $0x1d8] sm:$0xff] %vm2846, 0.0
  %2883 = vst.msk [vmem:[%s2868 + $0x228] sm:$0xff] %vm2846, 0.0
  %2884 = vst.msk [vmem:[%s2868 + $0x278] sm:$0xff] %vm2846, 0.0
  %2885 = vst.msk [vmem:[%s2868 + $0x8] sm:$0xff] %vm2846, %v2782
  %2886 = vst.msk [vmem:[%s2868 + $0x10] sm:$0xff] %vm2846, %v2783
  %2887 = vst.msk [vmem:[%s2868 + $0x18] sm:$0xff] %vm2846, %v2784
  %2888 = vst.msk [vmem:[%s2868 + $0x20] sm:$0xff] %vm2846, %v2785
  %2889 = vst.msk [vmem:[%s2868 + $0x28] sm:$0xff] %vm2846, %v2786
  %2890 = vst.msk [vmem:[%s2868 + $0x30] sm:$0xff] %vm2846, %v2787
  %2891 = vst.msk [vmem:[%s2868 + $0x38] sm:$0xff] %vm2846, %v2788
  %2892 = vst.msk [vmem:[%s2868 + $0x40] sm:$0xff] %vm2846, %v2789
  %2893 = vst.msk [vmem:[%s2868 + $0x58] sm:$0xff] %vm2846, %v2790
  %2894 = vst.msk [vmem:[%s2868 + $0x60] sm:$0xff] %vm2846, %v2791
  %2895 = vst.msk [vmem:[%s2868 + $0x68] sm:$0xff] %vm2846, %v2792
  %2896 = vst.msk [vmem:[%s2868 + $0x70] sm:$0xff] %vm2846, %v2793
  %2897 = vst.msk [vmem:[%s2868 + $0x78] sm:$0xff] %vm2846, %v2794
  %2898 = vst.msk [vmem:[%s2868 + $0x80] sm:$0xff] %vm2846, %v2795
  %2899 = vst.msk [vmem:[%s2868 + $0x88] sm:$0xff] %vm2846, %v2796
  %2900 = vst.msk [vmem:[%s2868 + $0x90] sm:$0xff] %vm2846, %v2797
  %2901 = vst.msk [vmem:[%s2868 + $0xa8] sm:$0xff] %vm2846, %v2798
  %2902 = vst.msk [vmem:[%s2868 + $0xb0] sm:$0xff] %vm2846, %v2799
  %2903 = vst.msk [vmem:[%s2868 + $0xb8] sm:$0xff] %vm2846, %v2800
  %2904 = vst.msk [vmem:[%s2868 + $0xc0] sm:$0xff] %vm2846, %v2801
  %2905 = vst.msk [vmem:[%s2868 + $0xc8] sm:$0xff] %vm2846, %v2802
  %2906 = vst.msk [vmem:[%s2868 + $0xd0] sm:$0xff] %vm2846, %v2803
  %2907 = vst.msk [vmem:[%s2868 + $0xd8] sm:$0xff] %vm2846, %v2804
  %2908 = vst.msk [vmem:[%s2868 + $0xe0] sm:$0xff] %vm2846, %v2805
  %2909 = vst.msk [vmem:[%s2868 + $0xf8] sm:$0xff] %vm2846, %v2806
  %2910 = vst.msk [vmem:[%s2868 + $0x100] sm:$0xff] %vm2846, %v2807
  %2911 = vst.msk [vmem:[%s2868 + $0x108] sm:$0xff] %vm2846, %v2808
  %2912 = vst.msk [vmem:[%s2868 + $0x110] sm:$0xff] %vm2846, %v2809
  %2913 = vst.msk [vmem:[%s2868 + $0x118] sm:$0xff] %vm2846, %v2810
  %2914 = vst.msk [vmem:[%s2868 + $0x120] sm:$0xff] %vm2846, %v2811
  %2915 = vst.msk [vmem:[%s2868 + $0x128] sm:$0xff] %vm2846, %v2812
  %2916 = vst.msk [vmem:[%s2868 + $0x130] sm:$0xff] %vm2846, %v2813
  %2917 = vst.msk [vmem:[%s2868 + $0x148] sm:$0xff] %vm2846, %v2814
  %2918 = vst.msk [vmem:[%s2868 + $0x150] sm:$0xff] %vm2846, %v2815
  %2919 = vst.msk [vmem:[%s2868 + $0x158] sm:$0xff] %vm2846, %v2816
  %2920 = vst.msk [vmem:[%s2868 + $0x160] sm:$0xff] %vm2846, %v2817
  %2921 = vst.msk [vmem:[%s2868 + $0x168] sm:$0xff] %vm2846, %v2818
  %2922 = vst.msk [vmem:[%s2868 + $0x170] sm:$0xff] %vm2846, %v2819
  %2923 = vst.msk [vmem:[%s2868 + $0x178] sm:$0xff] %vm2846, %v2820
  %2924 = vst.msk [vmem:[%s2868 + $0x180] sm:$0xff] %vm2846, %v2821
  %2925 = vst.msk [vmem:[%s2868 + $0x198] sm:$0xff] %vm2846, %v2822
  %2926 = vst.msk [vmem:[%s2868 + $0x1a0] sm:$0xff] %vm2846, %v2823
  %2927 = vst.msk [vmem:[%s2868 + $0x1a8] sm:$0xff] %vm2846, %v2824
  %2928 = vst.msk [vmem:[%s2868 + $0x1b0] sm:$0xff] %vm2846, %v2825
  %2929 = vst.msk [vmem:[%s2868 + $0x1b8] sm:$0xff] %vm2846, %v2826
  %2930 = vst.msk [vmem:[%s2868 + $0x1c0] sm:$0xff] %vm2846, %v2827
  %2931 = vst.msk [vmem:[%s2868 + $0x1c8] sm:$0xff] %vm2846, %v2828
  %2932 = vst.msk [vmem:[%s2868 + $0x1d0] sm:$0xff] %vm2846, %v2829
  %2933 = vst.msk [vmem:[%s2868 + $0x1e8] sm:$0xff] %vm2846, %v2830
  %2934 = vst.msk [vmem:[%s2868 + $0x1f0] sm:$0xff] %vm2846, %v2831
  %2935 = vst.msk [vmem:[%s2868 + $0x1f8] sm:$0xff] %vm2846, %v2832
  %2936 = vst.msk [vmem:[%s2868 + $0x200] sm:$0xff] %vm2846, %v2833
  %2937 = vst.msk [vmem:[%s2868 + $0x208] sm:$0xff] %vm2846, %v2834
  %2938 = vst.msk [vmem:[%s2868 + $0x210] sm:$0xff] %vm2846, %v2835
  %2939 = vst.msk [vmem:[%s2868 + $0x218] sm:$0xff] %vm2846, %v2836
  %2940 = vst.msk [vmem:[%s2868 + $0x220] sm:$0xff] %vm2846, %v2837
  %2941 = vst.msk [vmem:[%s2868 + $0x238] sm:$0xff] %vm2846, %v2838
  %2942 = vst.msk [vmem:[%s2868 + $0x240] sm:$0xff] %vm2846, %v2839
  %2943 = vst.msk [vmem:[%s2868 + $0x248] sm:$0xff] %vm2846, %v2840
  %2944 = vst.msk [vmem:[%s2868 + $0x250] sm:$0xff] %vm2846, %v2841
  %2945 = vst.msk [vmem:[%s2868 + $0x258] sm:$0xff] %vm2846, %v2842
  %2946 = vst.msk [vmem:[%s2868 + $0x260] sm:$0xff] %vm2846, %v2843
  %2947 = vst.msk [vmem:[%s2868 + $0x268] sm:$0xff] %vm2846, %v2844
  %2948 = vst.msk [vmem:[%s2868 + $0x270] sm:$0xff] %vm2846, %v2845
  %v2949 = vld [vmem:[#allocation2] sm:$0xff]
  %v2950 = vld [vmem:[#allocation2 + $0x8] sm:$0xff]
  %v2951 = vld [vmem:[#allocation2 + $0x10] sm:$0xff]
  %v2952 = vld [vmem:[#allocation2 + $0x18] sm:$0xff]
  %v2953 = vld [vmem:[#allocation2 + $0x20] sm:$0xff]
  %v2954 = vld [vmem:[#allocation2 + $0x28] sm:$0xff]
  %v2955 = vld [vmem:[#allocation2 + $0x30] sm:$0xff]
  %v2956 = vld [vmem:[#allocation2 + $0x38] sm:$0xff]
  %v2957 = vld [vmem:[#allocation2 + $0x50] sm:$0xff]
  %v2958 = vld [vmem:[#allocation2 + $0x58] sm:$0xff]
  %v2959 = vld [vmem:[#allocation2 + $0x60] sm:$0xff]
  %v2960 = vld [vmem:[#allocation2 + $0x68] sm:$0xff]
  %v2961 = vld [vmem:[#allocation2 + $0x70] sm:$0xff]
  %v2962 = vld [vmem:[#allocation2 + $0x78] sm:$0xff]
  %v2963 = vld [vmem:[#allocation2 + $0x80] sm:$0xff]
  %v2964 = vld [vmem:[#allocation2 + $0x88] sm:$0xff]
  %v2965 = vld [vmem:[#allocation2 + $0xa0] sm:$0xff]
  %v2966 = vld [vmem:[#allocation2 + $0xa8] sm:$0xff]
  %v2967 = vld [vmem:[#allocation2 + $0xb0] sm:$0xff]
  %v2968 = vld [vmem:[#allocation2 + $0xb8] sm:$0xff]
  %v2969 = vld [vmem:[#allocation2 + $0xc0] sm:$0xff]
  %v2970 = vld [vmem:[#allocation2 + $0xc8] sm:$0xff]
  %v2971 = vld [vmem:[#allocation2 + $0xd0] sm:$0xff]
  %v2972 = vld [vmem:[#allocation2 + $0xd8] sm:$0xff]
  %v2973 = vld [vmem:[#allocation2 + $0xf0] sm:$0xff]
  %v2974 = vld [vmem:[#allocation2 + $0xf8] sm:$0xff]
  %v2975 = vld [vmem:[#allocation2 + $0x100] sm:$0xff]
  %v2976 = vld [vmem:[#allocation2 + $0x108] sm:$0xff]
  %v2977 = vld [vmem:[#allocation2 + $0x110] sm:$0xff]
  %v2978 = vld [vmem:[#allocation2 + $0x118] sm:$0xff]
  %v2979 = vld [vmem:[#allocation2 + $0x120] sm:$0xff]
  %v2980 = vld [vmem:[#allocation2 + $0x128] sm:$0xff]
  %v2981 = vld [vmem:[#allocation2 + $0x140] sm:$0xff]
  %v2982 = vld [vmem:[#allocation2 + $0x148] sm:$0xff]
  %v2983 = vld [vmem:[#allocation2 + $0x150] sm:$0xff]
  %v2984 = vld [vmem:[#allocation2 + $0x158] sm:$0xff]
  %v2985 = vld [vmem:[#allocation2 + $0x160] sm:$0xff]
  %v2986 = vld [vmem:[#allocation2 + $0x168] sm:$0xff]
  %v2987 = vld [vmem:[#allocation2 + $0x170] sm:$0xff]
  %v2988 = vld [vmem:[#allocation2 + $0x178] sm:$0xff]
  %v2989 = vld [vmem:[#allocation2 + $0x190] sm:$0xff]
  %v2990 = vld [vmem:[#allocation2 + $0x198] sm:$0xff]
  %v2991 = vld [vmem:[#allocation2 + $0x1a0] sm:$0xff]
  %v2992 = vld [vmem:[#allocation2 + $0x1a8] sm:$0xff]
  %v2993 = vld [vmem:[#allocation2 + $0x1b0] sm:$0xff]
  %v2994 = vld [vmem:[#allocation2 + $0x1b8] sm:$0xff]
  %v2995 = vld [vmem:[#allocation2 + $0x1c0] sm:$0xff]
  %v2996 = vld [vmem:[#allocation2 + $0x1c8] sm:$0xff]
  %v2997 = vld [vmem:[#allocation2 + $0x1e0] sm:$0xff]
  %v2998 = vld [vmem:[#allocation2 + $0x1e8] sm:$0xff]
  %v2999 = vld [vmem:[#allocation2 + $0x1f0] sm:$0xff]
  %v3000 = vld [vmem:[#allocation2 + $0x1f8] sm:$0xff]
  %v3001 = vld [vmem:[#allocation2 + $0x200] sm:$0xff]
  %v3002 = vld [vmem:[#allocation2 + $0x208] sm:$0xff]
  %v3003 = vld [vmem:[#allocation2 + $0x210] sm:$0xff]
  %v3004 = vld [vmem:[#allocation2 + $0x218] sm:$0xff]
  %v3005 = vld [vmem:[#allocation2 + $0x230] sm:$0xff]
  %v3006 = vld [vmem:[#allocation2 + $0x238] sm:$0xff]
  %v3007 = vld [vmem:[#allocation2 + $0x240] sm:$0xff]
  %v3008 = vld [vmem:[#allocation2 + $0x248] sm:$0xff]
  %v3009 = vld [vmem:[#allocation2 + $0x250] sm:$0xff]
  %v3010 = vld [vmem:[#allocation2 + $0x258] sm:$0xff]
  %v3011 = vld [vmem:[#allocation2 + $0x260] sm:$0xff]
  %v3012 = vld [vmem:[#allocation2 + $0x268] sm:$0xff]
  %v3013 = vpack.c.bf16 %v2950, %v2949
  %v3014 = vpack.c.bf16 %v2952, %v2951
  %v3015 = vpack.c.bf16 %v2954, %v2953
  %v3016 = vpack.c.bf16 %v2956, %v2955
  %v3017 = vpack.c.bf16 %v2958, %v2957
  %v3018 = vpack.c.bf16 %v2960, %v2959
  %v3019 = vpack.c.bf16 %v2962, %v2961
  %v3020 = vpack.c.bf16 %v2964, %v2963
  %v3021 = vpack.c.bf16 %v2966, %v2965
  %v3022 = vpack.c.bf16 %v2968, %v2967
  %v3023 = vpack.c.bf16 %v2970, %v2969
  %v3024 = vpack.c.bf16 %v2972, %v2971
  %v3025 = vpack.c.bf16 %v2974, %v2973
  %v3026 = vpack.c.bf16 %v2976, %v2975
  %v3027 = vpack.c.bf16 %v2978, %v2977
  %v3028 = vpack.c.bf16 %v2980, %v2979
  %v3029 = vpack.c.bf16 %v2982, %v2981
  %v3030 = vpack.c.bf16 %v2984, %v2983
  %v3031 = vpack.c.bf16 %v2986, %v2985
  %v3032 = vpack.c.bf16 %v2988, %v2987
  %v3033 = vpack.c.bf16 %v2990, %v2989
  %v3034 = vpack.c.bf16 %v2992, %v2991
  %v3035 = vpack.c.bf16 %v2994, %v2993
  %v3036 = vpack.c.bf16 %v2996, %v2995
  %v3037 = vpack.c.bf16 %v2998, %v2997
  %v3038 = vpack.c.bf16 %v3000, %v2999
  %v3039 = vpack.c.bf16 %v3002, %v3001
  %v3040 = vpack.c.bf16 %v3004, %v3003
  %v3041 = vpack.c.bf16 %v3006, %v3005
  %v3042 = vpack.c.bf16 %v3008, %v3007
  %v3043 = vpack.c.bf16 %v3010, %v3009
  %v3044 = vpack.c.bf16 %v3012, %v3011
  %v3045 = vld [vmem:[%s3] sm:$0xf]
  %v3046 = vld [vmem:[%s3 + $0x4] sm:$0xf]
  %v3047 = vld [vmem:[%s3 + $0x8] sm:$0xf]
  %v3048 = vld [vmem:[%s3 + $0xc] sm:$0xf]
  %v3049 = vld [vmem:[#allocation2 + $0x40] sm:$0xff]
  %v3050 = vld [vmem:[#allocation2 + $0x90] sm:$0xff]
  %v3051 = vld [vmem:[#allocation2 + $0xe0] sm:$0xff]
  %v3052 = vld [vmem:[#allocation2 + $0x130] sm:$0xff]
  %v3053 = vld [vmem:[#allocation2 + $0x180] sm:$0xff]
  %v3054 = vld [vmem:[#allocation2 + $0x1d0] sm:$0xff]
  %v3055 = vld [vmem:[#allocation2 + $0x220] sm:$0xff]
  %v3056 = vld [vmem:[#allocation2 + $0x270] sm:$0xff]
  %v3057 = vpack.c.bf16 %v2951, %v2950
  %v3058 = vpack.c.bf16 %v2953, %v2952
  %v3059 = vpack.c.bf16 %v2955, %v2954
  %v3060 = vpack.c.bf16 %v3049, %v2956
  %v3061 = vpack.c.bf16 %v2959, %v2958
  %v3062 = vpack.c.bf16 %v2961, %v2960
  %v3063 = vpack.c.bf16 %v2963, %v2962
  %v3064 = vpack.c.bf16 %v3050, %v2964
  %v3065 = vpack.c.bf16 %v2967, %v2966
  %v3066 = vpack.c.bf16 %v2969, %v2968
  %v3067 = vpack.c.bf16 %v2971, %v2970
  %v3068 = vpack.c.bf16 %v3051, %v2972
  %v3069 = vpack.c.bf16 %v2975, %v2974
  %v3070 = vpack.c.bf16 %v2977, %v2976
  %v3071 = vpack.c.bf16 %v2979, %v2978
  %v3072 = vpack.c.bf16 %v3052, %v2980
  %v3073 = vpack.c.bf16 %v2983, %v2982
  %v3074 = vpack.c.bf16 %v2985, %v2984
  %v3075 = vpack.c.bf16 %v2987, %v2986
  %v3076 = vpack.c.bf16 %v3053, %v2988
  %v3077 = vpack.c.bf16 %v2991, %v2990
  %v3078 = vpack.c.bf16 %v2993, %v2992
  %v3079 = vpack.c.bf16 %v2995, %v2994
  %v3080 = vpack.c.bf16 %v3054, %v2996
  %v3081 = vpack.c.bf16 %v2999, %v2998
  %v3082 = vpack.c.bf16 %v3001, %v3000
  %v3083 = vpack.c.bf16 %v3003, %v3002
  %v3084 = vpack.c.bf16 %v3055, %v3004
  %v3085 = vpack.c.bf16 %v3007, %v3006
  %v3086 = vpack.c.bf16 %v3009, %v3008
  %v3087 = vpack.c.bf16 %v3011, %v3010
  %v3088 = vpack.c.bf16 %v3056, %v3012
  %s3089 = scalar_lea.vmem %s3, 16
  %v3090 = vld [vmem:[%s3089] sm:$0xf]
  %v3091 = vld [vmem:[%s3089 + $0x4] sm:$0xf]
  %v3092 = vld [vmem:[%s3089 + $0x8] sm:$0xf]
  %v3093 = vld [vmem:[%s3089 + $0xc] sm:$0xf]
  %v3098 = vunpack.c.l.b16 %v3090
  %v3099 = vunpack.c.l.b16 %v3091
  %v3100 = vunpack.c.l.b16 %v3092
  %v3101 = vunpack.c.l.b16 %v3093
  %v3102 = vpack.c.b16 %v3099, %v3098
  %v3103 = vpack.c.b16 %v3101, %v3100
  %v3107 = vsel %vm2846, %v3057, 0
  %v3110 = vsel %vm2846, %v3058, 0
  %v3113 = vsel %vm2846, %v3059, 0
  %v3116 = vsel %vm2846, %v3060, 0
  %v3119 = vsel %vm2846, %v3061, 0
  %v3122 = vsel %vm2846, %v3062, 0
  %v3125 = vsel %vm2846, %v3063, 0
  %v3128 = vsel %vm2846, %v3064, 0
  %v3131 = vsel %vm2846, %v3065, 0
  %v3134 = vsel %vm2846, %v3066, 0
  %v3137 = vsel %vm2846, %v3067, 0
  %v3140 = vsel %vm2846, %v3068, 0
  %v3143 = vsel %vm2846, %v3069, 0
  %v3146 = vsel %vm2846, %v3070, 0
  %v3149 = vsel %vm2846, %v3071, 0
  %v3152 = vsel %vm2846, %v3072, 0
  %v3155 = vsel %vm2846, %v3073, 0
  %v3158 = vsel %vm2846, %v3074, 0
  %v3161 = vsel %vm2846, %v3075, 0
  %v3164 = vsel %vm2846, %v3076, 0
  %v3167 = vsel %vm2846, %v3077, 0
  %v3170 = vsel %vm2846, %v3078, 0
  %v3173 = vsel %vm2846, %v3079, 0
  %v3176 = vsel %vm2846, %v3080, 0
  %v3179 = vsel %vm2846, %v3081, 0
  %v3182 = vsel %vm2846, %v3082, 0
  %v3185 = vsel %vm2846, %v3083, 0
  %v3188 = vsel %vm2846, %v3084, 0
  %v3191 = vsel %vm2846, %v3085, 0
  %v3194 = vsel %vm2846, %v3086, 0
  %v3197 = vsel %vm2846, %v3087, 0
  %v3200 = vsel %vm2846, %v3088, 0
  %3202 = vmatprep.subr.bf16.mxu0 0
  %3203 = vmatpush1.bf16.msra.mxu0 %v3102
  %3204 = vmatprep.subr.bf16.mxu0 0
  %3205 = vmatpush1.bf16.msra.mxu0 %v3103
  %3206 = vmatprep.subr.bf16.mxu0 0
  %3207 = vmatpush1.bf16.msra.mxu0 0
  %3208 = vmatprep.subr.bf16.mxu0 0
  %3209 = vmatpush1.bf16.msra.mxu0 0
  %3210 = vmatprep.subr.bf16.mxu0 0
  %3211 = vmatpush1.bf16.msra.mxu0 0
  %3212 = vmatprep.subr.bf16.mxu0 0
  %3213 = vmatpush1.bf16.msra.mxu0 0
  %3214 = vmatprep.subr.bf16.mxu0 0
  %3215 = vmatpush1.bf16.msra.mxu0 0
  %3216 = vmatprep.subr.bf16.mxu0 0
  %3217 = vmatpush1.bf16.msra.mxu0 0
  %3218 = vmatprep.subr.bf16.mxu0 0
  %3219 = vmatpush1.bf16.msra.mxu0 0
  %3220 = vmatprep.subr.bf16.mxu0 0
  %3221 = vmatpush1.bf16.msra.mxu0 0
  %3222 = vmatprep.subr.bf16.mxu0 0
  %3223 = vmatpush1.bf16.msra.mxu0 0
  %3224 = vmatprep.subr.bf16.mxu0 0
  %3225 = vmatpush1.bf16.msra.mxu0 0
  %3226 = vmatprep.subr.bf16.mxu0 0
  %3227 = vmatpush1.bf16.msra.mxu0 0
  %3228 = vmatprep.subr.bf16.mxu0 0
  %3229 = vmatpush1.bf16.msra.mxu0 0
  %3230 = vmatprep.subr.bf16.mxu0 0
  %3231 = vmatpush1.bf16.msra.mxu0 0
  %3232 = vmatprep.subr.bf16.mxu0 0
  %3233 = vmatpush1.bf16.msra.mxu0 0
  %3234 = vmatprep.mubr.bf16.mxu0 0
  %3235 = vmatmul.mubr.bf16.gmra.mrb[0].mxu0 %v3107
  %v3236 = vpop.f32.mrb[0].mxu0
  %v3237 = vadd.f32 0.0, %v3236
  %v3238 = vpop.f32.mrb[0].mxu0
  %v3239 = vpop.f32.mrb[0].mxu0
  %v3240 = vadd.f32 0.0, %v3239
  %v3241 = vpop.f32.mrb[0].mxu0
  %3242 = vmatprep.mubr.bf16.mxu0 0
  %3243 = vmatmul.mubr.bf16.gmra.mrb[0].mxu0 %v3110
  %v3244 = vpop.f32.mrb[0].mxu0
  %v3245 = vadd.f32 0.0, %v3244
  %v3246 = vpop.f32.mrb[0].mxu0
  %v3247 = vpop.f32.mrb[0].mxu0
  %v3248 = vadd.f32 0.0, %v3247
  %v3249 = vpop.f32.mrb[0].mxu0
  %3250 = vmatprep.mubr.bf16.mxu0 0
  %3251 = vmatmul.mubr.bf16.gmra.mrb[0].mxu0 %v3113
  %v3252 = vpop.f32.mrb[0].mxu0
  %v3253 = vadd.f32 0.0, %v3252
  %v3254 = vpop.f32.mrb[0].mxu0
  %v3255 = vpop.f32.mrb[0].mxu0
  %v3256 = vadd.f32 0.0, %v3255
  %v3257 = vpop.f32.mrb[0].mxu0
  %3258 = vmatprep.mubr.bf16.mxu0 0
  %3259 = vmatmul.mubr.bf16.gmra.mrb[0].mxu0 %v3116
  %v3260 = vpop.f32.mrb[0].mxu0
  %v3261 = vadd.f32 0.0, %v3260
  %v3262 = vpop.f32.mrb[0].mxu0
  %v3263 = vpop.f32.mrb[0].mxu0
  %v3264 = vadd.f32 0.0, %v3263
  %v3265 = vpop.f32.mrb[0].mxu0
  %3266 = vmatprep.mubr.bf16.mxu0 0
  %3267 = vmatmul.mubr.bf16.gmra.mrb[0].mxu0 %v3119
  %v3268 = vpop.f32.mrb[0].mxu0
  %v3269 = vadd.f32 0.0, %v3268
  %v3270 = vpop.f32.mrb[0].mxu0
  %v3271 = vpop.f32.mrb[0].mxu0
  %v3272 = vadd.f32 0.0, %v3271
  %v3273 = vpop.f32.mrb[0].mxu0
  %3274 = vmatprep.mubr.bf16.mxu0 0
  %3275 = vmatmul.mubr.bf16.gmra.mrb[0].mxu0 %v3122
  %v3276 = vpop.f32.mrb[0].mxu0
  %v3277 = vadd.f32 0.0, %v3276
  %v3278 = vpop.f32.mrb[0].mxu0
  %v3279 = vpop.f32.mrb[0].mxu0
  %v3280 = vadd.f32 0.0, %v3279
  %v3281 = vpop.f32.mrb[0].mxu0
  %3282 = vmatprep.mubr.bf16.mxu0 0
  %3283 = vmatmul.mubr.bf16.gmra.mrb[0].mxu0 %v3125
  %v3284 = vpop.f32.mrb[0].mxu0
  %v3285 = vadd.f32 0.0, %v3284
  %v3286 = vpop.f32.mrb[0].mxu0
  %v3287 = vpop.f32.mrb[0].mxu0
  %v3288 = vadd.f32 0.0, %v3287
  %v3289 = vpop.f32.mrb[0].mxu0
  %3290 = vmatprep.mubr.bf16.mxu0 0
  %3291 = vmatmul.mubr.bf16.gmra.mrb[0].mxu0 %v3128
  %v3292 = vpop.f32.mrb[0].mxu0
  %v3293 = vadd.f32 0.0, %v3292
  %v3294 = vpop.f32.mrb[0].mxu0
  %v3295 = vpop.f32.mrb[0].mxu0
  %v3296 = vadd.f32 0.0, %v3295
  %v3297 = vpop.f32.mrb[0].mxu0
  %3298 = vmatprep.mubr.bf16.mxu0 0
  %3299 = vmatmul.mubr.bf16.gmra.mrb[0].mxu0 %v3131
  %v3300 = vpop.f32.mrb[0].mxu0
  %v3301 = vadd.f32 0.0, %v3300
  %v3302 = vpop.f32.mrb[0].mxu0
  %v3303 = vpop.f32.mrb[0].mxu0
  %v3304 = vadd.f32 0.0, %v3303
  %v3305 = vpop.f32.mrb[0].mxu0
  %3306 = vmatprep.mubr.bf16.mxu0 0
  %3307 = vmatmul.mubr.bf16.gmra.mrb[0].mxu0 %v3134
  %v3308 = vpop.f32.mrb[0].mxu0
  %v3309 = vadd.f32 0.0, %v3308
  %v3310 = vpop.f32.mrb[0].mxu0
  %v3311 = vpop.f32.mrb[0].mxu0
  %v3312 = vadd.f32 0.0, %v3311
  %v3313 = vpop.f32.mrb[0].mxu0
  %3314 = vmatprep.mubr.bf16.mxu0 0
  %3315 = vmatmul.mubr.bf16.gmra.mrb[0].mxu0 %v3137
  %v3316 = vpop.f32.mrb[0].mxu0
  %v3317 = vadd.f32 0.0, %v3316
  %v3318 = vpop.f32.mrb[0].mxu0
  %v3319 = vpop.f32.mrb[0].mxu0
  %v3320 = vadd.f32 0.0, %v3319
  %v3321 = vpop.f32.mrb[0].mxu0
  %3322 = vmatprep.mubr.bf16.mxu0 0
  %3323 = vmatmul.mubr.bf16.gmra.mrb[0].mxu0 %v3140
  %v3324 = vpop.f32.mrb[0].mxu0
  %v3325 = vadd.f32 0.0, %v3324
  %v3326 = vpop.f32.mrb[0].mxu0
  %v3327 = vpop.f32.mrb[0].mxu0
  %v3328 = vadd.f32 0.0, %v3327
  %v3329 = vpop.f32.mrb[0].mxu0
  %3330 = vmatprep.mubr.bf16.mxu0 0
  %3331 = vmatmul.mubr.bf16.gmra.mrb[0].mxu0 %v3143
  %v3332 = vpop.f32.mrb[0].mxu0
  %v3333 = vadd.f32 0.0, %v3332
  %v3334 = vpop.f32.mrb[0].mxu0
  %v3335 = vpop.f32.mrb[0].mxu0
  %v3336 = vadd.f32 0.0, %v3335
  %v3337 = vpop.f32.mrb[0].mxu0
  %3338 = vmatprep.mubr.bf16.mxu0 0
  %3339 = vmatmul.mubr.bf16.gmra.mrb[0].mxu0 %v3146
  %v3340 = vpop.f32.mrb[0].mxu0
  %v3341 = vadd.f32 0.0, %v3340
  %v3342 = vpop.f32.mrb[0].mxu0
  %v3343 = vpop.f32.mrb[0].mxu0
  %v3344 = vadd.f32 0.0, %v3343
  %v3345 = vpop.f32.mrb[0].mxu0
  %3346 = vmatprep.mubr.bf16.mxu0 0
  %3347 = vmatmul.mubr.bf16.gmra.mrb[0].mxu0 %v3149
  %v3348 = vpop.f32.mrb[0].mxu0
  %v3349 = vadd.f32 0.0, %v3348
  %v3350 = vpop.f32.mrb[0].mxu0
  %v3351 = vpop.f32.mrb[0].mxu0
  %v3352 = vadd.f32 0.0, %v3351
  %v3353 = vpop.f32.mrb[0].mxu0
  %3354 = vmatprep.mubr.bf16.mxu0 0
  %3355 = vmatmul.mubr.bf16.gmra.mrb[0].mxu0 %v3152
  %v3356 = vpop.f32.mrb[0].mxu0
  %v3357 = vadd.f32 0.0, %v3356
  %v3358 = vpop.f32.mrb[0].mxu0
  %v3359 = vpop.f32.mrb[0].mxu0
  %v3360 = vadd.f32 0.0, %v3359
  %v3361 = vpop.f32.mrb[0].mxu0
  %3362 = vmatprep.mubr.bf16.mxu0 0
  %3363 = vmatmul.mubr.bf16.gmra.mrb[0].mxu0 %v3155
  %v3364 = vpop.f32.mrb[0].mxu0
  %v3365 = vadd.f32 0.0, %v3364
  %v3366 = vpop.f32.mrb[0].mxu0
  %v3367 = vpop.f32.mrb[0].mxu0
  %v3368 = vadd.f32 0.0, %v3367
  %v3369 = vpop.f32.mrb[0].mxu0
  %3370 = vmatprep.mubr.bf16.mxu0 0
  %3371 = vmatmul.mubr.bf16.gmra.mrb[0].mxu0 %v3158
  %v3372 = vpop.f32.mrb[0].mxu0
  %v3373 = vadd.f32 0.0, %v3372
  %v3374 = vpop.f32.mrb[0].mxu0
  %v3375 = vpop.f32.mrb[0].mxu0
  %v3376 = vadd.f32 0.0, %v3375
  %v3377 = vpop.f32.mrb[0].mxu0
  %3378 = vmatprep.mubr.bf16.mxu0 0
  %3379 = vmatmul.mubr.bf16.gmra.mrb[0].mxu0 %v3161
  %v3380 = vpop.f32.mrb[0].mxu0
  %v3381 = vadd.f32 0.0, %v3380
  %v3382 = vpop.f32.mrb[0].mxu0
  %v3383 = vpop.f32.mrb[0].mxu0
  %v3384 = vadd.f32 0.0, %v3383
  %v3385 = vpop.f32.mrb[0].mxu0
  %3386 = vmatprep.mubr.bf16.mxu0 0
  %3387 = vmatmul.mubr.bf16.gmra.mrb[0].mxu0 %v3164
  %v3388 = vpop.f32.mrb[0].mxu0
  %v3389 = vadd.f32 0.0, %v3388
  %v3390 = vpop.f32.mrb[0].mxu0
  %v3391 = vpop.f32.mrb[0].mxu0
  %v3392 = vadd.f32 0.0, %v3391
  %v3393 = vpop.f32.mrb[0].mxu0
  %3394 = vmatprep.mubr.bf16.mxu0 0
  %3395 = vmatmul.mubr.bf16.gmra.mrb[0].mxu0 %v3167
  %v3396 = vpop.f32.mrb[0].mxu0
  %v3397 = vadd.f32 0.0, %v3396
  %v3398 = vpop.f32.mrb[0].mxu0
  %v3399 = vpop.f32.mrb[0].mxu0
  %v3400 = vadd.f32 0.0, %v3399
  %v3401 = vpop.f32.mrb[0].mxu0
  %3402 = vmatprep.mubr.bf16.mxu0 0
  %3403 = vmatmul.mubr.bf16.gmra.mrb[0].mxu0 %v3170
  %v3404 = vpop.f32.mrb[0].mxu0
  %v3405 = vadd.f32 0.0, %v3404
  %v3406 = vpop.f32.mrb[0].mxu0
  %v3407 = vpop.f32.mrb[0].mxu0
  %v3408 = vadd.f32 0.0, %v3407
  %v3409 = vpop.f32.mrb[0].mxu0
  %3410 = vmatprep.mubr.bf16.mxu0 0
  %3411 = vmatmul.mubr.bf16.gmra.mrb[0].mxu0 %v3173
  %v3412 = vpop.f32.mrb[0].mxu0
  %v3413 = vadd.f32 0.0, %v3412
  %v3414 = vpop.f32.mrb[0].mxu0
  %v3415 = vpop.f32.mrb[0].mxu0
  %v3416 = vadd.f32 0.0, %v3415
  %v3417 = vpop.f32.mrb[0].mxu0
  %3418 = vmatprep.mubr.bf16.mxu0 0
  %3419 = vmatmul.mubr.bf16.gmra.mrb[0].mxu0 %v3176
  %v3420 = vpop.f32.mrb[0].mxu0
  %v3421 = vadd.f32 0.0, %v3420
  %v3422 = vpop.f32.mrb[0].mxu0
  %v3423 = vpop.f32.mrb[0].mxu0
  %v3424 = vadd.f32 0.0, %v3423
  %v3425 = vpop.f32.mrb[0].mxu0
  %3426 = vmatprep.mubr.bf16.mxu0 0
  %3427 = vmatmul.mubr.bf16.gmra.mrb[0].mxu0 %v3179
  %v3428 = vpop.f32.mrb[0].mxu0
  %v3429 = vadd.f32 0.0, %v3428
  %v3430 = vpop.f32.mrb[0].mxu0
  %v3431 = vpop.f32.mrb[0].mxu0
  %v3432 = vadd.f32 0.0, %v3431
  %v3433 = vpop.f32.mrb[0].mxu0
  %3434 = vmatprep.mubr.bf16.mxu0 0
  %3435 = vmatmul.mubr.bf16.gmra.mrb[0].mxu0 %v3182
  %v3436 = vpop.f32.mrb[0].mxu0
  %v3437 = vadd.f32 0.0, %v3436
  %v3438 = vpop.f32.mrb[0].mxu0
  %v3439 = vpop.f32.mrb[0].mxu0
  %v3440 = vadd.f32 0.0, %v3439
  %v3441 = vpop.f32.mrb[0].mxu0
  %3442 = vmatprep.mubr.bf16.mxu0 0
  %3443 = vmatmul.mubr.bf16.gmra.mrb[0].mxu0 %v3185
  %v3444 = vpop.f32.mrb[0].mxu0
  %v3445 = vadd.f32 0.0, %v3444
  %v3446 = vpop.f32.mrb[0].mxu0
  %v3447 = vpop.f32.mrb[0].mxu0
  %v3448 = vadd.f32 0.0, %v3447
  %v3449 = vpop.f32.mrb[0].mxu0
  %3450 = vmatprep.mubr.bf16.mxu0 0
  %3451 = vmatmul.mubr.bf16.gmra.mrb[0].mxu0 %v3188
  %v3452 = vpop.f32.mrb[0].mxu0
  %v3453 = vadd.f32 0.0, %v3452
  %v3454 = vpop.f32.mrb[0].mxu0
  %v3455 = vpop.f32.mrb[0].mxu0
  %v3456 = vadd.f32 0.0, %v3455
  %v3457 = vpop.f32.mrb[0].mxu0
  %3458 = vmatprep.mubr.bf16.mxu0 0
  %3459 = vmatmul.mubr.bf16.gmra.mrb[0].mxu0 %v3191
  %v3460 = vpop.f32.mrb[0].mxu0
  %v3461 = vadd.f32 0.0, %v3460
  %v3462 = vpop.f32.mrb[0].mxu0
  %v3463 = vpop.f32.mrb[0].mxu0
  %v3464 = vadd.f32 0.0, %v3463
  %v3465 = vpop.f32.mrb[0].mxu0
  %3466 = vmatprep.mubr.bf16.mxu0 0
  %3467 = vmatmul.mubr.bf16.gmra.mrb[0].mxu0 %v3194
  %v3468 = vpop.f32.mrb[0].mxu0
  %v3469 = vadd.f32 0.0, %v3468
  %v3470 = vpop.f32.mrb[0].mxu0
  %v3471 = vpop.f32.mrb[0].mxu0
  %v3472 = vadd.f32 0.0, %v3471
  %v3473 = vpop.f32.mrb[0].mxu0
  %3474 = vmatprep.mubr.bf16.mxu0 0
  %3475 = vmatmul.mubr.bf16.gmra.mrb[0].mxu0 %v3197
  %v3476 = vpop.f32.mrb[0].mxu0
  %v3477 = vadd.f32 0.0, %v3476
  %v3478 = vpop.f32.mrb[0].mxu0
  %v3479 = vpop.f32.mrb[0].mxu0
  %v3480 = vadd.f32 0.0, %v3479
  %v3481 = vpop.f32.mrb[0].mxu0
  %3482 = vmatprep.mubr.bf16.mxu0 0
  %3483 = vmatmul.mubr.bf16.gmra.mrb[0].mxu0 %v3200
  %v3484 = vpop.f32.mrb[0].mxu0
  %v3485 = vadd.f32 0.0, %v3484
  %v3486 = vpop.f32.mrb[0].mxu0
  %v3487 = vpop.f32.mrb[0].mxu0
  %v3488 = vadd.f32 0.0, %v3487
  %v3489 = vpop.f32.mrb[0].mxu0
  %3490 = vdwg.mxu0
  %v3495 = vunpack.c.l.b16 %v3045
  %v3496 = vunpack.c.l.b16 %v3046
  %v3497 = vunpack.c.l.b16 %v3047
  %v3498 = vunpack.c.l.b16 %v3048
  %v3499 = vpack.c.b16 %v3496, %v3495
  %v3500 = vpack.c.b16 %v3498, %v3497
  %v3504 = vsel %vm2846, %v3013, 0
  %v3507 = vsel %vm2846, %v3014, 0
  %v3510 = vsel %vm2846, %v3015, 0
  %v3513 = vsel %vm2846, %v3016, 0
  %v3516 = vsel %vm2846, %v3017, 0
  %v3519 = vsel %vm2846, %v3018, 0
  %v3522 = vsel %vm2846, %v3019, 0
  %v3525 = vsel %vm2846, %v3020, 0
  %v3528 = vsel %vm2846, %v3021, 0
  %v3531 = vsel %vm2846, %v3022, 0
  %v3534 = vsel %vm2846, %v3023, 0
  %v3537 = vsel %vm2846, %v3024, 0
  %v3540 = vsel %vm2846, %v3025, 0
  %v3543 = vsel %vm2846, %v3026, 0
  %v3546 = vsel %vm2846, %v3027, 0
  %v3549 = vsel %vm2846, %v3028, 0
  %v3552 = vsel %vm2846, %v3029, 0
  %v3555 = vsel %vm2846, %v3030, 0
  %v3558 = vsel %vm2846, %v3031, 0
  %v3561 = vsel %vm2846, %v3032, 0
  %v3564 = vsel %vm2846, %v3033, 0
  %v3567 = vsel %vm2846, %v3034, 0
  %v3570 = vsel %vm2846, %v3035, 0
  %v3573 = vsel %vm2846, %v3036, 0
  %v3576 = vsel %vm2846, %v3037, 0
  %v3579 = vsel %vm2846, %v3038, 0
  %v3582 = vsel %vm2846, %v3039, 0
  %v3585 = vsel %vm2846, %v3040, 0
  %v3588 = vsel %vm2846, %v3041, 0
  %v3591 = vsel %vm2846, %v3042, 0
  %v3594 = vsel %vm2846, %v3043, 0
  %v3597 = vsel %vm2846, %v3044, 0
  %3599 = vmatprep.subr.bf16.mxu0 0
  %3600 = vmatpush1.bf16.msra.mxu0 %v3499
  %3601 = vmatprep.subr.bf16.mxu0 0
  %3602 = vmatpush1.bf16.msra.mxu0 %v3500
  %3603 = vmatprep.subr.bf16.mxu0 0
  %3604 = vmatpush1.bf16.msra.mxu0 0
  %3605 = vmatprep.subr.bf16.mxu0 0
  %3606 = vmatpush1.bf16.msra.mxu0 0
  %3607 = vmatprep.subr.bf16.mxu0 0
  %3608 = vmatpush1.bf16.msra.mxu0 0
  %3609 = vmatprep.subr.bf16.mxu0 0
  %3610 = vmatpush1.bf16.msra.mxu0 0
  %3611 = vmatprep.subr.bf16.mxu0 0
  %3612 = vmatpush1.bf16.msra.mxu0 0
  %3613 = vmatprep.subr.bf16.mxu0 0
  %3614 = vmatpush1.bf16.msra.mxu0 0
  %3615 = vmatprep.subr.bf16.mxu0 0
  %3616 = vmatpush1.bf16.msra.mxu0 0
  %3617 = vmatprep.subr.bf16.mxu0 0
  %3618 = vmatpush1.bf16.msra.mxu0 0
  %3619 = vmatprep.subr.bf16.mxu0 0
  %3620 = vmatpush1.bf16.msra.mxu0 0
  %3621 = vmatprep.subr.bf16.mxu0 0
  %3622 = vmatpush1.bf16.msra.mxu0 0
  %3623 = vmatprep.subr.bf16.mxu0 0
  %3624 = vmatpush1.bf16.msra.mxu0 0
  %3625 = vmatprep.subr.bf16.mxu0 0
  %3626 = vmatpush1.bf16.msra.mxu0 0
  %3627 = vmatprep.subr.bf16.mxu0 0
  %3628 = vmatpush1.bf16.msra.mxu0 0
  %3629 = vmatprep.subr.bf16.mxu0 0
  %3630 = vmatpush1.bf16.msra.mxu0 0
  %3631 = vmatprep.mubr.bf16.mxu0 0
  %3632 = vmatmul.mubr.bf16.gmra.mrb[0].mxu0 %v3504
  %v3633 = vpop.f32.mrb[0].mxu0
  %v3634 = vadd.f32 %v3237, %v3633
  %v3635 = vpop.f32.mrb[0].mxu0
  %v3636 = vpop.f32.mrb[0].mxu0
  %v3637 = vadd.f32 %v3240, %v3636
  %v3638 = vpop.f32.mrb[0].mxu0
  %3639 = vmatprep.mubr.bf16.mxu0 0
  %3640 = vmatmul.mubr.bf16.gmra.mrb[0].mxu0 %v3507
  %v3641 = vpop.f32.mrb[0].mxu0
  %v3642 = vadd.f32 %v3245, %v3641
  %v3643 = vpop.f32.mrb[0].mxu0
  %v3644 = vpop.f32.mrb[0].mxu0
  %v3645 = vadd.f32 %v3248, %v3644
  %v3646 = vpop.f32.mrb[0].mxu0
  %3647 = vmatprep.mubr.bf16.mxu0 0
  %3648 = vmatmul.mubr.bf16.gmra.mrb[0].mxu0 %v3510
  %v3649 = vpop.f32.mrb[0].mxu0
  %v3650 = vadd.f32 %v3253, %v3649
  %v3651 = vpop.f32.mrb[0].mxu0
  %v3652 = vpop.f32.mrb[0].mxu0
  %v3653 = vadd.f32 %v3256, %v3652
  %v3654 = vpop.f32.mrb[0].mxu0
  %3655 = vmatprep.mubr.bf16.mxu0 0
  %3656 = vmatmul.mubr.bf16.gmra.mrb[0].mxu0 %v3513
  %v3657 = vpop.f32.mrb[0].mxu0
  %v3658 = vadd.f32 %v3261, %v3657
  %v3659 = vpop.f32.mrb[0].mxu0
  %v3660 = vpop.f32.mrb[0].mxu0
  %v3661 = vadd.f32 %v3264, %v3660
  %v3662 = vpop.f32.mrb[0].mxu0
  %3663 = vmatprep.mubr.bf16.mxu0 0
  %3664 = vmatmul.mubr.bf16.gmra.mrb[0].mxu0 %v3516
  %v3665 = vpop.f32.mrb[0].mxu0
  %v3666 = vadd.f32 %v3269, %v3665
  %v3667 = vpop.f32.mrb[0].mxu0
  %v3668 = vpop.f32.mrb[0].mxu0
  %v3669 = vadd.f32 %v3272, %v3668
  %v3670 = vpop.f32.mrb[0].mxu0
  %3671 = vmatprep.mubr.bf16.mxu0 0
  %3672 = vmatmul.mubr.bf16.gmra.mrb[0].mxu0 %v3519
  %v3673 = vpop.f32.mrb[0].mxu0
  %v3674 = vadd.f32 %v3277, %v3673
  %v3675 = vpop.f32.mrb[0].mxu0
  %v3676 = vpop.f32.mrb[0].mxu0
  %v3677 = vadd.f32 %v3280, %v3676
  %v3678 = vpop.f32.mrb[0].mxu0
  %3679 = vmatprep.mubr.bf16.mxu0 0
  %3680 = vmatmul.mubr.bf16.gmra.mrb[0].mxu0 %v3522
  %v3681 = vpop.f32.mrb[0].mxu0
  %v3682 = vadd.f32 %v3285, %v3681
  %v3683 = vpop.f32.mrb[0].mxu0
  %v3684 = vpop.f32.mrb[0].mxu0
  %v3685 = vadd.f32 %v3288, %v3684
  %v3686 = vpop.f32.mrb[0].mxu0
  %3687 = vmatprep.mubr.bf16.mxu0 0
  %3688 = vmatmul.mubr.bf16.gmra.mrb[0].mxu0 %v3525
  %v3689 = vpop.f32.mrb[0].mxu0
  %v3690 = vadd.f32 %v3293, %v3689
  %v3691 = vpop.f32.mrb[0].mxu0
  %v3692 = vpop.f32.mrb[0].mxu0
  %v3693 = vadd.f32 %v3296, %v3692
  %v3694 = vpop.f32.mrb[0].mxu0
  %3695 = vmatprep.mubr.bf16.mxu0 0
  %3696 = vmatmul.mubr.bf16.gmra.mrb[0].mxu0 %v3528
  %v3697 = vpop.f32.mrb[0].mxu0
  %v3698 = vadd.f32 %v3301, %v3697
  %v3699 = vpop.f32.mrb[0].mxu0
  %v3700 = vpop.f32.mrb[0].mxu0
  %v3701 = vadd.f32 %v3304, %v3700
  %v3702 = vpop.f32.mrb[0].mxu0
  %3703 = vmatprep.mubr.bf16.mxu0 0
  %3704 = vmatmul.mubr.bf16.gmra.mrb[0].mxu0 %v3531
  %v3705 = vpop.f32.mrb[0].mxu0
  %v3706 = vadd.f32 %v3309, %v3705
  %v3707 = vpop.f32.mrb[0].mxu0
  %v3708 = vpop.f32.mrb[0].mxu0
  %v3709 = vadd.f32 %v3312, %v3708
  %v3710 = vpop.f32.mrb[0].mxu0
  %3711 = vmatprep.mubr.bf16.mxu0 0
  %3712 = vmatmul.mubr.bf16.gmra.mrb[0].mxu0 %v3534
  %v3713 = vpop.f32.mrb[0].mxu0
  %v3714 = vadd.f32 %v3317, %v3713
  %v3715 = vpop.f32.mrb[0].mxu0
  %v3716 = vpop.f32.mrb[0].mxu0
  %v3717 = vadd.f32 %v3320, %v3716
  %v3718 = vpop.f32.mrb[0].mxu0
  %3719 = vmatprep.mubr.bf16.mxu0 0
  %3720 = vmatmul.mubr.bf16.gmra.mrb[0].mxu0 %v3537
  %v3721 = vpop.f32.mrb[0].mxu0
  %v3722 = vadd.f32 %v3325, %v3721
  %v3723 = vpop.f32.mrb[0].mxu0
  %v3724 = vpop.f32.mrb[0].mxu0
  %v3725 = vadd.f32 %v3328, %v3724
  %v3726 = vpop.f32.mrb[0].mxu0
  %3727 = vmatprep.mubr.bf16.mxu0 0
  %3728 = vmatmul.mubr.bf16.gmra.mrb[0].mxu0 %v3540
  %v3729 = vpop.f32.mrb[0].mxu0
  %v3730 = vadd.f32 %v3333, %v3729
  %v3731 = vpop.f32.mrb[0].mxu0
  %v3732 = vpop.f32.mrb[0].mxu0
  %v3733 = vadd.f32 %v3336, %v3732
  %v3734 = vpop.f32.mrb[0].mxu0
  %3735 = vmatprep.mubr.bf16.mxu0 0
  %3736 = vmatmul.mubr.bf16.gmra.mrb[0].mxu0 %v3543
  %v3737 = vpop.f32.mrb[0].mxu0
  %v3738 = vadd.f32 %v3341, %v3737
  %v3739 = vpop.f32.mrb[0].mxu0
  %v3740 = vpop.f32.mrb[0].mxu0
  %v3741 = vadd.f32 %v3344, %v3740
  %v3742 = vpop.f32.mrb[0].mxu0
  %3743 = vmatprep.mubr.bf16.mxu0 0
  %3744 = vmatmul.mubr.bf16.gmra.mrb[0].mxu0 %v3546
  %v3745 = vpop.f32.mrb[0].mxu0
  %v3746 = vadd.f32 %v3349, %v3745
  %v3747 = vpop.f32.mrb[0].mxu0
  %v3748 = vpop.f32.mrb[0].mxu0
  %v3749 = vadd.f32 %v3352, %v3748
  %v3750 = vpop.f32.mrb[0].mxu0
  %3751 = vmatprep.mubr.bf16.mxu0 0
  %3752 = vmatmul.mubr.bf16.gmra.mrb[0].mxu0 %v3549
  %v3753 = vpop.f32.mrb[0].mxu0
  %v3754 = vadd.f32 %v3357, %v3753
  %v3755 = vpop.f32.mrb[0].mxu0
  %v3756 = vpop.f32.mrb[0].mxu0
  %v3757 = vadd.f32 %v3360, %v3756
  %v3758 = vpop.f32.mrb[0].mxu0
  %3759 = vmatprep.mubr.bf16.mxu0 0
  %3760 = vmatmul.mubr.bf16.gmra.mrb[0].mxu0 %v3552
  %v3761 = vpop.f32.mrb[0].mxu0
  %v3762 = vadd.f32 %v3365, %v3761
  %v3763 = vpop.f32.mrb[0].mxu0
  %v3764 = vpop.f32.mrb[0].mxu0
  %v3765 = vadd.f32 %v3368, %v3764
  %v3766 = vpop.f32.mrb[0].mxu0
  %3767 = vmatprep.mubr.bf16.mxu0 0
  %3768 = vmatmul.mubr.bf16.gmra.mrb[0].mxu0 %v3555
  %v3769 = vpop.f32.mrb[0].mxu0
  %v3770 = vadd.f32 %v3373, %v3769
  %v3771 = vpop.f32.mrb[0].mxu0
  %v3772 = vpop.f32.mrb[0].mxu0
  %v3773 = vadd.f32 %v3376, %v3772
  %v3774 = vpop.f32.mrb[0].mxu0
  %3775 = vmatprep.mubr.bf16.mxu0 0
  %3776 = vmatmul.mubr.bf16.gmra.mrb[0].mxu0 %v3558
  %v3777 = vpop.f32.mrb[0].mxu0
  %v3778 = vadd.f32 %v3381, %v3777
  %v3779 = vpop.f32.mrb[0].mxu0
  %v3780 = vpop.f32.mrb[0].mxu0
  %v3781 = vadd.f32 %v3384, %v3780
  %v3782 = vpop.f32.mrb[0].mxu0
  %3783 = vmatprep.mubr.bf16.mxu0 0
  %3784 = vmatmul.mubr.bf16.gmra.mrb[0].mxu0 %v3561
  %v3785 = vpop.f32.mrb[0].mxu0
  %v3786 = vadd.f32 %v3389, %v3785
  %v3787 = vpop.f32.mrb[0].mxu0
  %v3788 = vpop.f32.mrb[0].mxu0
  %v3789 = vadd.f32 %v3392, %v3788
  %v3790 = vpop.f32.mrb[0].mxu0
  %3791 = vmatprep.mubr.bf16.mxu0 0
  %3792 = vmatmul.mubr.bf16.gmra.mrb[0].mxu0 %v3564
  %v3793 = vpop.f32.mrb[0].mxu0
  %v3794 = vadd.f32 %v3397, %v3793
  %v3795 = vpop.f32.mrb[0].mxu0
  %v3796 = vpop.f32.mrb[0].mxu0
  %v3797 = vadd.f32 %v3400, %v3796
  %v3798 = vpop.f32.mrb[0].mxu0
  %3799 = vmatprep.mubr.bf16.mxu0 0
  %3800 = vmatmul.mubr.bf16.gmra.mrb[0].mxu0 %v3567
  %v3801 = vpop.f32.mrb[0].mxu0
  %v3802 = vadd.f32 %v3405, %v3801
  %v3803 = vpop.f32.mrb[0].mxu0
  %v3804 = vpop.f32.mrb[0].mxu0
  %v3805 = vadd.f32 %v3408, %v3804
  %v3806 = vpop.f32.mrb[0].mxu0
  %3807 = vmatprep.mubr.bf16.mxu0 0
  %3808 = vmatmul.mubr.bf16.gmra.mrb[0].mxu0 %v3570
  %v3809 = vpop.f32.mrb[0].mxu0
  %v3810 = vadd.f32 %v3413, %v3809
  %v3811 = vpop.f32.mrb[0].mxu0
  %v3812 = vpop.f32.mrb[0].mxu0
  %v3813 = vadd.f32 %v3416, %v3812
  %v3814 = vpop.f32.mrb[0].mxu0
  %3815 = vmatprep.mubr.bf16.mxu0 0
  %3816 = vmatmul.mubr.bf16.gmra.mrb[0].mxu0 %v3573
  %v3817 = vpop.f32.mrb[0].mxu0
  %v3818 = vadd.f32 %v3421, %v3817
  %v3819 = vpop.f32.mrb[0].mxu0
  %v3820 = vpop.f32.mrb[0].mxu0
  %v3821 = vadd.f32 %v3424, %v3820
  %v3822 = vpop.f32.mrb[0].mxu0
  %3823 = vmatprep.mubr.bf16.mxu0 0
  %3824 = vmatmul.mubr.bf16.gmra.mrb[0].mxu0 %v3576
  %v3825 = vpop.f32.mrb[0].mxu0
  %v3826 = vadd.f32 %v3429, %v3825
  %v3827 = vpop.f32.mrb[0].mxu0
  %v3828 = vpop.f32.mrb[0].mxu0
  %v3829 = vadd.f32 %v3432, %v3828
  %v3830 = vpop.f32.mrb[0].mxu0
  %3831 = vmatprep.mubr.bf16.mxu0 0
  %3832 = vmatmul.mubr.bf16.gmra.mrb[0].mxu0 %v3579
  %v3833 = vpop.f32.mrb[0].mxu0
  %v3834 = vadd.f32 %v3437, %v3833
  %v3835 = vpop.f32.mrb[0].mxu0
  %v3836 = vpop.f32.mrb[0].mxu0
  %v3837 = vadd.f32 %v3440, %v3836
  %v3838 = vpop.f32.mrb[0].mxu0
  %3839 = vmatprep.mubr.bf16.mxu0 0
  %3840 = vmatmul.mubr.bf16.gmra.mrb[0].mxu0 %v3582
  %v3841 = vpop.f32.mrb[0].mxu0
  %v3842 = vadd.f32 %v3445, %v3841
  %v3843 = vpop.f32.mrb[0].mxu0
  %v3844 = vpop.f32.mrb[0].mxu0
  %v3845 = vadd.f32 %v3448, %v3844
  %v3846 = vpop.f32.mrb[0].mxu0
  %3847 = vmatprep.mubr.bf16.mxu0 0
  %3848 = vmatmul.mubr.bf16.gmra.mrb[0].mxu0 %v3585
  %v3849 = vpop.f32.mrb[0].mxu0
  %v3850 = vadd.f32 %v3453, %v3849
  %v3851 = vpop.f32.mrb[0].mxu0
  %v3852 = vpop.f32.mrb[0].mxu0
  %v3853 = vadd.f32 %v3456, %v3852
  %v3854 = vpop.f32.mrb[0].mxu0
  %3855 = vmatprep.mubr.bf16.mxu0 0
  %3856 = vmatmul.mubr.bf16.gmra.mrb[0].mxu0 %v3588
  %v3857 = vpop.f32.mrb[0].mxu0
  %v3858 = vadd.f32 %v3461, %v3857
  %v3859 = vpop.f32.mrb[0].mxu0
  %v3860 = vpop.f32.mrb[0].mxu0
  %v3861 = vadd.f32 %v3464, %v3860
  %v3862 = vpop.f32.mrb[0].mxu0
  %3863 = vmatprep.mubr.bf16.mxu0 0
  %3864 = vmatmul.mubr.bf16.gmra.mrb[0].mxu0 %v3591
  %v3865 = vpop.f32.mrb[0].mxu0
  %v3866 = vadd.f32 %v3469, %v3865
  %v3867 = vpop.f32.mrb[0].mxu0
  %v3868 = vpop.f32.mrb[0].mxu0
  %v3869 = vadd.f32 %v3472, %v3868
  %v3870 = vpop.f32.mrb[0].mxu0
  %3871 = vmatprep.mubr.bf16.mxu0 0
  %3872 = vmatmul.mubr.bf16.gmra.mrb[0].mxu0 %v3594
  %v3873 = vpop.f32.mrb[0].mxu0
  %v3874 = vadd.f32 %v3477, %v3873
  %v3875 = vpop.f32.mrb[0].mxu0
  %v3876 = vpop.f32.mrb[0].mxu0
  %v3877 = vadd.f32 %v3480, %v3876
  %v3878 = vpop.f32.mrb[0].mxu0
  %3879 = vmatprep.mubr.bf16.mxu0 0
  %3880 = vmatmul.mubr.bf16.gmra.mrb[0].mxu0 %v3597
  %v3881 = vpop.f32.mrb[0].mxu0
  %v3882 = vadd.f32 %v3485, %v3881
  %v3883 = vpop.f32.mrb[0].mxu0
  %v3884 = vpop.f32.mrb[0].mxu0
  %v3885 = vadd.f32 %v3488, %v3884
  %v3886 = vpop.f32.mrb[0].mxu0
  %3887 = vdwg.mxu0
  %v3888 = vld [vmem:[#allocation2 + $0x10] sm:$0xff]
  %v3889 = vld [vmem:[#allocation2 + $0x18] sm:$0xff]
  %v3890 = vld [vmem:[#allocation2 + $0x20] sm:$0xff]
  %v3891 = vld [vmem:[#allocation2 + $0x28] sm:$0xff]
  %v3892 = vld [vmem:[#allocation2 + $0x30] sm:$0xff]
  %v3893 = vld [vmem:[#allocation2 + $0x38] sm:$0xff]
  %v3894 = vld [vmem:[#allocation2 + $0x40] sm:$0xff]
  %v3895 = vld [vmem:[#allocation2 + $0x48] sm:$0xff]
  %v3896 = vld [vmem:[#allocation2 + $0x60] sm:$0xff]
  %v3897 = vld [vmem:[#allocation2 + $0x68] sm:$0xff]
  %v3898 = vld [vmem:[#allocation2 + $0x70] sm:$0xff]
  %v3899 = vld [vmem:[#allocation2 + $0x78] sm:$0xff]
  %v3900 = vld [vmem:[#allocation2 + $0x80] sm:$0xff]
  %v3901 = vld [vmem:[#allocation2 + $0x88] sm:$0xff]
  %v3902 = vld [vmem:[#allocation2 + $0x90] sm:$0xff]
  %v3903 = vld [vmem:[#allocation2 + $0x98] sm:$0xff]
  %v3904 = vld [vmem:[#allocation2 + $0xb0] sm:$0xff]
  %v3905 = vld [vmem:[#allocation2 + $0xb8] sm:$0xff]
  %v3906 = vld [vmem:[#allocation2 + $0xc0] sm:$0xff]
  %v3907 = vld [vmem:[#allocation2 + $0xc8] sm:$0xff]
  %v3908 = vld [vmem:[#allocation2 + $0xd0] sm:$0xff]
  %v3909 = vld [vmem:[#allocation2 + $0xd8] sm:$0xff]
  %v3910 = vld [vmem:[#allocation2 + $0xe0] sm:$0xff]
  %v3911 = vld [vmem:[#allocation2 + $0xe8] sm:$0xff]
  %v3912 = vld [vmem:[#allocation2 + $0x100] sm:$0xff]
  %v3913 = vld [vmem:[#allocation2 + $0x108] sm:$0xff]
  %v3914 = vld [vmem:[#allocation2 + $0x110] sm:$0xff]
  %v3915 = vld [vmem:[#allocation2 + $0x118] sm:$0xff]
  %v3916 = vld [vmem:[#allocation2 + $0x120] sm:$0xff]
  %v3917 = vld [vmem:[#allocation2 + $0x128] sm:$0xff]
  %v3918 = vld [vmem:[#allocation2 + $0x130] sm:$0xff]
  %v3919 = vld [vmem:[#allocation2 + $0x138] sm:$0xff]
  %v3920 = vld [vmem:[#allocation2 + $0x150] sm:$0xff]
  %v3921 = vld [vmem:[#allocation2 + $0x158] sm:$0xff]
  %v3922 = vld [vmem:[#allocation2 + $0x160] sm:$0xff]
  %v3923 = vld [vmem:[#allocation2 + $0x168] sm:$0xff]
  %v3924 = vld [vmem:[#allocation2 + $0x170] sm:$0xff]
  %v3925 = vld [vmem:[#allocation2 + $0x178] sm:$0xff]
  %v3926 = vld [vmem:[#allocation2 + $0x180] sm:$0xff]
  %v3927 = vld [vmem:[#allocation2 + $0x188] sm:$0xff]
  %v3928 = vld [vmem:[#allocation2 + $0x1a0] sm:$0xff]
  %v3929 = vld [vmem:[#allocation2 + $0x1a8] sm:$0xff]
  %v3930 = vld [vmem:[#allocation2 + $0x1b0] sm:$0xff]
  %v3931 = vld [vmem:[#allocation2 + $0x1b8] sm:$0xff]
  %v3932 = vld [vmem:[#allocation2 + $0x1c0] sm:$0xff]
  %v3933 = vld [vmem:[#allocation2 + $0x1c8] sm:$0xff]
  %v3934 = vld [vmem:[#allocation2 + $0x1d0] sm:$0xff]
  %v3935 = vld [vmem:[#allocation2 + $0x1d8] sm:$0xff]
  %v3936 = vld [vmem:[#allocation2 + $0x1f0] sm:$0xff]
  %v3937 = vld [vmem:[#allocation2 + $0x1f8] sm:$0xff]
  %v3938 = vld [vmem:[#allocation2 + $0x200] sm:$0xff]
  %v3939 = vld [vmem:[#allocation2 + $0x208] sm:$0xff]
  %v3940 = vld [vmem:[#allocation2 + $0x210] sm:$0xff]
  %v3941 = vld [vmem:[#allocation2 + $0x218] sm:$0xff]
  %v3942 = vld [vmem:[#allocation2 + $0x220] sm:$0xff]
  %v3943 = vld [vmem:[#allocation2 + $0x228] sm:$0xff]
  %v3944 = vld [vmem:[#allocation2 + $0x240] sm:$0xff]
  %v3945 = vld [vmem:[#allocation2 + $0x248] sm:$0xff]
  %v3946 = vld [vmem:[#allocation2 + $0x250] sm:$0xff]
  %v3947 = vld [vmem:[#allocation2 + $0x258] sm:$0xff]
  %v3948 = vld [vmem:[#allocation2 + $0x260] sm:$0xff]
  %v3949 = vld [vmem:[#allocation2 + $0x268] sm:$0xff]
  %v3950 = vld [vmem:[#allocation2 + $0x270] sm:$0xff]
  %v3951 = vld [vmem:[#allocation2 + $0x278] sm:$0xff]
  %v3952 = vpack.c.bf16 %v3889, %v3888
  %v3953 = vpack.c.bf16 %v3891, %v3890
  %v3954 = vpack.c.bf16 %v3893, %v3892
  %v3955 = vpack.c.bf16 %v3895, %v3894
  %v3956 = vpack.c.bf16 %v3897, %v3896
  %v3957 = vpack.c.bf16 %v3899, %v3898
  %v3958 = vpack.c.bf16 %v3901, %v3900
  %v3959 = vpack.c.bf16 %v3903, %v3902
  %v3960 = vpack.c.bf16 %v3905, %v3904
  %v3961 = vpack.c.bf16 %v3907, %v3906
  %v3962 = vpack.c.bf16 %v3909, %v3908
  %v3963 = vpack.c.bf16 %v3911, %v3910
  %v3964 = vpack.c.bf16 %v3913, %v3912
  %v3965 = vpack.c.bf16 %v3915, %v3914
  %v3966 = vpack.c.bf16 %v3917, %v3916
  %v3967 = vpack.c.bf16 %v3919, %v3918
  %v3968 = vpack.c.bf16 %v3921, %v3920
  %v3969 = vpack.c.bf16 %v3923, %v3922
  %v3970 = vpack.c.bf16 %v3925, %v3924
  %v3971 = vpack.c.bf16 %v3927, %v3926
  %v3972 = vpack.c.bf16 %v3929, %v3928
  %v3973 = vpack.c.bf16 %v3931, %v3930
  %v3974 = vpack.c.bf16 %v3933, %v3932
  %v3975 = vpack.c.bf16 %v3935, %v3934
  %v3976 = vpack.c.bf16 %v3937, %v3936
  %v3977 = vpack.c.bf16 %v3939, %v3938
  %v3978 = vpack.c.bf16 %v3941, %v3940
  %v3979 = vpack.c.bf16 %v3943, %v3942
  %v3980 = vpack.c.bf16 %v3945, %v3944
  %v3981 = vpack.c.bf16 %v3947, %v3946
  %v3982 = vpack.c.bf16 %v3949, %v3948
  %v3983 = vpack.c.bf16 %v3951, %v3950
  %s3984 = scalar_lea.vmem %s3, 32
  %v3985 = vld [vmem:[%s3984] sm:$0xf]
  %v3986 = vld [vmem:[%s3984 + $0x4] sm:$0xf]
  %v3987 = vld [vmem:[%s3984 + $0x8] sm:$0xf]
  %v3988 = vld [vmem:[%s3984 + $0xc] sm:$0xf]
  %v3993 = vunpack.c.l.b16 %v3985
  %v3994 = vunpack.c.l.b16 %v3986
  %v3995 = vunpack.c.l.b16 %v3987
  %v3996 = vunpack.c.l.b16 %v3988
  %v3997 = vpack.c.b16 %v3994, %v3993
  %v3998 = vpack.c.b16 %v3996, %v3995
  %v4002 = vsel %vm2846, %v3952, 0
  %v4005 = vsel %vm2846, %v3953, 0
  %v4008 = vsel %vm2846, %v3954, 0
  %v4011 = vsel %vm2846, %v3955, 0
  %v4014 = vsel %vm2846, %v3956, 0
  %v4017 = vsel %vm2846, %v3957, 0
  %v4020 = vsel %vm2846, %v3958, 0
  %v4023 = vsel %vm2846, %v3959, 0
  %v4026 = vsel %vm2846, %v3960, 0
  %v4029 = vsel %vm2846, %v3961, 0
  %v4032 = vsel %vm2846, %v3962, 0
  %v4035 = vsel %vm2846, %v3963, 0
  %v4038 = vsel %vm2846, %v3964, 0
  %v4041 = vsel %vm2846, %v3965, 0
  %v4044 = vsel %vm2846, %v3966, 0
  %v4047 = vsel %vm2846, %v3967, 0
  %v4050 = vsel %vm2846, %v3968, 0
  %v4053 = vsel %vm2846, %v3969, 0
  %v4056 = vsel %vm2846, %v3970, 0
  %v4059 = vsel %vm2846, %v3971, 0
  %v4062 = vsel %vm2846, %v3972, 0
  %v4065 = vsel %vm2846, %v3973, 0
  %v4068 = vsel %vm2846, %v3974, 0
  %v4071 = vsel %vm2846, %v3975, 0
  %v4074 = vsel %vm2846, %v3976, 0
  %v4077 = vsel %vm2846, %v3977, 0
  %v4080 = vsel %vm2846, %v3978, 0
  %v4083 = vsel %vm2846, %v3979, 0
  %v4086 = vsel %vm2846, %v3980, 0
  %v4089 = vsel %vm2846, %v3981, 0
  %v4092 = vsel %vm2846, %v3982, 0
  %v4095 = vsel %vm2846, %v3983, 0
  %4097 = vmatprep.subr.bf16.mxu0 0
  %4098 = vmatpush1.bf16.msra.mxu0 %v3997
  %4099 = vmatprep.subr.bf16.mxu0 0
  %4100 = vmatpush1.bf16.msra.mxu0 %v3998
  %4101 = vmatprep.subr.bf16.mxu0 0
  %4102 = vmatpush1.bf16.msra.mxu0 0
  %4103 = vmatprep.subr.bf16.mxu0 0
  %4104 = vmatpush1.bf16.msra.mxu0 0
  %4105 = vmatprep.subr.bf16.mxu0 0
  %4106 = vmatpush1.bf16.msra.mxu0 0
  %4107 = vmatprep.subr.bf16.mxu0 0
  %4108 = vmatpush1.bf16.msra.mxu0 0
  %4109 = vmatprep.subr.bf16.mxu0 0
  %4110 = vmatpush1.bf16.msra.mxu0 0
  %4111 = vmatprep.subr.bf16.mxu0 0
  %4112 = vmatpush1.bf16.msra.mxu0 0
  %4113 = vmatprep.subr.bf16.mxu0 0
  %4114 = vmatpush1.bf16.msra.mxu0 0
  %4115 = vmatprep.subr.bf16.mxu0 0
  %4116 = vmatpush1.bf16.msra.mxu0 0
  %4117 = vmatprep.subr.bf16.mxu0 0
  %4118 = vmatpush1.bf16.msra.mxu0 0
  %4119 = vmatprep.subr.bf16.mxu0 0
  %4120 = vmatpush1.bf16.msra.mxu0 0
  %4121 = vmatprep.subr.bf16.mxu0 0
  %4122 = vmatpush1.bf16.msra.mxu0 0
  %4123 = vmatprep.subr.bf16.mxu0 0
  %4124 = vmatpush1.bf16.msra.mxu0 0
  %4125 = vmatprep.subr.bf16.mxu0 0
  %4126 = vmatpush1.bf16.msra.mxu0 0
  %4127 = vmatprep.subr.bf16.mxu0 0
  %4128 = vmatpush1.bf16.msra.mxu0 0
  %4129 = vmatprep.mubr.bf16.mxu0 0
  %4130 = vmatmul.mubr.bf16.gmra.mrb[0].mxu0 %v4002
  %v4131 = vpop.f32.mrb[0].mxu0
  %v4132 = vadd.f32 0.0, %v4131
  %v4133 = vpop.f32.mrb[0].mxu0
  %v4134 = vpop.f32.mrb[0].mxu0
  %v4135 = vadd.f32 0.0, %v4134
  %v4136 = vpop.f32.mrb[0].mxu0
  %4137 = vmatprep.mubr.bf16.mxu0 0
  %4138 = vmatmul.mubr.bf16.gmra.mrb[0].mxu0 %v4005
  %v4139 = vpop.f32.mrb[0].mxu0
  %v4140 = vadd.f32 0.0, %v4139
  %v4141 = vpop.f32.mrb[0].mxu0
  %v4142 = vpop.f32.mrb[0].mxu0
  %v4143 = vadd.f32 0.0, %v4142
  %v4144 = vpop.f32.mrb[0].mxu0
  %4145 = vmatprep.mubr.bf16.mxu0 0
  %4146 = vmatmul.mubr.bf16.gmra.mrb[0].mxu0 %v4008
  %v4147 = vpop.f32.mrb[0].mxu0
  %v4148 = vadd.f32 0.0, %v4147
  %v4149 = vpop.f32.mrb[0].mxu0
  %v4150 = vpop.f32.mrb[0].mxu0
  %v4151 = vadd.f32 0.0, %v4150
  %v4152 = vpop.f32.mrb[0].mxu0
  %4153 = vmatprep.mubr.bf16.mxu0 0
  %4154 = vmatmul.mubr.bf16.gmra.mrb[0].mxu0 %v4011
  %v4155 = vpop.f32.mrb[0].mxu0
  %v4156 = vadd.f32 0.0, %v4155
  %v4157 = vpop.f32.mrb[0].mxu0
  %v4158 = vpop.f32.mrb[0].mxu0
  %v4159 = vadd.f32 0.0, %v4158
  %v4160 = vpop.f32.mrb[0].mxu0
  %4161 = vmatprep.mubr.bf16.mxu0 0
  %4162 = vmatmul.mubr.bf16.gmra.mrb[0].mxu0 %v4014
  %v4163 = vpop.f32.mrb[0].mxu0
  %v4164 = vadd.f32 0.0, %v4163
  %v4165 = vpop.f32.mrb[0].mxu0
  %v4166 = vpop.f32.mrb[0].mxu0
  %v4167 = vadd.f32 0.0, %v4166
  %v4168 = vpop.f32.mrb[0].mxu0
  %4169 = vmatprep.mubr.bf16.mxu0 0
  %4170 = vmatmul.mubr.bf16.gmra.mrb[0].mxu0 %v4017
  %v4171 = vpop.f32.mrb[0].mxu0
  %v4172 = vadd.f32 0.0, %v4171
  %v4173 = vpop.f32.mrb[0].mxu0
  %v4174 = vpop.f32.mrb[0].mxu0
  %v4175 = vadd.f32 0.0, %v4174
  %v4176 = vpop.f32.mrb[0].mxu0
  %4177 = vmatprep.mubr.bf16.mxu0 0
  %4178 = vmatmul.mubr.bf16.gmra.mrb[0].mxu0 %v4020
  %v4179 = vpop.f32.mrb[0].mxu0
  %v4180 = vadd.f32 0.0, %v4179
  %v4181 = vpop.f32.mrb[0].mxu0
  %v4182 = vpop.f32.mrb[0].mxu0
  %v4183 = vadd.f32 0.0, %v4182
  %v4184 = vpop.f32.mrb[0].mxu0
  %4185 = vmatprep.mubr.bf16.mxu0 0
  %4186 = vmatmul.mubr.bf16.gmra.mrb[0].mxu0 %v4023
  %v4187 = vpop.f32.mrb[0].mxu0
  %v4188 = vadd.f32 0.0, %v4187
  %v4189 = vpop.f32.mrb[0].mxu0
  %v4190 = vpop.f32.mrb[0].mxu0
  %v4191 = vadd.f32 0.0, %v4190
  %v4192 = vpop.f32.mrb[0].mxu0
  %4193 = vmatprep.mubr.bf16.mxu0 0
  %4194 = vmatmul.mubr.bf16.gmra.mrb[0].mxu0 %v4026
  %v4195 = vpop.f32.mrb[0].mxu0
  %v4196 = vadd.f32 0.0, %v4195
  %v4197 = vpop.f32.mrb[0].mxu0
  %v4198 = vpop.f32.mrb[0].mxu0
  %v4199 = vadd.f32 0.0, %v4198
  %v4200 = vpop.f32.mrb[0].mxu0
  %4201 = vmatprep.mubr.bf16.mxu0 0
  %4202 = vmatmul.mubr.bf16.gmra.mrb[0].mxu0 %v4029
  %v4203 = vpop.f32.mrb[0].mxu0
  %v4204 = vadd.f32 0.0, %v4203
  %v4205 = vpop.f32.mrb[0].mxu0
  %v4206 = vpop.f32.mrb[0].mxu0
  %v4207 = vadd.f32 0.0, %v4206
  %v4208 = vpop.f32.mrb[0].mxu0
  %4209 = vmatprep.mubr.bf16.mxu0 0
  %4210 = vmatmul.mubr.bf16.gmra.mrb[0].mxu0 %v4032
  %v4211 = vpop.f32.mrb[0].mxu0
  %v4212 = vadd.f32 0.0, %v4211
  %v4213 = vpop.f32.mrb[0].mxu0
  %v4214 = vpop.f32.mrb[0].mxu0
  %v4215 = vadd.f32 0.0, %v4214
  %v4216 = vpop.f32.mrb[0].mxu0
  %4217 = vmatprep.mubr.bf16.mxu0 0
  %4218 = vmatmul.mubr.bf16.gmra.mrb[0].mxu0 %v4035
  %v4219 = vpop.f32.mrb[0].mxu0
  %v4220 = vadd.f32 0.0, %v4219
  %v4221 = vpop.f32.mrb[0].mxu0
  %v4222 = vpop.f32.mrb[0].mxu0
  %v4223 = vadd.f32 0.0, %v4222
  %v4224 = vpop.f32.mrb[0].mxu0
  %4225 = vmatprep.mubr.bf16.mxu0 0
  %4226 = vmatmul.mubr.bf16.gmra.mrb[0].mxu0 %v4038
  %v4227 = vpop.f32.mrb[0].mxu0
  %v4228 = vadd.f32 0.0, %v4227
  %v4229 = vpop.f32.mrb[0].mxu0
  %v4230 = vpop.f32.mrb[0].mxu0
  %v4231 = vadd.f32 0.0, %v4230
  %v4232 = vpop.f32.mrb[0].mxu0
  %4233 = vmatprep.mubr.bf16.mxu0 0
  %4234 = vmatmul.mubr.bf16.gmra.mrb[0].mxu0 %v4041
  %v4235 = vpop.f32.mrb[0].mxu0
  %v4236 = vadd.f32 0.0, %v4235
  %v4237 = vpop.f32.mrb[0].mxu0
  %v4238 = vpop.f32.mrb[0].mxu0
  %v4239 = vadd.f32 0.0, %v4238
  %v4240 = vpop.f32.mrb[0].mxu0
  %4241 = vmatprep.mubr.bf16.mxu0 0
  %4242 = vmatmul.mubr.bf16.gmra.mrb[0].mxu0 %v4044
  %v4243 = vpop.f32.mrb[0].mxu0
  %v4244 = vadd.f32 0.0, %v4243
  %v4245 = vpop.f32.mrb[0].mxu0
  %v4246 = vpop.f32.mrb[0].mxu0
  %v4247 = vadd.f32 0.0, %v4246
  %v4248 = vpop.f32.mrb[0].mxu0
  %4249 = vmatprep.mubr.bf16.mxu0 0
  %4250 = vmatmul.mubr.bf16.gmra.mrb[0].mxu0 %v4047
  %v4251 = vpop.f32.mrb[0].mxu0
  %v4252 = vadd.f32 0.0, %v4251
  %v4253 = vpop.f32.mrb[0].mxu0
  %v4254 = vpop.f32.mrb[0].mxu0
  %v4255 = vadd.f32 0.0, %v4254
  %v4256 = vpop.f32.mrb[0].mxu0
  %4257 = vmatprep.mubr.bf16.mxu0 0
  %4258 = vmatmul.mubr.bf16.gmra.mrb[0].mxu0 %v4050
  %v4259 = vpop.f32.mrb[0].mxu0
  %v4260 = vadd.f32 0.0, %v4259
  %v4261 = vpop.f32.mrb[0].mxu0
  %v4262 = vpop.f32.mrb[0].mxu0
  %v4263 = vadd.f32 0.0, %v4262
  %v4264 = vpop.f32.mrb[0].mxu0
  %4265 = vmatprep.mubr.bf16.mxu0 0
  %4266 = vmatmul.mubr.bf16.gmra.mrb[0].mxu0 %v4053
  %v4267 = vpop.f32.mrb[0].mxu0
  %v4268 = vadd.f32 0.0, %v4267
  %v4269 = vpop.f32.mrb[0].mxu0
  %v4270 = vpop.f32.mrb[0].mxu0
  %v4271 = vadd.f32 0.0, %v4270
  %v4272 = vpop.f32.mrb[0].mxu0
  %4273 = vmatprep.mubr.bf16.mxu0 0
  %4274 = vmatmul.mubr.bf16.gmra.mrb[0].mxu0 %v4056
  %v4275 = vpop.f32.mrb[0].mxu0
  %v4276 = vadd.f32 0.0, %v4275
  %v4277 = vpop.f32.mrb[0].mxu0
  %v4278 = vpop.f32.mrb[0].mxu0
  %v4279 = vadd.f32 0.0, %v4278
  %v4280 = vpop.f32.mrb[0].mxu0
  %4281 = vmatprep.mubr.bf16.mxu0 0
  %4282 = vmatmul.mubr.bf16.gmra.mrb[0].mxu0 %v4059
  %v4283 = vpop.f32.mrb[0].mxu0
  %v4284 = vadd.f32 0.0, %v4283
  %v4285 = vpop.f32.mrb[0].mxu0
  %v4286 = vpop.f32.mrb[0].mxu0
  %v4287 = vadd.f32 0.0, %v4286
  %v4288 = vpop.f32.mrb[0].mxu0
  %4289 = vmatprep.mubr.bf16.mxu0 0
  %4290 = vmatmul.mubr.bf16.gmra.mrb[0].mxu0 %v4062
  %v4291 = vpop.f32.mrb[0].mxu0
  %v4292 = vadd.f32 0.0, %v4291
  %v4293 = vpop.f32.mrb[0].mxu0
  %v4294 = vpop.f32.mrb[0].mxu0
  %v4295 = vadd.f32 0.0, %v4294
  %v4296 = vpop.f32.mrb[0].mxu0
  %4297 = vmatprep.mubr.bf16.mxu0 0
  %4298 = vmatmul.mubr.bf16.gmra.mrb[0].mxu0 %v4065
  %v4299 = vpop.f32.mrb[0].mxu0
  %v4300 = vadd.f32 0.0, %v4299
  %v4301 = vpop.f32.mrb[0].mxu0
  %v4302 = vpop.f32.mrb[0].mxu0
  %v4303 = vadd.f32 0.0, %v4302
  %v4304 = vpop.f32.mrb[0].mxu0
  %4305 = vmatprep.mubr.bf16.mxu0 0
  %4306 = vmatmul.mubr.bf16.gmra.mrb[0].mxu0 %v4068
  %v4307 = vpop.f32.mrb[0].mxu0
  %v4308 = vadd.f32 0.0, %v4307
  %v4309 = vpop.f32.mrb[0].mxu0
  %v4310 = vpop.f32.mrb[0].mxu0
  %v4311 = vadd.f32 0.0, %v4310
  %v4312 = vpop.f32.mrb[0].mxu0
  %4313 = vmatprep.mubr.bf16.mxu0 0
  %4314 = vmatmul.mubr.bf16.gmra.mrb[0].mxu0 %v4071
  %v4315 = vpop.f32.mrb[0].mxu0
  %v4316 = vadd.f32 0.0, %v4315
  %v4317 = vpop.f32.mrb[0].mxu0
  %v4318 = vpop.f32.mrb[0].mxu0
  %v4319 = vadd.f32 0.0, %v4318
  %v4320 = vpop.f32.mrb[0].mxu0
  %4321 = vmatprep.mubr.bf16.mxu0 0
  %4322 = vmatmul.mubr.bf16.gmra.mrb[0].mxu0 %v4074
  %v4323 = vpop.f32.mrb[0].mxu0
  %v4324 = vadd.f32 0.0, %v4323
  %v4325 = vpop.f32.mrb[0].mxu0
  %v4326 = vpop.f32.mrb[0].mxu0
  %v4327 = vadd.f32 0.0, %v4326
  %v4328 = vpop.f32.mrb[0].mxu0
  %4329 = vmatprep.mubr.bf16.mxu0 0
  %4330 = vmatmul.mubr.bf16.gmra.mrb[0].mxu0 %v4077
  %v4331 = vpop.f32.mrb[0].mxu0
  %v4332 = vadd.f32 0.0, %v4331
  %v4333 = vpop.f32.mrb[0].mxu0
  %v4334 = vpop.f32.mrb[0].mxu0
  %v4335 = vadd.f32 0.0, %v4334
  %v4336 = vpop.f32.mrb[0].mxu0
  %4337 = vmatprep.mubr.bf16.mxu0 0
  %4338 = vmatmul.mubr.bf16.gmra.mrb[0].mxu0 %v4080
  %v4339 = vpop.f32.mrb[0].mxu0
  %v4340 = vadd.f32 0.0, %v4339
  %v4341 = vpop.f32.mrb[0].mxu0
  %v4342 = vpop.f32.mrb[0].mxu0
  %v4343 = vadd.f32 0.0, %v4342
  %v4344 = vpop.f32.mrb[0].mxu0
  %4345 = vmatprep.mubr.bf16.mxu0 0
  %4346 = vmatmul.mubr.bf16.gmra.mrb[0].mxu0 %v4083
  %v4347 = vpop.f32.mrb[0].mxu0
  %v4348 = vadd.f32 0.0, %v4347
  %v4349 = vpop.f32.mrb[0].mxu0
  %v4350 = vpop.f32.mrb[0].mxu0
  %v4351 = vadd.f32 0.0, %v4350
  %v4352 = vpop.f32.mrb[0].mxu0
  %4353 = vmatprep.mubr.bf16.mxu0 0
  %4354 = vmatmul.mubr.bf16.gmra.mrb[0].mxu0 %v4086
  %v4355 = vpop.f32.mrb[0].mxu0
  %v4356 = vadd.f32 0.0, %v4355
  %v4357 = vpop.f32.mrb[0].mxu0
  %v4358 = vpop.f32.mrb[0].mxu0
  %v4359 = vadd.f32 0.0, %v4358
  %v4360 = vpop.f32.mrb[0].mxu0
  %4361 = vmatprep.mubr.bf16.mxu0 0
  %4362 = vmatmul.mubr.bf16.gmra.mrb[0].mxu0 %v4089
  %v4363 = vpop.f32.mrb[0].mxu0
  %v4364 = vadd.f32 0.0, %v4363
  %v4365 = vpop.f32.mrb[0].mxu0
  %v4366 = vpop.f32.mrb[0].mxu0
  %v4367 = vadd.f32 0.0, %v4366
  %v4368 = vpop.f32.mrb[0].mxu0
  %4369 = vmatprep.mubr.bf16.mxu0 0
  %4370 = vmatmul.mubr.bf16.gmra.mrb[0].mxu0 %v4092
  %v4371 = vpop.f32.mrb[0].mxu0
  %v4372 = vadd.f32 0.0, %v4371
  %v4373 = vpop.f32.mrb[0].mxu0
  %v4374 = vpop.f32.mrb[0].mxu0
  %v4375 = vadd.f32 0.0, %v4374
  %v4376 = vpop.f32.mrb[0].mxu0
  %4377 = vmatprep.mubr.bf16.mxu0 0
  %4378 = vmatmul.mubr.bf16.gmra.mrb[0].mxu0 %v4095
  %v4379 = vpop.f32.mrb[0].mxu0
  %v4380 = vadd.f32 0.0, %v4379
  %v4381 = vpop.f32.mrb[0].mxu0
  %v4382 = vpop.f32.mrb[0].mxu0
  %v4383 = vadd.f32 0.0, %v4382
  %v4384 = vpop.f32.mrb[0].mxu0
  %4385 = vdwg.mxu0
  %v4386 = vadd.f32 %v3634, %v4132
  %v4387 = vadd.f32 %v3637, %v4135
  %v4388 = vadd.f32 %v3642, %v4140
  %v4389 = vadd.f32 %v3645, %v4143
  %v4390 = vadd.f32 %v3650, %v4148
  %v4391 = vadd.f32 %v3653, %v4151
  %v4392 = vadd.f32 %v3658, %v4156
  %v4393 = vadd.f32 %v3661, %v4159
  %v4394 = vadd.f32 %v3666, %v4164
  %v4395 = vadd.f32 %v3669, %v4167
  %v4396 = vadd.f32 %v3674, %v4172
  %v4397 = vadd.f32 %v3677, %v4175
  %v4398 = vadd.f32 %v3682, %v4180
  %v4399 = vadd.f32 %v3685, %v4183
  %v4400 = vadd.f32 %v3690, %v4188
  %v4401 = vadd.f32 %v3693, %v4191
  %v4402 = vadd.f32 %v3698, %v4196
  %v4403 = vadd.f32 %v3701, %v4199
  %v4404 = vadd.f32 %v3706, %v4204
  %v4405 = vadd.f32 %v3709, %v4207
  %v4406 = vadd.f32 %v3714, %v4212
  %v4407 = vadd.f32 %v3717, %v4215
  %v4408 = vadd.f32 %v3722, %v4220
  %v4409 = vadd.f32 %v3725, %v4223
  %v4410 = vadd.f32 %v3730, %v4228
  %v4411 = vadd.f32 %v3733, %v4231
  %v4412 = vadd.f32 %v3738, %v4236
  %v4413 = vadd.f32 %v3741, %v4239
  %v4414 = vadd.f32 %v3746, %v4244
  %v4415 = vadd.f32 %v3749, %v4247
  %v4416 = vadd.f32 %v3754, %v4252
  %v4417 = vadd.f32 %v3757, %v4255
  %v4418 = vadd.f32 %v3762, %v4260
  %v4419 = vadd.f32 %v3765, %v4263
  %v4420 = vadd.f32 %v3770, %v4268
  %v4421 = vadd.f32 %v3773, %v4271
  %v4422 = vadd.f32 %v3778, %v4276
  %v4423 = vadd.f32 %v3781, %v4279
  %v4424 = vadd.f32 %v3786, %v4284
  %v4425 = vadd.f32 %v3789, %v4287
  %v4426 = vadd.f32 %v3794, %v4292
  %v4427 = vadd.f32 %v3797, %v4295
  %v4428 = vadd.f32 %v3802, %v4300
  %v4429 = vadd.f32 %v3805, %v4303
  %v4430 = vadd.f32 %v3810, %v4308
  %v4431 = vadd.f32 %v3813, %v4311
  %v4432 = vadd.f32 %v3818, %v4316
  %v4433 = vadd.f32 %v3821, %v4319
  %v4434 = vadd.f32 %v3826, %v4324
  %v4435 = vadd.f32 %v3829, %v4327
  %v4436 = vadd.f32 %v3834, %v4332
  %v4437 = vadd.f32 %v3837, %v4335
  %v4438 = vadd.f32 %v3842, %v4340
  %v4439 = vadd.f32 %v3845, %v4343
  %v4440 = vadd.f32 %v3850, %v4348
  %v4441 = vadd.f32 %v3853, %v4351
  %v4442 = vadd.f32 %v3858, %v4356
  %v4443 = vadd.f32 %v3861, %v4359
  %v4444 = vadd.f32 %v3866, %v4364
  %v4445 = vadd.f32 %v3869, %v4367
  %v4446 = vadd.f32 %v3874, %v4372
  %v4447 = vadd.f32 %v3877, %v4375
  %v4448 = vadd.f32 %v3882, %v4380
  %v4449 = vadd.f32 %v3885, %v4383
  %v4450 = vld [vmem:[%s2868] sm:$0xff]
  %v4451 = vld [vmem:[%s2868 + $0x8] sm:$0xff]
  %v4452 = vld [vmem:[%s2868 + $0x10] sm:$0xff]
  %v4453 = vld [vmem:[%s2868 + $0x18] sm:$0xff]
  %v4454 = vld [vmem:[%s2868 + $0x20] sm:$0xff]
  %v4455 = vld [vmem:[%s2868 + $0x28] sm:$0xff]
  %v4456 = vld [vmem:[%s2868 + $0x30] sm:$0xff]
  %v4457 = vld [vmem:[%s2868 + $0x38] sm:$0xff]
  %v4458 = vld [vmem:[%s2868 + $0x50] sm:$0xff]
  %v4459 = vld [vmem:[%s2868 + $0x58] sm:$0xff]
  %v4460 = vld [vmem:[%s2868 + $0x60] sm:$0xff]
  %v4461 = vld [vmem:[%s2868 + $0x68] sm:$0xff]
  %v4462 = vld [vmem:[%s2868 + $0x70] sm:$0xff]
  %v4463 = vld [vmem:[%s2868 + $0x78] sm:$0xff]
  %v4464 = vld [vmem:[%s2868 + $0x80] sm:$0xff]
  %v4465 = vld [vmem:[%s2868 + $0x88] sm:$0xff]
  %v4466 = vld [vmem:[%s2868 + $0xa0] sm:$0xff]
  %v4467 = vld [vmem:[%s2868 + $0xa8] sm:$0xff]
  %v4468 = vld [vmem:[%s2868 + $0xb0] sm:$0xff]
  %v4469 = vld [vmem:[%s2868 + $0xb8] sm:$0xff]
  %v4470 = vld [vmem:[%s2868 + $0xc0] sm:$0xff]
  %v4471 = vld [vmem:[%s2868 + $0xc8] sm:$0xff]
  %v4472 = vld [vmem:[%s2868 + $0xd0] sm:$0xff]
  %v4473 = vld [vmem:[%s2868 + $0xd8] sm:$0xff]
  %v4474 = vld [vmem:[%s2868 + $0xf0] sm:$0xff]
  %v4475 = vld [vmem:[%s2868 + $0xf8] sm:$0xff]
  %v4476 = vld [vmem:[%s2868 + $0x100] sm:$0xff]
  %v4477 = vld [vmem:[%s2868 + $0x108] sm:$0xff]
  %v4478 = vld [vmem:[%s2868 + $0x110] sm:$0xff]
  %v4479 = vld [vmem:[%s2868 + $0x118] sm:$0xff]
  %v4480 = vld [vmem:[%s2868 + $0x120] sm:$0xff]
  %v4481 = vld [vmem:[%s2868 + $0x128] sm:$0xff]
  %v4482 = vld [vmem:[%s2868 + $0x140] sm:$0xff]
  %v4483 = vld [vmem:[%s2868 + $0x148] sm:$0xff]
  %v4484 = vld [vmem:[%s2868 + $0x150] sm:$0xff]
  %v4485 = vld [vmem:[%s2868 + $0x158] sm:$0xff]
  %v4486 = vld [vmem:[%s2868 + $0x160] sm:$0xff]
  %v4487 = vld [vmem:[%s2868 + $0x168] sm:$0xff]
  %v4488 = vld [vmem:[%s2868 + $0x170] sm:$0xff]
  %v4489 = vld [vmem:[%s2868 + $0x178] sm:$0xff]
  %v4490 = vld [vmem:[%s2868 + $0x190] sm:$0xff]
  %v4491 = vld [vmem:[%s2868 + $0x198] sm:$0xff]
  %v4492 = vld [vmem:[%s2868 + $0x1a0] sm:$0xff]
  %v4493 = vld [vmem:[%s2868 + $0x1a8] sm:$0xff]
  %v4494 = vld [vmem:[%s2868 + $0x1b0] sm:$0xff]
  %v4495 = vld [vmem:[%s2868 + $0x1b8] sm:$0xff]
  %v4496 = vld [vmem:[%s2868 + $0x1c0] sm:$0xff]
  %v4497 = vld [vmem:[%s2868 + $0x1c8] sm:$0xff]
  %v4498 = vld [vmem:[%s2868 + $0x1e0] sm:$0xff]
  %v4499 = vld [vmem:[%s2868 + $0x1e8] sm:$0xff]
  %v4500 = vld [vmem:[%s2868 + $0x1f0] sm:$0xff]
  %v4501 = vld [vmem:[%s2868 + $0x1f8] sm:$0xff]
  %v4502 = vld [vmem:[%s2868 + $0x200] sm:$0xff]
  %v4503 = vld [vmem:[%s2868 + $0x208] sm:$0xff]
  %v4504 = vld [vmem:[%s2868 + $0x210] sm:$0xff]
  %v4505 = vld [vmem:[%s2868 + $0x218] sm:$0xff]
  %v4506 = vld [vmem:[%s2868 + $0x230] sm:$0xff]
  %v4507 = vld [vmem:[%s2868 + $0x238] sm:$0xff]
  %v4508 = vld [vmem:[%s2868 + $0x240] sm:$0xff]
  %v4509 = vld [vmem:[%s2868 + $0x248] sm:$0xff]
  %v4510 = vld [vmem:[%s2868 + $0x250] sm:$0xff]
  %v4511 = vld [vmem:[%s2868 + $0x258] sm:$0xff]
  %v4512 = vld [vmem:[%s2868 + $0x260] sm:$0xff]
  %v4513 = vld [vmem:[%s2868 + $0x268] sm:$0xff]
  %v4514 = vpack.c.bf16 %v4451, %v4450
  %v4515 = vpack.c.bf16 %v4453, %v4452
  %v4516 = vpack.c.bf16 %v4455, %v4454
  %v4517 = vpack.c.bf16 %v4457, %v4456
  %v4518 = vpack.c.bf16 %v4459, %v4458
  %v4519 = vpack.c.bf16 %v4461, %v4460
  %v4520 = vpack.c.bf16 %v4463, %v4462
  %v4521 = vpack.c.bf16 %v4465, %v4464
  %v4522 = vpack.c.bf16 %v4467, %v4466
  %v4523 = vpack.c.bf16 %v4469, %v4468
  %v4524 = vpack.c.bf16 %v4471, %v4470
  %v4525 = vpack.c.bf16 %v4473, %v4472
  %v4526 = vpack.c.bf16 %v4475, %v4474
  %v4527 = vpack.c.bf16 %v4477, %v4476
  %v4528 = vpack.c.bf16 %v4479, %v4478
  %v4529 = vpack.c.bf16 %v4481, %v4480
  %v4530 = vpack.c.bf16 %v4483, %v4482
  %v4531 = vpack.c.bf16 %v4485, %v4484
  %v4532 = vpack.c.bf16 %v4487, %v4486
  %v4533 = vpack.c.bf16 %v4489, %v4488
  %v4534 = vpack.c.bf16 %v4491, %v4490
  %v4535 = vpack.c.bf16 %v4493, %v4492
  %v4536 = vpack.c.bf16 %v4495, %v4494
  %v4537 = vpack.c.bf16 %v4497, %v4496
  %v4538 = vpack.c.bf16 %v4499, %v4498
  %v4539 = vpack.c.bf16 %v4501, %v4500
  %v4540 = vpack.c.bf16 %v4503, %v4502
  %v4541 = vpack.c.bf16 %v4505, %v4504
  %v4542 = vpack.c.bf16 %v4507, %v4506
  %v4543 = vpack.c.bf16 %v4509, %v4508
  %v4544 = vpack.c.bf16 %v4511, %v4510
  %v4545 = vpack.c.bf16 %v4513, %v4512
  %s4546 = scalar_lea.vmem %s3, 48
  %v4547 = vld [vmem:[%s4546] sm:$0xf]
  %v4548 = vld [vmem:[%s4546 + $0x4] sm:$0xf]
  %v4549 = vld [vmem:[%s4546 + $0x8] sm:$0xf]
  %v4550 = vld [vmem:[%s4546 + $0xc] sm:$0xf]
  %v4555 = vunpack.c.l.b16 %v4547
  %v4556 = vunpack.c.l.b16 %v4548
  %v4557 = vunpack.c.l.b16 %v4549
  %v4558 = vunpack.c.l.b16 %v4550
  %v4559 = vpack.c.b16 %v4556, %v4555
  %v4560 = vpack.c.b16 %v4558, %v4557
  %v4564 = vsel %vm2846, %v4514, 0
  %v4567 = vsel %vm2846, %v4515, 0
  %v4570 = vsel %vm2846, %v4516, 0
  %v4573 = vsel %vm2846, %v4517, 0
  %v4576 = vsel %vm2846, %v4518, 0
  %v4579 = vsel %vm2846, %v4519, 0
  %v4582 = vsel %vm2846, %v4520, 0
  %v4585 = vsel %vm2846, %v4521, 0
  %v4588 = vsel %vm2846, %v4522, 0
  %v4591 = vsel %vm2846, %v4523, 0
  %v4594 = vsel %vm2846, %v4524, 0
  %v4597 = vsel %vm2846, %v4525, 0
  %v4600 = vsel %vm2846, %v4526, 0
  %v4603 = vsel %vm2846, %v4527, 0
  %v4606 = vsel %vm2846, %v4528, 0
  %v4609 = vsel %vm2846, %v4529, 0
  %v4612 = vsel %vm2846, %v4530, 0
  %v4615 = vsel %vm2846, %v4531, 0
  %v4618 = vsel %vm2846, %v4532, 0
  %v4621 = vsel %vm2846, %v4533, 0
  %v4624 = vsel %vm2846, %v4534, 0
  %v4627 = vsel %vm2846, %v4535, 0
  %v4630 = vsel %vm2846, %v4536, 0
  %v4633 = vsel %vm2846, %v4537, 0
  %v4636 = vsel %vm2846, %v4538, 0
  %v4639 = vsel %vm2846, %v4539, 0
  %v4642 = vsel %vm2846, %v4540, 0
  %v4645 = vsel %vm2846, %v4541, 0
  %v4648 = vsel %vm2846, %v4542, 0
  %v4651 = vsel %vm2846, %v4543, 0
  %v4654 = vsel %vm2846, %v4544, 0
  %v4657 = vsel %vm2846, %v4545, 0
  %4659 = vmatprep.subr.bf16.mxu0 0
  %4660 = vmatpush1.bf16.msra.mxu0 %v4559
  %4661 = vmatprep.subr.bf16.mxu0 0
  %4662 = vmatpush1.bf16.msra.mxu0 %v4560
  %4663 = vmatprep.subr.bf16.mxu0 0
  %4664 = vmatpush1.bf16.msra.mxu0 0
  %4665 = vmatprep.subr.bf16.mxu0 0
  %4666 = vmatpush1.bf16.msra.mxu0 0
  %4667 = vmatprep.subr.bf16.mxu0 0
  %4668 = vmatpush1.bf16.msra.mxu0 0
  %4669 = vmatprep.subr.bf16.mxu0 0
  %4670 = vmatpush1.bf16.msra.mxu0 0
  %4671 = vmatprep.subr.bf16.mxu0 0
  %4672 = vmatpush1.bf16.msra.mxu0 0
  %4673 = vmatprep.subr.bf16.mxu0 0
  %4674 = vmatpush1.bf16.msra.mxu0 0
  %4675 = vmatprep.subr.bf16.mxu0 0
  %4676 = vmatpush1.bf16.msra.mxu0 0
  %4677 = vmatprep.subr.bf16.mxu0 0
  %4678 = vmatpush1.bf16.msra.mxu0 0
  %4679 = vmatprep.subr.bf16.mxu0 0
  %4680 = vmatpush1.bf16.msra.mxu0 0
  %4681 = vmatprep.subr.bf16.mxu0 0
  %4682 = vmatpush1.bf16.msra.mxu0 0
  %4683 = vmatprep.subr.bf16.mxu0 0
  %4684 = vmatpush1.bf16.msra.mxu0 0
  %4685 = vmatprep.subr.bf16.mxu0 0
  %4686 = vmatpush1.bf16.msra.mxu0 0
  %4687 = vmatprep.subr.bf16.mxu0 0
  %4688 = vmatpush1.bf16.msra.mxu0 0
  %4689 = vmatprep.subr.bf16.mxu0 0
  %4690 = vmatpush1.bf16.msra.mxu0 0
  %4691 = vmatprep.mubr.bf16.mxu0 0
  %4692 = vmatmul.mubr.bf16.gmra.mrb[0].mxu0 %v4564
  %v4693 = vpop.f32.mrb[0].mxu0
  %v4694 = vadd.f32 0.0, %v4693
  %v4695 = vpop.f32.mrb[0].mxu0
  %v4696 = vpop.f32.mrb[0].mxu0
  %v4697 = vadd.f32 0.0, %v4696
  %v4698 = vpop.f32.mrb[0].mxu0
  %4699 = vmatprep.mubr.bf16.mxu0 0
  %4700 = vmatmul.mubr.bf16.gmra.mrb[0].mxu0 %v4567
  %v4701 = vpop.f32.mrb[0].mxu0
  %v4702 = vadd.f32 0.0, %v4701
  %v4703 = vpop.f32.mrb[0].mxu0
  %v4704 = vpop.f32.mrb[0].mxu0
  %v4705 = vadd.f32 0.0, %v4704
  %v4706 = vpop.f32.mrb[0].mxu0
  %4707 = vmatprep.mubr.bf16.mxu0 0
  %4708 = vmatmul.mubr.bf16.gmra.mrb[0].mxu0 %v4570
  %v4709 = vpop.f32.mrb[0].mxu0
  %v4710 = vadd.f32 0.0, %v4709
  %v4711 = vpop.f32.mrb[0].mxu0
  %v4712 = vpop.f32.mrb[0].mxu0
  %v4713 = vadd.f32 0.0, %v4712
  %v4714 = vpop.f32.mrb[0].mxu0
  %4715 = vmatprep.mubr.bf16.mxu0 0
  %4716 = vmatmul.mubr.bf16.gmra.mrb[0].mxu0 %v4573
  %v4717 = vpop.f32.mrb[0].mxu0
  %v4718 = vadd.f32 0.0, %v4717
  %v4719 = vpop.f32.mrb[0].mxu0
  %v4720 = vpop.f32.mrb[0].mxu0
  %v4721 = vadd.f32 0.0, %v4720
  %v4722 = vpop.f32.mrb[0].mxu0
  %4723 = vmatprep.mubr.bf16.mxu0 0
  %4724 = vmatmul.mubr.bf16.gmra.mrb[0].mxu0 %v4576
  %v4725 = vpop.f32.mrb[0].mxu0
  %v4726 = vadd.f32 0.0, %v4725
  %v4727 = vpop.f32.mrb[0].mxu0
  %v4728 = vpop.f32.mrb[0].mxu0
  %v4729 = vadd.f32 0.0, %v4728
  %v4730 = vpop.f32.mrb[0].mxu0
  %4731 = vmatprep.mubr.bf16.mxu0 0
  %4732 = vmatmul.mubr.bf16.gmra.mrb[0].mxu0 %v4579
  %v4733 = vpop.f32.mrb[0].mxu0
  %v4734 = vadd.f32 0.0, %v4733
  %v4735 = vpop.f32.mrb[0].mxu0
  %v4736 = vpop.f32.mrb[0].mxu0
  %v4737 = vadd.f32 0.0, %v4736
  %v4738 = vpop.f32.mrb[0].mxu0
  %4739 = vmatprep.mubr.bf16.mxu0 0
  %4740 = vmatmul.mubr.bf16.gmra.mrb[0].mxu0 %v4582
  %v4741 = vpop.f32.mrb[0].mxu0
  %v4742 = vadd.f32 0.0, %v4741
  %v4743 = vpop.f32.mrb[0].mxu0
  %v4744 = vpop.f32.mrb[0].mxu0
  %v4745 = vadd.f32 0.0, %v4744
  %v4746 = vpop.f32.mrb[0].mxu0
  %4747 = vmatprep.mubr.bf16.mxu0 0
  %4748 = vmatmul.mubr.bf16.gmra.mrb[0].mxu0 %v4585
  %v4749 = vpop.f32.mrb[0].mxu0
  %v4750 = vadd.f32 0.0, %v4749
  %v4751 = vpop.f32.mrb[0].mxu0
  %v4752 = vpop.f32.mrb[0].mxu0
  %v4753 = vadd.f32 0.0, %v4752
  %v4754 = vpop.f32.mrb[0].mxu0
  %4755 = vmatprep.mubr.bf16.mxu0 0
  %4756 = vmatmul.mubr.bf16.gmra.mrb[0].mxu0 %v4588
  %v4757 = vpop.f32.mrb[0].mxu0
  %v4758 = vadd.f32 0.0, %v4757
  %v4759 = vpop.f32.mrb[0].mxu0
  %v4760 = vpop.f32.mrb[0].mxu0
  %v4761 = vadd.f32 0.0, %v4760
  %v4762 = vpop.f32.mrb[0].mxu0
  %4763 = vmatprep.mubr.bf16.mxu0 0
  %4764 = vmatmul.mubr.bf16.gmra.mrb[0].mxu0 %v4591
  %v4765 = vpop.f32.mrb[0].mxu0
  %v4766 = vadd.f32 0.0, %v4765
  %v4767 = vpop.f32.mrb[0].mxu0
  %v4768 = vpop.f32.mrb[0].mxu0
  %v4769 = vadd.f32 0.0, %v4768
  %v4770 = vpop.f32.mrb[0].mxu0
  %4771 = vmatprep.mubr.bf16.mxu0 0
  %4772 = vmatmul.mubr.bf16.gmra.mrb[0].mxu0 %v4594
  %v4773 = vpop.f32.mrb[0].mxu0
  %v4774 = vadd.f32 0.0, %v4773
  %v4775 = vpop.f32.mrb[0].mxu0
  %v4776 = vpop.f32.mrb[0].mxu0
  %v4777 = vadd.f32 0.0, %v4776
  %v4778 = vpop.f32.mrb[0].mxu0
  %4779 = vmatprep.mubr.bf16.mxu0 0
  %4780 = vmatmul.mubr.bf16.gmra.mrb[0].mxu0 %v4597
  %v4781 = vpop.f32.mrb[0].mxu0
  %v4782 = vadd.f32 0.0, %v4781
  %v4783 = vpop.f32.mrb[0].mxu0
  %v4784 = vpop.f32.mrb[0].mxu0
  %v4785 = vadd.f32 0.0, %v4784
  %v4786 = vpop.f32.mrb[0].mxu0
  %4787 = vmatprep.mubr.bf16.mxu0 0
  %4788 = vmatmul.mubr.bf16.gmra.mrb[0].mxu0 %v4600
  %v4789 = vpop.f32.mrb[0].mxu0
  %v4790 = vadd.f32 0.0, %v4789
  %v4791 = vpop.f32.mrb[0].mxu0
  %v4792 = vpop.f32.mrb[0].mxu0
  %v4793 = vadd.f32 0.0, %v4792
  %v4794 = vpop.f32.mrb[0].mxu0
  %4795 = vmatprep.mubr.bf16.mxu0 0
  %4796 = vmatmul.mubr.bf16.gmra.mrb[0].mxu0 %v4603
  %v4797 = vpop.f32.mrb[0].mxu0
  %v4798 = vadd.f32 0.0, %v4797
  %v4799 = vpop.f32.mrb[0].mxu0
  %v4800 = vpop.f32.mrb[0].mxu0
  %v4801 = vadd.f32 0.0, %v4800
  %v4802 = vpop.f32.mrb[0].mxu0
  %4803 = vmatprep.mubr.bf16.mxu0 0
  %4804 = vmatmul.mubr.bf16.gmra.mrb[0].mxu0 %v4606
  %v4805 = vpop.f32.mrb[0].mxu0
  %v4806 = vadd.f32 0.0, %v4805
  %v4807 = vpop.f32.mrb[0].mxu0
  %v4808 = vpop.f32.mrb[0].mxu0
  %v4809 = vadd.f32 0.0, %v4808
  %v4810 = vpop.f32.mrb[0].mxu0
  %4811 = vmatprep.mubr.bf16.mxu0 0
  %4812 = vmatmul.mubr.bf16.gmra.mrb[0].mxu0 %v4609
  %v4813 = vpop.f32.mrb[0].mxu0
  %v4814 = vadd.f32 0.0, %v4813
  %v4815 = vpop.f32.mrb[0].mxu0
  %v4816 = vpop.f32.mrb[0].mxu0
  %v4817 = vadd.f32 0.0, %v4816
  %v4818 = vpop.f32.mrb[0].mxu0
  %4819 = vmatprep.mubr.bf16.mxu0 0
  %4820 = vmatmul.mubr.bf16.gmra.mrb[0].mxu0 %v4612
  %v4821 = vpop.f32.mrb[0].mxu0
  %v4822 = vadd.f32 0.0, %v4821
  %v4823 = vpop.f32.mrb[0].mxu0
  %v4824 = vpop.f32.mrb[0].mxu0
  %v4825 = vadd.f32 0.0, %v4824
  %v4826 = vpop.f32.mrb[0].mxu0
  %4827 = vmatprep.mubr.bf16.mxu0 0
  %4828 = vmatmul.mubr.bf16.gmra.mrb[0].mxu0 %v4615
  %v4829 = vpop.f32.mrb[0].mxu0
  %v4830 = vadd.f32 0.0, %v4829
  %v4831 = vpop.f32.mrb[0].mxu0
  %v4832 = vpop.f32.mrb[0].mxu0
  %v4833 = vadd.f32 0.0, %v4832
  %v4834 = vpop.f32.mrb[0].mxu0
  %4835 = vmatprep.mubr.bf16.mxu0 0
  %4836 = vmatmul.mubr.bf16.gmra.mrb[0].mxu0 %v4618
  %v4837 = vpop.f32.mrb[0].mxu0
  %v4838 = vadd.f32 0.0, %v4837
  %v4839 = vpop.f32.mrb[0].mxu0
  %v4840 = vpop.f32.mrb[0].mxu0
  %v4841 = vadd.f32 0.0, %v4840
  %v4842 = vpop.f32.mrb[0].mxu0
  %4843 = vmatprep.mubr.bf16.mxu0 0
  %4844 = vmatmul.mubr.bf16.gmra.mrb[0].mxu0 %v4621
  %v4845 = vpop.f32.mrb[0].mxu0
  %v4846 = vadd.f32 0.0, %v4845
  %v4847 = vpop.f32.mrb[0].mxu0
  %v4848 = vpop.f32.mrb[0].mxu0
  %v4849 = vadd.f32 0.0, %v4848
  %v4850 = vpop.f32.mrb[0].mxu0
  %4851 = vmatprep.mubr.bf16.mxu0 0
  %4852 = vmatmul.mubr.bf16.gmra.mrb[0].mxu0 %v4624
  %v4853 = vpop.f32.mrb[0].mxu0
  %v4854 = vadd.f32 0.0, %v4853
  %v4855 = vpop.f32.mrb[0].mxu0
  %v4856 = vpop.f32.mrb[0].mxu0
  %v4857 = vadd.f32 0.0, %v4856
  %v4858 = vpop.f32.mrb[0].mxu0
  %4859 = vmatprep.mubr.bf16.mxu0 0
  %4860 = vmatmul.mubr.bf16.gmra.mrb[0].mxu0 %v4627
  %v4861 = vpop.f32.mrb[0].mxu0
  %v4862 = vadd.f32 0.0, %v4861
  %v4863 = vpop.f32.mrb[0].mxu0
  %v4864 = vpop.f32.mrb[0].mxu0
  %v4865 = vadd.f32 0.0, %v4864
  %v4866 = vpop.f32.mrb[0].mxu0
  %4867 = vmatprep.mubr.bf16.mxu0 0
  %4868 = vmatmul.mubr.bf16.gmra.mrb[0].mxu0 %v4630
  %v4869 = vpop.f32.mrb[0].mxu0
  %v4870 = vadd.f32 0.0, %v4869
  %v4871 = vpop.f32.mrb[0].mxu0
  %v4872 = vpop.f32.mrb[0].mxu0
  %v4873 = vadd.f32 0.0, %v4872
  %v4874 = vpop.f32.mrb[0].mxu0
  %4875 = vmatprep.mubr.bf16.mxu0 0
  %4876 = vmatmul.mubr.bf16.gmra.mrb[0].mxu0 %v4633
  %v4877 = vpop.f32.mrb[0].mxu0
  %v4878 = vadd.f32 0.0, %v4877
  %v4879 = vpop.f32.mrb[0].mxu0
  %v4880 = vpop.f32.mrb[0].mxu0
  %v4881 = vadd.f32 0.0, %v4880
  %v4882 = vpop.f32.mrb[0].mxu0
  %4883 = vmatprep.mubr.bf16.mxu0 0
  %4884 = vmatmul.mubr.bf16.gmra.mrb[0].mxu0 %v4636
  %v4885 = vpop.f32.mrb[0].mxu0
  %v4886 = vadd.f32 0.0, %v4885
  %v4887 = vpop.f32.mrb[0].mxu0
  %v4888 = vpop.f32.mrb[0].mxu0
  %v4889 = vadd.f32 0.0, %v4888
  %v4890 = vpop.f32.mrb[0].mxu0
  %4891 = vmatprep.mubr.bf16.mxu0 0
  %4892 = vmatmul.mubr.bf16.gmra.mrb[0].mxu0 %v4639
  %v4893 = vpop.f32.mrb[0].mxu0
  %v4894 = vadd.f32 0.0, %v4893
  %v4895 = vpop.f32.mrb[0].mxu0
  %v4896 = vpop.f32.mrb[0].mxu0
  %v4897 = vadd.f32 0.0, %v4896
  %v4898 = vpop.f32.mrb[0].mxu0
  %4899 = vmatprep.mubr.bf16.mxu0 0
  %4900 = vmatmul.mubr.bf16.gmra.mrb[0].mxu0 %v4642
  %v4901 = vpop.f32.mrb[0].mxu0
  %v4902 = vadd.f32 0.0, %v4901
  %v4903 = vpop.f32.mrb[0].mxu0
  %v4904 = vpop.f32.mrb[0].mxu0
  %v4905 = vadd.f32 0.0, %v4904
  %v4906 = vpop.f32.mrb[0].mxu0
  %4907 = vmatprep.mubr.bf16.mxu0 0
  %4908 = vmatmul.mubr.bf16.gmra.mrb[0].mxu0 %v4645
  %v4909 = vpop.f32.mrb[0].mxu0
  %v4910 = vadd.f32 0.0, %v4909
  %v4911 = vpop.f32.mrb[0].mxu0
  %v4912 = vpop.f32.mrb[0].mxu0
  %v4913 = vadd.f32 0.0, %v4912
  %v4914 = vpop.f32.mrb[0].mxu0
  %4915 = vmatprep.mubr.bf16.mxu0 0
  %4916 = vmatmul.mubr.bf16.gmra.mrb[0].mxu0 %v4648
  %v4917 = vpop.f32.mrb[0].mxu0
  %v4918 = vadd.f32 0.0, %v4917
  %v4919 = vpop.f32.mrb[0].mxu0
  %v4920 = vpop.f32.mrb[0].mxu0
  %v4921 = vadd.f32 0.0, %v4920
  %v4922 = vpop.f32.mrb[0].mxu0
  %4923 = vmatprep.mubr.bf16.mxu0 0
  %4924 = vmatmul.mubr.bf16.gmra.mrb[0].mxu0 %v4651
  %v4925 = vpop.f32.mrb[0].mxu0
  %v4926 = vadd.f32 0.0, %v4925
  %v4927 = vpop.f32.mrb[0].mxu0
  %v4928 = vpop.f32.mrb[0].mxu0
  %v4929 = vadd.f32 0.0, %v4928
  %v4930 = vpop.f32.mrb[0].mxu0
  %4931 = vmatprep.mubr.bf16.mxu0 0
  %4932 = vmatmul.mubr.bf16.gmra.mrb[0].mxu0 %v4654
  %v4933 = vpop.f32.mrb[0].mxu0
  %v4934 = vadd.f32 0.0, %v4933
  %v4935 = vpop.f32.mrb[0].mxu0
  %v4936 = vpop.f32.mrb[0].mxu0
  %v4937 = vadd.f32 0.0, %v4936
  %v4938 = vpop.f32.mrb[0].mxu0
  %4939 = vmatprep.mubr.bf16.mxu0 0
  %4940 = vmatmul.mubr.bf16.gmra.mrb[0].mxu0 %v4657
  %v4941 = vpop.f32.mrb[0].mxu0
  %v4942 = vadd.f32 0.0, %v4941
  %v4943 = vpop.f32.mrb[0].mxu0
  %v4944 = vpop.f32.mrb[0].mxu0
  %v4945 = vadd.f32 0.0, %v4944
  %v4946 = vpop.f32.mrb[0].mxu0
  %4947 = vdwg.mxu0
  %v4948 = vadd.f32 %v4386, %v4694
  %v4949 = vadd.f32 %v4387, %v4697
  %v4950 = vadd.f32 %v4388, %v4702
  %v4951 = vadd.f32 %v4389, %v4705
  %v4952 = vadd.f32 %v4390, %v4710
  %v4953 = vadd.f32 %v4391, %v4713
  %v4954 = vadd.f32 %v4392, %v4718
  %v4955 = vadd.f32 %v4393, %v4721
  %v4956 = vadd.f32 %v4394, %v4726
  %v4957 = vadd.f32 %v4395, %v4729
  %v4958 = vadd.f32 %v4396, %v4734
  %v4959 = vadd.f32 %v4397, %v4737
  %v4960 = vadd.f32 %v4398, %v4742
  %v4961 = vadd.f32 %v4399, %v4745
  %v4962 = vadd.f32 %v4400, %v4750
  %v4963 = vadd.f32 %v4401, %v4753
  %v4964 = vadd.f32 %v4402, %v4758
  %v4965 = vadd.f32 %v4403, %v4761
  %v4966 = vadd.f32 %v4404, %v4766
  %v4967 = vadd.f32 %v4405, %v4769
  %v4968 = vadd.f32 %v4406, %v4774
  %v4969 = vadd.f32 %v4407, %v4777
  %v4970 = vadd.f32 %v4408, %v4782
  %v4971 = vadd.f32 %v4409, %v4785
  %v4972 = vadd.f32 %v4410, %v4790
  %v4973 = vadd.f32 %v4411, %v4793
  %v4974 = vadd.f32 %v4412, %v4798
  %v4975 = vadd.f32 %v4413, %v4801
  %v4976 = vadd.f32 %v4414, %v4806
  %v4977 = vadd.f32 %v4415, %v4809
  %v4978 = vadd.f32 %v4416, %v4814
  %v4979 = vadd.f32 %v4417, %v4817
  %v4980 = vadd.f32 %v4418, %v4822
  %v4981 = vadd.f32 %v4419, %v4825
  %v4982 = vadd.f32 %v4420, %v4830
  %v4983 = vadd.f32 %v4421, %v4833
  %v4984 = vadd.f32 %v4422, %v4838
  %v4985 = vadd.f32 %v4423, %v4841
  %v4986 = vadd.f32 %v4424, %v4846
  %v4987 = vadd.f32 %v4425, %v4849
  %v4988 = vadd.f32 %v4426, %v4854
  %v4989 = vadd.f32 %v4427, %v4857
  %v4990 = vadd.f32 %v4428, %v4862
  %v4991 = vadd.f32 %v4429, %v4865
  %v4992 = vadd.f32 %v4430, %v4870
  %v4993 = vadd.f32 %v4431, %v4873
  %v4994 = vadd.f32 %v4432, %v4878
  %v4995 = vadd.f32 %v4433, %v4881
  %v4996 = vadd.f32 %v4434, %v4886
  %v4997 = vadd.f32 %v4435, %v4889
  %v4998 = vadd.f32 %v4436, %v4894
  %v4999 = vadd.f32 %v4437, %v4897
  %v5000 = vadd.f32 %v4438, %v4902
  %v5001 = vadd.f32 %v4439, %v4905
  %v5002 = vadd.f32 %v4440, %v4910
  %v5003 = vadd.f32 %v4441, %v4913
  %v5004 = vadd.f32 %v4442, %v4918
  %v5005 = vadd.f32 %v4443, %v4921
  %v5006 = vadd.f32 %v4444, %v4926
  %v5007 = vadd.f32 %v4445, %v4929
  %v5008 = vadd.f32 %v4446, %v4934
  %v5009 = vadd.f32 %v4447, %v4937
  %v5010 = vadd.f32 %v4448, %v4942
  %v5011 = vadd.f32 %v4449, %v4945
  %v5012 = vld [vmem:[%s2868 + $0x8] sm:$0xff]
  %v5013 = vld [vmem:[%s2868 + $0x10] sm:$0xff]
  %v5014 = vld [vmem:[%s2868 + $0x18] sm:$0xff]
  %v5015 = vld [vmem:[%s2868 + $0x20] sm:$0xff]
  %v5016 = vld [vmem:[%s2868 + $0x28] sm:$0xff]
  %v5017 = vld [vmem:[%s2868 + $0x30] sm:$0xff]
  %v5018 = vld [vmem:[%s2868 + $0x38] sm:$0xff]
  %v5019 = vld [vmem:[%s2868 + $0x40] sm:$0xff]
  %v5020 = vld [vmem:[%s2868 + $0x58] sm:$0xff]
  %v5021 = vld [vmem:[%s2868 + $0x60] sm:$0xff]
  %v5022 = vld [vmem:[%s2868 + $0x68] sm:$0xff]
  %v5023 = vld [vmem:[%s2868 + $0x70] sm:$0xff]
  %v5024 = vld [vmem:[%s2868 + $0x78] sm:$0xff]
  %v5025 = vld [vmem:[%s2868 + $0x80] sm:$0xff]
  %v5026 = vld [vmem:[%s2868 + $0x88] sm:$0xff]
  %v5027 = vld [vmem:[%s2868 + $0x90] sm:$0xff]
  %v5028 = vld [vmem:[%s2868 + $0xa8] sm:$0xff]
  %v5029 = vld [vmem:[%s2868 + $0xb0] sm:$0xff]
  %v5030 = vld [vmem:[%s2868 + $0xb8] sm:$0xff]
  %v5031 = vld [vmem:[%s2868 + $0xc0] sm:$0xff]
  %v5032 = vld [vmem:[%s2868 + $0xc8] sm:$0xff]
  %v5033 = vld [vmem:[%s2868 + $0xd0] sm:$0xff]
  %v5034 = vld [vmem:[%s2868 + $0xd8] sm:$0xff]
  %v5035 = vld [vmem:[%s2868 + $0xe0] sm:$0xff]
  %v5036 = vld [vmem:[%s2868 + $0xf8] sm:$0xff]
  %v5037 = vld [vmem:[%s2868 + $0x100] sm:$0xff]
  %v5038 = vld [vmem:[%s2868 + $0x108] sm:$0xff]
  %v5039 = vld [vmem:[%s2868 + $0x110] sm:$0xff]
  %v5040 = vld [vmem:[%s2868 + $0x118] sm:$0xff]
  %v5041 = vld [vmem:[%s2868 + $0x120] sm:$0xff]
  %v5042 = vld [vmem:[%s2868 + $0x128] sm:$0xff]
  %v5043 = vld [vmem:[%s2868 + $0x130] sm:$0xff]
  %v5044 = vld [vmem:[%s2868 + $0x148] sm:$0xff]
  %v5045 = vld [vmem:[%s2868 + $0x150] sm:$0xff]
  %v5046 = vld [vmem:[%s2868 + $0x158] sm:$0xff]
  %v5047 = vld [vmem:[%s2868 + $0x160] sm:$0xff]
  %v5048 = vld [vmem:[%s2868 + $0x168] sm:$0xff]
  %v5049 = vld [vmem:[%s2868 + $0x170] sm:$0xff]
  %v5050 = vld [vmem:[%s2868 + $0x178] sm:$0xff]
  %v5051 = vld [vmem:[%s2868 + $0x180] sm:$0xff]
  %v5052 = vld [vmem:[%s2868 + $0x198] sm:$0xff]
  %v5053 = vld [vmem:[%s2868 + $0x1a0] sm:$0xff]
  %v5054 = vld [vmem:[%s2868 + $0x1a8] sm:$0xff]
  %v5055 = vld [vmem:[%s2868 + $0x1b0] sm:$0xff]
  %v5056 = vld [vmem:[%s2868 + $0x1b8] sm:$0xff]
  %v5057 = vld [vmem:[%s2868 + $0x1c0] sm:$0xff]
  %v5058 = vld [vmem:[%s2868 + $0x1c8] sm:$0xff]
  %v5059 = vld [vmem:[%s2868 + $0x1d0] sm:$0xff]
  %v5060 = vld [vmem:[%s2868 + $0x1e8] sm:$0xff]
  %v5061 = vld [vmem:[%s2868 + $0x1f0] sm:$0xff]
  %v5062 = vld [vmem:[%s2868 + $0x1f8] sm:$0xff]
  %v5063 = vld [vmem:[%s2868 + $0x200] sm:$0xff]
  %v5064 = vld [vmem:[%s2868 + $0x208] sm:$0xff]
  %v5065 = vld [vmem:[%s2868 + $0x210] sm:$0xff]
  %v5066 = vld [vmem:[%s2868 + $0x218] sm:$0xff]
  %v5067 = vld [vmem:[%s2868 + $0x220] sm:$0xff]
  %v5068 = vld [vmem:[%s2868 + $0x238] sm:$0xff]
  %v5069 = vld [vmem:[%s2868 + $0x240] sm:$0xff]
  %v5070 = vld [vmem:[%s2868 + $0x248] sm:$0xff]
  %v5071 = vld [vmem:[%s2868 + $0x250] sm:$0xff]
  %v5072 = vld [vmem:[%s2868 + $0x258] sm:$0xff]
  %v5073 = vld [vmem:[%s2868 + $0x260] sm:$0xff]
  %v5074 = vld [vmem:[%s2868 + $0x268] sm:$0xff]
  %v5075 = vld [vmem:[%s2868 + $0x270] sm:$0xff]
  %v5076 = vpack.c.bf16 %v5013, %v5012
  %v5077 = vpack.c.bf16 %v5015, %v5014
  %v5078 = vpack.c.bf16 %v5017, %v5016
  %v5079 = vpack.c.bf16 %v5019, %v5018
  %v5080 = vpack.c.bf16 %v5021, %v5020
  %v5081 = vpack.c.bf16 %v5023, %v5022
  %v5082 = vpack.c.bf16 %v5025, %v5024
  %v5083 = vpack.c.bf16 %v5027, %v5026
  %v5084 = vpack.c.bf16 %v5029, %v5028
  %v5085 = vpack.c.bf16 %v5031, %v5030
  %v5086 = vpack.c.bf16 %v5033, %v5032
  %v5087 = vpack.c.bf16 %v5035, %v5034
  %v5088 = vpack.c.bf16 %v5037, %v5036
  %v5089 = vpack.c.bf16 %v5039, %v5038
  %v5090 = vpack.c.bf16 %v5041, %v5040
  %v5091 = vpack.c.bf16 %v5043, %v5042
  %v5092 = vpack.c.bf16 %v5045, %v5044
  %v5093 = vpack.c.bf16 %v5047, %v5046
  %v5094 = vpack.c.bf16 %v5049, %v5048
  %v5095 = vpack.c.bf16 %v5051, %v5050
  %v5096 = vpack.c.bf16 %v5053, %v5052
  %v5097 = vpack.c.bf16 %v5055, %v5054
  %v5098 = vpack.c.bf16 %v5057, %v5056
  %v5099 = vpack.c.bf16 %v5059, %v5058
  %v5100 = vpack.c.bf16 %v5061, %v5060
  %v5101 = vpack.c.bf16 %v5063, %v5062
  %v5102 = vpack.c.bf16 %v5065, %v5064
  %v5103 = vpack.c.bf16 %v5067, %v5066
  %v5104 = vpack.c.bf16 %v5069, %v5068
  %v5105 = vpack.c.bf16 %v5071, %v5070
  %v5106 = vpack.c.bf16 %v5073, %v5072
  %v5107 = vpack.c.bf16 %v5075, %v5074
  %s5108 = scalar_lea.vmem %s3, 64
  %v5109 = vld [vmem:[%s5108] sm:$0xf]
  %v5110 = vld [vmem:[%s5108 + $0x4] sm:$0xf]
  %v5111 = vld [vmem:[%s5108 + $0x8] sm:$0xf]
  %v5112 = vld [vmem:[%s5108 + $0xc] sm:$0xf]
  %v5117 = vunpack.c.l.b16 %v5109
  %v5118 = vunpack.c.l.b16 %v5110
  %v5119 = vunpack.c.l.b16 %v5111
  %v5120 = vunpack.c.l.b16 %v5112
  %v5121 = vpack.c.b16 %v5118, %v5117
  %v5122 = vpack.c.b16 %v5120, %v5119
  %v5126 = vsel %vm2846, %v5076, 0
  %v5129 = vsel %vm2846, %v5077, 0
  %v5132 = vsel %vm2846, %v5078, 0
  %v5135 = vsel %vm2846, %v5079, 0
  %v5138 = vsel %vm2846, %v5080, 0
  %v5141 = vsel %vm2846, %v5081, 0
  %v5144 = vsel %vm2846, %v5082, 0
  %v5147 = vsel %vm2846, %v5083, 0
  %v5150 = vsel %vm2846, %v5084, 0
  %v5153 = vsel %vm2846, %v5085, 0
  %v5156 = vsel %vm2846, %v5086, 0
  %v5159 = vsel %vm2846, %v5087, 0
  %v5162 = vsel %vm2846, %v5088, 0
  %v5165 = vsel %vm2846, %v5089, 0
  %v5168 = vsel %vm2846, %v5090, 0
  %v5171 = vsel %vm2846, %v5091, 0
  %v5174 = vsel %vm2846, %v5092, 0
  %v5177 = vsel %vm2846, %v5093, 0
  %v5180 = vsel %vm2846, %v5094, 0
  %v5183 = vsel %vm2846, %v5095, 0
  %v5186 = vsel %vm2846, %v5096, 0
  %v5189 = vsel %vm2846, %v5097, 0
  %v5192 = vsel %vm2846, %v5098, 0
  %v5195 = vsel %vm2846, %v5099, 0
  %v5198 = vsel %vm2846, %v5100, 0
  %v5201 = vsel %vm2846, %v5101, 0
  %v5204 = vsel %vm2846, %v5102, 0
  %v5207 = vsel %vm2846, %v5103, 0
  %v5210 = vsel %vm2846, %v5104, 0
  %v5213 = vsel %vm2846, %v5105, 0
  %v5216 = vsel %vm2846, %v5106, 0
  %v5219 = vsel %vm2846, %v5107, 0
  %5221 = vmatprep.subr.bf16.mxu0 0
  %5222 = vmatpush1.bf16.msra.mxu0 %v5121
  %5223 = vmatprep.subr.bf16.mxu0 0
  %5224 = vmatpush1.bf16.msra.mxu0 %v5122
  %5225 = vmatprep.subr.bf16.mxu0 0
  %5226 = vmatpush1.bf16.msra.mxu0 0
  %5227 = vmatprep.subr.bf16.mxu0 0
  %5228 = vmatpush1.bf16.msra.mxu0 0
  %5229 = vmatprep.subr.bf16.mxu0 0
  %5230 = vmatpush1.bf16.msra.mxu0 0
  %5231 = vmatprep.subr.bf16.mxu0 0
  %5232 = vmatpush1.bf16.msra.mxu0 0
  %5233 = vmatprep.subr.bf16.mxu0 0
  %5234 = vmatpush1.bf16.msra.mxu0 0
  %5235 = vmatprep.subr.bf16.mxu0 0
  %5236 = vmatpush1.bf16.msra.mxu0 0
  %5237 = vmatprep.subr.bf16.mxu0 0
  %5238 = vmatpush1.bf16.msra.mxu0 0
  %5239 = vmatprep.subr.bf16.mxu0 0
  %5240 = vmatpush1.bf16.msra.mxu0 0
  %5241 = vmatprep.subr.bf16.mxu0 0
  %5242 = vmatpush1.bf16.msra.mxu0 0
  %5243 = vmatprep.subr.bf16.mxu0 0
  %5244 = vmatpush1.bf16.msra.mxu0 0
  %5245 = vmatprep.subr.bf16.mxu0 0
  %5246 = vmatpush1.bf16.msra.mxu0 0
  %5247 = vmatprep.subr.bf16.mxu0 0
  %5248 = vmatpush1.bf16.msra.mxu0 0
  %5249 = vmatprep.subr.bf16.mxu0 0
  %5250 = vmatpush1.bf16.msra.mxu0 0
  %5251 = vmatprep.subr.bf16.mxu0 0
  %5252 = vmatpush1.bf16.msra.mxu0 0
  %5253 = vmatprep.mubr.bf16.mxu0 0
  %5254 = vmatmul.mubr.bf16.gmra.mrb[0].mxu0 %v5126
  %v5255 = vpop.f32.mrb[0].mxu0
  %v5256 = vadd.f32 0.0, %v5255
  %v5257 = vpop.f32.mrb[0].mxu0
  %v5258 = vpop.f32.mrb[0].mxu0
  %v5259 = vadd.f32 0.0, %v5258
  %v5260 = vpop.f32.mrb[0].mxu0
  %5261 = vmatprep.mubr.bf16.mxu0 0
  %5262 = vmatmul.mubr.bf16.gmra.mrb[0].mxu0 %v5129
  %v5263 = vpop.f32.mrb[0].mxu0
  %v5264 = vadd.f32 0.0, %v5263
  %v5265 = vpop.f32.mrb[0].mxu0
  %v5266 = vpop.f32.mrb[0].mxu0
  %v5267 = vadd.f32 0.0, %v5266
  %v5268 = vpop.f32.mrb[0].mxu0
  %5269 = vmatprep.mubr.bf16.mxu0 0
  %5270 = vmatmul.mubr.bf16.gmra.mrb[0].mxu0 %v5132
  %v5271 = vpop.f32.mrb[0].mxu0
  %v5272 = vadd.f32 0.0, %v5271
  %v5273 = vpop.f32.mrb[0].mxu0
  %v5274 = vpop.f32.mrb[0].mxu0
  %v5275 = vadd.f32 0.0, %v5274
  %v5276 = vpop.f32.mrb[0].mxu0
  %5277 = vmatprep.mubr.bf16.mxu0 0
  %5278 = vmatmul.mubr.bf16.gmra.mrb[0].mxu0 %v5135
  %v5279 = vpop.f32.mrb[0].mxu0
  %v5280 = vadd.f32 0.0, %v5279
  %v5281 = vpop.f32.mrb[0].mxu0
  %v5282 = vpop.f32.mrb[0].mxu0
  %v5283 = vadd.f32 0.0, %v5282
  %v5284 = vpop.f32.mrb[0].mxu0
  %5285 = vmatprep.mubr.bf16.mxu0 0
  %5286 = vmatmul.mubr.bf16.gmra.mrb[0].mxu0 %v5138
  %v5287 = vpop.f32.mrb[0].mxu0
  %v5288 = vadd.f32 0.0, %v5287
  %v5289 = vpop.f32.mrb[0].mxu0
  %v5290 = vpop.f32.mrb[0].mxu0
  %v5291 = vadd.f32 0.0, %v5290
  %v5292 = vpop.f32.mrb[0].mxu0
  %5293 = vmatprep.mubr.bf16.mxu0 0
  %5294 = vmatmul.mubr.bf16.gmra.mrb[0].mxu0 %v5141
  %v5295 = vpop.f32.mrb[0].mxu0
  %v5296 = vadd.f32 0.0, %v5295
  %v5297 = vpop.f32.mrb[0].mxu0
  %v5298 = vpop.f32.mrb[0].mxu0
  %v5299 = vadd.f32 0.0, %v5298
  %v5300 = vpop.f32.mrb[0].mxu0
  %5301 = vmatprep.mubr.bf16.mxu0 0
  %5302 = vmatmul.mubr.bf16.gmra.mrb[0].mxu0 %v5144
  %v5303 = vpop.f32.mrb[0].mxu0
  %v5304 = vadd.f32 0.0, %v5303
  %v5305 = vpop.f32.mrb[0].mxu0
  %v5306 = vpop.f32.mrb[0].mxu0
  %v5307 = vadd.f32 0.0, %v5306
  %v5308 = vpop.f32.mrb[0].mxu0
  %5309 = vmatprep.mubr.bf16.mxu0 0
  %5310 = vmatmul.mubr.bf16.gmra.mrb[0].mxu0 %v5147
  %v5311 = vpop.f32.mrb[0].mxu0
  %v5312 = vadd.f32 0.0, %v5311
  %v5313 = vpop.f32.mrb[0].mxu0
  %v5314 = vpop.f32.mrb[0].mxu0
  %v5315 = vadd.f32 0.0, %v5314
  %v5316 = vpop.f32.mrb[0].mxu0
  %5317 = vmatprep.mubr.bf16.mxu0 0
  %5318 = vmatmul.mubr.bf16.gmra.mrb[0].mxu0 %v5150
  %v5319 = vpop.f32.mrb[0].mxu0
  %v5320 = vadd.f32 0.0, %v5319
  %v5321 = vpop.f32.mrb[0].mxu0
  %v5322 = vpop.f32.mrb[0].mxu0
  %v5323 = vadd.f32 0.0, %v5322
  %v5324 = vpop.f32.mrb[0].mxu0
  %5325 = vmatprep.mubr.bf16.mxu0 0
  %5326 = vmatmul.mubr.bf16.gmra.mrb[0].mxu0 %v5153
  %v5327 = vpop.f32.mrb[0].mxu0
  %v5328 = vadd.f32 0.0, %v5327
  %v5329 = vpop.f32.mrb[0].mxu0
  %v5330 = vpop.f32.mrb[0].mxu0
  %v5331 = vadd.f32 0.0, %v5330
  %v5332 = vpop.f32.mrb[0].mxu0
  %5333 = vmatprep.mubr.bf16.mxu0 0
  %5334 = vmatmul.mubr.bf16.gmra.mrb[0].mxu0 %v5156
  %v5335 = vpop.f32.mrb[0].mxu0
  %v5336 = vadd.f32 0.0, %v5335
  %v5337 = vpop.f32.mrb[0].mxu0
  %v5338 = vpop.f32.mrb[0].mxu0
  %v5339 = vadd.f32 0.0, %v5338
  %v5340 = vpop.f32.mrb[0].mxu0
  %5341 = vmatprep.mubr.bf16.mxu0 0
  %5342 = vmatmul.mubr.bf16.gmra.mrb[0].mxu0 %v5159
  %v5343 = vpop.f32.mrb[0].mxu0
  %v5344 = vadd.f32 0.0, %v5343
  %v5345 = vpop.f32.mrb[0].mxu0
  %v5346 = vpop.f32.mrb[0].mxu0
  %v5347 = vadd.f32 0.0, %v5346
  %v5348 = vpop.f32.mrb[0].mxu0
  %5349 = vmatprep.mubr.bf16.mxu0 0
  %5350 = vmatmul.mubr.bf16.gmra.mrb[0].mxu0 %v5162
  %v5351 = vpop.f32.mrb[0].mxu0
  %v5352 = vadd.f32 0.0, %v5351
  %v5353 = vpop.f32.mrb[0].mxu0
  %v5354 = vpop.f32.mrb[0].mxu0
  %v5355 = vadd.f32 0.0, %v5354
  %v5356 = vpop.f32.mrb[0].mxu0
  %5357 = vmatprep.mubr.bf16.mxu0 0
  %5358 = vmatmul.mubr.bf16.gmra.mrb[0].mxu0 %v5165
  %v5359 = vpop.f32.mrb[0].mxu0
  %v5360 = vadd.f32 0.0, %v5359
  %v5361 = vpop.f32.mrb[0].mxu0
  %v5362 = vpop.f32.mrb[0].mxu0
  %v5363 = vadd.f32 0.0, %v5362
  %v5364 = vpop.f32.mrb[0].mxu0
  %5365 = vmatprep.mubr.bf16.mxu0 0
  %5366 = vmatmul.mubr.bf16.gmra.mrb[0].mxu0 %v5168
  %v5367 = vpop.f32.mrb[0].mxu0
  %v5368 = vadd.f32 0.0, %v5367
  %v5369 = vpop.f32.mrb[0].mxu0
  %v5370 = vpop.f32.mrb[0].mxu0
  %v5371 = vadd.f32 0.0, %v5370
  %v5372 = vpop.f32.mrb[0].mxu0
  %5373 = vmatprep.mubr.bf16.mxu0 0
  %5374 = vmatmul.mubr.bf16.gmra.mrb[0].mxu0 %v5171
  %v5375 = vpop.f32.mrb[0].mxu0
  %v5376 = vadd.f32 0.0, %v5375
  %v5377 = vpop.f32.mrb[0].mxu0
  %v5378 = vpop.f32.mrb[0].mxu0
  %v5379 = vadd.f32 0.0, %v5378
  %v5380 = vpop.f32.mrb[0].mxu0
  %5381 = vmatprep.mubr.bf16.mxu0 0
  %5382 = vmatmul.mubr.bf16.gmra.mrb[0].mxu0 %v5174
  %v5383 = vpop.f32.mrb[0].mxu0
  %v5384 = vadd.f32 0.0, %v5383
  %v5385 = vpop.f32.mrb[0].mxu0
  %v5386 = vpop.f32.mrb[0].mxu0
  %v5387 = vadd.f32 0.0, %v5386
  %v5388 = vpop.f32.mrb[0].mxu0
  %5389 = vmatprep.mubr.bf16.mxu0 0
  %5390 = vmatmul.mubr.bf16.gmra.mrb[0].mxu0 %v5177
  %v5391 = vpop.f32.mrb[0].mxu0
  %v5392 = vadd.f32 0.0, %v5391
  %v5393 = vpop.f32.mrb[0].mxu0
  %v5394 = vpop.f32.mrb[0].mxu0
  %v5395 = vadd.f32 0.0, %v5394
  %v5396 = vpop.f32.mrb[0].mxu0
  %5397 = vmatprep.mubr.bf16.mxu0 0
  %5398 = vmatmul.mubr.bf16.gmra.mrb[0].mxu0 %v5180
  %v5399 = vpop.f32.mrb[0].mxu0
  %v5400 = vadd.f32 0.0, %v5399
  %v5401 = vpop.f32.mrb[0].mxu0
  %v5402 = vpop.f32.mrb[0].mxu0
  %v5403 = vadd.f32 0.0, %v5402
  %v5404 = vpop.f32.mrb[0].mxu0
  %5405 = vmatprep.mubr.bf16.mxu0 0
  %5406 = vmatmul.mubr.bf16.gmra.mrb[0].mxu0 %v5183
  %v5407 = vpop.f32.mrb[0].mxu0
  %v5408 = vadd.f32 0.0, %v5407
  %v5409 = vpop.f32.mrb[0].mxu0
  %v5410 = vpop.f32.mrb[0].mxu0
  %v5411 = vadd.f32 0.0, %v5410
  %v5412 = vpop.f32.mrb[0].mxu0
  %5413 = vmatprep.mubr.bf16.mxu0 0
  %5414 = vmatmul.mubr.bf16.gmra.mrb[0].mxu0 %v5186
  %v5415 = vpop.f32.mrb[0].mxu0
  %v5416 = vadd.f32 0.0, %v5415
  %v5417 = vpop.f32.mrb[0].mxu0
  %v5418 = vpop.f32.mrb[0].mxu0
  %v5419 = vadd.f32 0.0, %v5418
  %v5420 = vpop.f32.mrb[0].mxu0
  %5421 = vmatprep.mubr.bf16.mxu0 0
  %5422 = vmatmul.mubr.bf16.gmra.mrb[0].mxu0 %v5189
  %v5423 = vpop.f32.mrb[0].mxu0
  %v5424 = vadd.f32 0.0, %v5423
  %v5425 = vpop.f32.mrb[0].mxu0
  %v5426 = vpop.f32.mrb[0].mxu0
  %v5427 = vadd.f32 0.0, %v5426
  %v5428 = vpop.f32.mrb[0].mxu0
  %5429 = vmatprep.mubr.bf16.mxu0 0
  %5430 = vmatmul.mubr.bf16.gmra.mrb[0].mxu0 %v5192
  %v5431 = vpop.f32.mrb[0].mxu0
  %v5432 = vadd.f32 0.0, %v5431
  %v5433 = vpop.f32.mrb[0].mxu0
  %v5434 = vpop.f32.mrb[0].mxu0
  %v5435 = vadd.f32 0.0, %v5434
  %v5436 = vpop.f32.mrb[0].mxu0
  %5437 = vmatprep.mubr.bf16.mxu0 0
  %5438 = vmatmul.mubr.bf16.gmra.mrb[0].mxu0 %v5195
  %v5439 = vpop.f32.mrb[0].mxu0
  %v5440 = vadd.f32 0.0, %v5439
  %v5441 = vpop.f32.mrb[0].mxu0
  %v5442 = vpop.f32.mrb[0].mxu0
  %v5443 = vadd.f32 0.0, %v5442
  %v5444 = vpop.f32.mrb[0].mxu0
  %5445 = vmatprep.mubr.bf16.mxu0 0
  %5446 = vmatmul.mubr.bf16.gmra.mrb[0].mxu0 %v5198
  %v5447 = vpop.f32.mrb[0].mxu0
  %v5448 = vadd.f32 0.0, %v5447
  %v5449 = vpop.f32.mrb[0].mxu0
  %v5450 = vpop.f32.mrb[0].mxu0
  %v5451 = vadd.f32 0.0, %v5450
  %v5452 = vpop.f32.mrb[0].mxu0
  %5453 = vmatprep.mubr.bf16.mxu0 0
  %5454 = vmatmul.mubr.bf16.gmra.mrb[0].mxu0 %v5201
  %v5455 = vpop.f32.mrb[0].mxu0
  %v5456 = vadd.f32 0.0, %v5455
  %v5457 = vpop.f32.mrb[0].mxu0
  %v5458 = vpop.f32.mrb[0].mxu0
  %v5459 = vadd.f32 0.0, %v5458
  %v5460 = vpop.f32.mrb[0].mxu0
  %5461 = vmatprep.mubr.bf16.mxu0 0
  %5462 = vmatmul.mubr.bf16.gmra.mrb[0].mxu0 %v5204
  %v5463 = vpop.f32.mrb[0].mxu0
  %v5464 = vadd.f32 0.0, %v5463
  %v5465 = vpop.f32.mrb[0].mxu0
  %v5466 = vpop.f32.mrb[0].mxu0
  %v5467 = vadd.f32 0.0, %v5466
  %v5468 = vpop.f32.mrb[0].mxu0
  %5469 = vmatprep.mubr.bf16.mxu0 0
  %5470 = vmatmul.mubr.bf16.gmra.mrb[0].mxu0 %v5207
  %v5471 = vpop.f32.mrb[0].mxu0
  %v5472 = vadd.f32 0.0, %v5471
  %v5473 = vpop.f32.mrb[0].mxu0
  %v5474 = vpop.f32.mrb[0].mxu0
  %v5475 = vadd.f32 0.0, %v5474
  %v5476 = vpop.f32.mrb[0].mxu0
  %5477 = vmatprep.mubr.bf16.mxu0 0
  %5478 = vmatmul.mubr.bf16.gmra.mrb[0].mxu0 %v5210
  %v5479 = vpop.f32.mrb[0].mxu0
  %v5480 = vadd.f32 0.0, %v5479
  %v5481 = vpop.f32.mrb[0].mxu0
  %v5482 = vpop.f32.mrb[0].mxu0
  %v5483 = vadd.f32 0.0, %v5482
  %v5484 = vpop.f32.mrb[0].mxu0
  %5485 = vmatprep.mubr.bf16.mxu0 0
  %5486 = vmatmul.mubr.bf16.gmra.mrb[0].mxu0 %v5213
  %v5487 = vpop.f32.mrb[0].mxu0
  %v5488 = vadd.f32 0.0, %v5487
  %v5489 = vpop.f32.mrb[0].mxu0
  %v5490 = vpop.f32.mrb[0].mxu0
  %v5491 = vadd.f32 0.0, %v5490
  %v5492 = vpop.f32.mrb[0].mxu0
  %5493 = vmatprep.mubr.bf16.mxu0 0
  %5494 = vmatmul.mubr.bf16.gmra.mrb[0].mxu0 %v5216
  %v5495 = vpop.f32.mrb[0].mxu0
  %v5496 = vadd.f32 0.0, %v5495
  %v5497 = vpop.f32.mrb[0].mxu0
  %v5498 = vpop.f32.mrb[0].mxu0
  %v5499 = vadd.f32 0.0, %v5498
  %v5500 = vpop.f32.mrb[0].mxu0
  %5501 = vmatprep.mubr.bf16.mxu0 0
  %5502 = vmatmul.mubr.bf16.gmra.mrb[0].mxu0 %v5219
  %v5503 = vpop.f32.mrb[0].mxu0
  %v5504 = vadd.f32 0.0, %v5503
  %v5505 = vpop.f32.mrb[0].mxu0
  %v5506 = vpop.f32.mrb[0].mxu0
  %v5507 = vadd.f32 0.0, %v5506
  %v5508 = vpop.f32.mrb[0].mxu0
  %5509 = vdwg.mxu0
  %v5510 = vadd.f32 %v4948, %v5256
  %v5511 = vadd.f32 %v4949, %v5259
  %v5512 = vadd.f32 %v4950, %v5264
  %v5513 = vadd.f32 %v4951, %v5267
  %v5514 = vadd.f32 %v4952, %v5272
  %v5515 = vadd.f32 %v4953, %v5275
  %v5516 = vadd.f32 %v4954, %v5280
  %v5517 = vadd.f32 %v4955, %v5283
  %v5518 = vadd.f32 %v4956, %v5288
  %v5519 = vadd.f32 %v4957, %v5291
  %v5520 = vadd.f32 %v4958, %v5296
  %v5521 = vadd.f32 %v4959, %v5299
  %v5522 = vadd.f32 %v4960, %v5304
  %v5523 = vadd.f32 %v4961, %v5307
  %v5524 = vadd.f32 %v4962, %v5312
  %v5525 = vadd.f32 %v4963, %v5315
  %v5526 = vadd.f32 %v4964, %v5320
  %v5527 = vadd.f32 %v4965, %v5323
  %v5528 = vadd.f32 %v4966, %v5328
  %v5529 = vadd.f32 %v4967, %v5331
  %v5530 = vadd.f32 %v4968, %v5336
  %v5531 = vadd.f32 %v4969, %v5339
  %v5532 = vadd.f32 %v4970, %v5344
  %v5533 = vadd.f32 %v4971, %v5347
  %v5534 = vadd.f32 %v4972, %v5352
  %v5535 = vadd.f32 %v4973, %v5355
  %v5536 = vadd.f32 %v4974, %v5360
  %v5537 = vadd.f32 %v4975, %v5363
  %v5538 = vadd.f32 %v4976, %v5368
  %v5539 = vadd.f32 %v4977, %v5371
  %v5540 = vadd.f32 %v4978, %v5376
  %v5541 = vadd.f32 %v4979, %v5379
  %v5542 = vadd.f32 %v4980, %v5384
  %v5543 = vadd.f32 %v4981, %v5387
  %v5544 = vadd.f32 %v4982, %v5392
  %v5545 = vadd.f32 %v4983, %v5395
  %v5546 = vadd.f32 %v4984, %v5400
  %v5547 = vadd.f32 %v4985, %v5403
  %v5548 = vadd.f32 %v4986, %v5408
  %v5549 = vadd.f32 %v4987, %v5411
  %v5550 = vadd.f32 %v4988, %v5416
  %v5551 = vadd.f32 %v4989, %v5419
  %v5552 = vadd.f32 %v4990, %v5424
  %v5553 = vadd.f32 %v4991, %v5427
  %v5554 = vadd.f32 %v4992, %v5432
  %v5555 = vadd.f32 %v4993, %v5435
  %v5556 = vadd.f32 %v4994, %v5440
  %v5557 = vadd.f32 %v4995, %v5443
  %v5558 = vadd.f32 %v4996, %v5448
  %v5559 = vadd.f32 %v4997, %v5451
  %v5560 = vadd.f32 %v4998, %v5456
  %v5561 = vadd.f32 %v4999, %v5459
  %v5562 = vadd.f32 %v5000, %v5464
  %v5563 = vadd.f32 %v5001, %v5467
  %v5564 = vadd.f32 %v5002, %v5472
  %v5565 = vadd.f32 %v5003, %v5475
  %v5566 = vadd.f32 %v5004, %v5480
  %v5567 = vadd.f32 %v5005, %v5483
  %v5568 = vadd.f32 %v5006, %v5488
  %v5569 = vadd.f32 %v5007, %v5491
  %v5570 = vadd.f32 %v5008, %v5496
  %v5571 = vadd.f32 %v5009, %v5499
  %v5572 = vadd.f32 %v5010, %v5504
  %v5573 = vadd.f32 %v5011, %v5507
  %v5574 = vld [vmem:[%s2868 + $0x10] sm:$0xff]
  %v5575 = vld [vmem:[%s2868 + $0x18] sm:$0xff]
  %v5576 = vld [vmem:[%s2868 + $0x20] sm:$0xff]
  %v5577 = vld [vmem:[%s2868 + $0x28] sm:$0xff]
  %v5578 = vld [vmem:[%s2868 + $0x30] sm:$0xff]
  %v5579 = vld [vmem:[%s2868 + $0x38] sm:$0xff]
  %v5580 = vld [vmem:[%s2868 + $0x40] sm:$0xff]
  %v5581 = vld [vmem:[%s2868 + $0x48] sm:$0xff]
  %v5582 = vld [vmem:[%s2868 + $0x60] sm:$0xff]
  %v5583 = vld [vmem:[%s2868 + $0x68] sm:$0xff]
  %v5584 = vld [vmem:[%s2868 + $0x70] sm:$0xff]
  %v5585 = vld [vmem:[%s2868 + $0x78] sm:$0xff]
  %v5586 = vld [vmem:[%s2868 + $0x80] sm:$0xff]
  %v5587 = vld [vmem:[%s2868 + $0x88] sm:$0xff]
  %v5588 = vld [vmem:[%s2868 + $0x90] sm:$0xff]
  %v5589 = vld [vmem:[%s2868 + $0x98] sm:$0xff]
  %v5590 = vld [vmem:[%s2868 + $0xb0] sm:$0xff]
  %v5591 = vld [vmem:[%s2868 + $0xb8] sm:$0xff]
  %v5592 = vld [vmem:[%s2868 + $0xc0] sm:$0xff]
  %v5593 = vld [vmem:[%s2868 + $0xc8] sm:$0xff]
  %v5594 = vld [vmem:[%s2868 + $0xd0] sm:$0xff]
  %v5595 = vld [vmem:[%s2868 + $0xd8] sm:$0xff]
  %v5596 = vld [vmem:[%s2868 + $0xe0] sm:$0xff]
  %v5597 = vld [vmem:[%s2868 + $0xe8] sm:$0xff]
  %v5598 = vld [vmem:[%s2868 + $0x100] sm:$0xff]
  %v5599 = vld [vmem:[%s2868 + $0x108] sm:$0xff]
  %v5600 = vld [vmem:[%s2868 + $0x110] sm:$0xff]
  %v5601 = vld [vmem:[%s2868 + $0x118] sm:$0xff]
  %v5602 = vld [vmem:[%s2868 + $0x120] sm:$0xff]
  %v5603 = vld [vmem:[%s2868 + $0x128] sm:$0xff]
  %v5604 = vld [vmem:[%s2868 + $0x130] sm:$0xff]
  %v5605 = vld [vmem:[%s2868 + $0x138] sm:$0xff]
  %v5606 = vld [vmem:[%s2868 + $0x150] sm:$0xff]
  %v5607 = vld [vmem:[%s2868 + $0x158] sm:$0xff]
  %v5608 = vld [vmem:[%s2868 + $0x160] sm:$0xff]
  %v5609 = vld [vmem:[%s2868 + $0x168] sm:$0xff]
  %v5610 = vld [vmem:[%s2868 + $0x170] sm:$0xff]
  %v5611 = vld [vmem:[%s2868 + $0x178] sm:$0xff]
  %v5612 = vld [vmem:[%s2868 + $0x180] sm:$0xff]
  %v5613 = vld [vmem:[%s2868 + $0x188] sm:$0xff]
  %v5614 = vld [vmem:[%s2868 + $0x1a0] sm:$0xff]
  %v5615 = vld [vmem:[%s2868 + $0x1a8] sm:$0xff]
  %v5616 = vld [vmem:[%s2868 + $0x1b0] sm:$0xff]
  %v5617 = vld [vmem:[%s2868 + $0x1b8] sm:$0xff]
  %v5618 = vld [vmem:[%s2868 + $0x1c0] sm:$0xff]
  %v5619 = vld [vmem:[%s2868 + $0x1c8] sm:$0xff]
  %v5620 = vld [vmem:[%s2868 + $0x1d0] sm:$0xff]
  %v5621 = vld [vmem:[%s2868 + $0x1d8] sm:$0xff]
  %v5622 = vld [vmem:[%s2868 + $0x1f0] sm:$0xff]
  %v5623 = vld [vmem:[%s2868 + $0x1f8] sm:$0xff]
  %v5624 = vld [vmem:[%s2868 + $0x200] sm:$0xff]
  %v5625 = vld [vmem:[%s2868 + $0x208] sm:$0xff]
  %v5626 = vld [vmem:[%s2868 + $0x210] sm:$0xff]
  %v5627 = vld [vmem:[%s2868 + $0x218] sm:$0xff]
  %v5628 = vld [vmem:[%s2868 + $0x220] sm:$0xff]
  %v5629 = vld [vmem:[%s2868 + $0x228] sm:$0xff]
  %v5630 = vld [vmem:[%s2868 + $0x240] sm:$0xff]
  %v5631 = vld [vmem:[%s2868 + $0x248] sm:$0xff]
  %v5632 = vld [vmem:[%s2868 + $0x250] sm:$0xff]
  %v5633 = vld [vmem:[%s2868 + $0x258] sm:$0xff]
  %v5634 = vld [vmem:[%s2868 + $0x260] sm:$0xff]
  %v5635 = vld [vmem:[%s2868 + $0x268] sm:$0xff]
  %v5636 = vld [vmem:[%s2868 + $0x270] sm:$0xff]
  %v5637 = vld [vmem:[%s2868 + $0x278] sm:$0xff]
  %v5638 = vpack.c.bf16 %v5575, %v5574
  %v5639 = vpack.c.bf16 %v5577, %v5576
  %v5640 = vpack.c.bf16 %v5579, %v5578
  %v5641 = vpack.c.bf16 %v5581, %v5580
  %v5642 = vpack.c.bf16 %v5583, %v5582
  %v5643 = vpack.c.bf16 %v5585, %v5584
  %v5644 = vpack.c.bf16 %v5587, %v5586
  %v5645 = vpack.c.bf16 %v5589, %v5588
  %v5646 = vpack.c.bf16 %v5591, %v5590
  %v5647 = vpack.c.bf16 %v5593, %v5592
  %v5648 = vpack.c.bf16 %v5595, %v5594
  %v5649 = vpack.c.bf16 %v5597, %v5596
  %v5650 = vpack.c.bf16 %v5599, %v5598
  %v5651 = vpack.c.bf16 %v5601, %v5600
  %v5652 = vpack.c.bf16 %v5603, %v5602
  %v5653 = vpack.c.bf16 %v5605, %v5604
  %v5654 = vpack.c.bf16 %v5607, %v5606
  %v5655 = vpack.c.bf16 %v5609, %v5608
  %v5656 = vpack.c.bf16 %v5611, %v5610
  %v5657 = vpack.c.bf16 %v5613, %v5612
  %v5658 = vpack.c.bf16 %v5615, %v5614
  %v5659 = vpack.c.bf16 %v5617, %v5616
  %v5660 = vpack.c.bf16 %v5619, %v5618
  %v5661 = vpack.c.bf16 %v5621, %v5620
  %v5662 = vpack.c.bf16 %v5623, %v5622
  %v5663 = vpack.c.bf16 %v5625, %v5624
  %v5664 = vpack.c.bf16 %v5627, %v5626
  %v5665 = vpack.c.bf16 %v5629, %v5628
  %v5666 = vpack.c.bf16 %v5631, %v5630
  %v5667 = vpack.c.bf16 %v5633, %v5632
  %v5668 = vpack.c.bf16 %v5635, %v5634
  %v5669 = vpack.c.bf16 %v5637, %v5636
  %s5670 = scalar_lea.vmem %s3, 80
  %v5671 = vld [vmem:[%s5670] sm:$0xf]
  %v5672 = vld [vmem:[%s5670 + $0x4] sm:$0xf]
  %v5673 = vld [vmem:[%s5670 + $0x8] sm:$0xf]
  %v5674 = vld [vmem:[%s5670 + $0xc] sm:$0xf]
  %v5679 = vunpack.c.l.b16 %v5671
  %v5680 = vunpack.c.l.b16 %v5672
  %v5681 = vunpack.c.l.b16 %v5673
  %v5682 = vunpack.c.l.b16 %v5674
  %v5683 = vpack.c.b16 %v5680, %v5679
  %v5684 = vpack.c.b16 %v5682, %v5681
  %v5688 = vsel %vm2846, %v5638, 0
  %v5691 = vsel %vm2846, %v5639, 0
  %v5694 = vsel %vm2846, %v5640, 0
  %v5697 = vsel %vm2846, %v5641, 0
  %v5700 = vsel %vm2846, %v5642, 0
  %v5703 = vsel %vm2846, %v5643, 0
  %v5706 = vsel %vm2846, %v5644, 0
  %v5709 = vsel %vm2846, %v5645, 0
  %v5712 = vsel %vm2846, %v5646, 0
  %v5715 = vsel %vm2846, %v5647, 0
  %v5718 = vsel %vm2846, %v5648, 0
  %v5721 = vsel %vm2846, %v5649, 0
  %v5724 = vsel %vm2846, %v5650, 0
  %v5727 = vsel %vm2846, %v5651, 0
  %v5730 = vsel %vm2846, %v5652, 0
  %v5733 = vsel %vm2846, %v5653, 0
  %v5736 = vsel %vm2846, %v5654, 0
  %v5739 = vsel %vm2846, %v5655, 0
  %v5742 = vsel %vm2846, %v5656, 0
  %v5745 = vsel %vm2846, %v5657, 0
  %v5748 = vsel %vm2846, %v5658, 0
  %v5751 = vsel %vm2846, %v5659, 0
  %v5754 = vsel %vm2846, %v5660, 0
  %v5757 = vsel %vm2846, %v5661, 0
  %v5760 = vsel %vm2846, %v5662, 0
  %v5763 = vsel %vm2846, %v5663, 0
  %v5766 = vsel %vm2846, %v5664, 0
  %v5769 = vsel %vm2846, %v5665, 0
  %v5772 = vsel %vm2846, %v5666, 0
  %v5775 = vsel %vm2846, %v5667, 0
  %v5778 = vsel %vm2846, %v5668, 0
  %v5781 = vsel %vm2846, %v5669, 0
  %5783 = vmatprep.subr.bf16.mxu0 0
  %5784 = vmatpush1.bf16.msra.mxu0 %v5683
  %5785 = vmatprep.subr.bf16.mxu0 0
  %5786 = vmatpush1.bf16.msra.mxu0 %v5684
  %5787 = vmatprep.subr.bf16.mxu0 0
  %5788 = vmatpush1.bf16.msra.mxu0 0
  %5789 = vmatprep.subr.bf16.mxu0 0
  %5790 = vmatpush1.bf16.msra.mxu0 0
  %5791 = vmatprep.subr.bf16.mxu0 0
  %5792 = vmatpush1.bf16.msra.mxu0 0
  %5793 = vmatprep.subr.bf16.mxu0 0
  %5794 = vmatpush1.bf16.msra.mxu0 0
  %5795 = vmatprep.subr.bf16.mxu0 0
  %5796 = vmatpush1.bf16.msra.mxu0 0
  %5797 = vmatprep.subr.bf16.mxu0 0
  %5798 = vmatpush1.bf16.msra.mxu0 0
  %5799 = vmatprep.subr.bf16.mxu0 0
  %5800 = vmatpush1.bf16.msra.mxu0 0
  %5801 = vmatprep.subr.bf16.mxu0 0
  %5802 = vmatpush1.bf16.msra.mxu0 0
  %5803 = vmatprep.subr.bf16.mxu0 0
  %5804 = vmatpush1.bf16.msra.mxu0 0
  %5805 = vmatprep.subr.bf16.mxu0 0
  %5806 = vmatpush1.bf16.msra.mxu0 0
  %5807 = vmatprep.subr.bf16.mxu0 0
  %5808 = vmatpush1.bf16.msra.mxu0 0
  %5809 = vmatprep.subr.bf16.mxu0 0
  %5810 = vmatpush1.bf16.msra.mxu0 0
  %5811 = vmatprep.subr.bf16.mxu0 0
  %5812 = vmatpush1.bf16.msra.mxu0 0
  %5813 = vmatprep.subr.bf16.mxu0 0
  %5814 = vmatpush1.bf16.msra.mxu0 0
  %5815 = vmatprep.mubr.bf16.mxu0 0
  %5816 = vmatmul.mubr.bf16.gmra.mrb[0].mxu0 %v5688
  %v5817 = vpop.f32.mrb[0].mxu0
  %v5818 = vadd.f32 0.0, %v5817
  %v5819 = vpop.f32.mrb[0].mxu0
  %v5820 = vpop.f32.mrb[0].mxu0
  %v5821 = vadd.f32 0.0, %v5820
  %v5822 = vpop.f32.mrb[0].mxu0
  %5823 = vmatprep.mubr.bf16.mxu0 0
  %5824 = vmatmul.mubr.bf16.gmra.mrb[0].mxu0 %v5691
  %v5825 = vpop.f32.mrb[0].mxu0
  %v5826 = vadd.f32 0.0, %v5825
  %v5827 = vpop.f32.mrb[0].mxu0
  %v5828 = vpop.f32.mrb[0].mxu0
  %v5829 = vadd.f32 0.0, %v5828
  %v5830 = vpop.f32.mrb[0].mxu0
  %5831 = vmatprep.mubr.bf16.mxu0 0
  %5832 = vmatmul.mubr.bf16.gmra.mrb[0].mxu0 %v5694
  %v5833 = vpop.f32.mrb[0].mxu0
  %v5834 = vadd.f32 0.0, %v5833
  %v5835 = vpop.f32.mrb[0].mxu0
  %v5836 = vpop.f32.mrb[0].mxu0
  %v5837 = vadd.f32 0.0, %v5836
  %v5838 = vpop.f32.mrb[0].mxu0
  %5839 = vmatprep.mubr.bf16.mxu0 0
  %5840 = vmatmul.mubr.bf16.gmra.mrb[0].mxu0 %v5697
  %v5841 = vpop.f32.mrb[0].mxu0
  %v5842 = vadd.f32 0.0, %v5841
  %v5843 = vpop.f32.mrb[0].mxu0
  %v5844 = vpop.f32.mrb[0].mxu0
  %v5845 = vadd.f32 0.0, %v5844
  %v5846 = vpop.f32.mrb[0].mxu0
  %5847 = vmatprep.mubr.bf16.mxu0 0
  %5848 = vmatmul.mubr.bf16.gmra.mrb[0].mxu0 %v5700
  %v5849 = vpop.f32.mrb[0].mxu0
  %v5850 = vadd.f32 0.0, %v5849
  %v5851 = vpop.f32.mrb[0].mxu0
  %v5852 = vpop.f32.mrb[0].mxu0
  %v5853 = vadd.f32 0.0, %v5852
  %v5854 = vpop.f32.mrb[0].mxu0
  %5855 = vmatprep.mubr.bf16.mxu0 0
  %5856 = vmatmul.mubr.bf16.gmra.mrb[0].mxu0 %v5703
  %v5857 = vpop.f32.mrb[0].mxu0
  %v5858 = vadd.f32 0.0, %v5857
  %v5859 = vpop.f32.mrb[0].mxu0
  %v5860 = vpop.f32.mrb[0].mxu0
  %v5861 = vadd.f32 0.0, %v5860
  %v5862 = vpop.f32.mrb[0].mxu0
  %5863 = vmatprep.mubr.bf16.mxu0 0
  %5864 = vmatmul.mubr.bf16.gmra.mrb[0].mxu0 %v5706
  %v5865 = vpop.f32.mrb[0].mxu0
  %v5866 = vadd.f32 0.0, %v5865
  %v5867 = vpop.f32.mrb[0].mxu0
  %v5868 = vpop.f32.mrb[0].mxu0
  %v5869 = vadd.f32 0.0, %v5868
  %v5870 = vpop.f32.mrb[0].mxu0
  %5871 = vmatprep.mubr.bf16.mxu0 0
  %5872 = vmatmul.mubr.bf16.gmra.mrb[0].mxu0 %v5709
  %v5873 = vpop.f32.mrb[0].mxu0
  %v5874 = vadd.f32 0.0, %v5873
  %v5875 = vpop.f32.mrb[0].mxu0
  %v5876 = vpop.f32.mrb[0].mxu0
  %v5877 = vadd.f32 0.0, %v5876
  %v5878 = vpop.f32.mrb[0].mxu0
  %5879 = vmatprep.mubr.bf16.mxu0 0
  %5880 = vmatmul.mubr.bf16.gmra.mrb[0].mxu0 %v5712
  %v5881 = vpop.f32.mrb[0].mxu0
  %v5882 = vadd.f32 0.0, %v5881
  %v5883 = vpop.f32.mrb[0].mxu0
  %v5884 = vpop.f32.mrb[0].mxu0
  %v5885 = vadd.f32 0.0, %v5884
  %v5886 = vpop.f32.mrb[0].mxu0
  %5887 = vmatprep.mubr.bf16.mxu0 0
  %5888 = vmatmul.mubr.bf16.gmra.mrb[0].mxu0 %v5715
  %v5889 = vpop.f32.mrb[0].mxu0
  %v5890 = vadd.f32 0.0, %v5889
  %v5891 = vpop.f32.mrb[0].mxu0
  %v5892 = vpop.f32.mrb[0].mxu0
  %v5893 = vadd.f32 0.0, %v5892
  %v5894 = vpop.f32.mrb[0].mxu0
  %5895 = vmatprep.mubr.bf16.mxu0 0
  %5896 = vmatmul.mubr.bf16.gmra.mrb[0].mxu0 %v5718
  %v5897 = vpop.f32.mrb[0].mxu0
  %v5898 = vadd.f32 0.0, %v5897
  %v5899 = vpop.f32.mrb[0].mxu0
  %v5900 = vpop.f32.mrb[0].mxu0
  %v5901 = vadd.f32 0.0, %v5900
  %v5902 = vpop.f32.mrb[0].mxu0
  %5903 = vmatprep.mubr.bf16.mxu0 0
  %5904 = vmatmul.mubr.bf16.gmra.mrb[0].mxu0 %v5721
  %v5905 = vpop.f32.mrb[0].mxu0
  %v5906 = vadd.f32 0.0, %v5905
  %v5907 = vpop.f32.mrb[0].mxu0
  %v5908 = vpop.f32.mrb[0].mxu0
  %v5909 = vadd.f32 0.0, %v5908
  %v5910 = vpop.f32.mrb[0].mxu0
  %5911 = vmatprep.mubr.bf16.mxu0 0
  %5912 = vmatmul.mubr.bf16.gmra.mrb[0].mxu0 %v5724
  %v5913 = vpop.f32.mrb[0].mxu0
  %v5914 = vadd.f32 0.0, %v5913
  %v5915 = vpop.f32.mrb[0].mxu0
  %v5916 = vpop.f32.mrb[0].mxu0
  %v5917 = vadd.f32 0.0, %v5916
  %v5918 = vpop.f32.mrb[0].mxu0
  %5919 = vmatprep.mubr.bf16.mxu0 0
  %5920 = vmatmul.mubr.bf16.gmra.mrb[0].mxu0 %v5727
  %v5921 = vpop.f32.mrb[0].mxu0
  %v5922 = vadd.f32 0.0, %v5921
  %v5923 = vpop.f32.mrb[0].mxu0
  %v5924 = vpop.f32.mrb[0].mxu0
  %v5925 = vadd.f32 0.0, %v5924
  %v5926 = vpop.f32.mrb[0].mxu0
  %5927 = vmatprep.mubr.bf16.mxu0 0
  %5928 = vmatmul.mubr.bf16.gmra.mrb[0].mxu0 %v5730
  %v5929 = vpop.f32.mrb[0].mxu0
  %v5930 = vadd.f32 0.0, %v5929
  %v5931 = vpop.f32.mrb[0].mxu0
  %v5932 = vpop.f32.mrb[0].mxu0
  %v5933 = vadd.f32 0.0, %v5932
  %v5934 = vpop.f32.mrb[0].mxu0
  %5935 = vmatprep.mubr.bf16.mxu0 0
  %5936 = vmatmul.mubr.bf16.gmra.mrb[0].mxu0 %v5733
  %v5937 = vpop.f32.mrb[0].mxu0
  %v5938 = vadd.f32 0.0, %v5937
  %v5939 = vpop.f32.mrb[0].mxu0
  %v5940 = vpop.f32.mrb[0].mxu0
  %v5941 = vadd.f32 0.0, %v5940
  %v5942 = vpop.f32.mrb[0].mxu0
  %5943 = vmatprep.mubr.bf16.mxu0 0
  %5944 = vmatmul.mubr.bf16.gmra.mrb[0].mxu0 %v5736
  %v5945 = vpop.f32.mrb[0].mxu0
  %v5946 = vadd.f32 0.0, %v5945
  %v5947 = vpop.f32.mrb[0].mxu0
  %v5948 = vpop.f32.mrb[0].mxu0
  %v5949 = vadd.f32 0.0, %v5948
  %v5950 = vpop.f32.mrb[0].mxu0
  %5951 = vmatprep.mubr.bf16.mxu0 0
  %5952 = vmatmul.mubr.bf16.gmra.mrb[0].mxu0 %v5739
  %v5953 = vpop.f32.mrb[0].mxu0
  %v5954 = vadd.f32 0.0, %v5953
  %v5955 = vpop.f32.mrb[0].mxu0
  %v5956 = vpop.f32.mrb[0].mxu0
  %v5957 = vadd.f32 0.0, %v5956
  %v5958 = vpop.f32.mrb[0].mxu0
  %5959 = vmatprep.mubr.bf16.mxu0 0
  %5960 = vmatmul.mubr.bf16.gmra.mrb[0].mxu0 %v5742
  %v5961 = vpop.f32.mrb[0].mxu0
  %v5962 = vadd.f32 0.0, %v5961
  %v5963 = vpop.f32.mrb[0].mxu0
  %v5964 = vpop.f32.mrb[0].mxu0
  %v5965 = vadd.f32 0.0, %v5964
  %v5966 = vpop.f32.mrb[0].mxu0
  %5967 = vmatprep.mubr.bf16.mxu0 0
  %5968 = vmatmul.mubr.bf16.gmra.mrb[0].mxu0 %v5745
  %v5969 = vpop.f32.mrb[0].mxu0
  %v5970 = vadd.f32 0.0, %v5969
  %v5971 = vpop.f32.mrb[0].mxu0
  %v5972 = vpop.f32.mrb[0].mxu0
  %v5973 = vadd.f32 0.0, %v5972
  %v5974 = vpop.f32.mrb[0].mxu0
  %5975 = vmatprep.mubr.bf16.mxu0 0
  %5976 = vmatmul.mubr.bf16.gmra.mrb[0].mxu0 %v5748
  %v5977 = vpop.f32.mrb[0].mxu0
  %v5978 = vadd.f32 0.0, %v5977
  %v5979 = vpop.f32.mrb[0].mxu0
  %v5980 = vpop.f32.mrb[0].mxu0
  %v5981 = vadd.f32 0.0, %v5980
  %v5982 = vpop.f32.mrb[0].mxu0
  %5983 = vmatprep.mubr.bf16.mxu0 0
  %5984 = vmatmul.mubr.bf16.gmra.mrb[0].mxu0 %v5751
  %v5985 = vpop.f32.mrb[0].mxu0
  %v5986 = vadd.f32 0.0, %v5985
  %v5987 = vpop.f32.mrb[0].mxu0
  %v5988 = vpop.f32.mrb[0].mxu0
  %v5989 = vadd.f32 0.0, %v5988
  %v5990 = vpop.f32.mrb[0].mxu0
  %5991 = vmatprep.mubr.bf16.mxu0 0
  %5992 = vmatmul.mubr.bf16.gmra.mrb[0].mxu0 %v5754
  %v5993 = vpop.f32.mrb[0].mxu0
  %v5994 = vadd.f32 0.0, %v5993
  %v5995 = vpop.f32.mrb[0].mxu0
  %v5996 = vpop.f32.mrb[0].mxu0
  %v5997 = vadd.f32 0.0, %v5996
  %v5998 = vpop.f32.mrb[0].mxu0
  %5999 = vmatprep.mubr.bf16.mxu0 0
  %6000 = vmatmul.mubr.bf16.gmra.mrb[0].mxu0 %v5757
  %v6001 = vpop.f32.mrb[0].mxu0
  %v6002 = vadd.f32 0.0, %v6001
  %v6003 = vpop.f32.mrb[0].mxu0
  %v6004 = vpop.f32.mrb[0].mxu0
  %v6005 = vadd.f32 0.0, %v6004
  %v6006 = vpop.f32.mrb[0].mxu0
  %6007 = vmatprep.mubr.bf16.mxu0 0
  %6008 = vmatmul.mubr.bf16.gmra.mrb[0].mxu0 %v5760
  %v6009 = vpop.f32.mrb[0].mxu0
  %v6010 = vadd.f32 0.0, %v6009
  %v6011 = vpop.f32.mrb[0].mxu0
  %v6012 = vpop.f32.mrb[0].mxu0
  %v6013 = vadd.f32 0.0, %v6012
  %v6014 = vpop.f32.mrb[0].mxu0
  %6015 = vmatprep.mubr.bf16.mxu0 0
  %6016 = vmatmul.mubr.bf16.gmra.mrb[0].mxu0 %v5763
  %v6017 = vpop.f32.mrb[0].mxu0
  %v6018 = vadd.f32 0.0, %v6017
  %v6019 = vpop.f32.mrb[0].mxu0
  %v6020 = vpop.f32.mrb[0].mxu0
  %v6021 = vadd.f32 0.0, %v6020
  %v6022 = vpop.f32.mrb[0].mxu0
  %6023 = vmatprep.mubr.bf16.mxu0 0
  %6024 = vmatmul.mubr.bf16.gmra.mrb[0].mxu0 %v5766
  %v6025 = vpop.f32.mrb[0].mxu0
  %v6026 = vadd.f32 0.0, %v6025
  %v6027 = vpop.f32.mrb[0].mxu0
  %v6028 = vpop.f32.mrb[0].mxu0
  %v6029 = vadd.f32 0.0, %v6028
  %v6030 = vpop.f32.mrb[0].mxu0
  %6031 = vmatprep.mubr.bf16.mxu0 0
  %6032 = vmatmul.mubr.bf16.gmra.mrb[0].mxu0 %v5769
  %v6033 = vpop.f32.mrb[0].mxu0
  %v6034 = vadd.f32 0.0, %v6033
  %v6035 = vpop.f32.mrb[0].mxu0
  %v6036 = vpop.f32.mrb[0].mxu0
  %v6037 = vadd.f32 0.0, %v6036
  %v6038 = vpop.f32.mrb[0].mxu0
  %6039 = vmatprep.mubr.bf16.mxu0 0
  %6040 = vmatmul.mubr.bf16.gmra.mrb[0].mxu0 %v5772
  %v6041 = vpop.f32.mrb[0].mxu0
  %v6042 = vadd.f32 0.0, %v6041
  %v6043 = vpop.f32.mrb[0].mxu0
  %v6044 = vpop.f32.mrb[0].mxu0
  %v6045 = vadd.f32 0.0, %v6044
  %v6046 = vpop.f32.mrb[0].mxu0
  %6047 = vmatprep.mubr.bf16.mxu0 0
  %6048 = vmatmul.mubr.bf16.gmra.mrb[0].mxu0 %v5775
  %v6049 = vpop.f32.mrb[0].mxu0
  %v6050 = vadd.f32 0.0, %v6049
  %v6051 = vpop.f32.mrb[0].mxu0
  %v6052 = vpop.f32.mrb[0].mxu0
  %v6053 = vadd.f32 0.0, %v6052
  %v6054 = vpop.f32.mrb[0].mxu0
  %6055 = vmatprep.mubr.bf16.mxu0 0
  %6056 = vmatmul.mubr.bf16.gmra.mrb[0].mxu0 %v5778
  %v6057 = vpop.f32.mrb[0].mxu0
  %v6058 = vadd.f32 0.0, %v6057
  %v6059 = vpop.f32.mrb[0].mxu0
  %v6060 = vpop.f32.mrb[0].mxu0
  %v6061 = vadd.f32 0.0, %v6060
  %v6062 = vpop.f32.mrb[0].mxu0
  %6063 = vmatprep.mubr.bf16.mxu0 0
  %6064 = vmatmul.mubr.bf16.gmra.mrb[0].mxu0 %v5781
  %v6065 = vpop.f32.mrb[0].mxu0
  %v6066 = vadd.f32 0.0, %v6065
  %v6067 = vpop.f32.mrb[0].mxu0
  %v6068 = vpop.f32.mrb[0].mxu0
  %v6069 = vadd.f32 0.0, %v6068
  %v6070 = vpop.f32.mrb[0].mxu0
  %6071 = vdwg.mxu0
  %v6072 = vadd.f32 %v5510, %v5818
  %v6073 = vadd.f32 %v5511, %v5821
  %v6074 = vadd.f32 %v5512, %v5826
  %v6075 = vadd.f32 %v5513, %v5829
  %v6076 = vadd.f32 %v5514, %v5834
  %v6077 = vadd.f32 %v5515, %v5837
  %v6078 = vadd.f32 %v5516, %v5842
  %v6079 = vadd.f32 %v5517, %v5845
  %v6080 = vadd.f32 %v5518, %v5850
  %v6081 = vadd.f32 %v5519, %v5853
  %v6082 = vadd.f32 %v5520, %v5858
  %v6083 = vadd.f32 %v5521, %v5861
  %v6084 = vadd.f32 %v5522, %v5866
  %v6085 = vadd.f32 %v5523, %v5869
  %v6086 = vadd.f32 %v5524, %v5874
  %v6087 = vadd.f32 %v5525, %v5877
  %v6088 = vadd.f32 %v5526, %v5882
  %v6089 = vadd.f32 %v5527, %v5885
  %v6090 = vadd.f32 %v5528, %v5890
  %v6091 = vadd.f32 %v5529, %v5893
  %v6092 = vadd.f32 %v5530, %v5898
  %v6093 = vadd.f32 %v5531, %v5901
  %v6094 = vadd.f32 %v5532, %v5906
  %v6095 = vadd.f32 %v5533, %v5909
  %v6096 = vadd.f32 %v5534, %v5914
  %v6097 = vadd.f32 %v5535, %v5917
  %v6098 = vadd.f32 %v5536, %v5922
  %v6099 = vadd.f32 %v5537, %v5925
  %v6100 = vadd.f32 %v5538, %v5930
  %v6101 = vadd.f32 %v5539, %v5933
  %v6102 = vadd.f32 %v5540, %v5938
  %v6103 = vadd.f32 %v5541, %v5941
  %v6104 = vadd.f32 %v5542, %v5946
  %v6105 = vadd.f32 %v5543, %v5949
  %v6106 = vadd.f32 %v5544, %v5954
  %v6107 = vadd.f32 %v5545, %v5957
  %v6108 = vadd.f32 %v5546, %v5962
  %v6109 = vadd.f32 %v5547, %v5965
  %v6110 = vadd.f32 %v5548, %v5970
  %v6111 = vadd.f32 %v5549, %v5973
  %v6112 = vadd.f32 %v5550, %v5978
  %v6113 = vadd.f32 %v5551, %v5981
  %v6114 = vadd.f32 %v5552, %v5986
  %v6115 = vadd.f32 %v5553, %v5989
  %v6116 = vadd.f32 %v5554, %v5994
  %v6117 = vadd.f32 %v5555, %v5997
  %v6118 = vadd.f32 %v5556, %v6002
  %v6119 = vadd.f32 %v5557, %v6005
  %v6120 = vadd.f32 %v5558, %v6010
  %v6121 = vadd.f32 %v5559, %v6013
  %v6122 = vadd.f32 %v5560, %v6018
  %v6123 = vadd.f32 %v5561, %v6021
  %v6124 = vadd.f32 %v5562, %v6026
  %v6125 = vadd.f32 %v5563, %v6029
  %v6126 = vadd.f32 %v5564, %v6034
  %v6127 = vadd.f32 %v5565, %v6037
  %v6128 = vadd.f32 %v5566, %v6042
  %v6129 = vadd.f32 %v5567, %v6045
  %v6130 = vadd.f32 %v5568, %v6050
  %v6131 = vadd.f32 %v5569, %v6053
  %v6132 = vadd.f32 %v5570, %v6058
  %v6133 = vadd.f32 %v5571, %v6061
  %v6134 = vadd.f32 %v5572, %v6066
  %v6135 = vadd.f32 %v5573, %v6069
  %s6136 = scalar_lea.vmem [#allocation2], 160
  %v6137 = vld [vmem:[%s6136] sm:$0xff]
  %v6138 = vld [vmem:[%s6136 + $0x8] sm:$0xff]
  %v6139 = vld [vmem:[%s6136 + $0x10] sm:$0xff]
  %v6140 = vld [vmem:[%s6136 + $0x18] sm:$0xff]
  %v6141 = vld [vmem:[%s6136 + $0x20] sm:$0xff]
  %v6142 = vld [vmem:[%s6136 + $0x28] sm:$0xff]
  %v6143 = vld [vmem:[%s6136 + $0x30] sm:$0xff]
  %v6144 = vld [vmem:[%s6136 + $0x38] sm:$0xff]
  %v6145 = vld [vmem:[%s6136 + $0x50] sm:$0xff]
  %v6146 = vld [vmem:[%s6136 + $0x58] sm:$0xff]
  %v6147 = vld [vmem:[%s6136 + $0x60] sm:$0xff]
  %v6148 = vld [vmem:[%s6136 + $0x68] sm:$0xff]
  %v6149 = vld [vmem:[%s6136 + $0x70] sm:$0xff]
  %v6150 = vld [vmem:[%s6136 + $0x78] sm:$0xff]
  %v6151 = vld [vmem:[%s6136 + $0x80] sm:$0xff]
  %v6152 = vld [vmem:[%s6136 + $0x88] sm:$0xff]
  %v6153 = vld [vmem:[%s6136 + $0xa0] sm:$0xff]
  %v6154 = vld [vmem:[%s6136 + $0xa8] sm:$0xff]
  %v6155 = vld [vmem:[%s6136 + $0xb0] sm:$0xff]
  %v6156 = vld [vmem:[%s6136 + $0xb8] sm:$0xff]
  %v6157 = vld [vmem:[%s6136 + $0xc0] sm:$0xff]
  %v6158 = vld [vmem:[%s6136 + $0xc8] sm:$0xff]
  %v6159 = vld [vmem:[%s6136 + $0xd0] sm:$0xff]
  %v6160 = vld [vmem:[%s6136 + $0xd8] sm:$0xff]
  %v6161 = vld [vmem:[%s6136 + $0xf0] sm:$0xff]
  %v6162 = vld [vmem:[%s6136 + $0xf8] sm:$0xff]
  %v6163 = vld [vmem:[%s6136 + $0x100] sm:$0xff]
  %v6164 = vld [vmem:[%s6136 + $0x108] sm:$0xff]
  %v6165 = vld [vmem:[%s6136 + $0x110] sm:$0xff]
  %v6166 = vld [vmem:[%s6136 + $0x118] sm:$0xff]
  %v6167 = vld [vmem:[%s6136 + $0x120] sm:$0xff]
  %v6168 = vld [vmem:[%s6136 + $0x128] sm:$0xff]
  %v6169 = vld [vmem:[%s6136 + $0x140] sm:$0xff]
  %v6170 = vld [vmem:[%s6136 + $0x148] sm:$0xff]
  %v6171 = vld [vmem:[%s6136 + $0x150] sm:$0xff]
  %v6172 = vld [vmem:[%s6136 + $0x158] sm:$0xff]
  %v6173 = vld [vmem:[%s6136 + $0x160] sm:$0xff]
  %v6174 = vld [vmem:[%s6136 + $0x168] sm:$0xff]
  %v6175 = vld [vmem:[%s6136 + $0x170] sm:$0xff]
  %v6176 = vld [vmem:[%s6136 + $0x178] sm:$0xff]
  %v6177 = vld [vmem:[%s6136 + $0x190] sm:$0xff]
  %v6178 = vld [vmem:[%s6136 + $0x198] sm:$0xff]
  %v6179 = vld [vmem:[%s6136 + $0x1a0] sm:$0xff]
  %v6180 = vld [vmem:[%s6136 + $0x1a8] sm:$0xff]
  %v6181 = vld [vmem:[%s6136 + $0x1b0] sm:$0xff]
  %v6182 = vld [vmem:[%s6136 + $0x1b8] sm:$0xff]
  %v6183 = vld [vmem:[%s6136 + $0x1c0] sm:$0xff]
  %v6184 = vld [vmem:[%s6136 + $0x1c8] sm:$0xff]
  %v6185 = vld [vmem:[%s6136 + $0x1e0] sm:$0xff]
  %v6186 = vld [vmem:[%s6136 + $0x1e8] sm:$0xff]
  %v6187 = vld [vmem:[%s6136 + $0x1f0] sm:$0xff]
  %v6188 = vld [vmem:[%s6136 + $0x1f8] sm:$0xff]
  %v6189 = vld [vmem:[%s6136 + $0x200] sm:$0xff]
  %v6190 = vld [vmem:[%s6136 + $0x208] sm:$0xff]
  %v6191 = vld [vmem:[%s6136 + $0x210] sm:$0xff]
  %v6192 = vld [vmem:[%s6136 + $0x218] sm:$0xff]
  %v6193 = vld [vmem:[%s6136 + $0x230] sm:$0xff]
  %v6194 = vld [vmem:[%s6136 + $0x238] sm:$0xff]
  %v6195 = vld [vmem:[%s6136 + $0x240] sm:$0xff]
  %v6196 = vld [vmem:[%s6136 + $0x248] sm:$0xff]
  %v6197 = vld [vmem:[%s6136 + $0x250] sm:$0xff]
  %v6198 = vld [vmem:[%s6136 + $0x258] sm:$0xff]
  %v6199 = vld [vmem:[%s6136 + $0x260] sm:$0xff]
  %v6200 = vld [vmem:[%s6136 + $0x268] sm:$0xff]
  %v6201 = vpack.c.bf16 %v6138, %v6137
  %v6202 = vpack.c.bf16 %v6140, %v6139
  %v6203 = vpack.c.bf16 %v6142, %v6141
  %v6204 = vpack.c.bf16 %v6144, %v6143
  %v6205 = vpack.c.bf16 %v6146, %v6145
  %v6206 = vpack.c.bf16 %v6148, %v6147
  %v6207 = vpack.c.bf16 %v6150, %v6149
  %v6208 = vpack.c.bf16 %v6152, %v6151
  %v6209 = vpack.c.bf16 %v6154, %v6153
  %v6210 = vpack.c.bf16 %v6156, %v6155
  %v6211 = vpack.c.bf16 %v6158, %v6157
  %v6212 = vpack.c.bf16 %v6160, %v6159
  %v6213 = vpack.c.bf16 %v6162, %v6161
  %v6214 = vpack.c.bf16 %v6164, %v6163
  %v6215 = vpack.c.bf16 %v6166, %v6165
  %v6216 = vpack.c.bf16 %v6168, %v6167
  %v6217 = vpack.c.bf16 %v6170, %v6169
  %v6218 = vpack.c.bf16 %v6172, %v6171
  %v6219 = vpack.c.bf16 %v6174, %v6173
  %v6220 = vpack.c.bf16 %v6176, %v6175
  %v6221 = vpack.c.bf16 %v6178, %v6177
  %v6222 = vpack.c.bf16 %v6180, %v6179
  %v6223 = vpack.c.bf16 %v6182, %v6181
  %v6224 = vpack.c.bf16 %v6184, %v6183
  %v6225 = vpack.c.bf16 %v6186, %v6185
  %v6226 = vpack.c.bf16 %v6188, %v6187
  %v6227 = vpack.c.bf16 %v6190, %v6189
  %v6228 = vpack.c.bf16 %v6192, %v6191
  %v6229 = vpack.c.bf16 %v6194, %v6193
  %v6230 = vpack.c.bf16 %v6196, %v6195
  %v6231 = vpack.c.bf16 %v6198, %v6197
  %v6232 = vpack.c.bf16 %v6200, %v6199
  %s6233 = scalar_lea.vmem %s3, 96
  %v6234 = vld [vmem:[%s6233] sm:$0xf]
  %v6235 = vld [vmem:[%s6233 + $0x4] sm:$0xf]
  %v6236 = vld [vmem:[%s6233 + $0x8] sm:$0xf]
  %v6237 = vld [vmem:[%s6233 + $0xc] sm:$0xf]
  %v6242 = vunpack.c.l.b16 %v6234
  %v6243 = vunpack.c.l.b16 %v6235
  %v6244 = vunpack.c.l.b16 %v6236
  %v6245 = vunpack.c.l.b16 %v6237
  %v6246 = vpack.c.b16 %v6243, %v6242
  %v6247 = vpack.c.b16 %v6245, %v6244
  %v6251 = vsel %vm2846, %v6201, 0
  %v6254 = vsel %vm2846, %v6202, 0
  %v6257 = vsel %vm2846, %v6203, 0
  %v6260 = vsel %vm2846, %v6204, 0
  %v6263 = vsel %vm2846, %v6205, 0
  %v6266 = vsel %vm2846, %v6206, 0
  %v6269 = vsel %vm2846, %v6207, 0
  %v6272 = vsel %vm2846, %v6208, 0
  %v6275 = vsel %vm2846, %v6209, 0
  %v6278 = vsel %vm2846, %v6210, 0
  %v6281 = vsel %vm2846, %v6211, 0
  %v6284 = vsel %vm2846, %v6212, 0
  %v6287 = vsel %vm2846, %v6213, 0
  %v6290 = vsel %vm2846, %v6214, 0
  %v6293 = vsel %vm2846, %v6215, 0
  %v6296 = vsel %vm2846, %v6216, 0
  %v6299 = vsel %vm2846, %v6217, 0
  %v6302 = vsel %vm2846, %v6218, 0
  %v6305 = vsel %vm2846, %v6219, 0
  %v6308 = vsel %vm2846, %v6220, 0
  %v6311 = vsel %vm2846, %v6221, 0
  %v6314 = vsel %vm2846, %v6222, 0
  %v6317 = vsel %vm2846, %v6223, 0
  %v6320 = vsel %vm2846, %v6224, 0
  %v6323 = vsel %vm2846, %v6225, 0
  %v6326 = vsel %vm2846, %v6226, 0
  %v6329 = vsel %vm2846, %v6227, 0
  %v6332 = vsel %vm2846, %v6228, 0
  %v6335 = vsel %vm2846, %v6229, 0
  %v6338 = vsel %vm2846, %v6230, 0
  %v6341 = vsel %vm2846, %v6231, 0
  %v6344 = vsel %vm2846, %v6232, 0
  %6346 = vmatprep.subr.bf16.mxu0 0
  %6347 = vmatpush1.bf16.msra.mxu0 %v6246
  %6348 = vmatprep.subr.bf16.mxu0 0
  %6349 = vmatpush1.bf16.msra.mxu0 %v6247
  %6350 = vmatprep.subr.bf16.mxu0 0
  %6351 = vmatpush1.bf16.msra.mxu0 0
  %6352 = vmatprep.subr.bf16.mxu0 0
  %6353 = vmatpush1.bf16.msra.mxu0 0
  %6354 = vmatprep.subr.bf16.mxu0 0
  %6355 = vmatpush1.bf16.msra.mxu0 0
  %6356 = vmatprep.subr.bf16.mxu0 0
  %6357 = vmatpush1.bf16.msra.mxu0 0
  %6358 = vmatprep.subr.bf16.mxu0 0
  %6359 = vmatpush1.bf16.msra.mxu0 0
  %6360 = vmatprep.subr.bf16.mxu0 0
  %6361 = vmatpush1.bf16.msra.mxu0 0
  %6362 = vmatprep.subr.bf16.mxu0 0
  %6363 = vmatpush1.bf16.msra.mxu0 0
  %6364 = vmatprep.subr.bf16.mxu0 0
  %6365 = vmatpush1.bf16.msra.mxu0 0
  %6366 = vmatprep.subr.bf16.mxu0 0
  %6367 = vmatpush1.bf16.msra.mxu0 0
  %6368 = vmatprep.subr.bf16.mxu0 0
  %6369 = vmatpush1.bf16.msra.mxu0 0
  %6370 = vmatprep.subr.bf16.mxu0 0
  %6371 = vmatpush1.bf16.msra.mxu0 0
  %6372 = vmatprep.subr.bf16.mxu0 0
  %6373 = vmatpush1.bf16.msra.mxu0 0
  %6374 = vmatprep.subr.bf16.mxu0 0
  %6375 = vmatpush1.bf16.msra.mxu0 0
  %6376 = vmatprep.subr.bf16.mxu0 0
  %6377 = vmatpush1.bf16.msra.mxu0 0
  %6378 = vmatprep.mubr.bf16.mxu0 0
  %6379 = vmatmul.mubr.bf16.gmra.mrb[0].mxu0 %v6251
  %v6380 = vpop.f32.mrb[0].mxu0
  %v6381 = vadd.f32 0.0, %v6380
  %v6382 = vpop.f32.mrb[0].mxu0
  %v6383 = vpop.f32.mrb[0].mxu0
  %v6384 = vadd.f32 0.0, %v6383
  %v6385 = vpop.f32.mrb[0].mxu0
  %6386 = vmatprep.mubr.bf16.mxu0 0
  %6387 = vmatmul.mubr.bf16.gmra.mrb[0].mxu0 %v6254
  %v6388 = vpop.f32.mrb[0].mxu0
  %v6389 = vadd.f32 0.0, %v6388
  %v6390 = vpop.f32.mrb[0].mxu0
  %v6391 = vpop.f32.mrb[0].mxu0
  %v6392 = vadd.f32 0.0, %v6391
  %v6393 = vpop.f32.mrb[0].mxu0
  %6394 = vmatprep.mubr.bf16.mxu0 0
  %6395 = vmatmul.mubr.bf16.gmra.mrb[0].mxu0 %v6257
  %v6396 = vpop.f32.mrb[0].mxu0
  %v6397 = vadd.f32 0.0, %v6396
  %v6398 = vpop.f32.mrb[0].mxu0
  %v6399 = vpop.f32.mrb[0].mxu0
  %v6400 = vadd.f32 0.0, %v6399
  %v6401 = vpop.f32.mrb[0].mxu0
  %6402 = vmatprep.mubr.bf16.mxu0 0
  %6403 = vmatmul.mubr.bf16.gmra.mrb[0].mxu0 %v6260
  %v6404 = vpop.f32.mrb[0].mxu0
  %v6405 = vadd.f32 0.0, %v6404
  %v6406 = vpop.f32.mrb[0].mxu0
  %v6407 = vpop.f32.mrb[0].mxu0
  %v6408 = vadd.f32 0.0, %v6407
  %v6409 = vpop.f32.mrb[0].mxu0
  %6410 = vmatprep.mubr.bf16.mxu0 0
  %6411 = vmatmul.mubr.bf16.gmra.mrb[0].mxu0 %v6263
  %v6412 = vpop.f32.mrb[0].mxu0
  %v6413 = vadd.f32 0.0, %v6412
  %v6414 = vpop.f32.mrb[0].mxu0
  %v6415 = vpop.f32.mrb[0].mxu0
  %v6416 = vadd.f32 0.0, %v6415
  %v6417 = vpop.f32.mrb[0].mxu0
  %6418 = vmatprep.mubr.bf16.mxu0 0
  %6419 = vmatmul.mubr.bf16.gmra.mrb[0].mxu0 %v6266
  %v6420 = vpop.f32.mrb[0].mxu0
  %v6421 = vadd.f32 0.0, %v6420
  %v6422 = vpop.f32.mrb[0].mxu0
  %v6423 = vpop.f32.mrb[0].mxu0
  %v6424 = vadd.f32 0.0, %v6423
  %v6425 = vpop.f32.mrb[0].mxu0
  %6426 = vmatprep.mubr.bf16.mxu0 0
  %6427 = vmatmul.mubr.bf16.gmra.mrb[0].mxu0 %v6269
  %v6428 = vpop.f32.mrb[0].mxu0
  %v6429 = vadd.f32 0.0, %v6428
  %v6430 = vpop.f32.mrb[0].mxu0
  %v6431 = vpop.f32.mrb[0].mxu0
  %v6432 = vadd.f32 0.0, %v6431
  %v6433 = vpop.f32.mrb[0].mxu0
  %6434 = vmatprep.mubr.bf16.mxu0 0
  %6435 = vmatmul.mubr.bf16.gmra.mrb[0].mxu0 %v6272
  %v6436 = vpop.f32.mrb[0].mxu0
  %v6437 = vadd.f32 0.0, %v6436
  %v6438 = vpop.f32.mrb[0].mxu0
  %v6439 = vpop.f32.mrb[0].mxu0
  %v6440 = vadd.f32 0.0, %v6439
  %v6441 = vpop.f32.mrb[0].mxu0
  %6442 = vmatprep.mubr.bf16.mxu0 0
  %6443 = vmatmul.mubr.bf16.gmra.mrb[0].mxu0 %v6275
  %v6444 = vpop.f32.mrb[0].mxu0
  %v6445 = vadd.f32 0.0, %v6444
  %v6446 = vpop.f32.mrb[0].mxu0
  %v6447 = vpop.f32.mrb[0].mxu0
  %v6448 = vadd.f32 0.0, %v6447
  %v6449 = vpop.f32.mrb[0].mxu0
  %6450 = vmatprep.mubr.bf16.mxu0 0
  %6451 = vmatmul.mubr.bf16.gmra.mrb[0].mxu0 %v6278
  %v6452 = vpop.f32.mrb[0].mxu0
  %v6453 = vadd.f32 0.0, %v6452
  %v6454 = vpop.f32.mrb[0].mxu0
  %v6455 = vpop.f32.mrb[0].mxu0
  %v6456 = vadd.f32 0.0, %v6455
  %v6457 = vpop.f32.mrb[0].mxu0
  %6458 = vmatprep.mubr.bf16.mxu0 0
  %6459 = vmatmul.mubr.bf16.gmra.mrb[0].mxu0 %v6281
  %v6460 = vpop.f32.mrb[0].mxu0
  %v6461 = vadd.f32 0.0, %v6460
  %v6462 = vpop.f32.mrb[0].mxu0
  %v6463 = vpop.f32.mrb[0].mxu0
  %v6464 = vadd.f32 0.0, %v6463
  %v6465 = vpop.f32.mrb[0].mxu0
  %6466 = vmatprep.mubr.bf16.mxu0 0
  %6467 = vmatmul.mubr.bf16.gmra.mrb[0].mxu0 %v6284
  %v6468 = vpop.f32.mrb[0].mxu0
  %v6469 = vadd.f32 0.0, %v6468
  %v6470 = vpop.f32.mrb[0].mxu0
  %v6471 = vpop.f32.mrb[0].mxu0
  %v6472 = vadd.f32 0.0, %v6471
  %v6473 = vpop.f32.mrb[0].mxu0
  %6474 = vmatprep.mubr.bf16.mxu0 0
  %6475 = vmatmul.mubr.bf16.gmra.mrb[0].mxu0 %v6287
  %v6476 = vpop.f32.mrb[0].mxu0
  %v6477 = vadd.f32 0.0, %v6476
  %v6478 = vpop.f32.mrb[0].mxu0
  %v6479 = vpop.f32.mrb[0].mxu0
  %v6480 = vadd.f32 0.0, %v6479
  %v6481 = vpop.f32.mrb[0].mxu0
  %6482 = vmatprep.mubr.bf16.mxu0 0
  %6483 = vmatmul.mubr.bf16.gmra.mrb[0].mxu0 %v6290
  %v6484 = vpop.f32.mrb[0].mxu0
  %v6485 = vadd.f32 0.0, %v6484
  %v6486 = vpop.f32.mrb[0].mxu0
  %v6487 = vpop.f32.mrb[0].mxu0
  %v6488 = vadd.f32 0.0, %v6487
  %v6489 = vpop.f32.mrb[0].mxu0
  %6490 = vmatprep.mubr.bf16.mxu0 0
  %6491 = vmatmul.mubr.bf16.gmra.mrb[0].mxu0 %v6293
  %v6492 = vpop.f32.mrb[0].mxu0
  %v6493 = vadd.f32 0.0, %v6492
  %v6494 = vpop.f32.mrb[0].mxu0
  %v6495 = vpop.f32.mrb[0].mxu0
  %v6496 = vadd.f32 0.0, %v6495
  %v6497 = vpop.f32.mrb[0].mxu0
  %6498 = vmatprep.mubr.bf16.mxu0 0
  %6499 = vmatmul.mubr.bf16.gmra.mrb[0].mxu0 %v6296
  %v6500 = vpop.f32.mrb[0].mxu0
  %v6501 = vadd.f32 0.0, %v6500
  %v6502 = vpop.f32.mrb[0].mxu0
  %v6503 = vpop.f32.mrb[0].mxu0
  %v6504 = vadd.f32 0.0, %v6503
  %v6505 = vpop.f32.mrb[0].mxu0
  %6506 = vmatprep.mubr.bf16.mxu0 0
  %6507 = vmatmul.mubr.bf16.gmra.mrb[0].mxu0 %v6299
  %v6508 = vpop.f32.mrb[0].mxu0
  %v6509 = vadd.f32 0.0, %v6508
  %v6510 = vpop.f32.mrb[0].mxu0
  %v6511 = vpop.f32.mrb[0].mxu0
  %v6512 = vadd.f32 0.0, %v6511
  %v6513 = vpop.f32.mrb[0].mxu0
  %6514 = vmatprep.mubr.bf16.mxu0 0
  %6515 = vmatmul.mubr.bf16.gmra.mrb[0].mxu0 %v6302
  %v6516 = vpop.f32.mrb[0].mxu0
  %v6517 = vadd.f32 0.0, %v6516
  %v6518 = vpop.f32.mrb[0].mxu0
  %v6519 = vpop.f32.mrb[0].mxu0
  %v6520 = vadd.f32 0.0, %v6519
  %v6521 = vpop.f32.mrb[0].mxu0
  %6522 = vmatprep.mubr.bf16.mxu0 0
  %6523 = vmatmul.mubr.bf16.gmra.mrb[0].mxu0 %v6305
  %v6524 = vpop.f32.mrb[0].mxu0
  %v6525 = vadd.f32 0.0, %v6524
  %v6526 = vpop.f32.mrb[0].mxu0
  %v6527 = vpop.f32.mrb[0].mxu0
  %v6528 = vadd.f32 0.0, %v6527
  %v6529 = vpop.f32.mrb[0].mxu0
  %6530 = vmatprep.mubr.bf16.mxu0 0
  %6531 = vmatmul.mubr.bf16.gmra.mrb[0].mxu0 %v6308
  %v6532 = vpop.f32.mrb[0].mxu0
  %v6533 = vadd.f32 0.0, %v6532
  %v6534 = vpop.f32.mrb[0].mxu0
  %v6535 = vpop.f32.mrb[0].mxu0
  %v6536 = vadd.f32 0.0, %v6535
  %v6537 = vpop.f32.mrb[0].mxu0
  %6538 = vmatprep.mubr.bf16.mxu0 0
  %6539 = vmatmul.mubr.bf16.gmra.mrb[0].mxu0 %v6311
  %v6540 = vpop.f32.mrb[0].mxu0
  %v6541 = vadd.f32 0.0, %v6540
  %v6542 = vpop.f32.mrb[0].mxu0
  %v6543 = vpop.f32.mrb[0].mxu0
  %v6544 = vadd.f32 0.0, %v6543
  %v6545 = vpop.f32.mrb[0].mxu0
  %6546 = vmatprep.mubr.bf16.mxu0 0
  %6547 = vmatmul.mubr.bf16.gmra.mrb[0].mxu0 %v6314
  %v6548 = vpop.f32.mrb[0].mxu0
  %v6549 = vadd.f32 0.0, %v6548
  %v6550 = vpop.f32.mrb[0].mxu0
  %v6551 = vpop.f32.mrb[0].mxu0
  %v6552 = vadd.f32 0.0, %v6551
  %v6553 = vpop.f32.mrb[0].mxu0
  %6554 = vmatprep.mubr.bf16.mxu0 0
  %6555 = vmatmul.mubr.bf16.gmra.mrb[0].mxu0 %v6317
  %v6556 = vpop.f32.mrb[0].mxu0
  %v6557 = vadd.f32 0.0, %v6556
  %v6558 = vpop.f32.mrb[0].mxu0
  %v6559 = vpop.f32.mrb[0].mxu0
  %v6560 = vadd.f32 0.0, %v6559
  %v6561 = vpop.f32.mrb[0].mxu0
  %6562 = vmatprep.mubr.bf16.mxu0 0
  %6563 = vmatmul.mubr.bf16.gmra.mrb[0].mxu0 %v6320
  %v6564 = vpop.f32.mrb[0].mxu0
  %v6565 = vadd.f32 0.0, %v6564
  %v6566 = vpop.f32.mrb[0].mxu0
  %v6567 = vpop.f32.mrb[0].mxu0
  %v6568 = vadd.f32 0.0, %v6567
  %v6569 = vpop.f32.mrb[0].mxu0
  %6570 = vmatprep.mubr.bf16.mxu0 0
  %6571 = vmatmul.mubr.bf16.gmra.mrb[0].mxu0 %v6323
  %v6572 = vpop.f32.mrb[0].mxu0
  %v6573 = vadd.f32 0.0, %v6572
  %v6574 = vpop.f32.mrb[0].mxu0
  %v6575 = vpop.f32.mrb[0].mxu0
  %v6576 = vadd.f32 0.0, %v6575
  %v6577 = vpop.f32.mrb[0].mxu0
  %6578 = vmatprep.mubr.bf16.mxu0 0
  %6579 = vmatmul.mubr.bf16.gmra.mrb[0].mxu0 %v6326
  %v6580 = vpop.f32.mrb[0].mxu0
  %v6581 = vadd.f32 0.0, %v6580
  %v6582 = vpop.f32.mrb[0].mxu0
  %v6583 = vpop.f32.mrb[0].mxu0
  %v6584 = vadd.f32 0.0, %v6583
  %v6585 = vpop.f32.mrb[0].mxu0
  %6586 = vmatprep.mubr.bf16.mxu0 0
  %6587 = vmatmul.mubr.bf16.gmra.mrb[0].mxu0 %v6329
  %v6588 = vpop.f32.mrb[0].mxu0
  %v6589 = vadd.f32 0.0, %v6588
  %v6590 = vpop.f32.mrb[0].mxu0
  %v6591 = vpop.f32.mrb[0].mxu0
  %v6592 = vadd.f32 0.0, %v6591
  %v6593 = vpop.f32.mrb[0].mxu0
  %6594 = vmatprep.mubr.bf16.mxu0 0
  %6595 = vmatmul.mubr.bf16.gmra.mrb[0].mxu0 %v6332
  %v6596 = vpop.f32.mrb[0].mxu0
  %v6597 = vadd.f32 0.0, %v6596
  %v6598 = vpop.f32.mrb[0].mxu0
  %v6599 = vpop.f32.mrb[0].mxu0
  %v6600 = vadd.f32 0.0, %v6599
  %v6601 = vpop.f32.mrb[0].mxu0
  %6602 = vmatprep.mubr.bf16.mxu0 0
  %6603 = vmatmul.mubr.bf16.gmra.mrb[0].mxu0 %v6335
  %v6604 = vpop.f32.mrb[0].mxu0
  %v6605 = vadd.f32 0.0, %v6604
  %v6606 = vpop.f32.mrb[0].mxu0
  %v6607 = vpop.f32.mrb[0].mxu0
  %v6608 = vadd.f32 0.0, %v6607
  %v6609 = vpop.f32.mrb[0].mxu0
  %6610 = vmatprep.mubr.bf16.mxu0 0
  %6611 = vmatmul.mubr.bf16.gmra.mrb[0].mxu0 %v6338
  %v6612 = vpop.f32.mrb[0].mxu0
  %v6613 = vadd.f32 0.0, %v6612
  %v6614 = vpop.f32.mrb[0].mxu0
  %v6615 = vpop.f32.mrb[0].mxu0
  %v6616 = vadd.f32 0.0, %v6615
  %v6617 = vpop.f32.mrb[0].mxu0
  %6618 = vmatprep.mubr.bf16.mxu0 0
  %6619 = vmatmul.mubr.bf16.gmra.mrb[0].mxu0 %v6341
  %v6620 = vpop.f32.mrb[0].mxu0
  %v6621 = vadd.f32 0.0, %v6620
  %v6622 = vpop.f32.mrb[0].mxu0
  %v6623 = vpop.f32.mrb[0].mxu0
  %v6624 = vadd.f32 0.0, %v6623
  %v6625 = vpop.f32.mrb[0].mxu0
  %6626 = vmatprep.mubr.bf16.mxu0 0
  %6627 = vmatmul.mubr.bf16.gmra.mrb[0].mxu0 %v6344
  %v6628 = vpop.f32.mrb[0].mxu0
  %v6629 = vadd.f32 0.0, %v6628
  %v6630 = vpop.f32.mrb[0].mxu0
  %v6631 = vpop.f32.mrb[0].mxu0
  %v6632 = vadd.f32 0.0, %v6631
  %v6633 = vpop.f32.mrb[0].mxu0
  %6634 = vdwg.mxu0
  %v6635 = vadd.f32 %v6072, %v6381
  %v6636 = vadd.f32 %v6073, %v6384
  %v6637 = vadd.f32 %v6074, %v6389
  %v6638 = vadd.f32 %v6075, %v6392
  %v6639 = vadd.f32 %v6076, %v6397
  %v6640 = vadd.f32 %v6077, %v6400
  %v6641 = vadd.f32 %v6078, %v6405
  %v6642 = vadd.f32 %v6079, %v6408
  %v6643 = vadd.f32 %v6080, %v6413
  %v6644 = vadd.f32 %v6081, %v6416
  %v6645 = vadd.f32 %v6082, %v6421
  %v6646 = vadd.f32 %v6083, %v6424
  %v6647 = vadd.f32 %v6084, %v6429
  %v6648 = vadd.f32 %v6085, %v6432
  %v6649 = vadd.f32 %v6086, %v6437
  %v6650 = vadd.f32 %v6087, %v6440
  %v6651 = vadd.f32 %v6088, %v6445
  %v6652 = vadd.f32 %v6089, %v6448
  %v6653 = vadd.f32 %v6090, %v6453
  %v6654 = vadd.f32 %v6091, %v6456
  %v6655 = vadd.f32 %v6092, %v6461
  %v6656 = vadd.f32 %v6093, %v6464
  %v6657 = vadd.f32 %v6094, %v6469
  %v6658 = vadd.f32 %v6095, %v6472
  %v6659 = vadd.f32 %v6096, %v6477
  %v6660 = vadd.f32 %v6097, %v6480
  %v6661 = vadd.f32 %v6098, %v6485
  %v6662 = vadd.f32 %v6099, %v6488
  %v6663 = vadd.f32 %v6100, %v6493
  %v6664 = vadd.f32 %v6101, %v6496
  %v6665 = vadd.f32 %v6102, %v6501
  %v6666 = vadd.f32 %v6103, %v6504
  %v6667 = vadd.f32 %v6104, %v6509
  %v6668 = vadd.f32 %v6105, %v6512
  %v6669 = vadd.f32 %v6106, %v6517
  %v6670 = vadd.f32 %v6107, %v6520
  %v6671 = vadd.f32 %v6108, %v6525
  %v6672 = vadd.f32 %v6109, %v6528
  %v6673 = vadd.f32 %v6110, %v6533
  %v6674 = vadd.f32 %v6111, %v6536
  %v6675 = vadd.f32 %v6112, %v6541
  %v6676 = vadd.f32 %v6113, %v6544
  %v6677 = vadd.f32 %v6114, %v6549
  %v6678 = vadd.f32 %v6115, %v6552
  %v6679 = vadd.f32 %v6116, %v6557
  %v6680 = vadd.f32 %v6117, %v6560
  %v6681 = vadd.f32 %v6118, %v6565
  %v6682 = vadd.f32 %v6119, %v6568
  %v6683 = vadd.f32 %v6120, %v6573
  %v6684 = vadd.f32 %v6121, %v6576
  %v6685 = vadd.f32 %v6122, %v6581
  %v6686 = vadd.f32 %v6123, %v6584
  %v6687 = vadd.f32 %v6124, %v6589
  %v6688 = vadd.f32 %v6125, %v6592
  %v6689 = vadd.f32 %v6126, %v6597
  %v6690 = vadd.f32 %v6127, %v6600
  %v6691 = vadd.f32 %v6128, %v6605
  %v6692 = vadd.f32 %v6129, %v6608
  %v6693 = vadd.f32 %v6130, %v6613
  %v6694 = vadd.f32 %v6131, %v6616
  %v6695 = vadd.f32 %v6132, %v6621
  %v6696 = vadd.f32 %v6133, %v6624
  %v6697 = vadd.f32 %v6134, %v6629
  %v6698 = vadd.f32 %v6135, %v6632
  %v6699 = vld [vmem:[%s6136 + $0x8] sm:$0xff]
  %v6700 = vld [vmem:[%s6136 + $0x10] sm:$0xff]
  %v6701 = vld [vmem:[%s6136 + $0x18] sm:$0xff]
  %v6702 = vld [vmem:[%s6136 + $0x20] sm:$0xff]
  %v6703 = vld [vmem:[%s6136 + $0x28] sm:$0xff]
  %v6704 = vld [vmem:[%s6136 + $0x30] sm:$0xff]
  %v6705 = vld [vmem:[%s6136 + $0x38] sm:$0xff]
  %v6706 = vld [vmem:[%s6136 + $0x40] sm:$0xff]
  %v6707 = vld [vmem:[%s6136 + $0x58] sm:$0xff]
  %v6708 = vld [vmem:[%s6136 + $0x60] sm:$0xff]
  %v6709 = vld [vmem:[%s6136 + $0x68] sm:$0xff]
  %v6710 = vld [vmem:[%s6136 + $0x70] sm:$0xff]
  %v6711 = vld [vmem:[%s6136 + $0x78] sm:$0xff]
  %v6712 = vld [vmem:[%s6136 + $0x80] sm:$0xff]
  %v6713 = vld [vmem:[%s6136 + $0x88] sm:$0xff]
  %v6714 = vld [vmem:[%s6136 + $0x90] sm:$0xff]
  %v6715 = vld [vmem:[%s6136 + $0xa8] sm:$0xff]
  %v6716 = vld [vmem:[%s6136 + $0xb0] sm:$0xff]
  %v6717 = vld [vmem:[%s6136 + $0xb8] sm:$0xff]
  %v6718 = vld [vmem:[%s6136 + $0xc0] sm:$0xff]
  %v6719 = vld [vmem:[%s6136 + $0xc8] sm:$0xff]
  %v6720 = vld [vmem:[%s6136 + $0xd0] sm:$0xff]
  %v6721 = vld [vmem:[%s6136 + $0xd8] sm:$0xff]
  %v6722 = vld [vmem:[%s6136 + $0xe0] sm:$0xff]
  %v6723 = vld [vmem:[%s6136 + $0xf8] sm:$0xff]
  %v6724 = vld [vmem:[%s6136 + $0x100] sm:$0xff]
  %v6725 = vld [vmem:[%s6136 + $0x108] sm:$0xff]
  %v6726 = vld [vmem:[%s6136 + $0x110] sm:$0xff]
  %v6727 = vld [vmem:[%s6136 + $0x118] sm:$0xff]
  %v6728 = vld [vmem:[%s6136 + $0x120] sm:$0xff]
  %v6729 = vld [vmem:[%s6136 + $0x128] sm:$0xff]
  %v6730 = vld [vmem:[%s6136 + $0x130] sm:$0xff]
  %v6731 = vld [vmem:[%s6136 + $0x148] sm:$0xff]
  %v6732 = vld [vmem:[%s6136 + $0x150] sm:$0xff]
  %v6733 = vld [vmem:[%s6136 + $0x158] sm:$0xff]
  %v6734 = vld [vmem:[%s6136 + $0x160] sm:$0xff]
  %v6735 = vld [vmem:[%s6136 + $0x168] sm:$0xff]
  %v6736 = vld [vmem:[%s6136 + $0x170] sm:$0xff]
  %v6737 = vld [vmem:[%s6136 + $0x178] sm:$0xff]
  %v6738 = vld [vmem:[%s6136 + $0x180] sm:$0xff]
  %v6739 = vld [vmem:[%s6136 + $0x198] sm:$0xff]
  %v6740 = vld [vmem:[%s6136 + $0x1a0] sm:$0xff]
  %v6741 = vld [vmem:[%s6136 + $0x1a8] sm:$0xff]
  %v6742 = vld [vmem:[%s6136 + $0x1b0] sm:$0xff]
  %v6743 = vld [vmem:[%s6136 + $0x1b8] sm:$0xff]
  %v6744 = vld [vmem:[%s6136 + $0x1c0] sm:$0xff]
  %v6745 = vld [vmem:[%s6136 + $0x1c8] sm:$0xff]
  %v6746 = vld [vmem:[%s6136 + $0x1d0] sm:$0xff]
  %v6747 = vld [vmem:[%s6136 + $0x1e8] sm:$0xff]
  %v6748 = vld [vmem:[%s6136 + $0x1f0] sm:$0xff]
  %v6749 = vld [vmem:[%s6136 + $0x1f8] sm:$0xff]
  %v6750 = vld [vmem:[%s6136 + $0x200] sm:$0xff]
  %v6751 = vld [vmem:[%s6136 + $0x208] sm:$0xff]
  %v6752 = vld [vmem:[%s6136 + $0x210] sm:$0xff]
  %v6753 = vld [vmem:[%s6136 + $0x218] sm:$0xff]
  %v6754 = vld [vmem:[%s6136 + $0x220] sm:$0xff]
  %v6755 = vld [vmem:[%s6136 + $0x238] sm:$0xff]
  %v6756 = vld [vmem:[%s6136 + $0x240] sm:$0xff]
  %v6757 = vld [vmem:[%s6136 + $0x248] sm:$0xff]
  %v6758 = vld [vmem:[%s6136 + $0x250] sm:$0xff]
  %v6759 = vld [vmem:[%s6136 + $0x258] sm:$0xff]
  %v6760 = vld [vmem:[%s6136 + $0x260] sm:$0xff]
  %v6761 = vld [vmem:[%s6136 + $0x268] sm:$0xff]
  %v6762 = vld [vmem:[%s6136 + $0x270] sm:$0xff]
  %v6763 = vpack.c.bf16 %v6700, %v6699
  %v6764 = vpack.c.bf16 %v6702, %v6701
  %v6765 = vpack.c.bf16 %v6704, %v6703
  %v6766 = vpack.c.bf16 %v6706, %v6705
  %v6767 = vpack.c.bf16 %v6708, %v6707
  %v6768 = vpack.c.bf16 %v6710, %v6709
  %v6769 = vpack.c.bf16 %v6712, %v6711
  %v6770 = vpack.c.bf16 %v6714, %v6713
  %v6771 = vpack.c.bf16 %v6716, %v6715
  %v6772 = vpack.c.bf16 %v6718, %v6717
  %v6773 = vpack.c.bf16 %v6720, %v6719
  %v6774 = vpack.c.bf16 %v6722, %v6721
  %v6775 = vpack.c.bf16 %v6724, %v6723
  %v6776 = vpack.c.bf16 %v6726, %v6725
  %v6777 = vpack.c.bf16 %v6728, %v6727
  %v6778 = vpack.c.bf16 %v6730, %v6729
  %v6779 = vpack.c.bf16 %v6732, %v6731
  %v6780 = vpack.c.bf16 %v6734, %v6733
  %v6781 = vpack.c.bf16 %v6736, %v6735
  %v6782 = vpack.c.bf16 %v6738, %v6737
  %v6783 = vpack.c.bf16 %v6740, %v6739
  %v6784 = vpack.c.bf16 %v6742, %v6741
  %v6785 = vpack.c.bf16 %v6744, %v6743
  %v6786 = vpack.c.bf16 %v6746, %v6745
  %v6787 = vpack.c.bf16 %v6748, %v6747
  %v6788 = vpack.c.bf16 %v6750, %v6749
  %v6789 = vpack.c.bf16 %v6752, %v6751
  %v6790 = vpack.c.bf16 %v6754, %v6753
  %v6791 = vpack.c.bf16 %v6756, %v6755
  %v6792 = vpack.c.bf16 %v6758, %v6757
  %v6793 = vpack.c.bf16 %v6760, %v6759
  %v6794 = vpack.c.bf16 %v6762, %v6761
  %s6795 = scalar_lea.vmem %s3, 112
  %v6796 = vld [vmem:[%s6795] sm:$0xf]
  %v6797 = vld [vmem:[%s6795 + $0x4] sm:$0xf]
  %v6798 = vld [vmem:[%s6795 + $0x8] sm:$0xf]
  %v6799 = vld [vmem:[%s6795 + $0xc] sm:$0xf]
  %v6804 = vunpack.c.l.b16 %v6796
  %v6805 = vunpack.c.l.b16 %v6797
  %v6806 = vunpack.c.l.b16 %v6798
  %v6807 = vunpack.c.l.b16 %v6799
  %v6808 = vpack.c.b16 %v6805, %v6804
  %v6809 = vpack.c.b16 %v6807, %v6806
  %v6813 = vsel %vm2846, %v6763, 0
  %v6816 = vsel %vm2846, %v6764, 0
  %v6819 = vsel %vm2846, %v6765, 0
  %v6822 = vsel %vm2846, %v6766, 0
  %v6825 = vsel %vm2846, %v6767, 0
  %v6828 = vsel %vm2846, %v6768, 0
  %v6831 = vsel %vm2846, %v6769, 0
  %v6834 = vsel %vm2846, %v6770, 0
  %v6837 = vsel %vm2846, %v6771, 0
  %v6840 = vsel %vm2846, %v6772, 0
  %v6843 = vsel %vm2846, %v6773, 0
  %v6846 = vsel %vm2846, %v6774, 0
  %v6849 = vsel %vm2846, %v6775, 0
  %v6852 = vsel %vm2846, %v6776, 0
  %v6855 = vsel %vm2846, %v6777, 0
  %v6858 = vsel %vm2846, %v6778, 0
  %v6861 = vsel %vm2846, %v6779, 0
  %v6864 = vsel %vm2846, %v6780, 0
  %v6867 = vsel %vm2846, %v6781, 0
  %v6870 = vsel %vm2846, %v6782, 0
  %v6873 = vsel %vm2846, %v6783, 0
  %v6876 = vsel %vm2846, %v6784, 0
  %v6879 = vsel %vm2846, %v6785, 0
  %v6882 = vsel %vm2846, %v6786, 0
  %v6885 = vsel %vm2846, %v6787, 0
  %v6888 = vsel %vm2846, %v6788, 0
  %v6891 = vsel %vm2846, %v6789, 0
  %v6894 = vsel %vm2846, %v6790, 0
  %v6897 = vsel %vm2846, %v6791, 0
  %v6900 = vsel %vm2846, %v6792, 0
  %v6903 = vsel %vm2846, %v6793, 0
  %v6906 = vsel %vm2846, %v6794, 0
  %6908 = vmatprep.subr.bf16.mxu0 0
  %6909 = vmatpush1.bf16.msra.mxu0 %v6808
  %6910 = vmatprep.subr.bf16.mxu0 0
  %6911 = vmatpush1.bf16.msra.mxu0 %v6809
  %6912 = vmatprep.subr.bf16.mxu0 0
  %6913 = vmatpush1.bf16.msra.mxu0 0
  %6914 = vmatprep.subr.bf16.mxu0 0
  %6915 = vmatpush1.bf16.msra.mxu0 0
  %6916 = vmatprep.subr.bf16.mxu0 0
  %6917 = vmatpush1.bf16.msra.mxu0 0
  %6918 = vmatprep.subr.bf16.mxu0 0
  %6919 = vmatpush1.bf16.msra.mxu0 0
  %6920 = vmatprep.subr.bf16.mxu0 0
  %6921 = vmatpush1.bf16.msra.mxu0 0
  %6922 = vmatprep.subr.bf16.mxu0 0
  %6923 = vmatpush1.bf16.msra.mxu0 0
  %6924 = vmatprep.subr.bf16.mxu0 0
  %6925 = vmatpush1.bf16.msra.mxu0 0
  %6926 = vmatprep.subr.bf16.mxu0 0
  %6927 = vmatpush1.bf16.msra.mxu0 0
  %6928 = vmatprep.subr.bf16.mxu0 0
  %6929 = vmatpush1.bf16.msra.mxu0 0
  %6930 = vmatprep.subr.bf16.mxu0 0
  %6931 = vmatpush1.bf16.msra.mxu0 0
  %6932 = vmatprep.subr.bf16.mxu0 0
  %6933 = vmatpush1.bf16.msra.mxu0 0
  %6934 = vmatprep.subr.bf16.mxu0 0
  %6935 = vmatpush1.bf16.msra.mxu0 0
  %6936 = vmatprep.subr.bf16.mxu0 0
  %6937 = vmatpush1.bf16.msra.mxu0 0
  %6938 = vmatprep.subr.bf16.mxu0 0
  %6939 = vmatpush1.bf16.msra.mxu0 0
  %6940 = vmatprep.mubr.bf16.mxu0 0
  %6941 = vmatmul.mubr.bf16.gmra.mrb[0].mxu0 %v6813
  %v6942 = vpop.f32.mrb[0].mxu0
  %v6943 = vadd.f32 0.0, %v6942
  %v6944 = vpop.f32.mrb[0].mxu0
  %v6945 = vpop.f32.mrb[0].mxu0
  %v6946 = vadd.f32 0.0, %v6945
  %v6947 = vpop.f32.mrb[0].mxu0
  %6948 = vmatprep.mubr.bf16.mxu0 0
  %6949 = vmatmul.mubr.bf16.gmra.mrb[0].mxu0 %v6816
  %v6950 = vpop.f32.mrb[0].mxu0
  %v6951 = vadd.f32 0.0, %v6950
  %v6952 = vpop.f32.mrb[0].mxu0
  %v6953 = vpop.f32.mrb[0].mxu0
  %v6954 = vadd.f32 0.0, %v6953
  %v6955 = vpop.f32.mrb[0].mxu0
  %6956 = vmatprep.mubr.bf16.mxu0 0
  %6957 = vmatmul.mubr.bf16.gmra.mrb[0].mxu0 %v6819
  %v6958 = vpop.f32.mrb[0].mxu0
  %v6959 = vadd.f32 0.0, %v6958
  %v6960 = vpop.f32.mrb[0].mxu0
  %v6961 = vpop.f32.mrb[0].mxu0
  %v6962 = vadd.f32 0.0, %v6961
  %v6963 = vpop.f32.mrb[0].mxu0
  %6964 = vmatprep.mubr.bf16.mxu0 0
  %6965 = vmatmul.mubr.bf16.gmra.mrb[0].mxu0 %v6822
  %v6966 = vpop.f32.mrb[0].mxu0
  %v6967 = vadd.f32 0.0, %v6966
  %v6968 = vpop.f32.mrb[0].mxu0
  %v6969 = vpop.f32.mrb[0].mxu0
  %v6970 = vadd.f32 0.0, %v6969
  %v6971 = vpop.f32.mrb[0].mxu0
  %6972 = vmatprep.mubr.bf16.mxu0 0
  %6973 = vmatmul.mubr.bf16.gmra.mrb[0].mxu0 %v6825
  %v6974 = vpop.f32.mrb[0].mxu0
  %v6975 = vadd.f32 0.0, %v6974
  %v6976 = vpop.f32.mrb[0].mxu0
  %v6977 = vpop.f32.mrb[0].mxu0
  %v6978 = vadd.f32 0.0, %v6977
  %v6979 = vpop.f32.mrb[0].mxu0
  %6980 = vmatprep.mubr.bf16.mxu0 0
  %6981 = vmatmul.mubr.bf16.gmra.mrb[0].mxu0 %v6828
  %v6982 = vpop.f32.mrb[0].mxu0
  %v6983 = vadd.f32 0.0, %v6982
  %v6984 = vpop.f32.mrb[0].mxu0
  %v6985 = vpop.f32.mrb[0].mxu0
  %v6986 = vadd.f32 0.0, %v6985
  %v6987 = vpop.f32.mrb[0].mxu0
  %6988 = vmatprep.mubr.bf16.mxu0 0
  %6989 = vmatmul.mubr.bf16.gmra.mrb[0].mxu0 %v6831
  %v6990 = vpop.f32.mrb[0].mxu0
  %v6991 = vadd.f32 0.0, %v6990
  %v6992 = vpop.f32.mrb[0].mxu0
  %v6993 = vpop.f32.mrb[0].mxu0
  %v6994 = vadd.f32 0.0, %v6993
  %v6995 = vpop.f32.mrb[0].mxu0
  %6996 = vmatprep.mubr.bf16.mxu0 0
  %6997 = vmatmul.mubr.bf16.gmra.mrb[0].mxu0 %v6834
  %v6998 = vpop.f32.mrb[0].mxu0
  %v6999 = vadd.f32 0.0, %v6998
  %v7000 = vpop.f32.mrb[0].mxu0
  %v7001 = vpop.f32.mrb[0].mxu0
  %v7002 = vadd.f32 0.0, %v7001
  %v7003 = vpop.f32.mrb[0].mxu0
  %7004 = vmatprep.mubr.bf16.mxu0 0
  %7005 = vmatmul.mubr.bf16.gmra.mrb[0].mxu0 %v6837
  %v7006 = vpop.f32.mrb[0].mxu0
  %v7007 = vadd.f32 0.0, %v7006
  %v7008 = vpop.f32.mrb[0].mxu0
  %v7009 = vpop.f32.mrb[0].mxu0
  %v7010 = vadd.f32 0.0, %v7009
  %v7011 = vpop.f32.mrb[0].mxu0
  %7012 = vmatprep.mubr.bf16.mxu0 0
  %7013 = vmatmul.mubr.bf16.gmra.mrb[0].mxu0 %v6840
  %v7014 = vpop.f32.mrb[0].mxu0
  %v7015 = vadd.f32 0.0, %v7014
  %v7016 = vpop.f32.mrb[0].mxu0
  %v7017 = vpop.f32.mrb[0].mxu0
  %v7018 = vadd.f32 0.0, %v7017
  %v7019 = vpop.f32.mrb[0].mxu0
  %7020 = vmatprep.mubr.bf16.mxu0 0
  %7021 = vmatmul.mubr.bf16.gmra.mrb[0].mxu0 %v6843
  %v7022 = vpop.f32.mrb[0].mxu0
  %v7023 = vadd.f32 0.0, %v7022
  %v7024 = vpop.f32.mrb[0].mxu0
  %v7025 = vpop.f32.mrb[0].mxu0
  %v7026 = vadd.f32 0.0, %v7025
  %v7027 = vpop.f32.mrb[0].mxu0
  %7028 = vmatprep.mubr.bf16.mxu0 0
  %7029 = vmatmul.mubr.bf16.gmra.mrb[0].mxu0 %v6846
  %v7030 = vpop.f32.mrb[0].mxu0
  %v7031 = vadd.f32 0.0, %v7030
  %v7032 = vpop.f32.mrb[0].mxu0
  %v7033 = vpop.f32.mrb[0].mxu0
  %v7034 = vadd.f32 0.0, %v7033
  %v7035 = vpop.f32.mrb[0].mxu0
  %7036 = vmatprep.mubr.bf16.mxu0 0
  %7037 = vmatmul.mubr.bf16.gmra.mrb[0].mxu0 %v6849
  %v7038 = vpop.f32.mrb[0].mxu0
  %v7039 = vadd.f32 0.0, %v7038
  %v7040 = vpop.f32.mrb[0].mxu0
  %v7041 = vpop.f32.mrb[0].mxu0
  %v7042 = vadd.f32 0.0, %v7041
  %v7043 = vpop.f32.mrb[0].mxu0
  %7044 = vmatprep.mubr.bf16.mxu0 0
  %7045 = vmatmul.mubr.bf16.gmra.mrb[0].mxu0 %v6852
  %v7046 = vpop.f32.mrb[0].mxu0
  %v7047 = vadd.f32 0.0, %v7046
  %v7048 = vpop.f32.mrb[0].mxu0
  %v7049 = vpop.f32.mrb[0].mxu0
  %v7050 = vadd.f32 0.0, %v7049
  %v7051 = vpop.f32.mrb[0].mxu0
  %7052 = vmatprep.mubr.bf16.mxu0 0
  %7053 = vmatmul.mubr.bf16.gmra.mrb[0].mxu0 %v6855
  %v7054 = vpop.f32.mrb[0].mxu0
  %v7055 = vadd.f32 0.0, %v7054
  %v7056 = vpop.f32.mrb[0].mxu0
  %v7057 = vpop.f32.mrb[0].mxu0
  %v7058 = vadd.f32 0.0, %v7057
  %v7059 = vpop.f32.mrb[0].mxu0
  %7060 = vmatprep.mubr.bf16.mxu0 0
  %7061 = vmatmul.mubr.bf16.gmra.mrb[0].mxu0 %v6858
  %v7062 = vpop.f32.mrb[0].mxu0
  %v7063 = vadd.f32 0.0, %v7062
  %v7064 = vpop.f32.mrb[0].mxu0
  %v7065 = vpop.f32.mrb[0].mxu0
  %v7066 = vadd.f32 0.0, %v7065
  %v7067 = vpop.f32.mrb[0].mxu0
  %7068 = vmatprep.mubr.bf16.mxu0 0
  %7069 = vmatmul.mubr.bf16.gmra.mrb[0].mxu0 %v6861
  %v7070 = vpop.f32.mrb[0].mxu0
  %v7071 = vadd.f32 0.0, %v7070
  %v7072 = vpop.f32.mrb[0].mxu0
  %v7073 = vpop.f32.mrb[0].mxu0
  %v7074 = vadd.f32 0.0, %v7073
  %v7075 = vpop.f32.mrb[0].mxu0
  %7076 = vmatprep.mubr.bf16.mxu0 0
  %7077 = vmatmul.mubr.bf16.gmra.mrb[0].mxu0 %v6864
  %v7078 = vpop.f32.mrb[0].mxu0
  %v7079 = vadd.f32 0.0, %v7078
  %v7080 = vpop.f32.mrb[0].mxu0
  %v7081 = vpop.f32.mrb[0].mxu0
  %v7082 = vadd.f32 0.0, %v7081
  %v7083 = vpop.f32.mrb[0].mxu0
  %7084 = vmatprep.mubr.bf16.mxu0 0
  %7085 = vmatmul.mubr.bf16.gmra.mrb[0].mxu0 %v6867
  %v7086 = vpop.f32.mrb[0].mxu0
  %v7087 = vadd.f32 0.0, %v7086
  %v7088 = vpop.f32.mrb[0].mxu0
  %v7089 = vpop.f32.mrb[0].mxu0
  %v7090 = vadd.f32 0.0, %v7089
  %v7091 = vpop.f32.mrb[0].mxu0
  %7092 = vmatprep.mubr.bf16.mxu0 0
  %7093 = vmatmul.mubr.bf16.gmra.mrb[0].mxu0 %v6870
  %v7094 = vpop.f32.mrb[0].mxu0
  %v7095 = vadd.f32 0.0, %v7094
  %v7096 = vpop.f32.mrb[0].mxu0
  %v7097 = vpop.f32.mrb[0].mxu0
  %v7098 = vadd.f32 0.0, %v7097
  %v7099 = vpop.f32.mrb[0].mxu0
  %7100 = vmatprep.mubr.bf16.mxu0 0
  %7101 = vmatmul.mubr.bf16.gmra.mrb[0].mxu0 %v6873
  %v7102 = vpop.f32.mrb[0].mxu0
  %v7103 = vadd.f32 0.0, %v7102
  %v7104 = vpop.f32.mrb[0].mxu0
  %v7105 = vpop.f32.mrb[0].mxu0
  %v7106 = vadd.f32 0.0, %v7105
  %v7107 = vpop.f32.mrb[0].mxu0
  %7108 = vmatprep.mubr.bf16.mxu0 0
  %7109 = vmatmul.mubr.bf16.gmra.mrb[0].mxu0 %v6876
  %v7110 = vpop.f32.mrb[0].mxu0
  %v7111 = vadd.f32 0.0, %v7110
  %v7112 = vpop.f32.mrb[0].mxu0
  %v7113 = vpop.f32.mrb[0].mxu0
  %v7114 = vadd.f32 0.0, %v7113
  %v7115 = vpop.f32.mrb[0].mxu0
  %7116 = vmatprep.mubr.bf16.mxu0 0
  %7117 = vmatmul.mubr.bf16.gmra.mrb[0].mxu0 %v6879
  %v7118 = vpop.f32.mrb[0].mxu0
  %v7119 = vadd.f32 0.0, %v7118
  %v7120 = vpop.f32.mrb[0].mxu0
  %v7121 = vpop.f32.mrb[0].mxu0
  %v7122 = vadd.f32 0.0, %v7121
  %v7123 = vpop.f32.mrb[0].mxu0
  %7124 = vmatprep.mubr.bf16.mxu0 0
  %7125 = vmatmul.mubr.bf16.gmra.mrb[0].mxu0 %v6882
  %v7126 = vpop.f32.mrb[0].mxu0
  %v7127 = vadd.f32 0.0, %v7126
  %v7128 = vpop.f32.mrb[0].mxu0
  %v7129 = vpop.f32.mrb[0].mxu0
  %v7130 = vadd.f32 0.0, %v7129
  %v7131 = vpop.f32.mrb[0].mxu0
  %7132 = vmatprep.mubr.bf16.mxu0 0
  %7133 = vmatmul.mubr.bf16.gmra.mrb[0].mxu0 %v6885
  %v7134 = vpop.f32.mrb[0].mxu0
  %v7135 = vadd.f32 0.0, %v7134
  %v7136 = vpop.f32.mrb[0].mxu0
  %v7137 = vpop.f32.mrb[0].mxu0
  %v7138 = vadd.f32 0.0, %v7137
  %v7139 = vpop.f32.mrb[0].mxu0
  %7140 = vmatprep.mubr.bf16.mxu0 0
  %7141 = vmatmul.mubr.bf16.gmra.mrb[0].mxu0 %v6888
  %v7142 = vpop.f32.mrb[0].mxu0
  %v7143 = vadd.f32 0.0, %v7142
  %v7144 = vpop.f32.mrb[0].mxu0
  %v7145 = vpop.f32.mrb[0].mxu0
  %v7146 = vadd.f32 0.0, %v7145
  %v7147 = vpop.f32.mrb[0].mxu0
  %7148 = vmatprep.mubr.bf16.mxu0 0
  %7149 = vmatmul.mubr.bf16.gmra.mrb[0].mxu0 %v6891
  %v7150 = vpop.f32.mrb[0].mxu0
  %v7151 = vadd.f32 0.0, %v7150
  %v7152 = vpop.f32.mrb[0].mxu0
  %v7153 = vpop.f32.mrb[0].mxu0
  %v7154 = vadd.f32 0.0, %v7153
  %v7155 = vpop.f32.mrb[0].mxu0
  %7156 = vmatprep.mubr.bf16.mxu0 0
  %7157 = vmatmul.mubr.bf16.gmra.mrb[0].mxu0 %v6894
  %v7158 = vpop.f32.mrb[0].mxu0
  %v7159 = vadd.f32 0.0, %v7158
  %v7160 = vpop.f32.mrb[0].mxu0
  %v7161 = vpop.f32.mrb[0].mxu0
  %v7162 = vadd.f32 0.0, %v7161
  %v7163 = vpop.f32.mrb[0].mxu0
  %7164 = vmatprep.mubr.bf16.mxu0 0
  %7165 = vmatmul.mubr.bf16.gmra.mrb[0].mxu0 %v6897
  %v7166 = vpop.f32.mrb[0].mxu0
  %v7167 = vadd.f32 0.0, %v7166
  %v7168 = vpop.f32.mrb[0].mxu0
  %v7169 = vpop.f32.mrb[0].mxu0
  %v7170 = vadd.f32 0.0, %v7169
  %v7171 = vpop.f32.mrb[0].mxu0
  %7172 = vmatprep.mubr.bf16.mxu0 0
  %7173 = vmatmul.mubr.bf16.gmra.mrb[0].mxu0 %v6900
  %v7174 = vpop.f32.mrb[0].mxu0
  %v7175 = vadd.f32 0.0, %v7174
  %v7176 = vpop.f32.mrb[0].mxu0
  %v7177 = vpop.f32.mrb[0].mxu0
  %v7178 = vadd.f32 0.0, %v7177
  %v7179 = vpop.f32.mrb[0].mxu0
  %7180 = vmatprep.mubr.bf16.mxu0 0
  %7181 = vmatmul.mubr.bf16.gmra.mrb[0].mxu0 %v6903
  %v7182 = vpop.f32.mrb[0].mxu0
  %v7183 = vadd.f32 0.0, %v7182
  %v7184 = vpop.f32.mrb[0].mxu0
  %v7185 = vpop.f32.mrb[0].mxu0
  %v7186 = vadd.f32 0.0, %v7185
  %v7187 = vpop.f32.mrb[0].mxu0
  %7188 = vmatprep.mubr.bf16.mxu0 0
  %7189 = vmatmul.mubr.bf16.gmra.mrb[0].mxu0 %v6906
  %v7190 = vpop.f32.mrb[0].mxu0
  %v7191 = vadd.f32 0.0, %v7190
  %v7192 = vpop.f32.mrb[0].mxu0
  %v7193 = vpop.f32.mrb[0].mxu0
  %v7194 = vadd.f32 0.0, %v7193
  %v7195 = vpop.f32.mrb[0].mxu0
  %7196 = vdwg.mxu0
  %v7197 = vadd.f32 %v6635, %v6943
  %v7198 = vadd.f32 %v6636, %v6946
  %v7199 = vadd.f32 %v6637, %v6951
  %v7200 = vadd.f32 %v6638, %v6954
  %v7201 = vadd.f32 %v6639, %v6959
  %v7202 = vadd.f32 %v6640, %v6962
  %v7203 = vadd.f32 %v6641, %v6967
  %v7204 = vadd.f32 %v6642, %v6970
  %v7205 = vadd.f32 %v6643, %v6975
  %v7206 = vadd.f32 %v6644, %v6978
  %v7207 = vadd.f32 %v6645, %v6983
  %v7208 = vadd.f32 %v6646, %v6986
  %v7209 = vadd.f32 %v6647, %v6991
  %v7210 = vadd.f32 %v6648, %v6994
  %v7211 = vadd.f32 %v6649, %v6999
  %v7212 = vadd.f32 %v6650, %v7002
  %v7213 = vadd.f32 %v6651, %v7007
  %v7214 = vadd.f32 %v6652, %v7010
  %v7215 = vadd.f32 %v6653, %v7015
  %v7216 = vadd.f32 %v6654, %v7018
  %v7217 = vadd.f32 %v6655, %v7023
  %v7218 = vadd.f32 %v6656, %v7026
  %v7219 = vadd.f32 %v6657, %v7031
  %v7220 = vadd.f32 %v6658, %v7034
  %v7221 = vadd.f32 %v6659, %v7039
  %v7222 = vadd.f32 %v6660, %v7042
  %v7223 = vadd.f32 %v6661, %v7047
  %v7224 = vadd.f32 %v6662, %v7050
  %v7225 = vadd.f32 %v6663, %v7055
  %v7226 = vadd.f32 %v6664, %v7058
  %v7227 = vadd.f32 %v6665, %v7063
  %v7228 = vadd.f32 %v6666, %v7066
  %v7229 = vadd.f32 %v6667, %v7071
  %v7230 = vadd.f32 %v6668, %v7074
  %v7231 = vadd.f32 %v6669, %v7079
  %v7232 = vadd.f32 %v6670, %v7082
  %v7233 = vadd.f32 %v6671, %v7087
  %v7234 = vadd.f32 %v6672, %v7090
  %v7235 = vadd.f32 %v6673, %v7095
  %v7236 = vadd.f32 %v6674, %v7098
  %v7237 = vadd.f32 %v6675, %v7103
  %v7238 = vadd.f32 %v6676, %v7106
  %v7239 = vadd.f32 %v6677, %v7111
  %v7240 = vadd.f32 %v6678, %v7114
  %v7241 = vadd.f32 %v6679, %v7119
  %v7242 = vadd.f32 %v6680, %v7122
  %v7243 = vadd.f32 %v6681, %v7127
  %v7244 = vadd.f32 %v6682, %v7130
  %v7245 = vadd.f32 %v6683, %v7135
  %v7246 = vadd.f32 %v6684, %v7138
  %v7247 = vadd.f32 %v6685, %v7143
  %v7248 = vadd.f32 %v6686, %v7146
  %v7249 = vadd.f32 %v6687, %v7151
  %v7250 = vadd.f32 %v6688, %v7154
  %v7251 = vadd.f32 %v6689, %v7159
  %v7252 = vadd.f32 %v6690, %v7162
  %v7253 = vadd.f32 %v6691, %v7167
  %v7254 = vadd.f32 %v6692, %v7170
  %v7255 = vadd.f32 %v6693, %v7175
  %v7256 = vadd.f32 %v6694, %v7178
  %v7257 = vadd.f32 %v6695, %v7183
  %v7258 = vadd.f32 %v6696, %v7186
  %v7259 = vadd.f32 %v6697, %v7191
  %v7260 = vadd.f32 %v6698, %v7194
  %v7261 = vld [vmem:[%s6136 + $0x10] sm:$0xff]
  %v7262 = vld [vmem:[%s6136 + $0x18] sm:$0xff]
  %v7263 = vld [vmem:[%s6136 + $0x20] sm:$0xff]
  %v7264 = vld [vmem:[%s6136 + $0x28] sm:$0xff]
  %v7265 = vld [vmem:[%s6136 + $0x30] sm:$0xff]
  %v7266 = vld [vmem:[%s6136 + $0x38] sm:$0xff]
  %v7267 = vld [vmem:[%s6136 + $0x40] sm:$0xff]
  %v7268 = vld [vmem:[%s6136 + $0x48] sm:$0xff]
  %v7269 = vld [vmem:[%s6136 + $0x60] sm:$0xff]
  %v7270 = vld [vmem:[%s6136 + $0x68] sm:$0xff]
  %v7271 = vld [vmem:[%s6136 + $0x70] sm:$0xff]
  %v7272 = vld [vmem:[%s6136 + $0x78] sm:$0xff]
  %v7273 = vld [vmem:[%s6136 + $0x80] sm:$0xff]
  %v7274 = vld [vmem:[%s6136 + $0x88] sm:$0xff]
  %v7275 = vld [vmem:[%s6136 + $0x90] sm:$0xff]
  %v7276 = vld [vmem:[%s6136 + $0x98] sm:$0xff]
  %v7277 = vld [vmem:[%s6136 + $0xb0] sm:$0xff]
  %v7278 = vld [vmem:[%s6136 + $0xb8] sm:$0xff]
  %v7279 = vld [vmem:[%s6136 + $0xc0] sm:$0xff]
  %v7280 = vld [vmem:[%s6136 + $0xc8] sm:$0xff]
  %v7281 = vld [vmem:[%s6136 + $0xd0] sm:$0xff]
  %v7282 = vld [vmem:[%s6136 + $0xd8] sm:$0xff]
  %v7283 = vld [vmem:[%s6136 + $0xe0] sm:$0xff]
  %v7284 = vld [vmem:[%s6136 + $0xe8] sm:$0xff]
  %v7285 = vld [vmem:[%s6136 + $0x100] sm:$0xff]
  %v7286 = vld [vmem:[%s6136 + $0x108] sm:$0xff]
  %v7287 = vld [vmem:[%s6136 + $0x110] sm:$0xff]
  %v7288 = vld [vmem:[%s6136 + $0x118] sm:$0xff]
  %v7289 = vld [vmem:[%s6136 + $0x120] sm:$0xff]
  %v7290 = vld [vmem:[%s6136 + $0x128] sm:$0xff]
  %v7291 = vld [vmem:[%s6136 + $0x130] sm:$0xff]
  %v7292 = vld [vmem:[%s6136 + $0x138] sm:$0xff]
  %v7293 = vld [vmem:[%s6136 + $0x150] sm:$0xff]
  %v7294 = vld [vmem:[%s6136 + $0x158] sm:$0xff]
  %v7295 = vld [vmem:[%s6136 + $0x160] sm:$0xff]
  %v7296 = vld [vmem:[%s6136 + $0x168] sm:$0xff]
  %v7297 = vld [vmem:[%s6136 + $0x170] sm:$0xff]
  %v7298 = vld [vmem:[%s6136 + $0x178] sm:$0xff]
  %v7299 = vld [vmem:[%s6136 + $0x180] sm:$0xff]
  %v7300 = vld [vmem:[%s6136 + $0x188] sm:$0xff]
  %v7301 = vld [vmem:[%s6136 + $0x1a0] sm:$0xff]
  %v7302 = vld [vmem:[%s6136 + $0x1a8] sm:$0xff]
  %v7303 = vld [vmem:[%s6136 + $0x1b0] sm:$0xff]
  %v7304 = vld [vmem:[%s6136 + $0x1b8] sm:$0xff]
  %v7305 = vld [vmem:[%s6136 + $0x1c0] sm:$0xff]
  %v7306 = vld [vmem:[%s6136 + $0x1c8] sm:$0xff]
  %v7307 = vld [vmem:[%s6136 + $0x1d0] sm:$0xff]
  %v7308 = vld [vmem:[%s6136 + $0x1d8] sm:$0xff]
  %v7309 = vld [vmem:[%s6136 + $0x1f0] sm:$0xff]
  %v7310 = vld [vmem:[%s6136 + $0x1f8] sm:$0xff]
  %v7311 = vld [vmem:[%s6136 + $0x200] sm:$0xff]
  %v7312 = vld [vmem:[%s6136 + $0x208] sm:$0xff]
  %v7313 = vld [vmem:[%s6136 + $0x210] sm:$0xff]
  %v7314 = vld [vmem:[%s6136 + $0x218] sm:$0xff]
  %v7315 = vld [vmem:[%s6136 + $0x220] sm:$0xff]
  %v7316 = vld [vmem:[%s6136 + $0x228] sm:$0xff]
  %v7317 = vld [vmem:[%s6136 + $0x240] sm:$0xff]
  %v7318 = vld [vmem:[%s6136 + $0x248] sm:$0xff]
  %v7319 = vld [vmem:[%s6136 + $0x250] sm:$0xff]
  %v7320 = vld [vmem:[%s6136 + $0x258] sm:$0xff]
  %v7321 = vld [vmem:[%s6136 + $0x260] sm:$0xff]
  %v7322 = vld [vmem:[%s6136 + $0x268] sm:$0xff]
  %v7323 = vld [vmem:[%s6136 + $0x270] sm:$0xff]
  %v7324 = vld [vmem:[%s6136 + $0x278] sm:$0xff]
  %v7325 = vpack.c.bf16 %v7262, %v7261
  %v7326 = vpack.c.bf16 %v7264, %v7263
  %v7327 = vpack.c.bf16 %v7266, %v7265
  %v7328 = vpack.c.bf16 %v7268, %v7267
  %v7329 = vpack.c.bf16 %v7270, %v7269
  %v7330 = vpack.c.bf16 %v7272, %v7271
  %v7331 = vpack.c.bf16 %v7274, %v7273
  %v7332 = vpack.c.bf16 %v7276, %v7275
  %v7333 = vpack.c.bf16 %v7278, %v7277
  %v7334 = vpack.c.bf16 %v7280, %v7279
  %v7335 = vpack.c.bf16 %v7282, %v7281
  %v7336 = vpack.c.bf16 %v7284, %v7283
  %v7337 = vpack.c.bf16 %v7286, %v7285
  %v7338 = vpack.c.bf16 %v7288, %v7287
  %v7339 = vpack.c.bf16 %v7290, %v7289
  %v7340 = vpack.c.bf16 %v7292, %v7291
  %v7341 = vpack.c.bf16 %v7294, %v7293
  %v7342 = vpack.c.bf16 %v7296, %v7295
  %v7343 = vpack.c.bf16 %v7298, %v7297
  %v7344 = vpack.c.bf16 %v7300, %v7299
  %v7345 = vpack.c.bf16 %v7302, %v7301
  %v7346 = vpack.c.bf16 %v7304, %v7303
  %v7347 = vpack.c.bf16 %v7306, %v7305
  %v7348 = vpack.c.bf16 %v7308, %v7307
  %v7349 = vpack.c.bf16 %v7310, %v7309
  %v7350 = vpack.c.bf16 %v7312, %v7311
  %v7351 = vpack.c.bf16 %v7314, %v7313
  %v7352 = vpack.c.bf16 %v7316, %v7315
  %v7353 = vpack.c.bf16 %v7318, %v7317
  %v7354 = vpack.c.bf16 %v7320, %v7319
  %v7355 = vpack.c.bf16 %v7322, %v7321
  %v7356 = vpack.c.bf16 %v7324, %v7323
  %s7357 = scalar_lea.vmem %s3, 128
  %v7358 = vld [vmem:[%s7357] sm:$0xf]
  %v7359 = vld [vmem:[%s7357 + $0x4] sm:$0xf]
  %v7360 = vld [vmem:[%s7357 + $0x8] sm:$0xf]
  %v7361 = vld [vmem:[%s7357 + $0xc] sm:$0xf]
  %v7366 = vunpack.c.l.b16 %v7358
  %v7367 = vunpack.c.l.b16 %v7359
  %v7368 = vunpack.c.l.b16 %v7360
  %v7369 = vunpack.c.l.b16 %v7361
  %v7370 = vpack.c.b16 %v7367, %v7366
  %v7371 = vpack.c.b16 %v7369, %v7368
  %v7375 = vsel %vm2846, %v7325, 0
  %v7378 = vsel %vm2846, %v7326, 0
  %v7381 = vsel %vm2846, %v7327, 0
  %v7384 = vsel %vm2846, %v7328, 0
  %v7387 = vsel %vm2846, %v7329, 0
  %v7390 = vsel %vm2846, %v7330, 0
  %v7393 = vsel %vm2846, %v7331, 0
  %v7396 = vsel %vm2846, %v7332, 0
  %v7399 = vsel %vm2846, %v7333, 0
  %v7402 = vsel %vm2846, %v7334, 0
  %v7405 = vsel %vm2846, %v7335, 0
  %v7408 = vsel %vm2846, %v7336, 0
  %v7411 = vsel %vm2846, %v7337, 0
  %v7414 = vsel %vm2846, %v7338, 0
  %v7417 = vsel %vm2846, %v7339, 0
  %v7420 = vsel %vm2846, %v7340, 0
  %v7423 = vsel %vm2846, %v7341, 0
  %v7426 = vsel %vm2846, %v7342, 0
  %v7429 = vsel %vm2846, %v7343, 0
  %v7432 = vsel %vm2846, %v7344, 0
  %v7435 = vsel %vm2846, %v7345, 0
  %v7438 = vsel %vm2846, %v7346, 0
  %v7441 = vsel %vm2846, %v7347, 0
  %v7444 = vsel %vm2846, %v7348, 0
  %v7447 = vsel %vm2846, %v7349, 0
  %v7450 = vsel %vm2846, %v7350, 0
  %v7453 = vsel %vm2846, %v7351, 0
  %v7456 = vsel %vm2846, %v7352, 0
  %v7459 = vsel %vm2846, %v7353, 0
  %v7462 = vsel %vm2846, %v7354, 0
  %v7465 = vsel %vm2846, %v7355, 0
  %v7468 = vsel %vm2846, %v7356, 0
  %7470 = vmatprep.subr.bf16.mxu0 0
  %7471 = vmatpush1.bf16.msra.mxu0 %v7370
  %7472 = vmatprep.subr.bf16.mxu0 0
  %7473 = vmatpush1.bf16.msra.mxu0 %v7371
  %7474 = vmatprep.subr.bf16.mxu0 0
  %7475 = vmatpush1.bf16.msra.mxu0 0
  %7476 = vmatprep.subr.bf16.mxu0 0
  %7477 = vmatpush1.bf16.msra.mxu0 0
  %7478 = vmatprep.subr.bf16.mxu0 0
  %7479 = vmatpush1.bf16.msra.mxu0 0
  %7480 = vmatprep.subr.bf16.mxu0 0
  %7481 = vmatpush1.bf16.msra.mxu0 0
  %7482 = vmatprep.subr.bf16.mxu0 0
  %7483 = vmatpush1.bf16.msra.mxu0 0
  %7484 = vmatprep.subr.bf16.mxu0 0
  %7485 = vmatpush1.bf16.msra.mxu0 0
  %7486 = vmatprep.subr.bf16.mxu0 0
  %7487 = vmatpush1.bf16.msra.mxu0 0
  %7488 = vmatprep.subr.bf16.mxu0 0
  %7489 = vmatpush1.bf16.msra.mxu0 0
  %7490 = vmatprep.subr.bf16.mxu0 0
  %7491 = vmatpush1.bf16.msra.mxu0 0
  %7492 = vmatprep.subr.bf16.mxu0 0
  %7493 = vmatpush1.bf16.msra.mxu0 0
  %7494 = vmatprep.subr.bf16.mxu0 0
  %7495 = vmatpush1.bf16.msra.mxu0 0
  %7496 = vmatprep.subr.bf16.mxu0 0
  %7497 = vmatpush1.bf16.msra.mxu0 0
  %7498 = vmatprep.subr.bf16.mxu0 0
  %7499 = vmatpush1.bf16.msra.mxu0 0
  %7500 = vmatprep.subr.bf16.mxu0 0
  %7501 = vmatpush1.bf16.msra.mxu0 0
  %7502 = vmatprep.mubr.bf16.mxu0 0
  %7503 = vmatmul.mubr.bf16.gmra.mrb[0].mxu0 %v7375
  %v7504 = vpop.f32.mrb[0].mxu0
  %v7505 = vadd.f32 0.0, %v7504
  %v7506 = vpop.f32.mrb[0].mxu0
  %v7507 = vpop.f32.mrb[0].mxu0
  %v7508 = vadd.f32 0.0, %v7507
  %v7509 = vpop.f32.mrb[0].mxu0
  %7510 = vmatprep.mubr.bf16.mxu0 0
  %7511 = vmatmul.mubr.bf16.gmra.mrb[0].mxu0 %v7378
  %v7512 = vpop.f32.mrb[0].mxu0
  %v7513 = vadd.f32 0.0, %v7512
  %v7514 = vpop.f32.mrb[0].mxu0
  %v7515 = vpop.f32.mrb[0].mxu0
  %v7516 = vadd.f32 0.0, %v7515
  %v7517 = vpop.f32.mrb[0].mxu0
  %7518 = vmatprep.mubr.bf16.mxu0 0
  %7519 = vmatmul.mubr.bf16.gmra.mrb[0].mxu0 %v7381
  %v7520 = vpop.f32.mrb[0].mxu0
  %v7521 = vadd.f32 0.0, %v7520
  %v7522 = vpop.f32.mrb[0].mxu0
  %v7523 = vpop.f32.mrb[0].mxu0
  %v7524 = vadd.f32 0.0, %v7523
  %v7525 = vpop.f32.mrb[0].mxu0
  %7526 = vmatprep.mubr.bf16.mxu0 0
  %7527 = vmatmul.mubr.bf16.gmra.mrb[0].mxu0 %v7384
  %v7528 = vpop.f32.mrb[0].mxu0
  %v7529 = vadd.f32 0.0, %v7528
  %v7530 = vpop.f32.mrb[0].mxu0
  %v7531 = vpop.f32.mrb[0].mxu0
  %v7532 = vadd.f32 0.0, %v7531
  %v7533 = vpop.f32.mrb[0].mxu0
  %7534 = vmatprep.mubr.bf16.mxu0 0
  %7535 = vmatmul.mubr.bf16.gmra.mrb[0].mxu0 %v7387
  %v7536 = vpop.f32.mrb[0].mxu0
  %v7537 = vadd.f32 0.0, %v7536
  %v7538 = vpop.f32.mrb[0].mxu0
  %v7539 = vpop.f32.mrb[0].mxu0
  %v7540 = vadd.f32 0.0, %v7539
  %v7541 = vpop.f32.mrb[0].mxu0
  %7542 = vmatprep.mubr.bf16.mxu0 0
  %7543 = vmatmul.mubr.bf16.gmra.mrb[0].mxu0 %v7390
  %v7544 = vpop.f32.mrb[0].mxu0
  %v7545 = vadd.f32 0.0, %v7544
  %v7546 = vpop.f32.mrb[0].mxu0
  %v7547 = vpop.f32.mrb[0].mxu0
  %v7548 = vadd.f32 0.0, %v7547
  %v7549 = vpop.f32.mrb[0].mxu0
  %7550 = vmatprep.mubr.bf16.mxu0 0
  %7551 = vmatmul.mubr.bf16.gmra.mrb[0].mxu0 %v7393
  %v7552 = vpop.f32.mrb[0].mxu0
  %v7553 = vadd.f32 0.0, %v7552
  %v7554 = vpop.f32.mrb[0].mxu0
  %v7555 = vpop.f32.mrb[0].mxu0
  %v7556 = vadd.f32 0.0, %v7555
  %v7557 = vpop.f32.mrb[0].mxu0
  %7558 = vmatprep.mubr.bf16.mxu0 0
  %7559 = vmatmul.mubr.bf16.gmra.mrb[0].mxu0 %v7396
  %v7560 = vpop.f32.mrb[0].mxu0
  %v7561 = vadd.f32 0.0, %v7560
  %v7562 = vpop.f32.mrb[0].mxu0
  %v7563 = vpop.f32.mrb[0].mxu0
  %v7564 = vadd.f32 0.0, %v7563
  %v7565 = vpop.f32.mrb[0].mxu0
  %7566 = vmatprep.mubr.bf16.mxu0 0
  %7567 = vmatmul.mubr.bf16.gmra.mrb[0].mxu0 %v7399
  %v7568 = vpop.f32.mrb[0].mxu0
  %v7569 = vadd.f32 0.0, %v7568
  %v7570 = vpop.f32.mrb[0].mxu0
  %v7571 = vpop.f32.mrb[0].mxu0
  %v7572 = vadd.f32 0.0, %v7571
  %v7573 = vpop.f32.mrb[0].mxu0
  %7574 = vmatprep.mubr.bf16.mxu0 0
  %7575 = vmatmul.mubr.bf16.gmra.mrb[0].mxu0 %v7402
  %v7576 = vpop.f32.mrb[0].mxu0
  %v7577 = vadd.f32 0.0, %v7576
  %v7578 = vpop.f32.mrb[0].mxu0
  %v7579 = vpop.f32.mrb[0].mxu0
  %v7580 = vadd.f32 0.0, %v7579
  %v7581 = vpop.f32.mrb[0].mxu0
  %7582 = vmatprep.mubr.bf16.mxu0 0
  %7583 = vmatmul.mubr.bf16.gmra.mrb[0].mxu0 %v7405
  %v7584 = vpop.f32.mrb[0].mxu0
  %v7585 = vadd.f32 0.0, %v7584
  %v7586 = vpop.f32.mrb[0].mxu0
  %v7587 = vpop.f32.mrb[0].mxu0
  %v7588 = vadd.f32 0.0, %v7587
  %v7589 = vpop.f32.mrb[0].mxu0
  %7590 = vmatprep.mubr.bf16.mxu0 0
  %7591 = vmatmul.mubr.bf16.gmra.mrb[0].mxu0 %v7408
  %v7592 = vpop.f32.mrb[0].mxu0
  %v7593 = vadd.f32 0.0, %v7592
  %v7594 = vpop.f32.mrb[0].mxu0
  %v7595 = vpop.f32.mrb[0].mxu0
  %v7596 = vadd.f32 0.0, %v7595
  %v7597 = vpop.f32.mrb[0].mxu0
  %7598 = vmatprep.mubr.bf16.mxu0 0
  %7599 = vmatmul.mubr.bf16.gmra.mrb[0].mxu0 %v7411
  %v7600 = vpop.f32.mrb[0].mxu0
  %v7601 = vadd.f32 0.0, %v7600
  %v7602 = vpop.f32.mrb[0].mxu0
  %v7603 = vpop.f32.mrb[0].mxu0
  %v7604 = vadd.f32 0.0, %v7603
  %v7605 = vpop.f32.mrb[0].mxu0
  %7606 = vmatprep.mubr.bf16.mxu0 0
  %7607 = vmatmul.mubr.bf16.gmra.mrb[0].mxu0 %v7414
  %v7608 = vpop.f32.mrb[0].mxu0
  %v7609 = vadd.f32 0.0, %v7608
  %v7610 = vpop.f32.mrb[0].mxu0
  %v7611 = vpop.f32.mrb[0].mxu0
  %v7612 = vadd.f32 0.0, %v7611
  %v7613 = vpop.f32.mrb[0].mxu0
  %7614 = vmatprep.mubr.bf16.mxu0 0
  %7615 = vmatmul.mubr.bf16.gmra.mrb[0].mxu0 %v7417
  %v7616 = vpop.f32.mrb[0].mxu0
  %v7617 = vadd.f32 0.0, %v7616
  %v7618 = vpop.f32.mrb[0].mxu0
  %v7619 = vpop.f32.mrb[0].mxu0
  %v7620 = vadd.f32 0.0, %v7619
  %v7621 = vpop.f32.mrb[0].mxu0
  %7622 = vmatprep.mubr.bf16.mxu0 0
  %7623 = vmatmul.mubr.bf16.gmra.mrb[0].mxu0 %v7420
  %v7624 = vpop.f32.mrb[0].mxu0
  %v7625 = vadd.f32 0.0, %v7624
  %v7626 = vpop.f32.mrb[0].mxu0
  %v7627 = vpop.f32.mrb[0].mxu0
  %v7628 = vadd.f32 0.0, %v7627
  %v7629 = vpop.f32.mrb[0].mxu0
  %7630 = vmatprep.mubr.bf16.mxu0 0
  %7631 = vmatmul.mubr.bf16.gmra.mrb[0].mxu0 %v7423
  %v7632 = vpop.f32.mrb[0].mxu0
  %v7633 = vadd.f32 0.0, %v7632
  %v7634 = vpop.f32.mrb[0].mxu0
  %v7635 = vpop.f32.mrb[0].mxu0
  %v7636 = vadd.f32 0.0, %v7635
  %v7637 = vpop.f32.mrb[0].mxu0
  %7638 = vmatprep.mubr.bf16.mxu0 0
  %7639 = vmatmul.mubr.bf16.gmra.mrb[0].mxu0 %v7426
  %v7640 = vpop.f32.mrb[0].mxu0
  %v7641 = vadd.f32 0.0, %v7640
  %v7642 = vpop.f32.mrb[0].mxu0
  %v7643 = vpop.f32.mrb[0].mxu0
  %v7644 = vadd.f32 0.0, %v7643
  %v7645 = vpop.f32.mrb[0].mxu0
  %7646 = vmatprep.mubr.bf16.mxu0 0
  %7647 = vmatmul.mubr.bf16.gmra.mrb[0].mxu0 %v7429
  %v7648 = vpop.f32.mrb[0].mxu0
  %v7649 = vadd.f32 0.0, %v7648
  %v7650 = vpop.f32.mrb[0].mxu0
  %v7651 = vpop.f32.mrb[0].mxu0
  %v7652 = vadd.f32 0.0, %v7651
  %v7653 = vpop.f32.mrb[0].mxu0
  %7654 = vmatprep.mubr.bf16.mxu0 0
  %7655 = vmatmul.mubr.bf16.gmra.mrb[0].mxu0 %v7432
  %v7656 = vpop.f32.mrb[0].mxu0
  %v7657 = vadd.f32 0.0, %v7656
  %v7658 = vpop.f32.mrb[0].mxu0
  %v7659 = vpop.f32.mrb[0].mxu0
  %v7660 = vadd.f32 0.0, %v7659
  %v7661 = vpop.f32.mrb[0].mxu0
  %7662 = vmatprep.mubr.bf16.mxu0 0
  %7663 = vmatmul.mubr.bf16.gmra.mrb[0].mxu0 %v7435
  %v7664 = vpop.f32.mrb[0].mxu0
  %v7665 = vadd.f32 0.0, %v7664
  %v7666 = vpop.f32.mrb[0].mxu0
  %v7667 = vpop.f32.mrb[0].mxu0
  %v7668 = vadd.f32 0.0, %v7667
  %v7669 = vpop.f32.mrb[0].mxu0
  %7670 = vmatprep.mubr.bf16.mxu0 0
  %7671 = vmatmul.mubr.bf16.gmra.mrb[0].mxu0 %v7438
  %v7672 = vpop.f32.mrb[0].mxu0
  %v7673 = vadd.f32 0.0, %v7672
  %v7674 = vpop.f32.mrb[0].mxu0
  %v7675 = vpop.f32.mrb[0].mxu0
  %v7676 = vadd.f32 0.0, %v7675
  %v7677 = vpop.f32.mrb[0].mxu0
  %7678 = vmatprep.mubr.bf16.mxu0 0
  %7679 = vmatmul.mubr.bf16.gmra.mrb[0].mxu0 %v7441
  %v7680 = vpop.f32.mrb[0].mxu0
  %v7681 = vadd.f32 0.0, %v7680
  %v7682 = vpop.f32.mrb[0].mxu0
  %v7683 = vpop.f32.mrb[0].mxu0
  %v7684 = vadd.f32 0.0, %v7683
  %v7685 = vpop.f32.mrb[0].mxu0
  %7686 = vmatprep.mubr.bf16.mxu0 0
  %7687 = vmatmul.mubr.bf16.gmra.mrb[0].mxu0 %v7444
  %v7688 = vpop.f32.mrb[0].mxu0
  %v7689 = vadd.f32 0.0, %v7688
  %v7690 = vpop.f32.mrb[0].mxu0
  %v7691 = vpop.f32.mrb[0].mxu0
  %v7692 = vadd.f32 0.0, %v7691
  %v7693 = vpop.f32.mrb[0].mxu0
  %7694 = vmatprep.mubr.bf16.mxu0 0
  %7695 = vmatmul.mubr.bf16.gmra.mrb[0].mxu0 %v7447
  %v7696 = vpop.f32.mrb[0].mxu0
  %v7697 = vadd.f32 0.0, %v7696
  %v7698 = vpop.f32.mrb[0].mxu0
  %v7699 = vpop.f32.mrb[0].mxu0
  %v7700 = vadd.f32 0.0, %v7699
  %v7701 = vpop.f32.mrb[0].mxu0
  %7702 = vmatprep.mubr.bf16.mxu0 0
  %7703 = vmatmul.mubr.bf16.gmra.mrb[0].mxu0 %v7450
  %v7704 = vpop.f32.mrb[0].mxu0
  %v7705 = vadd.f32 0.0, %v7704
  %v7706 = vpop.f32.mrb[0].mxu0
  %v7707 = vpop.f32.mrb[0].mxu0
  %v7708 = vadd.f32 0.0, %v7707
  %v7709 = vpop.f32.mrb[0].mxu0
  %7710 = vmatprep.mubr.bf16.mxu0 0
  %7711 = vmatmul.mubr.bf16.gmra.mrb[0].mxu0 %v7453
  %v7712 = vpop.f32.mrb[0].mxu0
  %v7713 = vadd.f32 0.0, %v7712
  %v7714 = vpop.f32.mrb[0].mxu0
  %v7715 = vpop.f32.mrb[0].mxu0
  %v7716 = vadd.f32 0.0, %v7715
  %v7717 = vpop.f32.mrb[0].mxu0
  %7718 = vmatprep.mubr.bf16.mxu0 0
  %7719 = vmatmul.mubr.bf16.gmra.mrb[0].mxu0 %v7456
  %v7720 = vpop.f32.mrb[0].mxu0
  %v7721 = vadd.f32 0.0, %v7720
  %v7722 = vpop.f32.mrb[0].mxu0
  %v7723 = vpop.f32.mrb[0].mxu0
  %v7724 = vadd.f32 0.0, %v7723
  %v7725 = vpop.f32.mrb[0].mxu0
  %7726 = vmatprep.mubr.bf16.mxu0 0
  %7727 = vmatmul.mubr.bf16.gmra.mrb[0].mxu0 %v7459
  %v7728 = vpop.f32.mrb[0].mxu0
  %v7729 = vadd.f32 0.0, %v7728
  %v7730 = vpop.f32.mrb[0].mxu0
  %v7731 = vpop.f32.mrb[0].mxu0
  %v7732 = vadd.f32 0.0, %v7731
  %v7733 = vpop.f32.mrb[0].mxu0
  %7734 = vmatprep.mubr.bf16.mxu0 0
  %7735 = vmatmul.mubr.bf16.gmra.mrb[0].mxu0 %v7462
  %v7736 = vpop.f32.mrb[0].mxu0
  %v7737 = vadd.f32 0.0, %v7736
  %v7738 = vpop.f32.mrb[0].mxu0
  %v7739 = vpop.f32.mrb[0].mxu0
  %v7740 = vadd.f32 0.0, %v7739
  %v7741 = vpop.f32.mrb[0].mxu0
  %7742 = vmatprep.mubr.bf16.mxu0 0
  %7743 = vmatmul.mubr.bf16.gmra.mrb[0].mxu0 %v7465
  %v7744 = vpop.f32.mrb[0].mxu0
  %v7745 = vadd.f32 0.0, %v7744
  %v7746 = vpop.f32.mrb[0].mxu0
  %v7747 = vpop.f32.mrb[0].mxu0
  %v7748 = vadd.f32 0.0, %v7747
  %v7749 = vpop.f32.mrb[0].mxu0
  %7750 = vmatprep.mubr.bf16.mxu0 0
  %7751 = vmatmul.mubr.bf16.gmra.mrb[0].mxu0 %v7468
  %v7752 = vpop.f32.mrb[0].mxu0
  %v7753 = vadd.f32 0.0, %v7752
  %v7754 = vpop.f32.mrb[0].mxu0
  %v7755 = vpop.f32.mrb[0].mxu0
  %v7756 = vadd.f32 0.0, %v7755
  %v7757 = vpop.f32.mrb[0].mxu0
  %7758 = vdwg.mxu0
  %v7759 = vadd.f32 %v7197, %v7505
  %v7760 = vadd.f32 %v7198, %v7508
  %v7761 = vadd.f32 %v7199, %v7513
  %v7762 = vadd.f32 %v7200, %v7516
  %v7763 = vadd.f32 %v7201, %v7521
  %v7764 = vadd.f32 %v7202, %v7524
  %v7765 = vadd.f32 %v7203, %v7529
  %v7766 = vadd.f32 %v7204, %v7532
  %v7767 = vadd.f32 %v7205, %v7537
  %v7768 = vadd.f32 %v7206, %v7540
  %v7769 = vadd.f32 %v7207, %v7545
  %v7770 = vadd.f32 %v7208, %v7548
  %v7771 = vadd.f32 %v7209, %v7553
  %v7772 = vadd.f32 %v7210, %v7556
  %v7773 = vadd.f32 %v7211, %v7561
  %v7774 = vadd.f32 %v7212, %v7564
  %v7775 = vadd.f32 %v7213, %v7569
  %v7776 = vadd.f32 %v7214, %v7572
  %v7777 = vadd.f32 %v7215, %v7577
  %v7778 = vadd.f32 %v7216, %v7580
  %v7779 = vadd.f32 %v7217, %v7585
  %v7780 = vadd.f32 %v7218, %v7588
  %v7781 = vadd.f32 %v7219, %v7593
  %v7782 = vadd.f32 %v7220, %v7596
  %v7783 = vadd.f32 %v7221, %v7601
  %v7784 = vadd.f32 %v7222, %v7604
  %v7785 = vadd.f32 %v7223, %v7609
  %v7786 = vadd.f32 %v7224, %v7612
  %v7787 = vadd.f32 %v7225, %v7617
  %v7788 = vadd.f32 %v7226, %v7620
  %v7789 = vadd.f32 %v7227, %v7625
  %v7790 = vadd.f32 %v7228, %v7628
  %v7791 = vadd.f32 %v7229, %v7633
  %v7792 = vadd.f32 %v7230, %v7636
  %v7793 = vadd.f32 %v7231, %v7641
  %v7794 = vadd.f32 %v7232, %v7644
  %v7795 = vadd.f32 %v7233, %v7649
  %v7796 = vadd.f32 %v7234, %v7652
  %v7797 = vadd.f32 %v7235, %v7657
  %v7798 = vadd.f32 %v7236, %v7660
  %v7799 = vadd.f32 %v7237, %v7665
  %v7800 = vadd.f32 %v7238, %v7668
  %v7801 = vadd.f32 %v7239, %v7673
  %v7802 = vadd.f32 %v7240, %v7676
  %v7803 = vadd.f32 %v7241, %v7681
  %v7804 = vadd.f32 %v7242, %v7684
  %v7805 = vadd.f32 %v7243, %v7689
  %v7806 = vadd.f32 %v7244, %v7692
  %v7807 = vadd.f32 %v7245, %v7697
  %v7808 = vadd.f32 %v7246, %v7700
  %v7809 = vadd.f32 %v7247, %v7705
  %v7810 = vadd.f32 %v7248, %v7708
  %v7811 = vadd.f32 %v7249, %v7713
  %v7812 = vadd.f32 %v7250, %v7716
  %v7813 = vadd.f32 %v7251, %v7721
  %v7814 = vadd.f32 %v7252, %v7724
  %v7815 = vadd.f32 %v7253, %v7729
  %v7816 = vadd.f32 %v7254, %v7732
  %v7817 = vadd.f32 %v7255, %v7737
  %v7818 = vadd.f32 %v7256, %v7740
  %v7819 = vadd.f32 %v7257, %v7745
  %v7820 = vadd.f32 %v7258, %v7748
  %v7821 = vadd.f32 %v7259, %v7753
  %v7822 = vadd.f32 %v7260, %v7756
  %v7823 = vld [vmem:[%s4] sm:$0x1]
  %v7825 = vlaneseq
  %v7826 = vshrl.u32 %v7825, 7
  %v7827 = vsub.s32 0, %v7826
  %v7828 = vrot.slane %v7823, %v7827
  %v7830 = vadd.f32 %v7759, %v7828
  %v7831 = vadd.f32 %v7760, %v7828
  %v7832 = vadd.f32 %v7761, %v7828
  %v7833 = vadd.f32 %v7762, %v7828
  %v7834 = vadd.f32 %v7763, %v7828
  %v7835 = vadd.f32 %v7764, %v7828
  %v7836 = vadd.f32 %v7765, %v7828
  %v7837 = vadd.f32 %v7766, %v7828
  %v7838 = vadd.f32 %v7767, %v7828
  %v7839 = vadd.f32 %v7768, %v7828
  %v7840 = vadd.f32 %v7769, %v7828
  %v7841 = vadd.f32 %v7770, %v7828
  %v7842 = vadd.f32 %v7771, %v7828
  %v7843 = vadd.f32 %v7772, %v7828
  %v7844 = vadd.f32 %v7773, %v7828
  %v7845 = vadd.f32 %v7774, %v7828
  %v7846 = vadd.f32 %v7775, %v7828
  %v7847 = vadd.f32 %v7776, %v7828
  %v7848 = vadd.f32 %v7777, %v7828
  %v7849 = vadd.f32 %v7778, %v7828
  %v7850 = vadd.f32 %v7779, %v7828
  %v7851 = vadd.f32 %v7780, %v7828
  %v7852 = vadd.f32 %v7781, %v7828
  %v7853 = vadd.f32 %v7782, %v7828
  %v7854 = vadd.f32 %v7783, %v7828
  %v7855 = vadd.f32 %v7784, %v7828
  %v7856 = vadd.f32 %v7785, %v7828
  %v7857 = vadd.f32 %v7786, %v7828
  %v7858 = vadd.f32 %v7787, %v7828
  %v7859 = vadd.f32 %v7788, %v7828
  %v7860 = vadd.f32 %v7789, %v7828
  %v7861 = vadd.f32 %v7790, %v7828
  %v7862 = vadd.f32 %v7791, %v7828
  %v7863 = vadd.f32 %v7792, %v7828
  %v7864 = vadd.f32 %v7793, %v7828
  %v7865 = vadd.f32 %v7794, %v7828
  %v7866 = vadd.f32 %v7795, %v7828
  %v7867 = vadd.f32 %v7796, %v7828
  %v7868 = vadd.f32 %v7797, %v7828
  %v7869 = vadd.f32 %v7798, %v7828
  %v7870 = vadd.f32 %v7799, %v7828
  %v7871 = vadd.f32 %v7800, %v7828
  %v7872 = vadd.f32 %v7801, %v7828
  %v7873 = vadd.f32 %v7802, %v7828
  %v7874 = vadd.f32 %v7803, %v7828
  %v7875 = vadd.f32 %v7804, %v7828
  %v7876 = vadd.f32 %v7805, %v7828
  %v7877 = vadd.f32 %v7806, %v7828
  %v7878 = vadd.f32 %v7807, %v7828
  %v7879 = vadd.f32 %v7808, %v7828
  %v7880 = vadd.f32 %v7809, %v7828
  %v7881 = vadd.f32 %v7810, %v7828
  %v7882 = vadd.f32 %v7811, %v7828
  %v7883 = vadd.f32 %v7812, %v7828
  %v7884 = vadd.f32 %v7813, %v7828
  %v7885 = vadd.f32 %v7814, %v7828
  %v7886 = vadd.f32 %v7815, %v7828
  %v7887 = vadd.f32 %v7816, %v7828
  %v7888 = vadd.f32 %v7817, %v7828
  %v7889 = vadd.f32 %v7818, %v7828
  %v7890 = vadd.f32 %v7819, %v7828
  %v7891 = vadd.f32 %v7820, %v7828
  %v7892 = vadd.f32 %v7821, %v7828
  %v7893 = vadd.f32 %v7822, %v7828
  %v7894 = vmax.f32 %v7830, 0.0
  %v7895 = vmax.f32 %v7831, 0.0
  %v7896 = vmax.f32 %v7832, 0.0
  %v7897 = vmax.f32 %v7833, 0.0
  %v7898 = vmax.f32 %v7834, 0.0
  %v7899 = vmax.f32 %v7835, 0.0
  %v7900 = vmax.f32 %v7836, 0.0
  %v7901 = vmax.f32 %v7837, 0.0
  %v7902 = vmax.f32 %v7838, 0.0
  %v7903 = vmax.f32 %v7839, 0.0
  %v7904 = vmax.f32 %v7840, 0.0
  %v7905 = vmax.f32 %v7841, 0.0
  %v7906 = vmax.f32 %v7842, 0.0
  %v7907 = vmax.f32 %v7843, 0.0
  %v7908 = vmax.f32 %v7844, 0.0
  %v7909 = vmax.f32 %v7845, 0.0
  %v7910 = vmax.f32 %v7846, 0.0
  %v7911 = vmax.f32 %v7847, 0.0
  %v7912 = vmax.f32 %v7848, 0.0
  %v7913 = vmax.f32 %v7849, 0.0
  %v7914 = vmax.f32 %v7850, 0.0
  %v7915 = vmax.f32 %v7851, 0.0
  %v7916 = vmax.f32 %v7852, 0.0
  %v7917 = vmax.f32 %v7853, 0.0
  %v7918 = vmax.f32 %v7854, 0.0
  %v7919 = vmax.f32 %v7855, 0.0
  %v7920 = vmax.f32 %v7856, 0.0
  %v7921 = vmax.f32 %v7857, 0.0
  %v7922 = vmax.f32 %v7858, 0.0
  %v7923 = vmax.f32 %v7859, 0.0
  %v7924 = vmax.f32 %v7860, 0.0
  %v7925 = vmax.f32 %v7861, 0.0
  %v7926 = vmax.f32 %v7862, 0.0
  %v7927 = vmax.f32 %v7863, 0.0
  %v7928 = vmax.f32 %v7864, 0.0
  %v7929 = vmax.f32 %v7865, 0.0
  %v7930 = vmax.f32 %v7866, 0.0
  %v7931 = vmax.f32 %v7867, 0.0
  %v7932 = vmax.f32 %v7868, 0.0
  %v7933 = vmax.f32 %v7869, 0.0
  %v7934 = vmax.f32 %v7870, 0.0
  %v7935 = vmax.f32 %v7871, 0.0
  %v7936 = vmax.f32 %v7872, 0.0
  %v7937 = vmax.f32 %v7873, 0.0
  %v7938 = vmax.f32 %v7874, 0.0
  %v7939 = vmax.f32 %v7875, 0.0
  %v7940 = vmax.f32 %v7876, 0.0
  %v7941 = vmax.f32 %v7877, 0.0
  %v7942 = vmax.f32 %v7878, 0.0
  %v7943 = vmax.f32 %v7879, 0.0
  %v7944 = vmax.f32 %v7880, 0.0
  %v7945 = vmax.f32 %v7881, 0.0
  %v7946 = vmax.f32 %v7882, 0.0
  %v7947 = vmax.f32 %v7883, 0.0
  %v7948 = vmax.f32 %v7884, 0.0
  %v7949 = vmax.f32 %v7885, 0.0
  %v7950 = vmax.f32 %v7886, 0.0
  %v7951 = vmax.f32 %v7887, 0.0
  %v7952 = vmax.f32 %v7888, 0.0
  %v7953 = vmax.f32 %v7889, 0.0
  %v7954 = vmax.f32 %v7890, 0.0
  %v7955 = vmax.f32 %v7891, 0.0
  %v7956 = vmax.f32 %v7892, 0.0
  %v7957 = vmax.f32 %v7893, 0.0
  %v7958 = vmax.f32 %v7894, %v7902
  %v7959 = vmax.f32 %v7895, %v7903
  %v7960 = vmax.f32 %v7896, %v7904
  %v7961 = vmax.f32 %v7897, %v7905
  %v7962 = vmax.f32 %v7898, %v7906
  %v7963 = vmax.f32 %v7899, %v7907
  %v7964 = vmax.f32 %v7900, %v7908
  %v7965 = vmax.f32 %v7901, %v7909
  %v7966 = vmax.f32 %v7910, %v7918
  %v7967 = vmax.f32 %v7911, %v7919
  %v7968 = vmax.f32 %v7912, %v7920
  %v7969 = vmax.f32 %v7913, %v7921
  %v7970 = vmax.f32 %v7914, %v7922
  %v7971 = vmax.f32 %v7915, %v7923
  %v7972 = vmax.f32 %v7916, %v7924
  %v7973 = vmax.f32 %v7917, %v7925
  %v7974 = vmax.f32 %v7926, %v7934
  %v7975 = vmax.f32 %v7927, %v7935
  %v7976 = vmax.f32 %v7928, %v7936
  %v7977 = vmax.f32 %v7929, %v7937
  %v7978 = vmax.f32 %v7930, %v7938
  %v7979 = vmax.f32 %v7931, %v7939
  %v7980 = vmax.f32 %v7932, %v7940
  %v7981 = vmax.f32 %v7933, %v7941
  %v7982 = vmax.f32 %v7942, %v7950
  %v7983 = vmax.f32 %v7943, %v7951
  %v7984 = vmax.f32 %v7944, %v7952
  %v7985 = vmax.f32 %v7945, %v7953
  %v7986 = vmax.f32 %v7946, %v7954
  %v7987 = vmax.f32 %v7947, %v7955
  %v7988 = vmax.f32 %v7948, %v7956
  %v7989 = vmax.f32 %v7949, %v7957
  %v7990 = vmax.f32 %v7958, %v7959
  %v7991 = vmax.f32 %v7960, %v7961
  %v7992 = vmax.f32 %v7962, %v7963
  %v7993 = vmax.f32 %v7964, %v7965
  %v7994 = vmax.f32 %v7966, %v7967
  %v7995 = vmax.f32 %v7968, %v7969
  %v7996 = vmax.f32 %v7970, %v7971
  %v7997 = vmax.f32 %v7972, %v7973
  %v7998 = vmax.f32 %v7974, %v7975
  %v7999 = vmax.f32 %v7976, %v7977
  %v8000 = vmax.f32 %v7978, %v7979
  %v8001 = vmax.f32 %v7980, %v7981
  %v8002 = vmax.f32 %v7982, %v7983
  %v8003 = vmax.f32 %v7984, %v7985
  %v8004 = vmax.f32 %v7986, %v7987
  %v8005 = vmax.f32 %v7988, %v7989
  %vm8006 = vcmask 523264
  %8007 = vst.msk [vmem:[#allocation3] sm:$0xff] %vm8006, 0.0
  %8008 = vst.msk [vmem:[#allocation3 + $0x8] sm:$0xff] %vm8006, 0.0
  %8009 = vst.msk [vmem:[#allocation3 + $0x10] sm:$0xff] %vm8006, 0.0
  %8010 = vst.msk [vmem:[#allocation3 + $0x18] sm:$0xff] %vm8006, 0.0
  %8011 = vst.msk [vmem:[#allocation3 + $0x20] sm:$0xff] %vm8006, 0.0
  %8012 = vst.msk [vmem:[#allocation3 + $0x28] sm:$0xff] %vm8006, 0.0
  %s8013 = scalar_lea.vmem [#allocation3], 240
  %8014 = vst.msk [vmem:[%s8013] sm:$0xff] %vm8006, 0.0
  %8015 = vst.msk [vmem:[%s8013 + $0x8] sm:$0xff] %vm8006, 0.0
  %8016 = vst.msk [vmem:[%s8013 + $0x10] sm:$0xff] %vm8006, 0.0
  %8017 = vst.msk [vmem:[%s8013 + $0x18] sm:$0xff] %vm8006, 0.0
  %8018 = vst.msk [vmem:[%s8013 + $0x20] sm:$0xff] %vm8006, 0.0
  %8019 = vst.msk [vmem:[%s8013 + $0x28] sm:$0xff] %vm8006, 0.0
  %s8020 = scalar_lea.vmem [#allocation3], 48
  %8021 = vst.msk [vmem:[%s8020] sm:$0xff] %vm8006, 0.0
  %8022 = vst.msk [vmem:[%s8020 + $0x30] sm:$0xff] %vm8006, 0.0
  %8023 = vst.msk [vmem:[%s8020 + $0x60] sm:$0xff] %vm8006, 0.0
  %8024 = vst.msk [vmem:[%s8020 + $0x90] sm:$0xff] %vm8006, 0.0
  %8025 = vst.msk [vmem:[%s8020 + $0x28] sm:$0xff] %vm8006, 0.0
  %8026 = vst.msk [vmem:[%s8020 + $0x58] sm:$0xff] %vm8006, 0.0
  %8027 = vst.msk [vmem:[%s8020 + $0x88] sm:$0xff] %vm8006, 0.0
  %8028 = vst.msk [vmem:[%s8020 + $0xb8] sm:$0xff] %vm8006, 0.0
  %8029 = vst.msk [vmem:[%s8020 + $0x8] sm:$0xff] %vm8006, %v7990
  %8030 = vst.msk [vmem:[%s8020 + $0x10] sm:$0xff] %vm8006, %v7991
  %8031 = vst.msk [vmem:[%s8020 + $0x18] sm:$0xff] %vm8006, %v7992
  %8032 = vst.msk [vmem:[%s8020 + $0x20] sm:$0xff] %vm8006, %v7993
  %8033 = vst.msk [vmem:[%s8020 + $0x38] sm:$0xff] %vm8006, %v7994
  %8034 = vst.msk [vmem:[%s8020 + $0x40] sm:$0xff] %vm8006, %v7995
  %8035 = vst.msk [vmem:[%s8020 + $0x48] sm:$0xff] %vm8006, %v7996
  %8036 = vst.msk [vmem:[%s8020 + $0x50] sm:$0xff] %vm8006, %v7997
  %8037 = vst.msk [vmem:[%s8020 + $0x68] sm:$0xff] %vm8006, %v7998
  %8038 = vst.msk [vmem:[%s8020 + $0x70] sm:$0xff] %vm8006, %v7999
  %8039 = vst.msk [vmem:[%s8020 + $0x78] sm:$0xff] %vm8006, %v8000
  %8040 = vst.msk [vmem:[%s8020 + $0x80] sm:$0xff] %vm8006, %v8001
  %8041 = vst.msk [vmem:[%s8020 + $0x98] sm:$0xff] %vm8006, %v8002
  %8042 = vst.msk [vmem:[%s8020 + $0xa0] sm:$0xff] %vm8006, %v8003
  %8043 = vst.msk [vmem:[%s8020 + $0xa8] sm:$0xff] %vm8006, %v8004
  %8044 = vst.msk [vmem:[%s8020 + $0xb0] sm:$0xff] %vm8006, %v8005
  %v8045 = vld [vmem:[#allocation3] sm:$0xff]
  %v8046 = vld [vmem:[#allocation3 + $0x8] sm:$0xff]
  %v8047 = vld [vmem:[#allocation3 + $0x10] sm:$0xff]
  %v8048 = vld [vmem:[#allocation3 + $0x18] sm:$0xff]
  %v8049 = vld [vmem:[#allocation3 + $0x30] sm:$0xff]
  %v8050 = vld [vmem:[#allocation3 + $0x38] sm:$0xff]
  %v8051 = vld [vmem:[#allocation3 + $0x40] sm:$0xff]
  %v8052 = vld [vmem:[#allocation3 + $0x48] sm:$0xff]
  %v8053 = vld [vmem:[#allocation3 + $0x60] sm:$0xff]
  %v8054 = vld [vmem:[#allocation3 + $0x68] sm:$0xff]
  %v8055 = vld [vmem:[#allocation3 + $0x70] sm:$0xff]
  %v8056 = vld [vmem:[#allocation3 + $0x78] sm:$0xff]
  %v8057 = vld [vmem:[#allocation3 + $0x90] sm:$0xff]
  %v8058 = vld [vmem:[#allocation3 + $0x98] sm:$0xff]
  %v8059 = vld [vmem:[#allocation3 + $0xa0] sm:$0xff]
  %v8060 = vld [vmem:[#allocation3 + $0xa8] sm:$0xff]
  %v8061 = vpack.c.bf16 %v8046, %v8045
  %v8062 = vpack.c.bf16 %v8048, %v8047
  %v8063 = vpack.c.bf16 %v8050, %v8049
  %v8064 = vpack.c.bf16 %v8052, %v8051
  %v8065 = vpack.c.bf16 %v8054, %v8053
  %v8066 = vpack.c.bf16 %v8056, %v8055
  %v8067 = vpack.c.bf16 %v8058, %v8057
  %v8068 = vpack.c.bf16 %v8060, %v8059
  %v8069 = vld [vmem:[%s5] sm:$0xf]
  %v8070 = vld [vmem:[%s5 + $0x4] sm:$0xf]
  %v8071 = vld [vmem:[%s5 + $0x8] sm:$0xf]
  %v8072 = vld [vmem:[%s5 + $0xc] sm:$0xf]
  %v8073 = vld [vmem:[%s5 + $0x10] sm:$0xf]
  %v8074 = vld [vmem:[%s5 + $0x14] sm:$0xf]
  %v8075 = vld [vmem:[%s5 + $0x18] sm:$0xf]
  %v8076 = vld [vmem:[%s5 + $0x1c] sm:$0xf]
  %v8077 = vld [vmem:[#allocation3 + $0x20] sm:$0xff]
  %v8078 = vld [vmem:[#allocation3 + $0x50] sm:$0xff]
  %v8079 = vld [vmem:[#allocation3 + $0x80] sm:$0xff]
  %v8080 = vld [vmem:[#allocation3 + $0xb0] sm:$0xff]
  %v8081 = vpack.c.bf16 %v8047, %v8046
  %v8082 = vpack.c.bf16 %v8077, %v8048
  %v8083 = vpack.c.bf16 %v8051, %v8050
  %v8084 = vpack.c.bf16 %v8078, %v8052
  %v8085 = vpack.c.bf16 %v8055, %v8054
  %v8086 = vpack.c.bf16 %v8079, %v8056
  %v8087 = vpack.c.bf16 %v8059, %v8058
  %v8088 = vpack.c.bf16 %v8080, %v8060
  %s8089 = scalar_lea.vmem %s5, 32
  %v8090 = vld [vmem:[%s8089] sm:$0xf]
  %v8091 = vld [vmem:[%s8089 + $0x4] sm:$0xf]
  %v8092 = vld [vmem:[%s8089 + $0x8] sm:$0xf]
  %v8093 = vld [vmem:[%s8089 + $0xc] sm:$0xf]
  %v8094 = vld [vmem:[%s8089 + $0x10] sm:$0xf]
  %v8095 = vld [vmem:[%s8089 + $0x14] sm:$0xf]
  %v8096 = vld [vmem:[%s8089 + $0x18] sm:$0xf]
  %v8097 = vld [vmem:[%s8089 + $0x1c] sm:$0xf]
  %v8106 = vunpack.c.l.b16 %v8090
  %v8107 = vunpack.c.l.b16 %v8091
  %v8108 = vunpack.c.l.b16 %v8092
  %v8109 = vunpack.c.l.b16 %v8093
  %v8110 = vunpack.c.l.b16 %v8094
  %v8111 = vunpack.c.l.b16 %v8095
  %v8112 = vunpack.c.l.b16 %v8096
  %v8113 = vunpack.c.l.b16 %v8097
  %v8114 = vpack.c.b16 %v8107, %v8106
  %v8115 = vpack.c.b16 %v8109, %v8108
  %v8116 = vpack.c.b16 %v8111, %v8110
  %v8117 = vpack.c.b16 %v8113, %v8112
  %v8123 = vsel %vm8006, %v8081, 0
  %v8126 = vsel %vm8006, %v8082, 0
  %v8129 = vsel %vm8006, %v8083, 0
  %v8132 = vsel %vm8006, %v8084, 0
  %v8135 = vsel %vm8006, %v8085, 0
  %v8138 = vsel %vm8006, %v8086, 0
  %v8141 = vsel %vm8006, %v8087, 0
  %v8144 = vsel %vm8006, %v8088, 0
  %8146 = vmatprep.subr.bf16.mxu0 0
  %8147 = vmatpush1.bf16.msra.mxu0 %v8114
  %8148 = vmatprep.subr.bf16.mxu0 0
  %8149 = vmatpush1.bf16.msra.mxu0 %v8115
  %8150 = vmatprep.subr.bf16.mxu0 0
  %8151 = vmatpush1.bf16.msra.mxu0 %v8116
  %8152 = vmatprep.subr.bf16.mxu0 0
  %8153 = vmatpush1.bf16.msra.mxu0 %v8117
  %8154 = vmatprep.subr.bf16.mxu0 0
  %8155 = vmatpush1.bf16.msra.mxu0 0
  %8156 = vmatprep.subr.bf16.mxu0 0
  %8157 = vmatpush1.bf16.msra.mxu0 0
  %8158 = vmatprep.subr.bf16.mxu0 0
  %8159 = vmatpush1.bf16.msra.mxu0 0
  %8160 = vmatprep.subr.bf16.mxu0 0
  %8161 = vmatpush1.bf16.msra.mxu0 0
  %8162 = vmatprep.subr.bf16.mxu0 0
  %8163 = vmatpush1.bf16.msra.mxu0 0
  %8164 = vmatprep.subr.bf16.mxu0 0
  %8165 = vmatpush1.bf16.msra.mxu0 0
  %8166 = vmatprep.subr.bf16.mxu0 0
  %8167 = vmatpush1.bf16.msra.mxu0 0
  %8168 = vmatprep.subr.bf16.mxu0 0
  %8169 = vmatpush1.bf16.msra.mxu0 0
  %8170 = vmatprep.subr.bf16.mxu0 0
  %8171 = vmatpush1.bf16.msra.mxu0 0
  %8172 = vmatprep.subr.bf16.mxu0 0
  %8173 = vmatpush1.bf16.msra.mxu0 0
  %8174 = vmatprep.subr.bf16.mxu0 0
  %8175 = vmatpush1.bf16.msra.mxu0 0
  %8176 = vmatprep.subr.bf16.mxu0 0
  %8177 = vmatpush1.bf16.msra.mxu0 0
  %8178 = vmatprep.mubr.bf16.mxu0 0
  %8179 = vmatmul.mubr.bf16.gmra.mrb[0].mxu0 %v8123
  %v8180 = vpop.f32.mrb[0].mxu0
  %v8181 = vadd.f32 0.0, %v8180
  %v8182 = vpop.f32.mrb[0].mxu0
  %v8183 = vpop.f32.mrb[0].mxu0
  %v8184 = vadd.f32 0.0, %v8183
  %v8185 = vpop.f32.mrb[0].mxu0
  %8186 = vmatprep.mubr.bf16.mxu0 0
  %8187 = vmatmul.mubr.bf16.gmra.mrb[0].mxu0 %v8126
  %v8188 = vpop.f32.mrb[0].mxu0
  %v8189 = vadd.f32 0.0, %v8188
  %v8190 = vpop.f32.mrb[0].mxu0
  %v8191 = vpop.f32.mrb[0].mxu0
  %v8192 = vadd.f32 0.0, %v8191
  %v8193 = vpop.f32.mrb[0].mxu0
  %8194 = vmatprep.mubr.bf16.mxu0 0
  %8195 = vmatmul.mubr.bf16.gmra.mrb[0].mxu0 %v8129
  %v8196 = vpop.f32.mrb[0].mxu0
  %v8197 = vadd.f32 0.0, %v8196
  %v8198 = vpop.f32.mrb[0].mxu0
  %v8199 = vpop.f32.mrb[0].mxu0
  %v8200 = vadd.f32 0.0, %v8199
  %v8201 = vpop.f32.mrb[0].mxu0
  %8202 = vmatprep.mubr.bf16.mxu0 0
  %8203 = vmatmul.mubr.bf16.gmra.mrb[0].mxu0 %v8132
  %v8204 = vpop.f32.mrb[0].mxu0
  %v8205 = vadd.f32 0.0, %v8204
  %v8206 = vpop.f32.mrb[0].mxu0
  %v8207 = vpop.f32.mrb[0].mxu0
  %v8208 = vadd.f32 0.0, %v8207
  %v8209 = vpop.f32.mrb[0].mxu0
  %8210 = vmatprep.mubr.bf16.mxu0 0
  %8211 = vmatmul.mubr.bf16.gmra.mrb[0].mxu0 %v8135
  %v8212 = vpop.f32.mrb[0].mxu0
  %v8213 = vadd.f32 0.0, %v8212
  %v8214 = vpop.f32.mrb[0].mxu0
  %v8215 = vpop.f32.mrb[0].mxu0
  %v8216 = vadd.f32 0.0, %v8215
  %v8217 = vpop.f32.mrb[0].mxu0
  %8218 = vmatprep.mubr.bf16.mxu0 0
  %8219 = vmatmul.mubr.bf16.gmra.mrb[0].mxu0 %v8138
  %v8220 = vpop.f32.mrb[0].mxu0
  %v8221 = vadd.f32 0.0, %v8220
  %v8222 = vpop.f32.mrb[0].mxu0
  %v8223 = vpop.f32.mrb[0].mxu0
  %v8224 = vadd.f32 0.0, %v8223
  %v8225 = vpop.f32.mrb[0].mxu0
  %8226 = vmatprep.mubr.bf16.mxu0 0
  %8227 = vmatmul.mubr.bf16.gmra.mrb[0].mxu0 %v8141
  %v8228 = vpop.f32.mrb[0].mxu0
  %v8229 = vadd.f32 0.0, %v8228
  %v8230 = vpop.f32.mrb[0].mxu0
  %v8231 = vpop.f32.mrb[0].mxu0
  %v8232 = vadd.f32 0.0, %v8231
  %v8233 = vpop.f32.mrb[0].mxu0
  %8234 = vmatprep.mubr.bf16.mxu0 0
  %8235 = vmatmul.mubr.bf16.gmra.mrb[0].mxu0 %v8144
  %v8236 = vpop.f32.mrb[0].mxu0
  %v8237 = vadd.f32 0.0, %v8236
  %v8238 = vpop.f32.mrb[0].mxu0
  %v8239 = vpop.f32.mrb[0].mxu0
  %v8240 = vadd.f32 0.0, %v8239
  %v8241 = vpop.f32.mrb[0].mxu0
  %8242 = vdwg.mxu0
  %v8251 = vunpack.c.l.b16 %v8069
  %v8252 = vunpack.c.l.b16 %v8070
  %v8253 = vunpack.c.l.b16 %v8071
  %v8254 = vunpack.c.l.b16 %v8072
  %v8255 = vunpack.c.l.b16 %v8073
  %v8256 = vunpack.c.l.b16 %v8074
  %v8257 = vunpack.c.l.b16 %v8075
  %v8258 = vunpack.c.l.b16 %v8076
  %v8259 = vpack.c.b16 %v8252, %v8251
  %v8260 = vpack.c.b16 %v8254, %v8253
  %v8261 = vpack.c.b16 %v8256, %v8255
  %v8262 = vpack.c.b16 %v8258, %v8257
  %v8268 = vsel %vm8006, %v8061, 0
  %v8271 = vsel %vm8006, %v8062, 0
  %v8274 = vsel %vm8006, %v8063, 0
  %v8277 = vsel %vm8006, %v8064, 0
  %v8280 = vsel %vm8006, %v8065, 0
  %v8283 = vsel %vm8006, %v8066, 0
  %v8286 = vsel %vm8006, %v8067, 0
  %v8289 = vsel %vm8006, %v8068, 0
  %8291 = vmatprep.subr.bf16.mxu0 0
  %8292 = vmatpush1.bf16.msra.mxu0 %v8259
  %8293 = vmatprep.subr.bf16.mxu0 0
  %8294 = vmatpush1.bf16.msra.mxu0 %v8260
  %8295 = vmatprep.subr.bf16.mxu0 0
  %8296 = vmatpush1.bf16.msra.mxu0 %v8261
  %8297 = vmatprep.subr.bf16.mxu0 0
  %8298 = vmatpush1.bf16.msra.mxu0 %v8262
  %8299 = vmatprep.subr.bf16.mxu0 0
  %8300 = vmatpush1.bf16.msra.mxu0 0
  %8301 = vmatprep.subr.bf16.mxu0 0
  %8302 = vmatpush1.bf16.msra.mxu0 0
  %8303 = vmatprep.subr.bf16.mxu0 0
  %8304 = vmatpush1.bf16.msra.mxu0 0
  %8305 = vmatprep.subr.bf16.mxu0 0
  %8306 = vmatpush1.bf16.msra.mxu0 0
  %8307 = vmatprep.subr.bf16.mxu0 0
  %8308 = vmatpush1.bf16.msra.mxu0 0
  %8309 = vmatprep.subr.bf16.mxu0 0
  %8310 = vmatpush1.bf16.msra.mxu0 0
  %8311 = vmatprep.subr.bf16.mxu0 0
  %8312 = vmatpush1.bf16.msra.mxu0 0
  %8313 = vmatprep.subr.bf16.mxu0 0
  %8314 = vmatpush1.bf16.msra.mxu0 0
  %8315 = vmatprep.subr.bf16.mxu0 0
  %8316 = vmatpush1.bf16.msra.mxu0 0
  %8317 = vmatprep.subr.bf16.mxu0 0
  %8318 = vmatpush1.bf16.msra.mxu0 0
  %8319 = vmatprep.subr.bf16.mxu0 0
  %8320 = vmatpush1.bf16.msra.mxu0 0
  %8321 = vmatprep.subr.bf16.mxu0 0
  %8322 = vmatpush1.bf16.msra.mxu0 0
  %8323 = vmatprep.mubr.bf16.mxu0 0
  %8324 = vmatmul.mubr.bf16.gmra.mrb[0].mxu0 %v8268
  %v8325 = vpop.f32.mrb[0].mxu0
  %v8326 = vadd.f32 %v8181, %v8325
  %v8327 = vpop.f32.mrb[0].mxu0
  %v8328 = vpop.f32.mrb[0].mxu0
  %v8329 = vadd.f32 %v8184, %v8328
  %v8330 = vpop.f32.mrb[0].mxu0
  %8331 = vmatprep.mubr.bf16.mxu0 0
  %8332 = vmatmul.mubr.bf16.gmra.mrb[0].mxu0 %v8271
  %v8333 = vpop.f32.mrb[0].mxu0
  %v8334 = vadd.f32 %v8189, %v8333
  %v8335 = vpop.f32.mrb[0].mxu0
  %v8336 = vpop.f32.mrb[0].mxu0
  %v8337 = vadd.f32 %v8192, %v8336
  %v8338 = vpop.f32.mrb[0].mxu0
  %8339 = vmatprep.mubr.bf16.mxu0 0
  %8340 = vmatmul.mubr.bf16.gmra.mrb[0].mxu0 %v8274
  %v8341 = vpop.f32.mrb[0].mxu0
  %v8342 = vadd.f32 %v8197, %v8341
  %v8343 = vpop.f32.mrb[0].mxu0
  %v8344 = vpop.f32.mrb[0].mxu0
  %v8345 = vadd.f32 %v8200, %v8344
  %v8346 = vpop.f32.mrb[0].mxu0
  %8347 = vmatprep.mubr.bf16.mxu0 0
  %8348 = vmatmul.mubr.bf16.gmra.mrb[0].mxu0 %v8277
  %v8349 = vpop.f32.mrb[0].mxu0
  %v8350 = vadd.f32 %v8205, %v8349
  %v8351 = vpop.f32.mrb[0].mxu0
  %v8352 = vpop.f32.mrb[0].mxu0
  %v8353 = vadd.f32 %v8208, %v8352
  %v8354 = vpop.f32.mrb[0].mxu0
  %8355 = vmatprep.mubr.bf16.mxu0 0
  %8356 = vmatmul.mubr.bf16.gmra.mrb[0].mxu0 %v8280
  %v8357 = vpop.f32.mrb[0].mxu0
  %v8358 = vadd.f32 %v8213, %v8357
  %v8359 = vpop.f32.mrb[0].mxu0
  %v8360 = vpop.f32.mrb[0].mxu0
  %v8361 = vadd.f32 %v8216, %v8360
  %v8362 = vpop.f32.mrb[0].mxu0
  %8363 = vmatprep.mubr.bf16.mxu0 0
  %8364 = vmatmul.mubr.bf16.gmra.mrb[0].mxu0 %v8283
  %v8365 = vpop.f32.mrb[0].mxu0
  %v8366 = vadd.f32 %v8221, %v8365
  %v8367 = vpop.f32.mrb[0].mxu0
  %v8368 = vpop.f32.mrb[0].mxu0
  %v8369 = vadd.f32 %v8224, %v8368
  %v8370 = vpop.f32.mrb[0].mxu0
  %8371 = vmatprep.mubr.bf16.mxu0 0
  %8372 = vmatmul.mubr.bf16.gmra.mrb[0].mxu0 %v8286
  %v8373 = vpop.f32.mrb[0].mxu0
  %v8374 = vadd.f32 %v8229, %v8373
  %v8375 = vpop.f32.mrb[0].mxu0
  %v8376 = vpop.f32.mrb[0].mxu0
  %v8377 = vadd.f32 %v8232, %v8376
  %v8378 = vpop.f32.mrb[0].mxu0
  %8379 = vmatprep.mubr.bf16.mxu0 0
  %8380 = vmatmul.mubr.bf16.gmra.mrb[0].mxu0 %v8289
  %v8381 = vpop.f32.mrb[0].mxu0
  %v8382 = vadd.f32 %v8237, %v8381
  %v8383 = vpop.f32.mrb[0].mxu0
  %v8384 = vpop.f32.mrb[0].mxu0
  %v8385 = vadd.f32 %v8240, %v8384
  %v8386 = vpop.f32.mrb[0].mxu0
  %8387 = vdwg.mxu0
  %v8388 = vld [vmem:[#allocation3 + $0x10] sm:$0xff]
  %v8389 = vld [vmem:[#allocation3 + $0x18] sm:$0xff]
  %v8390 = vld [vmem:[#allocation3 + $0x20] sm:$0xff]
  %v8391 = vld [vmem:[#allocation3 + $0x28] sm:$0xff]
  %v8392 = vld [vmem:[#allocation3 + $0x40] sm:$0xff]
  %v8393 = vld [vmem:[#allocation3 + $0x48] sm:$0xff]
  %v8394 = vld [vmem:[#allocation3 + $0x50] sm:$0xff]
  %v8395 = vld [vmem:[#allocation3 + $0x58] sm:$0xff]
  %v8396 = vld [vmem:[#allocation3 + $0x70] sm:$0xff]
  %v8397 = vld [vmem:[#allocation3 + $0x78] sm:$0xff]
  %v8398 = vld [vmem:[#allocation3 + $0x80] sm:$0xff]
  %v8399 = vld [vmem:[#allocation3 + $0x88] sm:$0xff]
  %v8400 = vld [vmem:[#allocation3 + $0xa0] sm:$0xff]
  %v8401 = vld [vmem:[#allocation3 + $0xa8] sm:$0xff]
  %v8402 = vld [vmem:[#allocation3 + $0xb0] sm:$0xff]
  %v8403 = vld [vmem:[#allocation3 + $0xb8] sm:$0xff]
  %v8404 = vpack.c.bf16 %v8389, %v8388
  %v8405 = vpack.c.bf16 %v8391, %v8390
  %v8406 = vpack.c.bf16 %v8393, %v8392
  %v8407 = vpack.c.bf16 %v8395, %v8394
  %v8408 = vpack.c.bf16 %v8397, %v8396
  %v8409 = vpack.c.bf16 %v8399, %v8398
  %v8410 = vpack.c.bf16 %v8401, %v8400
  %v8411 = vpack.c.bf16 %v8403, %v8402
  %s8412 = scalar_lea.vmem %s5, 64
  %v8413 = vld [vmem:[%s8412] sm:$0xf]
  %v8414 = vld [vmem:[%s8412 + $0x4] sm:$0xf]
  %v8415 = vld [vmem:[%s8412 + $0x8] sm:$0xf]
  %v8416 = vld [vmem:[%s8412 + $0xc] sm:$0xf]
  %v8417 = vld [vmem:[%s8412 + $0x10] sm:$0xf]
  %v8418 = vld [vmem:[%s8412 + $0x14] sm:$0xf]
  %v8419 = vld [vmem:[%s8412 + $0x18] sm:$0xf]
  %v8420 = vld [vmem:[%s8412 + $0x1c] sm:$0xf]
  %v8429 = vunpack.c.l.b16 %v8413
  %v8430 = vunpack.c.l.b16 %v8414
  %v8431 = vunpack.c.l.b16 %v8415
  %v8432 = vunpack.c.l.b16 %v8416
  %v8433 = vunpack.c.l.b16 %v8417
  %v8434 = vunpack.c.l.b16 %v8418
  %v8435 = vunpack.c.l.b16 %v8419
  %v8436 = vunpack.c.l.b16 %v8420
  %v8437 = vpack.c.b16 %v8430, %v8429
  %v8438 = vpack.c.b16 %v8432, %v8431
  %v8439 = vpack.c.b16 %v8434, %v8433
  %v8440 = vpack.c.b16 %v8436, %v8435
  %v8446 = vsel %vm8006, %v8404, 0
  %v8449 = vsel %vm8006, %v8405, 0
  %v8452 = vsel %vm8006, %v8406, 0
  %v8455 = vsel %vm8006, %v8407, 0
  %v8458 = vsel %vm8006, %v8408, 0
  %v8461 = vsel %vm8006, %v8409, 0
  %v8464 = vsel %vm8006, %v8410, 0
  %v8467 = vsel %vm8006, %v8411, 0
  %8469 = vmatprep.subr.bf16.mxu0 0
  %8470 = vmatpush1.bf16.msra.mxu0 %v8437
  %8471 = vmatprep.subr.bf16.mxu0 0
  %8472 = vmatpush1.bf16.msra.mxu0 %v8438
  %8473 = vmatprep.subr.bf16.mxu0 0
  %8474 = vmatpush1.bf16.msra.mxu0 %v8439
  %8475 = vmatprep.subr.bf16.mxu0 0
  %8476 = vmatpush1.bf16.msra.mxu0 %v8440
  %8477 = vmatprep.subr.bf16.mxu0 0
  %8478 = vmatpush1.bf16.msra.mxu0 0
  %8479 = vmatprep.subr.bf16.mxu0 0
  %8480 = vmatpush1.bf16.msra.mxu0 0
  %8481 = vmatprep.subr.bf16.mxu0 0
  %8482 = vmatpush1.bf16.msra.mxu0 0
  %8483 = vmatprep.subr.bf16.mxu0 0
  %8484 = vmatpush1.bf16.msra.mxu0 0
  %8485 = vmatprep.subr.bf16.mxu0 0
  %8486 = vmatpush1.bf16.msra.mxu0 0
  %8487 = vmatprep.subr.bf16.mxu0 0
  %8488 = vmatpush1.bf16.msra.mxu0 0
  %8489 = vmatprep.subr.bf16.mxu0 0
  %8490 = vmatpush1.bf16.msra.mxu0 0
  %8491 = vmatprep.subr.bf16.mxu0 0
  %8492 = vmatpush1.bf16.msra.mxu0 0
  %8493 = vmatprep.subr.bf16.mxu0 0
  %8494 = vmatpush1.bf16.msra.mxu0 0
  %8495 = vmatprep.subr.bf16.mxu0 0
  %8496 = vmatpush1.bf16.msra.mxu0 0
  %8497 = vmatprep.subr.bf16.mxu0 0
  %8498 = vmatpush1.bf16.msra.mxu0 0
  %8499 = vmatprep.subr.bf16.mxu0 0
  %8500 = vmatpush1.bf16.msra.mxu0 0
  %8501 = vmatprep.mubr.bf16.mxu0 0
  %8502 = vmatmul.mubr.bf16.gmra.mrb[0].mxu0 %v8446
  %v8503 = vpop.f32.mrb[0].mxu0
  %v8504 = vadd.f32 0.0, %v8503
  %v8505 = vpop.f32.mrb[0].mxu0
  %v8506 = vpop.f32.mrb[0].mxu0
  %v8507 = vadd.f32 0.0, %v8506
  %v8508 = vpop.f32.mrb[0].mxu0
  %8509 = vmatprep.mubr.bf16.mxu0 0
  %8510 = vmatmul.mubr.bf16.gmra.mrb[0].mxu0 %v8449
  %v8511 = vpop.f32.mrb[0].mxu0
  %v8512 = vadd.f32 0.0, %v8511
  %v8513 = vpop.f32.mrb[0].mxu0
  %v8514 = vpop.f32.mrb[0].mxu0
  %v8515 = vadd.f32 0.0, %v8514
  %v8516 = vpop.f32.mrb[0].mxu0
  %8517 = vmatprep.mubr.bf16.mxu0 0
  %8518 = vmatmul.mubr.bf16.gmra.mrb[0].mxu0 %v8452
  %v8519 = vpop.f32.mrb[0].mxu0
  %v8520 = vadd.f32 0.0, %v8519
  %v8521 = vpop.f32.mrb[0].mxu0
  %v8522 = vpop.f32.mrb[0].mxu0
  %v8523 = vadd.f32 0.0, %v8522
  %v8524 = vpop.f32.mrb[0].mxu0
  %8525 = vmatprep.mubr.bf16.mxu0 0
  %8526 = vmatmul.mubr.bf16.gmra.mrb[0].mxu0 %v8455
  %v8527 = vpop.f32.mrb[0].mxu0
  %v8528 = vadd.f32 0.0, %v8527
  %v8529 = vpop.f32.mrb[0].mxu0
  %v8530 = vpop.f32.mrb[0].mxu0
  %v8531 = vadd.f32 0.0, %v8530
  %v8532 = vpop.f32.mrb[0].mxu0
  %8533 = vmatprep.mubr.bf16.mxu0 0
  %8534 = vmatmul.mubr.bf16.gmra.mrb[0].mxu0 %v8458
  %v8535 = vpop.f32.mrb[0].mxu0
  %v8536 = vadd.f32 0.0, %v8535
  %v8537 = vpop.f32.mrb[0].mxu0
  %v8538 = vpop.f32.mrb[0].mxu0
  %v8539 = vadd.f32 0.0, %v8538
  %v8540 = vpop.f32.mrb[0].mxu0
  %8541 = vmatprep.mubr.bf16.mxu0 0
  %8542 = vmatmul.mubr.bf16.gmra.mrb[0].mxu0 %v8461
  %v8543 = vpop.f32.mrb[0].mxu0
  %v8544 = vadd.f32 0.0, %v8543
  %v8545 = vpop.f32.mrb[0].mxu0
  %v8546 = vpop.f32.mrb[0].mxu0
  %v8547 = vadd.f32 0.0, %v8546
  %v8548 = vpop.f32.mrb[0].mxu0
  %8549 = vmatprep.mubr.bf16.mxu0 0
  %8550 = vmatmul.mubr.bf16.gmra.mrb[0].mxu0 %v8464
  %v8551 = vpop.f32.mrb[0].mxu0
  %v8552 = vadd.f32 0.0, %v8551
  %v8553 = vpop.f32.mrb[0].mxu0
  %v8554 = vpop.f32.mrb[0].mxu0
  %v8555 = vadd.f32 0.0, %v8554
  %v8556 = vpop.f32.mrb[0].mxu0
  %8557 = vmatprep.mubr.bf16.mxu0 0
  %8558 = vmatmul.mubr.bf16.gmra.mrb[0].mxu0 %v8467
  %v8559 = vpop.f32.mrb[0].mxu0
  %v8560 = vadd.f32 0.0, %v8559
  %v8561 = vpop.f32.mrb[0].mxu0
  %v8562 = vpop.f32.mrb[0].mxu0
  %v8563 = vadd.f32 0.0, %v8562
  %v8564 = vpop.f32.mrb[0].mxu0
  %8565 = vdwg.mxu0
  %v8566 = vadd.f32 %v8326, %v8504
  %v8567 = vadd.f32 %v8329, %v8507
  %v8568 = vadd.f32 %v8334, %v8512
  %v8569 = vadd.f32 %v8337, %v8515
  %v8570 = vadd.f32 %v8342, %v8520
  %v8571 = vadd.f32 %v8345, %v8523
  %v8572 = vadd.f32 %v8350, %v8528
  %v8573 = vadd.f32 %v8353, %v8531
  %v8574 = vadd.f32 %v8358, %v8536
  %v8575 = vadd.f32 %v8361, %v8539
  %v8576 = vadd.f32 %v8366, %v8544
  %v8577 = vadd.f32 %v8369, %v8547
  %v8578 = vadd.f32 %v8374, %v8552
  %v8579 = vadd.f32 %v8377, %v8555
  %v8580 = vadd.f32 %v8382, %v8560
  %v8581 = vadd.f32 %v8385, %v8563
  %v8582 = vld [vmem:[%s8020] sm:$0xff]
  %v8583 = vld [vmem:[%s8020 + $0x8] sm:$0xff]
  %v8584 = vld [vmem:[%s8020 + $0x10] sm:$0xff]
  %v8585 = vld [vmem:[%s8020 + $0x18] sm:$0xff]
  %v8586 = vld [vmem:[%s8020 + $0x30] sm:$0xff]
  %v8587 = vld [vmem:[%s8020 + $0x38] sm:$0xff]
  %v8588 = vld [vmem:[%s8020 + $0x40] sm:$0xff]
  %v8589 = vld [vmem:[%s8020 + $0x48] sm:$0xff]
  %v8590 = vld [vmem:[%s8020 + $0x60] sm:$0xff]
  %v8591 = vld [vmem:[%s8020 + $0x68] sm:$0xff]
  %v8592 = vld [vmem:[%s8020 + $0x70] sm:$0xff]
  %v8593 = vld [vmem:[%s8020 + $0x78] sm:$0xff]
  %v8594 = vld [vmem:[%s8020 + $0x90] sm:$0xff]
  %v8595 = vld [vmem:[%s8020 + $0x98] sm:$0xff]
  %v8596 = vld [vmem:[%s8020 + $0xa0] sm:$0xff]
  %v8597 = vld [vmem:[%s8020 + $0xa8] sm:$0xff]
  %v8598 = vpack.c.bf16 %v8583, %v8582
  %v8599 = vpack.c.bf16 %v8585, %v8584
  %v8600 = vpack.c.bf16 %v8587, %v8586
  %v8601 = vpack.c.bf16 %v8589, %v8588
  %v8602 = vpack.c.bf16 %v8591, %v8590
  %v8603 = vpack.c.bf16 %v8593, %v8592
  %v8604 = vpack.c.bf16 %v8595, %v8594
  %v8605 = vpack.c.bf16 %v8597, %v8596
  %s8606 = scalar_lea.vmem %s5, 96
  %v8607 = vld [vmem:[%s8606] sm:$0xf]
  %v8608 = vld [vmem:[%s8606 + $0x4] sm:$0xf]
  %v8609 = vld [vmem:[%s8606 + $0x8] sm:$0xf]
  %v8610 = vld [vmem:[%s8606 + $0xc] sm:$0xf]
  %v8611 = vld [vmem:[%s8606 + $0x10] sm:$0xf]
  %v8612 = vld [vmem:[%s8606 + $0x14] sm:$0xf]
  %v8613 = vld [vmem:[%s8606 + $0x18] sm:$0xf]
  %v8614 = vld [vmem:[%s8606 + $0x1c] sm:$0xf]
  %v8623 = vunpack.c.l.b16 %v8607
  %v8624 = vunpack.c.l.b16 %v8608
  %v8625 = vunpack.c.l.b16 %v8609
  %v8626 = vunpack.c.l.b16 %v8610
  %v8627 = vunpack.c.l.b16 %v8611
  %v8628 = vunpack.c.l.b16 %v8612
  %v8629 = vunpack.c.l.b16 %v8613
  %v8630 = vunpack.c.l.b16 %v8614
  %v8631 = vpack.c.b16 %v8624, %v8623
  %v8632 = vpack.c.b16 %v8626, %v8625
  %v8633 = vpack.c.b16 %v8628, %v8627
  %v8634 = vpack.c.b16 %v8630, %v8629
  %v8640 = vsel %vm8006, %v8598, 0
  %v8643 = vsel %vm8006, %v8599, 0
  %v8646 = vsel %vm8006, %v8600, 0
  %v8649 = vsel %vm8006, %v8601, 0
  %v8652 = vsel %vm8006, %v8602, 0
  %v8655 = vsel %vm8006, %v8603, 0
  %v8658 = vsel %vm8006, %v8604, 0
  %v8661 = vsel %vm8006, %v8605, 0
  %8663 = vmatprep.subr.bf16.mxu0 0
  %8664 = vmatpush1.bf16.msra.mxu0 %v8631
  %8665 = vmatprep.subr.bf16.mxu0 0
  %8666 = vmatpush1.bf16.msra.mxu0 %v8632
  %8667 = vmatprep.subr.bf16.mxu0 0
  %8668 = vmatpush1.bf16.msra.mxu0 %v8633
  %8669 = vmatprep.subr.bf16.mxu0 0
  %8670 = vmatpush1.bf16.msra.mxu0 %v8634
  %8671 = vmatprep.subr.bf16.mxu0 0
  %8672 = vmatpush1.bf16.msra.mxu0 0
  %8673 = vmatprep.subr.bf16.mxu0 0
  %8674 = vmatpush1.bf16.msra.mxu0 0
  %8675 = vmatprep.subr.bf16.mxu0 0
  %8676 = vmatpush1.bf16.msra.mxu0 0
  %8677 = vmatprep.subr.bf16.mxu0 0
  %8678 = vmatpush1.bf16.msra.mxu0 0
  %8679 = vmatprep.subr.bf16.mxu0 0
  %8680 = vmatpush1.bf16.msra.mxu0 0
  %8681 = vmatprep.subr.bf16.mxu0 0
  %8682 = vmatpush1.bf16.msra.mxu0 0
  %8683 = vmatprep.subr.bf16.mxu0 0
  %8684 = vmatpush1.bf16.msra.mxu0 0
  %8685 = vmatprep.subr.bf16.mxu0 0
  %8686 = vmatpush1.bf16.msra.mxu0 0
  %8687 = vmatprep.subr.bf16.mxu0 0
  %8688 = vmatpush1.bf16.msra.mxu0 0
  %8689 = vmatprep.subr.bf16.mxu0 0
  %8690 = vmatpush1.bf16.msra.mxu0 0
  %8691 = vmatprep.subr.bf16.mxu0 0
  %8692 = vmatpush1.bf16.msra.mxu0 0
  %8693 = vmatprep.subr.bf16.mxu0 0
  %8694 = vmatpush1.bf16.msra.mxu0 0
  %8695 = vmatprep.mubr.bf16.mxu0 0
  %8696 = vmatmul.mubr.bf16.gmra.mrb[0].mxu0 %v8640
  %v8697 = vpop.f32.mrb[0].mxu0
  %v8698 = vadd.f32 0.0, %v8697
  %v8699 = vpop.f32.mrb[0].mxu0
  %v8700 = vpop.f32.mrb[0].mxu0
  %v8701 = vadd.f32 0.0, %v8700
  %v8702 = vpop.f32.mrb[0].mxu0
  %8703 = vmatprep.mubr.bf16.mxu0 0
  %8704 = vmatmul.mubr.bf16.gmra.mrb[0].mxu0 %v8643
  %v8705 = vpop.f32.mrb[0].mxu0
  %v8706 = vadd.f32 0.0, %v8705
  %v8707 = vpop.f32.mrb[0].mxu0
  %v8708 = vpop.f32.mrb[0].mxu0
  %v8709 = vadd.f32 0.0, %v8708
  %v8710 = vpop.f32.mrb[0].mxu0
  %8711 = vmatprep.mubr.bf16.mxu0 0
  %8712 = vmatmul.mubr.bf16.gmra.mrb[0].mxu0 %v8646
  %v8713 = vpop.f32.mrb[0].mxu0
  %v8714 = vadd.f32 0.0, %v8713
  %v8715 = vpop.f32.mrb[0].mxu0
  %v8716 = vpop.f32.mrb[0].mxu0
  %v8717 = vadd.f32 0.0, %v8716
  %v8718 = vpop.f32.mrb[0].mxu0
  %8719 = vmatprep.mubr.bf16.mxu0 0
  %8720 = vmatmul.mubr.bf16.gmra.mrb[0].mxu0 %v8649
  %v8721 = vpop.f32.mrb[0].mxu0
  %v8722 = vadd.f32 0.0, %v8721
  %v8723 = vpop.f32.mrb[0].mxu0
  %v8724 = vpop.f32.mrb[0].mxu0
  %v8725 = vadd.f32 0.0, %v8724
  %v8726 = vpop.f32.mrb[0].mxu0
  %8727 = vmatprep.mubr.bf16.mxu0 0
  %8728 = vmatmul.mubr.bf16.gmra.mrb[0].mxu0 %v8652
  %v8729 = vpop.f32.mrb[0].mxu0
  %v8730 = vadd.f32 0.0, %v8729
  %v8731 = vpop.f32.mrb[0].mxu0
  %v8732 = vpop.f32.mrb[0].mxu0
  %v8733 = vadd.f32 0.0, %v8732
  %v8734 = vpop.f32.mrb[0].mxu0
  %8735 = vmatprep.mubr.bf16.mxu0 0
  %8736 = vmatmul.mubr.bf16.gmra.mrb[0].mxu0 %v8655
  %v8737 = vpop.f32.mrb[0].mxu0
  %v8738 = vadd.f32 0.0, %v8737
  %v8739 = vpop.f32.mrb[0].mxu0
  %v8740 = vpop.f32.mrb[0].mxu0
  %v8741 = vadd.f32 0.0, %v8740
  %v8742 = vpop.f32.mrb[0].mxu0
  %8743 = vmatprep.mubr.bf16.mxu0 0
  %8744 = vmatmul.mubr.bf16.gmra.mrb[0].mxu0 %v8658
  %v8745 = vpop.f32.mrb[0].mxu0
  %v8746 = vadd.f32 0.0, %v8745
  %v8747 = vpop.f32.mrb[0].mxu0
  %v8748 = vpop.f32.mrb[0].mxu0
  %v8749 = vadd.f32 0.0, %v8748
  %v8750 = vpop.f32.mrb[0].mxu0
  %8751 = vmatprep.mubr.bf16.mxu0 0
  %8752 = vmatmul.mubr.bf16.gmra.mrb[0].mxu0 %v8661
  %v8753 = vpop.f32.mrb[0].mxu0
  %v8754 = vadd.f32 0.0, %v8753
  %v8755 = vpop.f32.mrb[0].mxu0
  %v8756 = vpop.f32.mrb[0].mxu0
  %v8757 = vadd.f32 0.0, %v8756
  %v8758 = vpop.f32.mrb[0].mxu0
  %8759 = vdwg.mxu0
  %v8760 = vadd.f32 %v8566, %v8698
  %v8761 = vadd.f32 %v8567, %v8701
  %v8762 = vadd.f32 %v8568, %v8706
  %v8763 = vadd.f32 %v8569, %v8709
  %v8764 = vadd.f32 %v8570, %v8714
  %v8765 = vadd.f32 %v8571, %v8717
  %v8766 = vadd.f32 %v8572, %v8722
  %v8767 = vadd.f32 %v8573, %v8725
  %v8768 = vadd.f32 %v8574, %v8730
  %v8769 = vadd.f32 %v8575, %v8733
  %v8770 = vadd.f32 %v8576, %v8738
  %v8771 = vadd.f32 %v8577, %v8741
  %v8772 = vadd.f32 %v8578, %v8746
  %v8773 = vadd.f32 %v8579, %v8749
  %v8774 = vadd.f32 %v8580, %v8754
  %v8775 = vadd.f32 %v8581, %v8757
  %v8776 = vld [vmem:[%s8020 + $0x8] sm:$0xff]
  %v8777 = vld [vmem:[%s8020 + $0x10] sm:$0xff]
  %v8778 = vld [vmem:[%s8020 + $0x18] sm:$0xff]
  %v8779 = vld [vmem:[%s8020 + $0x20] sm:$0xff]
  %v8780 = vld [vmem:[%s8020 + $0x38] sm:$0xff]
  %v8781 = vld [vmem:[%s8020 + $0x40] sm:$0xff]
  %v8782 = vld [vmem:[%s8020 + $0x48] sm:$0xff]
  %v8783 = vld [vmem:[%s8020 + $0x50] sm:$0xff]
  %v8784 = vld [vmem:[%s8020 + $0x68] sm:$0xff]
  %v8785 = vld [vmem:[%s8020 + $0x70] sm:$0xff]
  %v8786 = vld [vmem:[%s8020 + $0x78] sm:$0xff]
  %v8787 = vld [vmem:[%s8020 + $0x80] sm:$0xff]
  %v8788 = vld [vmem:[%s8020 + $0x98] sm:$0xff]
  %v8789 = vld [vmem:[%s8020 + $0xa0] sm:$0xff]
  %v8790 = vld [vmem:[%s8020 + $0xa8] sm:$0xff]
  %v8791 = vld [vmem:[%s8020 + $0xb0] sm:$0xff]
  %v8792 = vpack.c.bf16 %v8777, %v8776
  %v8793 = vpack.c.bf16 %v8779, %v8778
  %v8794 = vpack.c.bf16 %v8781, %v8780
  %v8795 = vpack.c.bf16 %v8783, %v8782
  %v8796 = vpack.c.bf16 %v8785, %v8784
  %v8797 = vpack.c.bf16 %v8787, %v8786
  %v8798 = vpack.c.bf16 %v8789, %v8788
  %v8799 = vpack.c.bf16 %v8791, %v8790
  %s8800 = scalar_lea.vmem %s5, 128
  %v8801 = vld [vmem:[%s8800] sm:$0xf]
  %v8802 = vld [vmem:[%s8800 + $0x4] sm:$0xf]
  %v8803 = vld [vmem:[%s8800 + $0x8] sm:$0xf]
  %v8804 = vld [vmem:[%s8800 + $0xc] sm:$0xf]
  %v8805 = vld [vmem:[%s8800 + $0x10] sm:$0xf]
  %v8806 = vld [vmem:[%s8800 + $0x14] sm:$0xf]
  %v8807 = vld [vmem:[%s8800 + $0x18] sm:$0xf]
  %v8808 = vld [vmem:[%s8800 + $0x1c] sm:$0xf]
  %v8817 = vunpack.c.l.b16 %v8801
  %v8818 = vunpack.c.l.b16 %v8802
  %v8819 = vunpack.c.l.b16 %v8803
  %v8820 = vunpack.c.l.b16 %v8804
  %v8821 = vunpack.c.l.b16 %v8805
  %v8822 = vunpack.c.l.b16 %v8806
  %v8823 = vunpack.c.l.b16 %v8807
  %v8824 = vunpack.c.l.b16 %v8808
  %v8825 = vpack.c.b16 %v8818, %v8817
  %v8826 = vpack.c.b16 %v8820, %v8819
  %v8827 = vpack.c.b16 %v8822, %v8821
  %v8828 = vpack.c.b16 %v8824, %v8823
  %v8834 = vsel %vm8006, %v8792, 0
  %v8837 = vsel %vm8006, %v8793, 0
  %v8840 = vsel %vm8006, %v8794, 0
  %v8843 = vsel %vm8006, %v8795, 0
  %v8846 = vsel %vm8006, %v8796, 0
  %v8849 = vsel %vm8006, %v8797, 0
  %v8852 = vsel %vm8006, %v8798, 0
  %v8855 = vsel %vm8006, %v8799, 0
  %8857 = vmatprep.subr.bf16.mxu0 0
  %8858 = vmatpush1.bf16.msra.mxu0 %v8825
  %8859 = vmatprep.subr.bf16.mxu0 0
  %8860 = vmatpush1.bf16.msra.mxu0 %v8826
  %8861 = vmatprep.subr.bf16.mxu0 0
  %8862 = vmatpush1.bf16.msra.mxu0 %v8827
  %8863 = vmatprep.subr.bf16.mxu0 0
  %8864 = vmatpush1.bf16.msra.mxu0 %v8828
  %8865 = vmatprep.subr.bf16.mxu0 0
  %8866 = vmatpush1.bf16.msra.mxu0 0
  %8867 = vmatprep.subr.bf16.mxu0 0
  %8868 = vmatpush1.bf16.msra.mxu0 0
  %8869 = vmatprep.subr.bf16.mxu0 0
  %8870 = vmatpush1.bf16.msra.mxu0 0
  %8871 = vmatprep.subr.bf16.mxu0 0
  %8872 = vmatpush1.bf16.msra.mxu0 0
  %8873 = vmatprep.subr.bf16.mxu0 0
  %8874 = vmatpush1.bf16.msra.mxu0 0
  %8875 = vmatprep.subr.bf16.mxu0 0
  %8876 = vmatpush1.bf16.msra.mxu0 0
  %8877 = vmatprep.subr.bf16.mxu0 0
  %8878 = vmatpush1.bf16.msra.mxu0 0
  %8879 = vmatprep.subr.bf16.mxu0 0
  %8880 = vmatpush1.bf16.msra.mxu0 0
  %8881 = vmatprep.subr.bf16.mxu0 0
  %8882 = vmatpush1.bf16.msra.mxu0 0
  %8883 = vmatprep.subr.bf16.mxu0 0
  %8884 = vmatpush1.bf16.msra.mxu0 0
  %8885 = vmatprep.subr.bf16.mxu0 0
  %8886 = vmatpush1.bf16.msra.mxu0 0
  %8887 = vmatprep.subr.bf16.mxu0 0
  %8888 = vmatpush1.bf16.msra.mxu0 0
  %8889 = vmatprep.mubr.bf16.mxu0 0
  %8890 = vmatmul.mubr.bf16.gmra.mrb[0].mxu0 %v8834
  %v8891 = vpop.f32.mrb[0].mxu0
  %v8892 = vadd.f32 0.0, %v8891
  %v8893 = vpop.f32.mrb[0].mxu0
  %v8894 = vpop.f32.mrb[0].mxu0
  %v8895 = vadd.f32 0.0, %v8894
  %v8896 = vpop.f32.mrb[0].mxu0
  %8897 = vmatprep.mubr.bf16.mxu0 0
  %8898 = vmatmul.mubr.bf16.gmra.mrb[0].mxu0 %v8837
  %v8899 = vpop.f32.mrb[0].mxu0
  %v8900 = vadd.f32 0.0, %v8899
  %v8901 = vpop.f32.mrb[0].mxu0
  %v8902 = vpop.f32.mrb[0].mxu0
  %v8903 = vadd.f32 0.0, %v8902
  %v8904 = vpop.f32.mrb[0].mxu0
  %8905 = vmatprep.mubr.bf16.mxu0 0
  %8906 = vmatmul.mubr.bf16.gmra.mrb[0].mxu0 %v8840
  %v8907 = vpop.f32.mrb[0].mxu0
  %v8908 = vadd.f32 0.0, %v8907
  %v8909 = vpop.f32.mrb[0].mxu0
  %v8910 = vpop.f32.mrb[0].mxu0
  %v8911 = vadd.f32 0.0, %v8910
  %v8912 = vpop.f32.mrb[0].mxu0
  %8913 = vmatprep.mubr.bf16.mxu0 0
  %8914 = vmatmul.mubr.bf16.gmra.mrb[0].mxu0 %v8843
  %v8915 = vpop.f32.mrb[0].mxu0
  %v8916 = vadd.f32 0.0, %v8915
  %v8917 = vpop.f32.mrb[0].mxu0
  %v8918 = vpop.f32.mrb[0].mxu0
  %v8919 = vadd.f32 0.0, %v8918
  %v8920 = vpop.f32.mrb[0].mxu0
  %8921 = vmatprep.mubr.bf16.mxu0 0
  %8922 = vmatmul.mubr.bf16.gmra.mrb[0].mxu0 %v8846
  %v8923 = vpop.f32.mrb[0].mxu0
  %v8924 = vadd.f32 0.0, %v8923
  %v8925 = vpop.f32.mrb[0].mxu0
  %v8926 = vpop.f32.mrb[0].mxu0
  %v8927 = vadd.f32 0.0, %v8926
  %v8928 = vpop.f32.mrb[0].mxu0
  %8929 = vmatprep.mubr.bf16.mxu0 0
  %8930 = vmatmul.mubr.bf16.gmra.mrb[0].mxu0 %v8849
  %v8931 = vpop.f32.mrb[0].mxu0
  %v8932 = vadd.f32 0.0, %v8931
  %v8933 = vpop.f32.mrb[0].mxu0
  %v8934 = vpop.f32.mrb[0].mxu0
  %v8935 = vadd.f32 0.0, %v8934
  %v8936 = vpop.f32.mrb[0].mxu0
  %8937 = vmatprep.mubr.bf16.mxu0 0
  %8938 = vmatmul.mubr.bf16.gmra.mrb[0].mxu0 %v8852
  %v8939 = vpop.f32.mrb[0].mxu0
  %v8940 = vadd.f32 0.0, %v8939
  %v8941 = vpop.f32.mrb[0].mxu0
  %v8942 = vpop.f32.mrb[0].mxu0
  %v8943 = vadd.f32 0.0, %v8942
  %v8944 = vpop.f32.mrb[0].mxu0
  %8945 = vmatprep.mubr.bf16.mxu0 0
  %8946 = vmatmul.mubr.bf16.gmra.mrb[0].mxu0 %v8855
  %v8947 = vpop.f32.mrb[0].mxu0
  %v8948 = vadd.f32 0.0, %v8947
  %v8949 = vpop.f32.mrb[0].mxu0
  %v8950 = vpop.f32.mrb[0].mxu0
  %v8951 = vadd.f32 0.0, %v8950
  %v8952 = vpop.f32.mrb[0].mxu0
  %8953 = vdwg.mxu0
  %v8954 = vadd.f32 %v8760, %v8892
  %v8955 = vadd.f32 %v8761, %v8895
  %v8956 = vadd.f32 %v8762, %v8900
  %v8957 = vadd.f32 %v8763, %v8903
  %v8958 = vadd.f32 %v8764, %v8908
  %v8959 = vadd.f32 %v8765, %v8911
  %v8960 = vadd.f32 %v8766, %v8916
  %v8961 = vadd.f32 %v8767, %v8919
  %v8962 = vadd.f32 %v8768, %v8924
  %v8963 = vadd.f32 %v8769, %v8927
  %v8964 = vadd.f32 %v8770, %v8932
  %v8965 = vadd.f32 %v8771, %v8935
  %v8966 = vadd.f32 %v8772, %v8940
  %v8967 = vadd.f32 %v8773, %v8943
  %v8968 = vadd.f32 %v8774, %v8948
  %v8969 = vadd.f32 %v8775, %v8951
  %v8970 = vld [vmem:[%s8020 + $0x10] sm:$0xff]
  %v8971 = vld [vmem:[%s8020 + $0x18] sm:$0xff]
  %v8972 = vld [vmem:[%s8020 + $0x20] sm:$0xff]
  %v8973 = vld [vmem:[%s8020 + $0x28] sm:$0xff]
  %v8974 = vld [vmem:[%s8020 + $0x40] sm:$0xff]
  %v8975 = vld [vmem:[%s8020 + $0x48] sm:$0xff]
  %v8976 = vld [vmem:[%s8020 + $0x50] sm:$0xff]
  %v8977 = vld [vmem:[%s8020 + $0x58] sm:$0xff]
  %v8978 = vld [vmem:[%s8020 + $0x70] sm:$0xff]
  %v8979 = vld [vmem:[%s8020 + $0x78] sm:$0xff]
  %v8980 = vld [vmem:[%s8020 + $0x80] sm:$0xff]
  %v8981 = vld [vmem:[%s8020 + $0x88] sm:$0xff]
  %v8982 = vld [vmem:[%s8020 + $0xa0] sm:$0xff]
  %v8983 = vld [vmem:[%s8020 + $0xa8] sm:$0xff]
  %v8984 = vld [vmem:[%s8020 + $0xb0] sm:$0xff]
  %v8985 = vld [vmem:[%s8020 + $0xb8] sm:$0xff]
  %v8986 = vpack.c.bf16 %v8971, %v8970
  %v8987 = vpack.c.bf16 %v8973, %v8972
  %v8988 = vpack.c.bf16 %v8975, %v8974
  %v8989 = vpack.c.bf16 %v8977, %v8976
  %v8990 = vpack.c.bf16 %v8979, %v8978
  %v8991 = vpack.c.bf16 %v8981, %v8980
  %v8992 = vpack.c.bf16 %v8983, %v8982
  %v8993 = vpack.c.bf16 %v8985, %v8984
  %s8994 = scalar_lea.vmem %s5, 160
  %v8995 = vld [vmem:[%s8994] sm:$0xf]
  %v8996 = vld [vmem:[%s8994 + $0x4] sm:$0xf]
  %v8997 = vld [vmem:[%s8994 + $0x8] sm:$0xf]
  %v8998 = vld [vmem:[%s8994 + $0xc] sm:$0xf]
  %v8999 = vld [vmem:[%s8994 + $0x10] sm:$0xf]
  %v9000 = vld [vmem:[%s8994 + $0x14] sm:$0xf]
  %v9001 = vld [vmem:[%s8994 + $0x18] sm:$0xf]
  %v9002 = vld [vmem:[%s8994 + $0x1c] sm:$0xf]
  %v9011 = vunpack.c.l.b16 %v8995
  %v9012 = vunpack.c.l.b16 %v8996
  %v9013 = vunpack.c.l.b16 %v8997
  %v9014 = vunpack.c.l.b16 %v8998
  %v9015 = vunpack.c.l.b16 %v8999
  %v9016 = vunpack.c.l.b16 %v9000
  %v9017 = vunpack.c.l.b16 %v9001
  %v9018 = vunpack.c.l.b16 %v9002
  %v9019 = vpack.c.b16 %v9012, %v9011
  %v9020 = vpack.c.b16 %v9014, %v9013
  %v9021 = vpack.c.b16 %v9016, %v9015
  %v9022 = vpack.c.b16 %v9018, %v9017
  %v9028 = vsel %vm8006, %v8986, 0
  %v9031 = vsel %vm8006, %v8987, 0
  %v9034 = vsel %vm8006, %v8988, 0
  %v9037 = vsel %vm8006, %v8989, 0
  %v9040 = vsel %vm8006, %v8990, 0
  %v9043 = vsel %vm8006, %v8991, 0
  %v9046 = vsel %vm8006, %v8992, 0
  %v9049 = vsel %vm8006, %v8993, 0
  %9051 = vmatprep.subr.bf16.mxu0 0
  %9052 = vmatpush1.bf16.msra.mxu0 %v9019
  %9053 = vmatprep.subr.bf16.mxu0 0
  %9054 = vmatpush1.bf16.msra.mxu0 %v9020
  %9055 = vmatprep.subr.bf16.mxu0 0
  %9056 = vmatpush1.bf16.msra.mxu0 %v9021
  %9057 = vmatprep.subr.bf16.mxu0 0
  %9058 = vmatpush1.bf16.msra.mxu0 %v9022
  %9059 = vmatprep.subr.bf16.mxu0 0
  %9060 = vmatpush1.bf16.msra.mxu0 0
  %9061 = vmatprep.subr.bf16.mxu0 0
  %9062 = vmatpush1.bf16.msra.mxu0 0
  %9063 = vmatprep.subr.bf16.mxu0 0
  %9064 = vmatpush1.bf16.msra.mxu0 0
  %9065 = vmatprep.subr.bf16.mxu0 0
  %9066 = vmatpush1.bf16.msra.mxu0 0
  %9067 = vmatprep.subr.bf16.mxu0 0
  %9068 = vmatpush1.bf16.msra.mxu0 0
  %9069 = vmatprep.subr.bf16.mxu0 0
  %9070 = vmatpush1.bf16.msra.mxu0 0
  %9071 = vmatprep.subr.bf16.mxu0 0
  %9072 = vmatpush1.bf16.msra.mxu0 0
  %9073 = vmatprep.subr.bf16.mxu0 0
  %9074 = vmatpush1.bf16.msra.mxu0 0
  %9075 = vmatprep.subr.bf16.mxu0 0
  %9076 = vmatpush1.bf16.msra.mxu0 0
  %9077 = vmatprep.subr.bf16.mxu0 0
  %9078 = vmatpush1.bf16.msra.mxu0 0
  %9079 = vmatprep.subr.bf16.mxu0 0
  %9080 = vmatpush1.bf16.msra.mxu0 0
  %9081 = vmatprep.subr.bf16.mxu0 0
  %9082 = vmatpush1.bf16.msra.mxu0 0
  %9083 = vmatprep.mubr.bf16.mxu0 0
  %9084 = vmatmul.mubr.bf16.gmra.mrb[0].mxu0 %v9028
  %v9085 = vpop.f32.mrb[0].mxu0
  %v9086 = vadd.f32 0.0, %v9085
  %v9087 = vpop.f32.mrb[0].mxu0
  %v9088 = vpop.f32.mrb[0].mxu0
  %v9089 = vadd.f32 0.0, %v9088
  %v9090 = vpop.f32.mrb[0].mxu0
  %9091 = vmatprep.mubr.bf16.mxu0 0
  %9092 = vmatmul.mubr.bf16.gmra.mrb[0].mxu0 %v9031
  %v9093 = vpop.f32.mrb[0].mxu0
  %v9094 = vadd.f32 0.0, %v9093
  %v9095 = vpop.f32.mrb[0].mxu0
  %v9096 = vpop.f32.mrb[0].mxu0
  %v9097 = vadd.f32 0.0, %v9096
  %v9098 = vpop.f32.mrb[0].mxu0
  %9099 = vmatprep.mubr.bf16.mxu0 0
  %9100 = vmatmul.mubr.bf16.gmra.mrb[0].mxu0 %v9034
  %v9101 = vpop.f32.mrb[0].mxu0
  %v9102 = vadd.f32 0.0, %v9101
  %v9103 = vpop.f32.mrb[0].mxu0
  %v9104 = vpop.f32.mrb[0].mxu0
  %v9105 = vadd.f32 0.0, %v9104
  %v9106 = vpop.f32.mrb[0].mxu0
  %9107 = vmatprep.mubr.bf16.mxu0 0
  %9108 = vmatmul.mubr.bf16.gmra.mrb[0].mxu0 %v9037
  %v9109 = vpop.f32.mrb[0].mxu0
  %v9110 = vadd.f32 0.0, %v9109
  %v9111 = vpop.f32.mrb[0].mxu0
  %v9112 = vpop.f32.mrb[0].mxu0
  %v9113 = vadd.f32 0.0, %v9112
  %v9114 = vpop.f32.mrb[0].mxu0
  %9115 = vmatprep.mubr.bf16.mxu0 0
  %9116 = vmatmul.mubr.bf16.gmra.mrb[0].mxu0 %v9040
  %v9117 = vpop.f32.mrb[0].mxu0
  %v9118 = vadd.f32 0.0, %v9117
  %v9119 = vpop.f32.mrb[0].mxu0
  %v9120 = vpop.f32.mrb[0].mxu0
  %v9121 = vadd.f32 0.0, %v9120
  %v9122 = vpop.f32.mrb[0].mxu0
  %9123 = vmatprep.mubr.bf16.mxu0 0
  %9124 = vmatmul.mubr.bf16.gmra.mrb[0].mxu0 %v9043
  %v9125 = vpop.f32.mrb[0].mxu0
  %v9126 = vadd.f32 0.0, %v9125
  %v9127 = vpop.f32.mrb[0].mxu0
  %v9128 = vpop.f32.mrb[0].mxu0
  %v9129 = vadd.f32 0.0, %v9128
  %v9130 = vpop.f32.mrb[0].mxu0
  %9131 = vmatprep.mubr.bf16.mxu0 0
  %9132 = vmatmul.mubr.bf16.gmra.mrb[0].mxu0 %v9046
  %v9133 = vpop.f32.mrb[0].mxu0
  %v9134 = vadd.f32 0.0, %v9133
  %v9135 = vpop.f32.mrb[0].mxu0
  %v9136 = vpop.f32.mrb[0].mxu0
  %v9137 = vadd.f32 0.0, %v9136
  %v9138 = vpop.f32.mrb[0].mxu0
  %9139 = vmatprep.mubr.bf16.mxu0 0
  %9140 = vmatmul.mubr.bf16.gmra.mrb[0].mxu0 %v9049
  %v9141 = vpop.f32.mrb[0].mxu0
  %v9142 = vadd.f32 0.0, %v9141
  %v9143 = vpop.f32.mrb[0].mxu0
  %v9144 = vpop.f32.mrb[0].mxu0
  %v9145 = vadd.f32 0.0, %v9144
  %v9146 = vpop.f32.mrb[0].mxu0
  %9147 = vdwg.mxu0
  %v9148 = vadd.f32 %v8954, %v9086
  %v9149 = vadd.f32 %v8955, %v9089
  %v9150 = vadd.f32 %v8956, %v9094
  %v9151 = vadd.f32 %v8957, %v9097
  %v9152 = vadd.f32 %v8958, %v9102
  %v9153 = vadd.f32 %v8959, %v9105
  %v9154 = vadd.f32 %v8960, %v9110
  %v9155 = vadd.f32 %v8961, %v9113
  %v9156 = vadd.f32 %v8962, %v9118
  %v9157 = vadd.f32 %v8963, %v9121
  %v9158 = vadd.f32 %v8964, %v9126
  %v9159 = vadd.f32 %v8965, %v9129
  %v9160 = vadd.f32 %v8966, %v9134
  %v9161 = vadd.f32 %v8967, %v9137
  %v9162 = vadd.f32 %v8968, %v9142
  %v9163 = vadd.f32 %v8969, %v9145
  %s9164 = scalar_lea.vmem [#allocation3], 96
  %v9165 = vld [vmem:[%s9164] sm:$0xff]
  %v9166 = vld [vmem:[%s9164 + $0x8] sm:$0xff]
  %v9167 = vld [vmem:[%s9164 + $0x10] sm:$0xff]
  %v9168 = vld [vmem:[%s9164 + $0x18] sm:$0xff]
  %v9169 = vld [vmem:[%s9164 + $0x30] sm:$0xff]
  %v9170 = vld [vmem:[%s9164 + $0x38] sm:$0xff]
  %v9171 = vld [vmem:[%s9164 + $0x40] sm:$0xff]
  %v9172 = vld [vmem:[%s9164 + $0x48] sm:$0xff]
  %v9173 = vld [vmem:[%s9164 + $0x60] sm:$0xff]
  %v9174 = vld [vmem:[%s9164 + $0x68] sm:$0xff]
  %v9175 = vld [vmem:[%s9164 + $0x70] sm:$0xff]
  %v9176 = vld [vmem:[%s9164 + $0x78] sm:$0xff]
  %v9177 = vld [vmem:[%s9164 + $0x90] sm:$0xff]
  %v9178 = vld [vmem:[%s9164 + $0x98] sm:$0xff]
  %v9179 = vld [vmem:[%s9164 + $0xa0] sm:$0xff]
  %v9180 = vld [vmem:[%s9164 + $0xa8] sm:$0xff]
  %v9181 = vpack.c.bf16 %v9166, %v9165
  %v9182 = vpack.c.bf16 %v9168, %v9167
  %v9183 = vpack.c.bf16 %v9170, %v9169
  %v9184 = vpack.c.bf16 %v9172, %v9171
  %v9185 = vpack.c.bf16 %v9174, %v9173
  %v9186 = vpack.c.bf16 %v9176, %v9175
  %v9187 = vpack.c.bf16 %v9178, %v9177
  %v9188 = vpack.c.bf16 %v9180, %v9179
  %s9189 = scalar_lea.vmem %s5, 192
  %v9190 = vld [vmem:[%s9189] sm:$0xf]
  %v9191 = vld [vmem:[%s9189 + $0x4] sm:$0xf]
  %v9192 = vld [vmem:[%s9189 + $0x8] sm:$0xf]
  %v9193 = vld [vmem:[%s9189 + $0xc] sm:$0xf]
  %v9194 = vld [vmem:[%s9189 + $0x10] sm:$0xf]
  %v9195 = vld [vmem:[%s9189 + $0x14] sm:$0xf]
  %v9196 = vld [vmem:[%s9189 + $0x18] sm:$0xf]
  %v9197 = vld [vmem:[%s9189 + $0x1c] sm:$0xf]
  %v9206 = vunpack.c.l.b16 %v9190
  %v9207 = vunpack.c.l.b16 %v9191
  %v9208 = vunpack.c.l.b16 %v9192
  %v9209 = vunpack.c.l.b16 %v9193
  %v9210 = vunpack.c.l.b16 %v9194
  %v9211 = vunpack.c.l.b16 %v9195
  %v9212 = vunpack.c.l.b16 %v9196
  %v9213 = vunpack.c.l.b16 %v9197
  %v9214 = vpack.c.b16 %v9207, %v9206
  %v9215 = vpack.c.b16 %v9209, %v9208
  %v9216 = vpack.c.b16 %v9211, %v9210
  %v9217 = vpack.c.b16 %v9213, %v9212
  %v9223 = vsel %vm8006, %v9181, 0
  %v9226 = vsel %vm8006, %v9182, 0
  %v9229 = vsel %vm8006, %v9183, 0
  %v9232 = vsel %vm8006, %v9184, 0
  %v9235 = vsel %vm8006, %v9185, 0
  %v9238 = vsel %vm8006, %v9186, 0
  %v9241 = vsel %vm8006, %v9187, 0
  %v9244 = vsel %vm8006, %v9188, 0
  %9246 = vmatprep.subr.bf16.mxu0 0
  %9247 = vmatpush1.bf16.msra.mxu0 %v9214
  %9248 = vmatprep.subr.bf16.mxu0 0
  %9249 = vmatpush1.bf16.msra.mxu0 %v9215
  %9250 = vmatprep.subr.bf16.mxu0 0
  %9251 = vmatpush1.bf16.msra.mxu0 %v9216
  %9252 = vmatprep.subr.bf16.mxu0 0
  %9253 = vmatpush1.bf16.msra.mxu0 %v9217
  %9254 = vmatprep.subr.bf16.mxu0 0
  %9255 = vmatpush1.bf16.msra.mxu0 0
  %9256 = vmatprep.subr.bf16.mxu0 0
  %9257 = vmatpush1.bf16.msra.mxu0 0
  %9258 = vmatprep.subr.bf16.mxu0 0
  %9259 = vmatpush1.bf16.msra.mxu0 0
  %9260 = vmatprep.subr.bf16.mxu0 0
  %9261 = vmatpush1.bf16.msra.mxu0 0
  %9262 = vmatprep.subr.bf16.mxu0 0
  %9263 = vmatpush1.bf16.msra.mxu0 0
  %9264 = vmatprep.subr.bf16.mxu0 0
  %9265 = vmatpush1.bf16.msra.mxu0 0
  %9266 = vmatprep.subr.bf16.mxu0 0
  %9267 = vmatpush1.bf16.msra.mxu0 0
  %9268 = vmatprep.subr.bf16.mxu0 0
  %9269 = vmatpush1.bf16.msra.mxu0 0
  %9270 = vmatprep.subr.bf16.mxu0 0
  %9271 = vmatpush1.bf16.msra.mxu0 0
  %9272 = vmatprep.subr.bf16.mxu0 0
  %9273 = vmatpush1.bf16.msra.mxu0 0
  %9274 = vmatprep.subr.bf16.mxu0 0
  %9275 = vmatpush1.bf16.msra.mxu0 0
  %9276 = vmatprep.subr.bf16.mxu0 0
  %9277 = vmatpush1.bf16.msra.mxu0 0
  %9278 = vmatprep.mubr.bf16.mxu0 0
  %9279 = vmatmul.mubr.bf16.gmra.mrb[0].mxu0 %v9223
  %v9280 = vpop.f32.mrb[0].mxu0
  %v9281 = vadd.f32 0.0, %v9280
  %v9282 = vpop.f32.mrb[0].mxu0
  %v9283 = vpop.f32.mrb[0].mxu0
  %v9284 = vadd.f32 0.0, %v9283
  %v9285 = vpop.f32.mrb[0].mxu0
  %9286 = vmatprep.mubr.bf16.mxu0 0
  %9287 = vmatmul.mubr.bf16.gmra.mrb[0].mxu0 %v9226
  %v9288 = vpop.f32.mrb[0].mxu0
  %v9289 = vadd.f32 0.0, %v9288
  %v9290 = vpop.f32.mrb[0].mxu0
  %v9291 = vpop.f32.mrb[0].mxu0
  %v9292 = vadd.f32 0.0, %v9291
  %v9293 = vpop.f32.mrb[0].mxu0
  %9294 = vmatprep.mubr.bf16.mxu0 0
  %9295 = vmatmul.mubr.bf16.gmra.mrb[0].mxu0 %v9229
  %v9296 = vpop.f32.mrb[0].mxu0
  %v9297 = vadd.f32 0.0, %v9296
  %v9298 = vpop.f32.mrb[0].mxu0
  %v9299 = vpop.f32.mrb[0].mxu0
  %v9300 = vadd.f32 0.0, %v9299
  %v9301 = vpop.f32.mrb[0].mxu0
  %9302 = vmatprep.mubr.bf16.mxu0 0
  %9303 = vmatmul.mubr.bf16.gmra.mrb[0].mxu0 %v9232
  %v9304 = vpop.f32.mrb[0].mxu0
  %v9305 = vadd.f32 0.0, %v9304
  %v9306 = vpop.f32.mrb[0].mxu0
  %v9307 = vpop.f32.mrb[0].mxu0
  %v9308 = vadd.f32 0.0, %v9307
  %v9309 = vpop.f32.mrb[0].mxu0
  %9310 = vmatprep.mubr.bf16.mxu0 0
  %9311 = vmatmul.mubr.bf16.gmra.mrb[0].mxu0 %v9235
  %v9312 = vpop.f32.mrb[0].mxu0
  %v9313 = vadd.f32 0.0, %v9312
  %v9314 = vpop.f32.mrb[0].mxu0
  %v9315 = vpop.f32.mrb[0].mxu0
  %v9316 = vadd.f32 0.0, %v9315
  %v9317 = vpop.f32.mrb[0].mxu0
  %9318 = vmatprep.mubr.bf16.mxu0 0
  %9319 = vmatmul.mubr.bf16.gmra.mrb[0].mxu0 %v9238
  %v9320 = vpop.f32.mrb[0].mxu0
  %v9321 = vadd.f32 0.0, %v9320
  %v9322 = vpop.f32.mrb[0].mxu0
  %v9323 = vpop.f32.mrb[0].mxu0
  %v9324 = vadd.f32 0.0, %v9323
  %v9325 = vpop.f32.mrb[0].mxu0
  %9326 = vmatprep.mubr.bf16.mxu0 0
  %9327 = vmatmul.mubr.bf16.gmra.mrb[0].mxu0 %v9241
  %v9328 = vpop.f32.mrb[0].mxu0
  %v9329 = vadd.f32 0.0, %v9328
  %v9330 = vpop.f32.mrb[0].mxu0
  %v9331 = vpop.f32.mrb[0].mxu0
  %v9332 = vadd.f32 0.0, %v9331
  %v9333 = vpop.f32.mrb[0].mxu0
  %9334 = vmatprep.mubr.bf16.mxu0 0
  %9335 = vmatmul.mubr.bf16.gmra.mrb[0].mxu0 %v9244
  %v9336 = vpop.f32.mrb[0].mxu0
  %v9337 = vadd.f32 0.0, %v9336
  %v9338 = vpop.f32.mrb[0].mxu0
  %v9339 = vpop.f32.mrb[0].mxu0
  %v9340 = vadd.f32 0.0, %v9339
  %v9341 = vpop.f32.mrb[0].mxu0
  %9342 = vdwg.mxu0
  %v9343 = vadd.f32 %v9148, %v9281
  %v9344 = vadd.f32 %v9149, %v9284
  %v9345 = vadd.f32 %v9150, %v9289
  %v9346 = vadd.f32 %v9151, %v9292
  %v9347 = vadd.f32 %v9152, %v9297
  %v9348 = vadd.f32 %v9153, %v9300
  %v9349 = vadd.f32 %v9154, %v9305
  %v9350 = vadd.f32 %v9155, %v9308
  %v9351 = vadd.f32 %v9156, %v9313
  %v9352 = vadd.f32 %v9157, %v9316
  %v9353 = vadd.f32 %v9158, %v9321
  %v9354 = vadd.f32 %v9159, %v9324
  %v9355 = vadd.f32 %v9160, %v9329
  %v9356 = vadd.f32 %v9161, %v9332
  %v9357 = vadd.f32 %v9162, %v9337
  %v9358 = vadd.f32 %v9163, %v9340
  %v9359 = vld [vmem:[%s9164 + $0x8] sm:$0xff]
  %v9360 = vld [vmem:[%s9164 + $0x10] sm:$0xff]
  %v9361 = vld [vmem:[%s9164 + $0x18] sm:$0xff]
  %v9362 = vld [vmem:[%s9164 + $0x20] sm:$0xff]
  %v9363 = vld [vmem:[%s9164 + $0x38] sm:$0xff]
  %v9364 = vld [vmem:[%s9164 + $0x40] sm:$0xff]
  %v9365 = vld [vmem:[%s9164 + $0x48] sm:$0xff]
  %v9366 = vld [vmem:[%s9164 + $0x50] sm:$0xff]
  %v9367 = vld [vmem:[%s9164 + $0x68] sm:$0xff]
  %v9368 = vld [vmem:[%s9164 + $0x70] sm:$0xff]
  %v9369 = vld [vmem:[%s9164 + $0x78] sm:$0xff]
  %v9370 = vld [vmem:[%s9164 + $0x80] sm:$0xff]
  %v9371 = vld [vmem:[%s9164 + $0x98] sm:$0xff]
  %v9372 = vld [vmem:[%s9164 + $0xa0] sm:$0xff]
  %v9373 = vld [vmem:[%s9164 + $0xa8] sm:$0xff]
  %v9374 = vld [vmem:[%s9164 + $0xb0] sm:$0xff]
  %v9375 = vpack.c.bf16 %v9360, %v9359
  %v9376 = vpack.c.bf16 %v9362, %v9361
  %v9377 = vpack.c.bf16 %v9364, %v9363
  %v9378 = vpack.c.bf16 %v9366, %v9365
  %v9379 = vpack.c.bf16 %v9368, %v9367
  %v9380 = vpack.c.bf16 %v9370, %v9369
  %v9381 = vpack.c.bf16 %v9372, %v9371
  %v9382 = vpack.c.bf16 %v9374, %v9373
  %s9383 = scalar_lea.vmem %s5, 224
  %v9384 = vld [vmem:[%s9383] sm:$0xf]
  %v9385 = vld [vmem:[%s9383 + $0x4] sm:$0xf]
  %v9386 = vld [vmem:[%s9383 + $0x8] sm:$0xf]
  %v9387 = vld [vmem:[%s9383 + $0xc] sm:$0xf]
  %v9388 = vld [vmem:[%s9383 + $0x10] sm:$0xf]
  %v9389 = vld [vmem:[%s9383 + $0x14] sm:$0xf]
  %v9390 = vld [vmem:[%s9383 + $0x18] sm:$0xf]
  %v9391 = vld [vmem:[%s9383 + $0x1c] sm:$0xf]
  %v9400 = vunpack.c.l.b16 %v9384
  %v9401 = vunpack.c.l.b16 %v9385
  %v9402 = vunpack.c.l.b16 %v9386
  %v9403 = vunpack.c.l.b16 %v9387
  %v9404 = vunpack.c.l.b16 %v9388
  %v9405 = vunpack.c.l.b16 %v9389
  %v9406 = vunpack.c.l.b16 %v9390
  %v9407 = vunpack.c.l.b16 %v9391
  %v9408 = vpack.c.b16 %v9401, %v9400
  %v9409 = vpack.c.b16 %v9403, %v9402
  %v9410 = vpack.c.b16 %v9405, %v9404
  %v9411 = vpack.c.b16 %v9407, %v9406
  %v9417 = vsel %vm8006, %v9375, 0
  %v9420 = vsel %vm8006, %v9376, 0
  %v9423 = vsel %vm8006, %v9377, 0
  %v9426 = vsel %vm8006, %v9378, 0
  %v9429 = vsel %vm8006, %v9379, 0
  %v9432 = vsel %vm8006, %v9380, 0
  %v9435 = vsel %vm8006, %v9381, 0
  %v9438 = vsel %vm8006, %v9382, 0
  %9440 = vmatprep.subr.bf16.mxu0 0
  %9441 = vmatpush1.bf16.msra.mxu0 %v9408
  %9442 = vmatprep.subr.bf16.mxu0 0
  %9443 = vmatpush1.bf16.msra.mxu0 %v9409
  %9444 = vmatprep.subr.bf16.mxu0 0
  %9445 = vmatpush1.bf16.msra.mxu0 %v9410
  %9446 = vmatprep.subr.bf16.mxu0 0
  %9447 = vmatpush1.bf16.msra.mxu0 %v9411
  %9448 = vmatprep.subr.bf16.mxu0 0
  %9449 = vmatpush1.bf16.msra.mxu0 0
  %9450 = vmatprep.subr.bf16.mxu0 0
  %9451 = vmatpush1.bf16.msra.mxu0 0
  %9452 = vmatprep.subr.bf16.mxu0 0
  %9453 = vmatpush1.bf16.msra.mxu0 0
  %9454 = vmatprep.subr.bf16.mxu0 0
  %9455 = vmatpush1.bf16.msra.mxu0 0
  %9456 = vmatprep.subr.bf16.mxu0 0
  %9457 = vmatpush1.bf16.msra.mxu0 0
  %9458 = vmatprep.subr.bf16.mxu0 0
  %9459 = vmatpush1.bf16.msra.mxu0 0
  %9460 = vmatprep.subr.bf16.mxu0 0
  %9461 = vmatpush1.bf16.msra.mxu0 0
  %9462 = vmatprep.subr.bf16.mxu0 0
  %9463 = vmatpush1.bf16.msra.mxu0 0
  %9464 = vmatprep.subr.bf16.mxu0 0
  %9465 = vmatpush1.bf16.msra.mxu0 0
  %9466 = vmatprep.subr.bf16.mxu0 0
  %9467 = vmatpush1.bf16.msra.mxu0 0
  %9468 = vmatprep.subr.bf16.mxu0 0
  %9469 = vmatpush1.bf16.msra.mxu0 0
  %9470 = vmatprep.subr.bf16.mxu0 0
  %9471 = vmatpush1.bf16.msra.mxu0 0
  %9472 = vmatprep.mubr.bf16.mxu0 0
  %9473 = vmatmul.mubr.bf16.gmra.mrb[0].mxu0 %v9417
  %v9474 = vpop.f32.mrb[0].mxu0
  %v9475 = vadd.f32 0.0, %v9474
  %v9476 = vpop.f32.mrb[0].mxu0
  %v9477 = vpop.f32.mrb[0].mxu0
  %v9478 = vadd.f32 0.0, %v9477
  %v9479 = vpop.f32.mrb[0].mxu0
  %9480 = vmatprep.mubr.bf16.mxu0 0
  %9481 = vmatmul.mubr.bf16.gmra.mrb[0].mxu0 %v9420
  %v9482 = vpop.f32.mrb[0].mxu0
  %v9483 = vadd.f32 0.0, %v9482
  %v9484 = vpop.f32.mrb[0].mxu0
  %v9485 = vpop.f32.mrb[0].mxu0
  %v9486 = vadd.f32 0.0, %v9485
  %v9487 = vpop.f32.mrb[0].mxu0
  %9488 = vmatprep.mubr.bf16.mxu0 0
  %9489 = vmatmul.mubr.bf16.gmra.mrb[0].mxu0 %v9423
  %v9490 = vpop.f32.mrb[0].mxu0
  %v9491 = vadd.f32 0.0, %v9490
  %v9492 = vpop.f32.mrb[0].mxu0
  %v9493 = vpop.f32.mrb[0].mxu0
  %v9494 = vadd.f32 0.0, %v9493
  %v9495 = vpop.f32.mrb[0].mxu0
  %9496 = vmatprep.mubr.bf16.mxu0 0
  %9497 = vmatmul.mubr.bf16.gmra.mrb[0].mxu0 %v9426
  %v9498 = vpop.f32.mrb[0].mxu0
  %v9499 = vadd.f32 0.0, %v9498
  %v9500 = vpop.f32.mrb[0].mxu0
  %v9501 = vpop.f32.mrb[0].mxu0
  %v9502 = vadd.f32 0.0, %v9501
  %v9503 = vpop.f32.mrb[0].mxu0
  %9504 = vmatprep.mubr.bf16.mxu0 0
  %9505 = vmatmul.mubr.bf16.gmra.mrb[0].mxu0 %v9429
  %v9506 = vpop.f32.mrb[0].mxu0
  %v9507 = vadd.f32 0.0, %v9506
  %v9508 = vpop.f32.mrb[0].mxu0
  %v9509 = vpop.f32.mrb[0].mxu0
  %v9510 = vadd.f32 0.0, %v9509
  %v9511 = vpop.f32.mrb[0].mxu0
  %9512 = vmatprep.mubr.bf16.mxu0 0
  %9513 = vmatmul.mubr.bf16.gmra.mrb[0].mxu0 %v9432
  %v9514 = vpop.f32.mrb[0].mxu0
  %v9515 = vadd.f32 0.0, %v9514
  %v9516 = vpop.f32.mrb[0].mxu0
  %v9517 = vpop.f32.mrb[0].mxu0
  %v9518 = vadd.f32 0.0, %v9517
  %v9519 = vpop.f32.mrb[0].mxu0
  %9520 = vmatprep.mubr.bf16.mxu0 0
  %9521 = vmatmul.mubr.bf16.gmra.mrb[0].mxu0 %v9435
  %v9522 = vpop.f32.mrb[0].mxu0
  %v9523 = vadd.f32 0.0, %v9522
  %v9524 = vpop.f32.mrb[0].mxu0
  %v9525 = vpop.f32.mrb[0].mxu0
  %v9526 = vadd.f32 0.0, %v9525
  %v9527 = vpop.f32.mrb[0].mxu0
  %9528 = vmatprep.mubr.bf16.mxu0 0
  %9529 = vmatmul.mubr.bf16.gmra.mrb[0].mxu0 %v9438
  %v9530 = vpop.f32.mrb[0].mxu0
  %v9531 = vadd.f32 0.0, %v9530
  %v9532 = vpop.f32.mrb[0].mxu0
  %v9533 = vpop.f32.mrb[0].mxu0
  %v9534 = vadd.f32 0.0, %v9533
  %v9535 = vpop.f32.mrb[0].mxu0
  %9536 = vdwg.mxu0
  %v9537 = vadd.f32 %v9343, %v9475
  %v9538 = vadd.f32 %v9344, %v9478
  %v9539 = vadd.f32 %v9345, %v9483
  %v9540 = vadd.f32 %v9346, %v9486
  %v9541 = vadd.f32 %v9347, %v9491
  %v9542 = vadd.f32 %v9348, %v9494
  %v9543 = vadd.f32 %v9349, %v9499
  %v9544 = vadd.f32 %v9350, %v9502
  %v9545 = vadd.f32 %v9351, %v9507
  %v9546 = vadd.f32 %v9352, %v9510
  %v9547 = vadd.f32 %v9353, %v9515
  %v9548 = vadd.f32 %v9354, %v9518
  %v9549 = vadd.f32 %v9355, %v9523
  %v9550 = vadd.f32 %v9356, %v9526
  %v9551 = vadd.f32 %v9357, %v9531
  %v9552 = vadd.f32 %v9358, %v9534
  %v9553 = vld [vmem:[%s9164 + $0x10] sm:$0xff]
  %v9554 = vld [vmem:[%s9164 + $0x18] sm:$0xff]
  %v9555 = vld [vmem:[%s9164 + $0x20] sm:$0xff]
  %v9556 = vld [vmem:[%s9164 + $0x28] sm:$0xff]
  %v9557 = vld [vmem:[%s9164 + $0x40] sm:$0xff]
  %v9558 = vld [vmem:[%s9164 + $0x48] sm:$0xff]
  %v9559 = vld [vmem:[%s9164 + $0x50] sm:$0xff]
  %v9560 = vld [vmem:[%s9164 + $0x58] sm:$0xff]
  %v9561 = vld [vmem:[%s9164 + $0x70] sm:$0xff]
  %v9562 = vld [vmem:[%s9164 + $0x78] sm:$0xff]
  %v9563 = vld [vmem:[%s9164 + $0x80] sm:$0xff]
  %v9564 = vld [vmem:[%s9164 + $0x88] sm:$0xff]
  %v9565 = vld [vmem:[%s9164 + $0xa0] sm:$0xff]
  %v9566 = vld [vmem:[%s9164 + $0xa8] sm:$0xff]
  %v9567 = vld [vmem:[%s9164 + $0xb0] sm:$0xff]
  %v9568 = vld [vmem:[%s9164 + $0xb8] sm:$0xff]
  %v9569 = vpack.c.bf16 %v9554, %v9553
  %v9570 = vpack.c.bf16 %v9556, %v9555
  %v9571 = vpack.c.bf16 %v9558, %v9557
  %v9572 = vpack.c.bf16 %v9560, %v9559
  %v9573 = vpack.c.bf16 %v9562, %v9561
  %v9574 = vpack.c.bf16 %v9564, %v9563
  %v9575 = vpack.c.bf16 %v9566, %v9565
  %v9576 = vpack.c.bf16 %v9568, %v9567
  %s9577 = scalar_lea.vmem %s5, 256
  %v9578 = vld [vmem:[%s9577] sm:$0xf]
  %v9579 = vld [vmem:[%s9577 + $0x4] sm:$0xf]
  %v9580 = vld [vmem:[%s9577 + $0x8] sm:$0xf]
  %v9581 = vld [vmem:[%s9577 + $0xc] sm:$0xf]
  %v9582 = vld [vmem:[%s9577 + $0x10] sm:$0xf]
  %v9583 = vld [vmem:[%s9577 + $0x14] sm:$0xf]
  %v9584 = vld [vmem:[%s9577 + $0x18] sm:$0xf]
  %v9585 = vld [vmem:[%s9577 + $0x1c] sm:$0xf]
  %v9594 = vunpack.c.l.b16 %v9578
  %v9595 = vunpack.c.l.b16 %v9579
  %v9596 = vunpack.c.l.b16 %v9580
  %v9597 = vunpack.c.l.b16 %v9581
  %v9598 = vunpack.c.l.b16 %v9582
  %v9599 = vunpack.c.l.b16 %v9583
  %v9600 = vunpack.c.l.b16 %v9584
  %v9601 = vunpack.c.l.b16 %v9585
  %v9602 = vpack.c.b16 %v9595, %v9594
  %v9603 = vpack.c.b16 %v9597, %v9596
  %v9604 = vpack.c.b16 %v9599, %v9598
  %v9605 = vpack.c.b16 %v9601, %v9600
  %v9611 = vsel %vm8006, %v9569, 0
  %v9614 = vsel %vm8006, %v9570, 0
  %v9617 = vsel %vm8006, %v9571, 0
  %v9620 = vsel %vm8006, %v9572, 0
  %v9623 = vsel %vm8006, %v9573, 0
  %v9626 = vsel %vm8006, %v9574, 0
  %v9629 = vsel %vm8006, %v9575, 0
  %v9632 = vsel %vm8006, %v9576, 0
  %9634 = vmatprep.subr.bf16.mxu0 0
  %9635 = vmatpush1.bf16.msra.mxu0 %v9602
  %9636 = vmatprep.subr.bf16.mxu0 0
  %9637 = vmatpush1.bf16.msra.mxu0 %v9603
  %9638 = vmatprep.subr.bf16.mxu0 0
  %9639 = vmatpush1.bf16.msra.mxu0 %v9604
  %9640 = vmatprep.subr.bf16.mxu0 0
  %9641 = vmatpush1.bf16.msra.mxu0 %v9605
  %9642 = vmatprep.subr.bf16.mxu0 0
  %9643 = vmatpush1.bf16.msra.mxu0 0
  %9644 = vmatprep.subr.bf16.mxu0 0
  %9645 = vmatpush1.bf16.msra.mxu0 0
  %9646 = vmatprep.subr.bf16.mxu0 0
  %9647 = vmatpush1.bf16.msra.mxu0 0
  %9648 = vmatprep.subr.bf16.mxu0 0
  %9649 = vmatpush1.bf16.msra.mxu0 0
  %9650 = vmatprep.subr.bf16.mxu0 0
  %9651 = vmatpush1.bf16.msra.mxu0 0
  %9652 = vmatprep.subr.bf16.mxu0 0
  %9653 = vmatpush1.bf16.msra.mxu0 0
  %9654 = vmatprep.subr.bf16.mxu0 0
  %9655 = vmatpush1.bf16.msra.mxu0 0
  %9656 = vmatprep.subr.bf16.mxu0 0
  %9657 = vmatpush1.bf16.msra.mxu0 0
  %9658 = vmatprep.subr.bf16.mxu0 0
  %9659 = vmatpush1.bf16.msra.mxu0 0
  %9660 = vmatprep.subr.bf16.mxu0 0
  %9661 = vmatpush1.bf16.msra.mxu0 0
  %9662 = vmatprep.subr.bf16.mxu0 0
  %9663 = vmatpush1.bf16.msra.mxu0 0
  %9664 = vmatprep.subr.bf16.mxu0 0
  %9665 = vmatpush1.bf16.msra.mxu0 0
  %9666 = vmatprep.mubr.bf16.mxu0 0
  %9667 = vmatmul.mubr.bf16.gmra.mrb[0].mxu0 %v9611
  %v9668 = vpop.f32.mrb[0].mxu0
  %v9669 = vadd.f32 0.0, %v9668
  %v9670 = vpop.f32.mrb[0].mxu0
  %v9671 = vpop.f32.mrb[0].mxu0
  %v9672 = vadd.f32 0.0, %v9671
  %v9673 = vpop.f32.mrb[0].mxu0
  %9674 = vmatprep.mubr.bf16.mxu0 0
  %9675 = vmatmul.mubr.bf16.gmra.mrb[0].mxu0 %v9614
  %v9676 = vpop.f32.mrb[0].mxu0
  %v9677 = vadd.f32 0.0, %v9676
  %v9678 = vpop.f32.mrb[0].mxu0
  %v9679 = vpop.f32.mrb[0].mxu0
  %v9680 = vadd.f32 0.0, %v9679
  %v9681 = vpop.f32.mrb[0].mxu0
  %9682 = vmatprep.mubr.bf16.mxu0 0
  %9683 = vmatmul.mubr.bf16.gmra.mrb[0].mxu0 %v9617
  %v9684 = vpop.f32.mrb[0].mxu0
  %v9685 = vadd.f32 0.0, %v9684
  %v9686 = vpop.f32.mrb[0].mxu0
  %v9687 = vpop.f32.mrb[0].mxu0
  %v9688 = vadd.f32 0.0, %v9687
  %v9689 = vpop.f32.mrb[0].mxu0
  %9690 = vmatprep.mubr.bf16.mxu0 0
  %9691 = vmatmul.mubr.bf16.gmra.mrb[0].mxu0 %v9620
  %v9692 = vpop.f32.mrb[0].mxu0
  %v9693 = vadd.f32 0.0, %v9692
  %v9694 = vpop.f32.mrb[0].mxu0
  %v9695 = vpop.f32.mrb[0].mxu0
  %v9696 = vadd.f32 0.0, %v9695
  %v9697 = vpop.f32.mrb[0].mxu0
  %9698 = vmatprep.mubr.bf16.mxu0 0
  %9699 = vmatmul.mubr.bf16.gmra.mrb[0].mxu0 %v9623
  %v9700 = vpop.f32.mrb[0].mxu0
  %v9701 = vadd.f32 0.0, %v9700
  %v9702 = vpop.f32.mrb[0].mxu0
  %v9703 = vpop.f32.mrb[0].mxu0
  %v9704 = vadd.f32 0.0, %v9703
  %v9705 = vpop.f32.mrb[0].mxu0
  %9706 = vmatprep.mubr.bf16.mxu0 0
  %9707 = vmatmul.mubr.bf16.gmra.mrb[0].mxu0 %v9626
  %v9708 = vpop.f32.mrb[0].mxu0
  %v9709 = vadd.f32 0.0, %v9708
  %v9710 = vpop.f32.mrb[0].mxu0
  %v9711 = vpop.f32.mrb[0].mxu0
  %v9712 = vadd.f32 0.0, %v9711
  %v9713 = vpop.f32.mrb[0].mxu0
  %9714 = vmatprep.mubr.bf16.mxu0 0
  %9715 = vmatmul.mubr.bf16.gmra.mrb[0].mxu0 %v9629
  %v9716 = vpop.f32.mrb[0].mxu0
  %v9717 = vadd.f32 0.0, %v9716
  %v9718 = vpop.f32.mrb[0].mxu0
  %v9719 = vpop.f32.mrb[0].mxu0
  %v9720 = vadd.f32 0.0, %v9719
  %v9721 = vpop.f32.mrb[0].mxu0
  %9722 = vmatprep.mubr.bf16.mxu0 0
  %9723 = vmatmul.mubr.bf16.gmra.mrb[0].mxu0 %v9632
  %v9724 = vpop.f32.mrb[0].mxu0
  %v9725 = vadd.f32 0.0, %v9724
  %v9726 = vpop.f32.mrb[0].mxu0
  %v9727 = vpop.f32.mrb[0].mxu0
  %v9728 = vadd.f32 0.0, %v9727
  %v9729 = vpop.f32.mrb[0].mxu0
  %9730 = vdwg.mxu0
  %v9731 = vadd.f32 %v9537, %v9669
  %v9732 = vadd.f32 %v9538, %v9672
  %v9733 = vadd.f32 %v9539, %v9677
  %v9734 = vadd.f32 %v9540, %v9680
  %v9735 = vadd.f32 %v9541, %v9685
  %v9736 = vadd.f32 %v9542, %v9688
  %v9737 = vadd.f32 %v9543, %v9693
  %v9738 = vadd.f32 %v9544, %v9696
  %v9739 = vadd.f32 %v9545, %v9701
  %v9740 = vadd.f32 %v9546, %v9704
  %v9741 = vadd.f32 %v9547, %v9709
  %v9742 = vadd.f32 %v9548, %v9712
  %v9743 = vadd.f32 %v9549, %v9717
  %v9744 = vadd.f32 %v9550, %v9720
  %v9745 = vadd.f32 %v9551, %v9725
  %v9746 = vadd.f32 %v9552, %v9728
  %v9747 = vld [vmem:[%s6] sm:$0x1]
  %v9749 = vlaneseq
  %v9750 = vshrl.u32 %v9749, 7
  %v9751 = vsub.s32 0, %v9750
  %v9752 = vrot.slane %v9747, %v9751
  %v9754 = vadd.f32 %v9731, %v9752
  %v9755 = vadd.f32 %v9732, %v9752
  %v9756 = vadd.f32 %v9733, %v9752
  %v9757 = vadd.f32 %v9734, %v9752
  %v9758 = vadd.f32 %v9735, %v9752
  %v9759 = vadd.f32 %v9736, %v9752
  %v9760 = vadd.f32 %v9737, %v9752
  %v9761 = vadd.f32 %v9738, %v9752
  %v9762 = vadd.f32 %v9739, %v9752
  %v9763 = vadd.f32 %v9740, %v9752
  %v9764 = vadd.f32 %v9741, %v9752
  %v9765 = vadd.f32 %v9742, %v9752
  %v9766 = vadd.f32 %v9743, %v9752
  %v9767 = vadd.f32 %v9744, %v9752
  %v9768 = vadd.f32 %v9745, %v9752
  %v9769 = vadd.f32 %v9746, %v9752
  %v9770 = vmax.f32 %v9754, 0.0
  %v9771 = vmax.f32 %v9755, 0.0
  %v9772 = vmax.f32 %v9756, 0.0
  %v9773 = vmax.f32 %v9757, 0.0
  %v9774 = vmax.f32 %v9758, 0.0
  %v9775 = vmax.f32 %v9759, 0.0
  %v9776 = vmax.f32 %v9760, 0.0
  %v9777 = vmax.f32 %v9761, 0.0
  %v9778 = vmax.f32 %v9762, 0.0
  %v9779 = vmax.f32 %v9763, 0.0
  %v9780 = vmax.f32 %v9764, 0.0
  %v9781 = vmax.f32 %v9765, 0.0
  %v9782 = vmax.f32 %v9766, 0.0
  %v9783 = vmax.f32 %v9767, 0.0
  %v9784 = vmax.f32 %v9768, 0.0
  %v9785 = vmax.f32 %v9769, 0.0
  %v9786 = vmax.f32 %v9770, %v9774
  %v9787 = vmax.f32 %v9771, %v9775
  %v9788 = vmax.f32 %v9772, %v9776
  %v9789 = vmax.f32 %v9773, %v9777
  %v9790 = vmax.f32 %v9778, %v9782
  %v9791 = vmax.f32 %v9779, %v9783
  %v9792 = vmax.f32 %v9780, %v9784
  %v9793 = vmax.f32 %v9781, %v9785
  %v9794 = vmax.f32 %v9786, %v9787
  %v9795 = vmax.f32 %v9788, %v9789
  %v9796 = vmax.f32 %v9790, %v9791
  %v9797 = vmax.f32 %v9792, %v9793
  %9798 = vst [vmem:[#allocation4] sm:$0xff] 0.0
  %9799 = vst [vmem:[#allocation4 + $0x8] sm:$0xff] 0.0
  %9800 = vst [vmem:[#allocation4 + $0x10] sm:$0xff] 0.0
  %9801 = vst [vmem:[#allocation4 + $0x18] sm:$0xff] 0.0
  %s9802 = scalar_lea.vmem [#allocation4], 96
  %9803 = vst [vmem:[%s9802] sm:$0xff] 0.0
  %9804 = vst [vmem:[%s9802 + $0x8] sm:$0xff] 0.0
  %9805 = vst [vmem:[%s9802 + $0x10] sm:$0xff] 0.0
  %9806 = vst [vmem:[%s9802 + $0x18] sm:$0xff] 0.0
  %s9807 = scalar_lea.vmem [#allocation4], 32
  %9808 = vst [vmem:[%s9807] sm:$0xff] 0.0
  %9809 = vst [vmem:[%s9807 + $0x20] sm:$0xff] 0.0
  %9810 = vst [vmem:[%s9807 + $0x18] sm:$0xff] 0.0
  %9811 = vst [vmem:[%s9807 + $0x38] sm:$0xff] 0.0
  %9812 = vst [vmem:[%s9807 + $0x8] sm:$0xff] %v9794
  %9813 = vst [vmem:[%s9807 + $0x10] sm:$0xff] %v9795
  %9814 = vst [vmem:[%s9807 + $0x28] sm:$0xff] %v9796
  %9815 = vst [vmem:[%s9807 + $0x30] sm:$0xff] %v9797
  %v9816 = vld [vmem:[#allocation4] sm:$0xff]
  %v9817 = vld [vmem:[#allocation4 + $0x8] sm:$0xff]
  %v9818 = vld [vmem:[#allocation4 + $0x20] sm:$0xff]
  %v9819 = vld [vmem:[#allocation4 + $0x28] sm:$0xff]
  %v9820 = vpack.c.bf16 %v9817, %v9816
  %v9821 = vpack.c.bf16 %v9819, %v9818
  %v9822 = vld [vmem:[%s7] sm:$0xff]
  %v9823 = vld [vmem:[%s7 + $0x8] sm:$0xff]
  %v9824 = vld [vmem:[%s7 + $0x10] sm:$0xff]
  %v9825 = vld [vmem:[%s7 + $0x18] sm:$0xff]
  %v9826 = vld [vmem:[%s7 + $0x20] sm:$0xff]
  %v9827 = vld [vmem:[%s7 + $0x28] sm:$0xff]
  %v9828 = vld [vmem:[%s7 + $0x30] sm:$0xff]
  %v9829 = vld [vmem:[%s7 + $0x38] sm:$0xff]
  %v9830 = vld [vmem:[%s7 + $0x40] sm:$0xff]
  %v9831 = vld [vmem:[%s7 + $0x48] sm:$0xff]
  %v9832 = vld [vmem:[%s7 + $0x50] sm:$0xff]
  %v9833 = vld [vmem:[%s7 + $0x58] sm:$0xff]
  %v9834 = vld [vmem:[%s7 + $0x60] sm:$0xff]
  %v9835 = vld [vmem:[%s7 + $0x68] sm:$0xff]
  %v9836 = vld [vmem:[%s7 + $0x70] sm:$0xff]
  %v9837 = vld [vmem:[%s7 + $0x78] sm:$0xff]
  %v9838 = vld [vmem:[#allocation4 + $0x10] sm:$0xff]
  %v9839 = vld [vmem:[#allocation4 + $0x30] sm:$0xff]
  %v9840 = vpack.c.bf16 %v9838, %v9817
  %v9841 = vpack.c.bf16 %v9839, %v9819
  %s9842 = scalar_lea.vmem %s7, 128
  %v9843 = vld [vmem:[%s9842] sm:$0xff]
  %v9844 = vld [vmem:[%s9842 + $0x8] sm:$0xff]
  %v9845 = vld [vmem:[%s9842 + $0x10] sm:$0xff]
  %v9846 = vld [vmem:[%s9842 + $0x18] sm:$0xff]
  %v9847 = vld [vmem:[%s9842 + $0x20] sm:$0xff]
  %v9848 = vld [vmem:[%s9842 + $0x28] sm:$0xff]
  %v9849 = vld [vmem:[%s9842 + $0x30] sm:$0xff]
  %v9850 = vld [vmem:[%s9842 + $0x38] sm:$0xff]
  %v9851 = vld [vmem:[%s9842 + $0x40] sm:$0xff]
  %v9852 = vld [vmem:[%s9842 + $0x48] sm:$0xff]
  %v9853 = vld [vmem:[%s9842 + $0x50] sm:$0xff]
  %v9854 = vld [vmem:[%s9842 + $0x58] sm:$0xff]
  %v9855 = vld [vmem:[%s9842 + $0x60] sm:$0xff]
  %v9856 = vld [vmem:[%s9842 + $0x68] sm:$0xff]
  %v9857 = vld [vmem:[%s9842 + $0x70] sm:$0xff]
  %v9858 = vld [vmem:[%s9842 + $0x78] sm:$0xff]
  %v9875 = vunpack.c.l.b16 %v9843
  %v9876 = vunpack.c.h.b16 %v9843
  %v9877 = vunpack.c.l.b16 %v9844
  %v9878 = vunpack.c.h.b16 %v9844
  %v9879 = vunpack.c.l.b16 %v9845
  %v9880 = vunpack.c.h.b16 %v9845
  %v9881 = vunpack.c.l.b16 %v9846
  %v9882 = vunpack.c.h.b16 %v9846
  %v9883 = vunpack.c.l.b16 %v9847
  %v9884 = vunpack.c.h.b16 %v9847
  %v9885 = vunpack.c.l.b16 %v9848
  %v9886 = vunpack.c.h.b16 %v9848
  %v9887 = vunpack.c.l.b16 %v9849
  %v9888 = vunpack.c.h.b16 %v9849
  %v9889 = vunpack.c.l.b16 %v9850
  %v9890 = vunpack.c.h.b16 %v9850
  %v9891 = vunpack.c.l.b16 %v9851
  %v9892 = vunpack.c.h.b16 %v9851
  %v9893 = vunpack.c.l.b16 %v9852
  %v9894 = vunpack.c.h.b16 %v9852
  %v9895 = vunpack.c.l.b16 %v9853
  %v9896 = vunpack.c.h.b16 %v9853
  %v9897 = vunpack.c.l.b16 %v9854
  %v9898 = vunpack.c.h.b16 %v9854
  %v9899 = vunpack.c.l.b16 %v9855
  %v9900 = vunpack.c.h.b16 %v9855
  %v9901 = vunpack.c.l.b16 %v9856
  %v9902 = vunpack.c.h.b16 %v9856
  %v9903 = vunpack.c.l.b16 %v9857
  %v9904 = vunpack.c.h.b16 %v9857
  %v9905 = vunpack.c.l.b16 %v9858
  %v9906 = vunpack.c.h.b16 %v9858
  %v9907 = vpack.c.b16 %v9877, %v9875
  %v9908 = vpack.c.b16 %v9878, %v9876
  %v9909 = vpack.c.b16 %v9881, %v9879
  %v9910 = vpack.c.b16 %v9882, %v9880
  %v9911 = vpack.c.b16 %v9885, %v9883
  %v9912 = vpack.c.b16 %v9886, %v9884
  %v9913 = vpack.c.b16 %v9889, %v9887
  %v9914 = vpack.c.b16 %v9890, %v9888
  %v9915 = vpack.c.b16 %v9893, %v9891
  %v9916 = vpack.c.b16 %v9894, %v9892
  %v9917 = vpack.c.b16 %v9897, %v9895
  %v9918 = vpack.c.b16 %v9898, %v9896
  %v9919 = vpack.c.b16 %v9901, %v9899
  %v9920 = vpack.c.b16 %v9902, %v9900
  %v9921 = vpack.c.b16 %v9905, %v9903
  %v9922 = vpack.c.b16 %v9906, %v9904
  %9939 = vmatprep.subr.bf16.mxu0 %v9908
  %9940 = vmatpush1.bf16.msra.mxu0 %v9907
  %9941 = vmatprep.subr.bf16.mxu0 %v9910
  %9942 = vmatpush1.bf16.msra.mxu0 %v9909
  %9943 = vmatprep.subr.bf16.mxu0 %v9912
  %9944 = vmatpush1.bf16.msra.mxu0 %v9911
  %9945 = vmatprep.subr.bf16.mxu0 %v9914
  %9946 = vmatpush1.bf16.msra.mxu0 %v9913
  %9947 = vmatprep.subr.bf16.mxu0 %v9916
  %9948 = vmatpush1.bf16.msra.mxu0 %v9915
  %9949 = vmatprep.subr.bf16.mxu0 %v9918
  %9950 = vmatpush1.bf16.msra.mxu0 %v9917
  %9951 = vmatprep.subr.bf16.mxu0 %v9920
  %9952 = vmatpush1.bf16.msra.mxu0 %v9919
  %9953 = vmatprep.subr.bf16.mxu0 %v9922
  %9954 = vmatpush1.bf16.msra.mxu0 %v9921
  %9955 = vmatprep.subr.bf16.mxu0 0
  %9956 = vmatpush1.bf16.msra.mxu0 0
  %9957 = vmatprep.subr.bf16.mxu0 0
  %9958 = vmatpush1.bf16.msra.mxu0 0
  %9959 = vmatprep.subr.bf16.mxu0 0
  %9960 = vmatpush1.bf16.msra.mxu0 0
  %9961 = vmatprep.subr.bf16.mxu0 0
  %9962 = vmatpush1.bf16.msra.mxu0 0
  %9963 = vmatprep.subr.bf16.mxu0 0
  %9964 = vmatpush1.bf16.msra.mxu0 0
  %9965 = vmatprep.subr.bf16.mxu0 0
  %9966 = vmatpush1.bf16.msra.mxu0 0
  %9967 = vmatprep.subr.bf16.mxu0 0
  %9968 = vmatpush1.bf16.msra.mxu0 0
  %9969 = vmatprep.subr.bf16.mxu0 0
  %9970 = vmatpush1.bf16.msra.mxu0 0
  %9971 = vmatprep.mubr.bf16.mxu0 0
  %9972 = vmatmul.mubr.bf16.gmra.mrb[0].mxu0 %v9840
  %v9973 = vpop.f32.mrb[0].mxu0
  %v9974 = vadd.f32 0.0, %v9973
  %v9975 = vpop.f32.mrb[0].mxu0
  %v9976 = vadd.f32 0.0, %v9975
  %v9977 = vpop.f32.mrb[0].mxu0
  %v9978 = vadd.f32 0.0, %v9977
  %v9979 = vpop.f32.mrb[0].mxu0
  %v9980 = vadd.f32 0.0, %v9979
  %9981 = vmatprep.mubr.bf16.mxu0 0
  %9982 = vmatmul.mubr.bf16.gmra.mrb[0].mxu0 %v9841
  %v9983 = vpop.f32.mrb[0].mxu0
  %v9984 = vadd.f32 0.0, %v9983
  %v9985 = vpop.f32.mrb[0].mxu0
  %v9986 = vadd.f32 0.0, %v9985
  %v9987 = vpop.f32.mrb[0].mxu0
  %v9988 = vadd.f32 0.0, %v9987
  %v9989 = vpop.f32.mrb[0].mxu0
  %v9990 = vadd.f32 0.0, %v9989
  %9991 = vdwg.mxu0
  %v10008 = vunpack.c.l.b16 %v9822
  %v10009 = vunpack.c.h.b16 %v9822
  %v10010 = vunpack.c.l.b16 %v9823
  %v10011 = vunpack.c.h.b16 %v9823
  %v10012 = vunpack.c.l.b16 %v9824
  %v10013 = vunpack.c.h.b16 %v9824
  %v10014 = vunpack.c.l.b16 %v9825
  %v10015 = vunpack.c.h.b16 %v9825
  %v10016 = vunpack.c.l.b16 %v9826
  %v10017 = vunpack.c.h.b16 %v9826
  %v10018 = vunpack.c.l.b16 %v9827
  %v10019 = vunpack.c.h.b16 %v9827
  %v10020 = vunpack.c.l.b16 %v9828
  %v10021 = vunpack.c.h.b16 %v9828
  %v10022 = vunpack.c.l.b16 %v9829
  %v10023 = vunpack.c.h.b16 %v9829
  %v10024 = vunpack.c.l.b16 %v9830
  %v10025 = vunpack.c.h.b16 %v9830
  %v10026 = vunpack.c.l.b16 %v9831
  %v10027 = vunpack.c.h.b16 %v9831
  %v10028 = vunpack.c.l.b16 %v9832
  %v10029 = vunpack.c.h.b16 %v9832
  %v10030 = vunpack.c.l.b16 %v9833
  %v10031 = vunpack.c.h.b16 %v9833
  %v10032 = vunpack.c.l.b16 %v9834
  %v10033 = vunpack.c.h.b16 %v9834
  %v10034 = vunpack.c.l.b16 %v9835
  %v10035 = vunpack.c.h.b16 %v9835
  %v10036 = vunpack.c.l.b16 %v9836
  %v10037 = vunpack.c.h.b16 %v9836
  %v10038 = vunpack.c.l.b16 %v9837
  %v10039 = vunpack.c.h.b16 %v9837
  %v10040 = vpack.c.b16 %v10010, %v10008
  %v10041 = vpack.c.b16 %v10011, %v10009
  %v10042 = vpack.c.b16 %v10014, %v10012
  %v10043 = vpack.c.b16 %v10015, %v10013
  %v10044 = vpack.c.b16 %v10018, %v10016
  %v10045 = vpack.c.b16 %v10019, %v10017
  %v10046 = vpack.c.b16 %v10022, %v10020
  %v10047 = vpack.c.b16 %v10023, %v10021
  %v10048 = vpack.c.b16 %v10026, %v10024
  %v10049 = vpack.c.b16 %v10027, %v10025
  %v10050 = vpack.c.b16 %v10030, %v10028
  %v10051 = vpack.c.b16 %v10031, %v10029
  %v10052 = vpack.c.b16 %v10034, %v10032
  %v10053 = vpack.c.b16 %v10035, %v10033
  %v10054 = vpack.c.b16 %v10038, %v10036
  %v10055 = vpack.c.b16 %v10039, %v10037
  %10072 = vmatprep.subr.bf16.mxu0 %v10041
  %10073 = vmatpush1.bf16.msra.mxu0 %v10040
  %10074 = vmatprep.subr.bf16.mxu0 %v10043
  %10075 = vmatpush1.bf16.msra.mxu0 %v10042
  %10076 = vmatprep.subr.bf16.mxu0 %v10045
  %10077 = vmatpush1.bf16.msra.mxu0 %v10044
  %10078 = vmatprep.subr.bf16.mxu0 %v10047
  %10079 = vmatpush1.bf16.msra.mxu0 %v10046
  %10080 = vmatprep.subr.bf16.mxu0 %v10049
  %10081 = vmatpush1.bf16.msra.mxu0 %v10048
  %10082 = vmatprep.subr.bf16.mxu0 %v10051
  %10083 = vmatpush1.bf16.msra.mxu0 %v10050
  %10084 = vmatprep.subr.bf16.mxu0 %v10053
  %10085 = vmatpush1.bf16.msra.mxu0 %v10052
  %10086 = vmatprep.subr.bf16.mxu0 %v10055
  %10087 = vmatpush1.bf16.msra.mxu0 %v10054
  %10088 = vmatprep.subr.bf16.mxu0 0
  %10089 = vmatpush1.bf16.msra.mxu0 0
  %10090 = vmatprep.subr.bf16.mxu0 0
  %10091 = vmatpush1.bf16.msra.mxu0 0
  %10092 = vmatprep.subr.bf16.mxu0 0
  %10093 = vmatpush1.bf16.msra.mxu0 0
  %10094 = vmatprep.subr.bf16.mxu0 0
  %10095 = vmatpush1.bf16.msra.mxu0 0
  %10096 = vmatprep.subr.bf16.mxu0 0
  %10097 = vmatpush1.bf16.msra.mxu0 0
  %10098 = vmatprep.subr.bf16.mxu0 0
  %10099 = vmatpush1.bf16.msra.mxu0 0
  %10100 = vmatprep.subr.bf16.mxu0 0
  %10101 = vmatpush1.bf16.msra.mxu0 0
  %10102 = vmatprep.subr.bf16.mxu0 0
  %10103 = vmatpush1.bf16.msra.mxu0 0
  %10104 = vmatprep.mubr.bf16.mxu0 0
  %10105 = vmatmul.mubr.bf16.gmra.mrb[0].mxu0 %v9820
  %v10106 = vpop.f32.mrb[0].mxu0
  %v10107 = vadd.f32 %v9974, %v10106
  %v10108 = vpop.f32.mrb[0].mxu0
  %v10109 = vadd.f32 %v9976, %v10108
  %v10110 = vpop.f32.mrb[0].mxu0
  %v10111 = vadd.f32 %v9978, %v10110
  %v10112 = vpop.f32.mrb[0].mxu0
  %v10113 = vadd.f32 %v9980, %v10112
  %10114 = vmatprep.mubr.bf16.mxu0 0
  %10115 = vmatmul.mubr.bf16.gmra.mrb[0].mxu0 %v9821
  %v10116 = vpop.f32.mrb[0].mxu0
  %v10117 = vadd.f32 %v9984, %v10116
  %v10118 = vpop.f32.mrb[0].mxu0
  %v10119 = vadd.f32 %v9986, %v10118
  %v10120 = vpop.f32.mrb[0].mxu0
  %v10121 = vadd.f32 %v9988, %v10120
  %v10122 = vpop.f32.mrb[0].mxu0
  %v10123 = vadd.f32 %v9990, %v10122
  %10124 = vdwg.mxu0
  %v10125 = vld [vmem:[#allocation4 + $0x10] sm:$0xff]
  %v10126 = vld [vmem:[#allocation4 + $0x18] sm:$0xff]
  %v10127 = vld [vmem:[#allocation4 + $0x30] sm:$0xff]
  %v10128 = vld [vmem:[#allocation4 + $0x38] sm:$0xff]
  %v10129 = vpack.c.bf16 %v10126, %v10125
  %v10130 = vpack.c.bf16 %v10128, %v10127
  %s10131 = scalar_lea.vmem %s7, 256
  %v10132 = vld [vmem:[%s10131] sm:$0xff]
  %v10133 = vld [vmem:[%s10131 + $0x8] sm:$0xff]
  %v10134 = vld [vmem:[%s10131 + $0x10] sm:$0xff]
  %v10135 = vld [vmem:[%s10131 + $0x18] sm:$0xff]
  %v10136 = vld [vmem:[%s10131 + $0x20] sm:$0xff]
  %v10137 = vld [vmem:[%s10131 + $0x28] sm:$0xff]
  %v10138 = vld [vmem:[%s10131 + $0x30] sm:$0xff]
  %v10139 = vld [vmem:[%s10131 + $0x38] sm:$0xff]
  %v10140 = vld [vmem:[%s10131 + $0x40] sm:$0xff]
  %v10141 = vld [vmem:[%s10131 + $0x48] sm:$0xff]
  %v10142 = vld [vmem:[%s10131 + $0x50] sm:$0xff]
  %v10143 = vld [vmem:[%s10131 + $0x58] sm:$0xff]
  %v10144 = vld [vmem:[%s10131 + $0x60] sm:$0xff]
  %v10145 = vld [vmem:[%s10131 + $0x68] sm:$0xff]
  %v10146 = vld [vmem:[%s10131 + $0x70] sm:$0xff]
  %v10147 = vld [vmem:[%s10131 + $0x78] sm:$0xff]
  %v10164 = vunpack.c.l.b16 %v10132
  %v10165 = vunpack.c.h.b16 %v10132
  %v10166 = vunpack.c.l.b16 %v10133
  %v10167 = vunpack.c.h.b16 %v10133
  %v10168 = vunpack.c.l.b16 %v10134
  %v10169 = vunpack.c.h.b16 %v10134
  %v10170 = vunpack.c.l.b16 %v10135
  %v10171 = vunpack.c.h.b16 %v10135
  %v10172 = vunpack.c.l.b16 %v10136
  %v10173 = vunpack.c.h.b16 %v10136
  %v10174 = vunpack.c.l.b16 %v10137
  %v10175 = vunpack.c.h.b16 %v10137
  %v10176 = vunpack.c.l.b16 %v10138
  %v10177 = vunpack.c.h.b16 %v10138
  %v10178 = vunpack.c.l.b16 %v10139
  %v10179 = vunpack.c.h.b16 %v10139
  %v10180 = vunpack.c.l.b16 %v10140
  %v10181 = vunpack.c.h.b16 %v10140
  %v10182 = vunpack.c.l.b16 %v10141
  %v10183 = vunpack.c.h.b16 %v10141
  %v10184 = vunpack.c.l.b16 %v10142
  %v10185 = vunpack.c.h.b16 %v10142
  %v10186 = vunpack.c.l.b16 %v10143
  %v10187 = vunpack.c.h.b16 %v10143
  %v10188 = vunpack.c.l.b16 %v10144
  %v10189 = vunpack.c.h.b16 %v10144
  %v10190 = vunpack.c.l.b16 %v10145
  %v10191 = vunpack.c.h.b16 %v10145
  %v10192 = vunpack.c.l.b16 %v10146
  %v10193 = vunpack.c.h.b16 %v10146
  %v10194 = vunpack.c.l.b16 %v10147
  %v10195 = vunpack.c.h.b16 %v10147
  %v10196 = vpack.c.b16 %v10166, %v10164
  %v10197 = vpack.c.b16 %v10167, %v10165
  %v10198 = vpack.c.b16 %v10170, %v10168
  %v10199 = vpack.c.b16 %v10171, %v10169
  %v10200 = vpack.c.b16 %v10174, %v10172
  %v10201 = vpack.c.b16 %v10175, %v10173
  %v10202 = vpack.c.b16 %v10178, %v10176
  %v10203 = vpack.c.b16 %v10179, %v10177
  %v10204 = vpack.c.b16 %v10182, %v10180
  %v10205 = vpack.c.b16 %v10183, %v10181
  %v10206 = vpack.c.b16 %v10186, %v10184
  %v10207 = vpack.c.b16 %v10187, %v10185
  %v10208 = vpack.c.b16 %v10190, %v10188
  %v10209 = vpack.c.b16 %v10191, %v10189
  %v10210 = vpack.c.b16 %v10194, %v10192
  %v10211 = vpack.c.b16 %v10195, %v10193
  %10228 = vmatprep.subr.bf16.mxu0 %v10197
  %10229 = vmatpush1.bf16.msra.mxu0 %v10196
  %10230 = vmatprep.subr.bf16.mxu0 %v10199
  %10231 = vmatpush1.bf16.msra.mxu0 %v10198
  %10232 = vmatprep.subr.bf16.mxu0 %v10201
  %10233 = vmatpush1.bf16.msra.mxu0 %v10200
  %10234 = vmatprep.subr.bf16.mxu0 %v10203
  %10235 = vmatpush1.bf16.msra.mxu0 %v10202
  %10236 = vmatprep.subr.bf16.mxu0 %v10205
  %10237 = vmatpush1.bf16.msra.mxu0 %v10204
  %10238 = vmatprep.subr.bf16.mxu0 %v10207
  %10239 = vmatpush1.bf16.msra.mxu0 %v10206
  %10240 = vmatprep.subr.bf16.mxu0 %v10209
  %10241 = vmatpush1.bf16.msra.mxu0 %v10208
  %10242 = vmatprep.subr.bf16.mxu0 %v10211
  %10243 = vmatpush1.bf16.msra.mxu0 %v10210
  %10244 = vmatprep.subr.bf16.mxu0 0
  %10245 = vmatpush1.bf16.msra.mxu0 0
  %10246 = vmatprep.subr.bf16.mxu0 0
  %10247 = vmatpush1.bf16.msra.mxu0 0
  %10248 = vmatprep.subr.bf16.mxu0 0
  %10249 = vmatpush1.bf16.msra.mxu0 0
  %10250 = vmatprep.subr.bf16.mxu0 0
  %10251 = vmatpush1.bf16.msra.mxu0 0
  %10252 = vmatprep.subr.bf16.mxu0 0
  %10253 = vmatpush1.bf16.msra.mxu0 0
  %10254 = vmatprep.subr.bf16.mxu0 0
  %10255 = vmatpush1.bf16.msra.mxu0 0
  %10256 = vmatprep.subr.bf16.mxu0 0
  %10257 = vmatpush1.bf16.msra.mxu0 0
  %10258 = vmatprep.subr.bf16.mxu0 0
  %10259 = vmatpush1.bf16.msra.mxu0 0
  %10260 = vmatprep.mubr.bf16.mxu0 0
  %10261 = vmatmul.mubr.bf16.gmra.mrb[0].mxu0 %v10129
  %v10262 = vpop.f32.mrb[0].mxu0
  %v10263 = vadd.f32 0.0, %v10262
  %v10264 = vpop.f32.mrb[0].mxu0
  %v10265 = vadd.f32 0.0, %v10264
  %v10266 = vpop.f32.mrb[0].mxu0
  %v10267 = vadd.f32 0.0, %v10266
  %v10268 = vpop.f32.mrb[0].mxu0
  %v10269 = vadd.f32 0.0, %v10268
  %10270 = vmatprep.mubr.bf16.mxu0 0
  %10271 = vmatmul.mubr.bf16.gmra.mrb[0].mxu0 %v10130
  %v10272 = vpop.f32.mrb[0].mxu0
  %v10273 = vadd.f32 0.0, %v10272
  %v10274 = vpop.f32.mrb[0].mxu0
  %v10275 = vadd.f32 0.0, %v10274
  %v10276 = vpop.f32.mrb[0].mxu0
  %v10277 = vadd.f32 0.0, %v10276
  %v10278 = vpop.f32.mrb[0].mxu0
  %v10279 = vadd.f32 0.0, %v10278
  %10280 = vdwg.mxu0
  %v10281 = vadd.f32 %v10107, %v10263
  %v10282 = vadd.f32 %v10109, %v10265
  %v10283 = vadd.f32 %v10111, %v10267
  %v10284 = vadd.f32 %v10113, %v10269
  %v10285 = vadd.f32 %v10117, %v10273
  %v10286 = vadd.f32 %v10119, %v10275
  %v10287 = vadd.f32 %v10121, %v10277
  %v10288 = vadd.f32 %v10123, %v10279
  %v10289 = vld [vmem:[%s9807] sm:$0xff]
  %v10290 = vld [vmem:[%s9807 + $0x8] sm:$0xff]
  %v10291 = vld [vmem:[%s9807 + $0x20] sm:$0xff]
  %v10292 = vld [vmem:[%s9807 + $0x28] sm:$0xff]
  %v10293 = vpack.c.bf16 %v10290, %v10289
  %v10294 = vpack.c.bf16 %v10292, %v10291
  %s10295 = scalar_lea.vmem %s7, 384
  %v10296 = vld [vmem:[%s10295] sm:$0xff]
  %v10297 = vld [vmem:[%s10295 + $0x8] sm:$0xff]
  %v10298 = vld [vmem:[%s10295 + $0x10] sm:$0xff]
  %v10299 = vld [vmem:[%s10295 + $0x18] sm:$0xff]
  %v10300 = vld [vmem:[%s10295 + $0x20] sm:$0xff]
  %v10301 = vld [vmem:[%s10295 + $0x28] sm:$0xff]
  %v10302 = vld [vmem:[%s10295 + $0x30] sm:$0xff]
  %v10303 = vld [vmem:[%s10295 + $0x38] sm:$0xff]
  %v10304 = vld [vmem:[%s10295 + $0x40] sm:$0xff]
  %v10305 = vld [vmem:[%s10295 + $0x48] sm:$0xff]
  %v10306 = vld [vmem:[%s10295 + $0x50] sm:$0xff]
  %v10307 = vld [vmem:[%s10295 + $0x58] sm:$0xff]
  %v10308 = vld [vmem:[%s10295 + $0x60] sm:$0xff]
  %v10309 = vld [vmem:[%s10295 + $0x68] sm:$0xff]
  %v10310 = vld [vmem:[%s10295 + $0x70] sm:$0xff]
  %v10311 = vld [vmem:[%s10295 + $0x78] sm:$0xff]
  %v10328 = vunpack.c.l.b16 %v10296
  %v10329 = vunpack.c.h.b16 %v10296
  %v10330 = vunpack.c.l.b16 %v10297
  %v10331 = vunpack.c.h.b16 %v10297
  %v10332 = vunpack.c.l.b16 %v10298
  %v10333 = vunpack.c.h.b16 %v10298
  %v10334 = vunpack.c.l.b16 %v10299
  %v10335 = vunpack.c.h.b16 %v10299
  %v10336 = vunpack.c.l.b16 %v10300
  %v10337 = vunpack.c.h.b16 %v10300
  %v10338 = vunpack.c.l.b16 %v10301
  %v10339 = vunpack.c.h.b16 %v10301
  %v10340 = vunpack.c.l.b16 %v10302
  %v10341 = vunpack.c.h.b16 %v10302
  %v10342 = vunpack.c.l.b16 %v10303
  %v10343 = vunpack.c.h.b16 %v10303
  %v10344 = vunpack.c.l.b16 %v10304
  %v10345 = vunpack.c.h.b16 %v10304
  %v10346 = vunpack.c.l.b16 %v10305
  %v10347 = vunpack.c.h.b16 %v10305
  %v10348 = vunpack.c.l.b16 %v10306
  %v10349 = vunpack.c.h.b16 %v10306
  %v10350 = vunpack.c.l.b16 %v10307
  %v10351 = vunpack.c.h.b16 %v10307
  %v10352 = vunpack.c.l.b16 %v10308
  %v10353 = vunpack.c.h.b16 %v10308
  %v10354 = vunpack.c.l.b16 %v10309
  %v10355 = vunpack.c.h.b16 %v10309
  %v10356 = vunpack.c.l.b16 %v10310
  %v10357 = vunpack.c.h.b16 %v10310
  %v10358 = vunpack.c.l.b16 %v10311
  %v10359 = vunpack.c.h.b16 %v10311
  %v10360 = vpack.c.b16 %v10330, %v10328
  %v10361 = vpack.c.b16 %v10331, %v10329
  %v10362 = vpack.c.b16 %v10334, %v10332
  %v10363 = vpack.c.b16 %v10335, %v10333
  %v10364 = vpack.c.b16 %v10338, %v10336
  %v10365 = vpack.c.b16 %v10339, %v10337
  %v10366 = vpack.c.b16 %v10342, %v10340
  %v10367 = vpack.c.b16 %v10343, %v10341
  %v10368 = vpack.c.b16 %v10346, %v10344
  %v10369 = vpack.c.b16 %v10347, %v10345
  %v10370 = vpack.c.b16 %v10350, %v10348
  %v10371 = vpack.c.b16 %v10351, %v10349
  %v10372 = vpack.c.b16 %v10354, %v10352
  %v10373 = vpack.c.b16 %v10355, %v10353
  %v10374 = vpack.c.b16 %v10358, %v10356
  %v10375 = vpack.c.b16 %v10359, %v10357
  %10392 = vmatprep.subr.bf16.mxu0 %v10361
  %10393 = vmatpush1.bf16.msra.mxu0 %v10360
  %10394 = vmatprep.subr.bf16.mxu0 %v10363
  %10395 = vmatpush1.bf16.msra.mxu0 %v10362
  %10396 = vmatprep.subr.bf16.mxu0 %v10365
  %10397 = vmatpush1.bf16.msra.mxu0 %v10364
  %10398 = vmatprep.subr.bf16.mxu0 %v10367
  %10399 = vmatpush1.bf16.msra.mxu0 %v10366
  %10400 = vmatprep.subr.bf16.mxu0 %v10369
  %10401 = vmatpush1.bf16.msra.mxu0 %v10368
  %10402 = vmatprep.subr.bf16.mxu0 %v10371
  %10403 = vmatpush1.bf16.msra.mxu0 %v10370
  %10404 = vmatprep.subr.bf16.mxu0 %v10373
  %10405 = vmatpush1.bf16.msra.mxu0 %v10372
  %10406 = vmatprep.subr.bf16.mxu0 %v10375
  %10407 = vmatpush1.bf16.msra.mxu0 %v10374
  %10408 = vmatprep.subr.bf16.mxu0 0
  %10409 = vmatpush1.bf16.msra.mxu0 0
  %10410 = vmatprep.subr.bf16.mxu0 0
  %10411 = vmatpush1.bf16.msra.mxu0 0
  %10412 = vmatprep.subr.bf16.mxu0 0
  %10413 = vmatpush1.bf16.msra.mxu0 0
  %10414 = vmatprep.subr.bf16.mxu0 0
  %10415 = vmatpush1.bf16.msra.mxu0 0
  %10416 = vmatprep.subr.bf16.mxu0 0
  %10417 = vmatpush1.bf16.msra.mxu0 0
  %10418 = vmatprep.subr.bf16.mxu0 0
  %10419 = vmatpush1.bf16.msra.mxu0 0
  %10420 = vmatprep.subr.bf16.mxu0 0
  %10421 = vmatpush1.bf16.msra.mxu0 0
  %10422 = vmatprep.subr.bf16.mxu0 0
  %10423 = vmatpush1.bf16.msra.mxu0 0
  %10424 = vmatprep.mubr.bf16.mxu0 0
  %10425 = vmatmul.mubr.bf16.gmra.mrb[0].mxu0 %v10293
  %v10426 = vpop.f32.mrb[0].mxu0
  %v10427 = vadd.f32 0.0, %v10426
  %v10428 = vpop.f32.mrb[0].mxu0
  %v10429 = vadd.f32 0.0, %v10428
  %v10430 = vpop.f32.mrb[0].mxu0
  %v10431 = vadd.f32 0.0, %v10430
  %v10432 = vpop.f32.mrb[0].mxu0
  %v10433 = vadd.f32 0.0, %v10432
  %10434 = vmatprep.mubr.bf16.mxu0 0
  %10435 = vmatmul.mubr.bf16.gmra.mrb[0].mxu0 %v10294
  %v10436 = vpop.f32.mrb[0].mxu0
  %v10437 = vadd.f32 0.0, %v10436
  %v10438 = vpop.f32.mrb[0].mxu0
  %v10439 = vadd.f32 0.0, %v10438
  %v10440 = vpop.f32.mrb[0].mxu0
  %v10441 = vadd.f32 0.0, %v10440
  %v10442 = vpop.f32.mrb[0].mxu0
  %v10443 = vadd.f32 0.0, %v10442
  %10444 = vdwg.mxu0
  %v10445 = vadd.f32 %v10281, %v10427
  %v10446 = vadd.f32 %v10282, %v10429
  %v10447 = vadd.f32 %v10283, %v10431
  %v10448 = vadd.f32 %v10284, %v10433
  %v10449 = vadd.f32 %v10285, %v10437
  %v10450 = vadd.f32 %v10286, %v10439
  %v10451 = vadd.f32 %v10287, %v10441
  %v10452 = vadd.f32 %v10288, %v10443
  %v10453 = vld [vmem:[%s9807 + $0x8] sm:$0xff]
  %v10454 = vld [vmem:[%s9807 + $0x10] sm:$0xff]
  %v10455 = vld [vmem:[%s9807 + $0x28] sm:$0xff]
  %v10456 = vld [vmem:[%s9807 + $0x30] sm:$0xff]
  %v10457 = vpack.c.bf16 %v10454, %v10453
  %v10458 = vpack.c.bf16 %v10456, %v10455
  %s10459 = scalar_lea.vmem %s7, 512
  %v10460 = vld [vmem:[%s10459] sm:$0xff]
  %v10461 = vld [vmem:[%s10459 + $0x8] sm:$0xff]
  %v10462 = vld [vmem:[%s10459 + $0x10] sm:$0xff]
  %v10463 = vld [vmem:[%s10459 + $0x18] sm:$0xff]
  %v10464 = vld [vmem:[%s10459 + $0x20] sm:$0xff]
  %v10465 = vld [vmem:[%s10459 + $0x28] sm:$0xff]
  %v10466 = vld [vmem:[%s10459 + $0x30] sm:$0xff]
  %v10467 = vld [vmem:[%s10459 + $0x38] sm:$0xff]
  %v10468 = vld [vmem:[%s10459 + $0x40] sm:$0xff]
  %v10469 = vld [vmem:[%s10459 + $0x48] sm:$0xff]
  %v10470 = vld [vmem:[%s10459 + $0x50] sm:$0xff]
  %v10471 = vld [vmem:[%s10459 + $0x58] sm:$0xff]
  %v10472 = vld [vmem:[%s10459 + $0x60] sm:$0xff]
  %v10473 = vld [vmem:[%s10459 + $0x68] sm:$0xff]
  %v10474 = vld [vmem:[%s10459 + $0x70] sm:$0xff]
  %v10475 = vld [vmem:[%s10459 + $0x78] sm:$0xff]
  %v10492 = vunpack.c.l.b16 %v10460
  %v10493 = vunpack.c.h.b16 %v10460
  %v10494 = vunpack.c.l.b16 %v10461
  %v10495 = vunpack.c.h.b16 %v10461
  %v10496 = vunpack.c.l.b16 %v10462
  %v10497 = vunpack.c.h.b16 %v10462
  %v10498 = vunpack.c.l.b16 %v10463
  %v10499 = vunpack.c.h.b16 %v10463
  %v10500 = vunpack.c.l.b16 %v10464
  %v10501 = vunpack.c.h.b16 %v10464
  %v10502 = vunpack.c.l.b16 %v10465
  %v10503 = vunpack.c.h.b16 %v10465
  %v10504 = vunpack.c.l.b16 %v10466
  %v10505 = vunpack.c.h.b16 %v10466
  %v10506 = vunpack.c.l.b16 %v10467
  %v10507 = vunpack.c.h.b16 %v10467
  %v10508 = vunpack.c.l.b16 %v10468
  %v10509 = vunpack.c.h.b16 %v10468
  %v10510 = vunpack.c.l.b16 %v10469
  %v10511 = vunpack.c.h.b16 %v10469
  %v10512 = vunpack.c.l.b16 %v10470
  %v10513 = vunpack.c.h.b16 %v10470
  %v10514 = vunpack.c.l.b16 %v10471
  %v10515 = vunpack.c.h.b16 %v10471
  %v10516 = vunpack.c.l.b16 %v10472
  %v10517 = vunpack.c.h.b16 %v10472
  %v10518 = vunpack.c.l.b16 %v10473
  %v10519 = vunpack.c.h.b16 %v10473
  %v10520 = vunpack.c.l.b16 %v10474
  %v10521 = vunpack.c.h.b16 %v10474
  %v10522 = vunpack.c.l.b16 %v10475
  %v10523 = vunpack.c.h.b16 %v10475
  %v10524 = vpack.c.b16 %v10494, %v10492
  %v10525 = vpack.c.b16 %v10495, %v10493
  %v10526 = vpack.c.b16 %v10498, %v10496
  %v10527 = vpack.c.b16 %v10499, %v10497
  %v10528 = vpack.c.b16 %v10502, %v10500
  %v10529 = vpack.c.b16 %v10503, %v10501
  %v10530 = vpack.c.b16 %v10506, %v10504
  %v10531 = vpack.c.b16 %v10507, %v10505
  %v10532 = vpack.c.b16 %v10510, %v10508
  %v10533 = vpack.c.b16 %v10511, %v10509
  %v10534 = vpack.c.b16 %v10514, %v10512
  %v10535 = vpack.c.b16 %v10515, %v10513
  %v10536 = vpack.c.b16 %v10518, %v10516
  %v10537 = vpack.c.b16 %v10519, %v10517
  %v10538 = vpack.c.b16 %v10522, %v10520
  %v10539 = vpack.c.b16 %v10523, %v10521
  %10556 = vmatprep.subr.bf16.mxu0 %v10525
  %10557 = vmatpush1.bf16.msra.mxu0 %v10524
  %10558 = vmatprep.subr.bf16.mxu0 %v10527
  %10559 = vmatpush1.bf16.msra.mxu0 %v10526
  %10560 = vmatprep.subr.bf16.mxu0 %v10529
  %10561 = vmatpush1.bf16.msra.mxu0 %v10528
  %10562 = vmatprep.subr.bf16.mxu0 %v10531
  %10563 = vmatpush1.bf16.msra.mxu0 %v10530
  %10564 = vmatprep.subr.bf16.mxu0 %v10533
  %10565 = vmatpush1.bf16.msra.mxu0 %v10532
  %10566 = vmatprep.subr.bf16.mxu0 %v10535
  %10567 = vmatpush1.bf16.msra.mxu0 %v10534
  %10568 = vmatprep.subr.bf16.mxu0 %v10537
  %10569 = vmatpush1.bf16.msra.mxu0 %v10536
  %10570 = vmatprep.subr.bf16.mxu0 %v10539
  %10571 = vmatpush1.bf16.msra.mxu0 %v10538
  %10572 = vmatprep.subr.bf16.mxu0 0
  %10573 = vmatpush1.bf16.msra.mxu0 0
  %10574 = vmatprep.subr.bf16.mxu0 0
  %10575 = vmatpush1.bf16.msra.mxu0 0
  %10576 = vmatprep.subr.bf16.mxu0 0
  %10577 = vmatpush1.bf16.msra.mxu0 0
  %10578 = vmatprep.subr.bf16.mxu0 0
  %10579 = vmatpush1.bf16.msra.mxu0 0
  %10580 = vmatprep.subr.bf16.mxu0 0
  %10581 = vmatpush1.bf16.msra.mxu0 0
  %10582 = vmatprep.subr.bf16.mxu0 0
  %10583 = vmatpush1.bf16.msra.mxu0 0
  %10584 = vmatprep.subr.bf16.mxu0 0
  %10585 = vmatpush1.bf16.msra.mxu0 0
  %10586 = vmatprep.subr.bf16.mxu0 0
  %10587 = vmatpush1.bf16.msra.mxu0 0
  %10588 = vmatprep.mubr.bf16.mxu0 0
  %10589 = vmatmul.mubr.bf16.gmra.mrb[0].mxu0 %v10457
  %v10590 = vpop.f32.mrb[0].mxu0
  %v10591 = vadd.f32 0.0, %v10590
  %v10592 = vpop.f32.mrb[0].mxu0
  %v10593 = vadd.f32 0.0, %v10592
  %v10594 = vpop.f32.mrb[0].mxu0
  %v10595 = vadd.f32 0.0, %v10594
  %v10596 = vpop.f32.mrb[0].mxu0
  %v10597 = vadd.f32 0.0, %v10596
  %10598 = vmatprep.mubr.bf16.mxu0 0
  %10599 = vmatmul.mubr.bf16.gmra.mrb[0].mxu0 %v10458
  %v10600 = vpop.f32.mrb[0].mxu0
  %v10601 = vadd.f32 0.0, %v10600
  %v10602 = vpop.f32.mrb[0].mxu0
  %v10603 = vadd.f32 0.0, %v10602
  %v10604 = vpop.f32.mrb[0].mxu0
  %v10605 = vadd.f32 0.0, %v10604
  %v10606 = vpop.f32.mrb[0].mxu0
  %v10607 = vadd.f32 0.0, %v10606
  %10608 = vdwg.mxu0
  %v10609 = vadd.f32 %v10445, %v10591
  %v10610 = vadd.f32 %v10446, %v10593
  %v10611 = vadd.f32 %v10447, %v10595
  %v10612 = vadd.f32 %v10448, %v10597
  %v10613 = vadd.f32 %v10449, %v10601
  %v10614 = vadd.f32 %v10450, %v10603
  %v10615 = vadd.f32 %v10451, %v10605
  %v10616 = vadd.f32 %v10452, %v10607
  %v10617 = vld [vmem:[%s9807 + $0x10] sm:$0xff]
  %v10618 = vld [vmem:[%s9807 + $0x18] sm:$0xff]
  %v10619 = vld [vmem:[%s9807 + $0x30] sm:$0xff]
  %v10620 = vld [vmem:[%s9807 + $0x38] sm:$0xff]
  %v10621 = vpack.c.bf16 %v10618, %v10617
  %v10622 = vpack.c.bf16 %v10620, %v10619
  %s10623 = scalar_lea.vmem %s7, 640
  %v10624 = vld [vmem:[%s10623] sm:$0xff]
  %v10625 = vld [vmem:[%s10623 + $0x8] sm:$0xff]
  %v10626 = vld [vmem:[%s10623 + $0x10] sm:$0xff]
  %v10627 = vld [vmem:[%s10623 + $0x18] sm:$0xff]
  %v10628 = vld [vmem:[%s10623 + $0x20] sm:$0xff]
  %v10629 = vld [vmem:[%s10623 + $0x28] sm:$0xff]
  %v10630 = vld [vmem:[%s10623 + $0x30] sm:$0xff]
  %v10631 = vld [vmem:[%s10623 + $0x38] sm:$0xff]
  %v10632 = vld [vmem:[%s10623 + $0x40] sm:$0xff]
  %v10633 = vld [vmem:[%s10623 + $0x48] sm:$0xff]
  %v10634 = vld [vmem:[%s10623 + $0x50] sm:$0xff]
  %v10635 = vld [vmem:[%s10623 + $0x58] sm:$0xff]
  %v10636 = vld [vmem:[%s10623 + $0x60] sm:$0xff]
  %v10637 = vld [vmem:[%s10623 + $0x68] sm:$0xff]
  %v10638 = vld [vmem:[%s10623 + $0x70] sm:$0xff]
  %v10639 = vld [vmem:[%s10623 + $0x78] sm:$0xff]
  %v10656 = vunpack.c.l.b16 %v10624
  %v10657 = vunpack.c.h.b16 %v10624
  %v10658 = vunpack.c.l.b16 %v10625
  %v10659 = vunpack.c.h.b16 %v10625
  %v10660 = vunpack.c.l.b16 %v10626
  %v10661 = vunpack.c.h.b16 %v10626
  %v10662 = vunpack.c.l.b16 %v10627
  %v10663 = vunpack.c.h.b16 %v10627
  %v10664 = vunpack.c.l.b16 %v10628
  %v10665 = vunpack.c.h.b16 %v10628
  %v10666 = vunpack.c.l.b16 %v10629
  %v10667 = vunpack.c.h.b16 %v10629
  %v10668 = vunpack.c.l.b16 %v10630
  %v10669 = vunpack.c.h.b16 %v10630
  %v10670 = vunpack.c.l.b16 %v10631
  %v10671 = vunpack.c.h.b16 %v10631
  %v10672 = vunpack.c.l.b16 %v10632
  %v10673 = vunpack.c.h.b16 %v10632
  %v10674 = vunpack.c.l.b16 %v10633
  %v10675 = vunpack.c.h.b16 %v10633
  %v10676 = vunpack.c.l.b16 %v10634
  %v10677 = vunpack.c.h.b16 %v10634
  %v10678 = vunpack.c.l.b16 %v10635
  %v10679 = vunpack.c.h.b16 %v10635
  %v10680 = vunpack.c.l.b16 %v10636
  %v10681 = vunpack.c.h.b16 %v10636
  %v10682 = vunpack.c.l.b16 %v10637
  %v10683 = vunpack.c.h.b16 %v10637
  %v10684 = vunpack.c.l.b16 %v10638
  %v10685 = vunpack.c.h.b16 %v10638
  %v10686 = vunpack.c.l.b16 %v10639
  %v10687 = vunpack.c.h.b16 %v10639
  %v10688 = vpack.c.b16 %v10658, %v10656
  %v10689 = vpack.c.b16 %v10659, %v10657
  %v10690 = vpack.c.b16 %v10662, %v10660
  %v10691 = vpack.c.b16 %v10663, %v10661
  %v10692 = vpack.c.b16 %v10666, %v10664
  %v10693 = vpack.c.b16 %v10667, %v10665
  %v10694 = vpack.c.b16 %v10670, %v10668
  %v10695 = vpack.c.b16 %v10671, %v10669
  %v10696 = vpack.c.b16 %v10674, %v10672
  %v10697 = vpack.c.b16 %v10675, %v10673
  %v10698 = vpack.c.b16 %v10678, %v10676
  %v10699 = vpack.c.b16 %v10679, %v10677
  %v10700 = vpack.c.b16 %v10682, %v10680
  %v10701 = vpack.c.b16 %v10683, %v10681
  %v10702 = vpack.c.b16 %v10686, %v10684
  %v10703 = vpack.c.b16 %v10687, %v10685
  %10720 = vmatprep.subr.bf16.mxu0 %v10689
  %10721 = vmatpush1.bf16.msra.mxu0 %v10688
  %10722 = vmatprep.subr.bf16.mxu0 %v10691
  %10723 = vmatpush1.bf16.msra.mxu0 %v10690
  %10724 = vmatprep.subr.bf16.mxu0 %v10693
  %10725 = vmatpush1.bf16.msra.mxu0 %v10692
  %10726 = vmatprep.subr.bf16.mxu0 %v10695
  %10727 = vmatpush1.bf16.msra.mxu0 %v10694
  %10728 = vmatprep.subr.bf16.mxu0 %v10697
  %10729 = vmatpush1.bf16.msra.mxu0 %v10696
  %10730 = vmatprep.subr.bf16.mxu0 %v10699
  %10731 = vmatpush1.bf16.msra.mxu0 %v10698
  %10732 = vmatprep.subr.bf16.mxu0 %v10701
  %10733 = vmatpush1.bf16.msra.mxu0 %v10700
  %10734 = vmatprep.subr.bf16.mxu0 %v10703
  %10735 = vmatpush1.bf16.msra.mxu0 %v10702
  %10736 = vmatprep.subr.bf16.mxu0 0
  %10737 = vmatpush1.bf16.msra.mxu0 0
  %10738 = vmatprep.subr.bf16.mxu0 0
  %10739 = vmatpush1.bf16.msra.mxu0 0
  %10740 = vmatprep.subr.bf16.mxu0 0
  %10741 = vmatpush1.bf16.msra.mxu0 0
  %10742 = vmatprep.subr.bf16.mxu0 0
  %10743 = vmatpush1.bf16.msra.mxu0 0
  %10744 = vmatprep.subr.bf16.mxu0 0
  %10745 = vmatpush1.bf16.msra.mxu0 0
  %10746 = vmatprep.subr.bf16.mxu0 0
  %10747 = vmatpush1.bf16.msra.mxu0 0
  %10748 = vmatprep.subr.bf16.mxu0 0
  %10749 = vmatpush1.bf16.msra.mxu0 0
  %10750 = vmatprep.subr.bf16.mxu0 0
  %10751 = vmatpush1.bf16.msra.mxu0 0
  %10752 = vmatprep.mubr.bf16.mxu0 0
  %10753 = vmatmul.mubr.bf16.gmra.mrb[0].mxu0 %v10621
  %v10754 = vpop.f32.mrb[0].mxu0
  %v10755 = vadd.f32 0.0, %v10754
  %v10756 = vpop.f32.mrb[0].mxu0
  %v10757 = vadd.f32 0.0, %v10756
  %v10758 = vpop.f32.mrb[0].mxu0
  %v10759 = vadd.f32 0.0, %v10758
  %v10760 = vpop.f32.mrb[0].mxu0
  %v10761 = vadd.f32 0.0, %v10760
  %10762 = vmatprep.mubr.bf16.mxu0 0
  %10763 = vmatmul.mubr.bf16.gmra.mrb[0].mxu0 %v10622
  %v10764 = vpop.f32.mrb[0].mxu0
  %v10765 = vadd.f32 0.0, %v10764
  %v10766 = vpop.f32.mrb[0].mxu0
  %v10767 = vadd.f32 0.0, %v10766
  %v10768 = vpop.f32.mrb[0].mxu0
  %v10769 = vadd.f32 0.0, %v10768
  %v10770 = vpop.f32.mrb[0].mxu0
  %v10771 = vadd.f32 0.0, %v10770
  %10772 = vdwg.mxu0
  %v10773 = vadd.f32 %v10609, %v10755
  %v10774 = vadd.f32 %v10610, %v10757
  %v10775 = vadd.f32 %v10611, %v10759
  %v10776 = vadd.f32 %v10612, %v10761
  %v10777 = vadd.f32 %v10613, %v10765
  %v10778 = vadd.f32 %v10614, %v10767
  %v10779 = vadd.f32 %v10615, %v10769
  %v10780 = vadd.f32 %v10616, %v10771
  %s10781 = scalar_lea.vmem [#allocation4], 64
  %v10782 = vld [vmem:[%s10781] sm:$0xff]
  %v10783 = vld [vmem:[%s10781 + $0x8] sm:$0xff]
  %v10784 = vld [vmem:[%s10781 + $0x20] sm:$0xff]
  %v10785 = vld [vmem:[%s10781 + $0x28] sm:$0xff]
  %v10786 = vpack.c.bf16 %v10783, %v10782
  %v10787 = vpack.c.bf16 %v10785, %v10784
  %s10788 = scalar_lea.vmem %s7, 768
  %v10789 = vld [vmem:[%s10788] sm:$0xff]
  %v10790 = vld [vmem:[%s10788 + $0x8] sm:$0xff]
  %v10791 = vld [vmem:[%s10788 + $0x10] sm:$0xff]
  %v10792 = vld [vmem:[%s10788 + $0x18] sm:$0xff]
  %v10793 = vld [vmem:[%s10788 + $0x20] sm:$0xff]
  %v10794 = vld [vmem:[%s10788 + $0x28] sm:$0xff]
  %v10795 = vld [vmem:[%s10788 + $0x30] sm:$0xff]
  %v10796 = vld [vmem:[%s10788 + $0x38] sm:$0xff]
  %v10797 = vld [vmem:[%s10788 + $0x40] sm:$0xff]
  %v10798 = vld [vmem:[%s10788 + $0x48] sm:$0xff]
  %v10799 = vld [vmem:[%s10788 + $0x50] sm:$0xff]
  %v10800 = vld [vmem:[%s10788 + $0x58] sm:$0xff]
  %v10801 = vld [vmem:[%s10788 + $0x60] sm:$0xff]
  %v10802 = vld [vmem:[%s10788 + $0x68] sm:$0xff]
  %v10803 = vld [vmem:[%s10788 + $0x70] sm:$0xff]
  %v10804 = vld [vmem:[%s10788 + $0x78] sm:$0xff]
  %v10821 = vunpack.c.l.b16 %v10789
  %v10822 = vunpack.c.h.b16 %v10789
  %v10823 = vunpack.c.l.b16 %v10790
  %v10824 = vunpack.c.h.b16 %v10790
  %v10825 = vunpack.c.l.b16 %v10791
  %v10826 = vunpack.c.h.b16 %v10791
  %v10827 = vunpack.c.l.b16 %v10792
  %v10828 = vunpack.c.h.b16 %v10792
  %v10829 = vunpack.c.l.b16 %v10793
  %v10830 = vunpack.c.h.b16 %v10793
  %v10831 = vunpack.c.l.b16 %v10794
  %v10832 = vunpack.c.h.b16 %v10794
  %v10833 = vunpack.c.l.b16 %v10795
  %v10834 = vunpack.c.h.b16 %v10795
  %v10835 = vunpack.c.l.b16 %v10796
  %v10836 = vunpack.c.h.b16 %v10796
  %v10837 = vunpack.c.l.b16 %v10797
  %v10838 = vunpack.c.h.b16 %v10797
  %v10839 = vunpack.c.l.b16 %v10798
  %v10840 = vunpack.c.h.b16 %v10798
  %v10841 = vunpack.c.l.b16 %v10799
  %v10842 = vunpack.c.h.b16 %v10799
  %v10843 = vunpack.c.l.b16 %v10800
  %v10844 = vunpack.c.h.b16 %v10800
  %v10845 = vunpack.c.l.b16 %v10801
  %v10846 = vunpack.c.h.b16 %v10801
  %v10847 = vunpack.c.l.b16 %v10802
  %v10848 = vunpack.c.h.b16 %v10802
  %v10849 = vunpack.c.l.b16 %v10803
  %v10850 = vunpack.c.h.b16 %v10803
  %v10851 = vunpack.c.l.b16 %v10804
  %v10852 = vunpack.c.h.b16 %v10804
  %v10853 = vpack.c.b16 %v10823, %v10821
  %v10854 = vpack.c.b16 %v10824, %v10822
  %v10855 = vpack.c.b16 %v10827, %v10825
  %v10856 = vpack.c.b16 %v10828, %v10826
  %v10857 = vpack.c.b16 %v10831, %v10829
  %v10858 = vpack.c.b16 %v10832, %v10830
  %v10859 = vpack.c.b16 %v10835, %v10833
  %v10860 = vpack.c.b16 %v10836, %v10834
  %v10861 = vpack.c.b16 %v10839, %v10837
  %v10862 = vpack.c.b16 %v10840, %v10838
  %v10863 = vpack.c.b16 %v10843, %v10841
  %v10864 = vpack.c.b16 %v10844, %v10842
  %v10865 = vpack.c.b16 %v10847, %v10845
  %v10866 = vpack.c.b16 %v10848, %v10846
  %v10867 = vpack.c.b16 %v10851, %v10849
  %v10868 = vpack.c.b16 %v10852, %v10850
  %10885 = vmatprep.subr.bf16.mxu0 %v10854
  %10886 = vmatpush1.bf16.msra.mxu0 %v10853
  %10887 = vmatprep.subr.bf16.mxu0 %v10856
  %10888 = vmatpush1.bf16.msra.mxu0 %v10855
  %10889 = vmatprep.subr.bf16.mxu0 %v10858
  %10890 = vmatpush1.bf16.msra.mxu0 %v10857
  %10891 = vmatprep.subr.bf16.mxu0 %v10860
  %10892 = vmatpush1.bf16.msra.mxu0 %v10859
  %10893 = vmatprep.subr.bf16.mxu0 %v10862
  %10894 = vmatpush1.bf16.msra.mxu0 %v10861
  %10895 = vmatprep.subr.bf16.mxu0 %v10864
  %10896 = vmatpush1.bf16.msra.mxu0 %v10863
  %10897 = vmatprep.subr.bf16.mxu0 %v10866
  %10898 = vmatpush1.bf16.msra.mxu0 %v10865
  %10899 = vmatprep.subr.bf16.mxu0 %v10868
  %10900 = vmatpush1.bf16.msra.mxu0 %v10867
  %10901 = vmatprep.subr.bf16.mxu0 0
  %10902 = vmatpush1.bf16.msra.mxu0 0
  %10903 = vmatprep.subr.bf16.mxu0 0
  %10904 = vmatpush1.bf16.msra.mxu0 0
  %10905 = vmatprep.subr.bf16.mxu0 0
  %10906 = vmatpush1.bf16.msra.mxu0 0
  %10907 = vmatprep.subr.bf16.mxu0 0
  %10908 = vmatpush1.bf16.msra.mxu0 0
  %10909 = vmatprep.subr.bf16.mxu0 0
  %10910 = vmatpush1.bf16.msra.mxu0 0
  %10911 = vmatprep.subr.bf16.mxu0 0
  %10912 = vmatpush1.bf16.msra.mxu0 0
  %10913 = vmatprep.subr.bf16.mxu0 0
  %10914 = vmatpush1.bf16.msra.mxu0 0
  %10915 = vmatprep.subr.bf16.mxu0 0
  %10916 = vmatpush1.bf16.msra.mxu0 0
  %10917 = vmatprep.mubr.bf16.mxu0 0
  %10918 = vmatmul.mubr.bf16.gmra.mrb[0].mxu0 %v10786
  %v10919 = vpop.f32.mrb[0].mxu0
  %v10920 = vadd.f32 0.0, %v10919
  %v10921 = vpop.f32.mrb[0].mxu0
  %v10922 = vadd.f32 0.0, %v10921
  %v10923 = vpop.f32.mrb[0].mxu0
  %v10924 = vadd.f32 0.0, %v10923
  %v10925 = vpop.f32.mrb[0].mxu0
  %v10926 = vadd.f32 0.0, %v10925
  %10927 = vmatprep.mubr.bf16.mxu0 0
  %10928 = vmatmul.mubr.bf16.gmra.mrb[0].mxu0 %v10787
  %v10929 = vpop.f32.mrb[0].mxu0
  %v10930 = vadd.f32 0.0, %v10929
  %v10931 = vpop.f32.mrb[0].mxu0
  %v10932 = vadd.f32 0.0, %v10931
  %v10933 = vpop.f32.mrb[0].mxu0
  %v10934 = vadd.f32 0.0, %v10933
  %v10935 = vpop.f32.mrb[0].mxu0
  %v10936 = vadd.f32 0.0, %v10935
  %10937 = vdwg.mxu0
  %v10938 = vadd.f32 %v10773, %v10920
  %v10939 = vadd.f32 %v10774, %v10922
  %v10940 = vadd.f32 %v10775, %v10924
  %v10941 = vadd.f32 %v10776, %v10926
  %v10942 = vadd.f32 %v10777, %v10930
  %v10943 = vadd.f32 %v10778, %v10932
  %v10944 = vadd.f32 %v10779, %v10934
  %v10945 = vadd.f32 %v10780, %v10936
  %v10946 = vld [vmem:[%s10781 + $0x8] sm:$0xff]
  %v10947 = vld [vmem:[%s10781 + $0x10] sm:$0xff]
  %v10948 = vld [vmem:[%s10781 + $0x28] sm:$0xff]
  %v10949 = vld [vmem:[%s10781 + $0x30] sm:$0xff]
  %v10950 = vpack.c.bf16 %v10947, %v10946
  %v10951 = vpack.c.bf16 %v10949, %v10948
  %s10952 = scalar_lea.vmem %s7, 896
  %v10953 = vld [vmem:[%s10952] sm:$0xff]
  %v10954 = vld [vmem:[%s10952 + $0x8] sm:$0xff]
  %v10955 = vld [vmem:[%s10952 + $0x10] sm:$0xff]
  %v10956 = vld [vmem:[%s10952 + $0x18] sm:$0xff]
  %v10957 = vld [vmem:[%s10952 + $0x20] sm:$0xff]
  %v10958 = vld [vmem:[%s10952 + $0x28] sm:$0xff]
  %v10959 = vld [vmem:[%s10952 + $0x30] sm:$0xff]
  %v10960 = vld [vmem:[%s10952 + $0x38] sm:$0xff]
  %v10961 = vld [vmem:[%s10952 + $0x40] sm:$0xff]
  %v10962 = vld [vmem:[%s10952 + $0x48] sm:$0xff]
  %v10963 = vld [vmem:[%s10952 + $0x50] sm:$0xff]
  %v10964 = vld [vmem:[%s10952 + $0x58] sm:$0xff]
  %v10965 = vld [vmem:[%s10952 + $0x60] sm:$0xff]
  %v10966 = vld [vmem:[%s10952 + $0x68] sm:$0xff]
  %v10967 = vld [vmem:[%s10952 + $0x70] sm:$0xff]
  %v10968 = vld [vmem:[%s10952 + $0x78] sm:$0xff]
  %v10985 = vunpack.c.l.b16 %v10953
  %v10986 = vunpack.c.h.b16 %v10953
  %v10987 = vunpack.c.l.b16 %v10954
  %v10988 = vunpack.c.h.b16 %v10954
  %v10989 = vunpack.c.l.b16 %v10955
  %v10990 = vunpack.c.h.b16 %v10955
  %v10991 = vunpack.c.l.b16 %v10956
  %v10992 = vunpack.c.h.b16 %v10956
  %v10993 = vunpack.c.l.b16 %v10957
  %v10994 = vunpack.c.h.b16 %v10957
  %v10995 = vunpack.c.l.b16 %v10958
  %v10996 = vunpack.c.h.b16 %v10958
  %v10997 = vunpack.c.l.b16 %v10959
  %v10998 = vunpack.c.h.b16 %v10959
  %v10999 = vunpack.c.l.b16 %v10960
  %v11000 = vunpack.c.h.b16 %v10960
  %v11001 = vunpack.c.l.b16 %v10961
  %v11002 = vunpack.c.h.b16 %v10961
  %v11003 = vunpack.c.l.b16 %v10962
  %v11004 = vunpack.c.h.b16 %v10962
  %v11005 = vunpack.c.l.b16 %v10963
  %v11006 = vunpack.c.h.b16 %v10963
  %v11007 = vunpack.c.l.b16 %v10964
  %v11008 = vunpack.c.h.b16 %v10964
  %v11009 = vunpack.c.l.b16 %v10965
  %v11010 = vunpack.c.h.b16 %v10965
  %v11011 = vunpack.c.l.b16 %v10966
  %v11012 = vunpack.c.h.b16 %v10966
  %v11013 = vunpack.c.l.b16 %v10967
  %v11014 = vunpack.c.h.b16 %v10967
  %v11015 = vunpack.c.l.b16 %v10968
  %v11016 = vunpack.c.h.b16 %v10968
  %v11017 = vpack.c.b16 %v10987, %v10985
  %v11018 = vpack.c.b16 %v10988, %v10986
  %v11019 = vpack.c.b16 %v10991, %v10989
  %v11020 = vpack.c.b16 %v10992, %v10990
  %v11021 = vpack.c.b16 %v10995, %v10993
  %v11022 = vpack.c.b16 %v10996, %v10994
  %v11023 = vpack.c.b16 %v10999, %v10997
  %v11024 = vpack.c.b16 %v11000, %v10998
  %v11025 = vpack.c.b16 %v11003, %v11001
  %v11026 = vpack.c.b16 %v11004, %v11002
  %v11027 = vpack.c.b16 %v11007, %v11005
  %v11028 = vpack.c.b16 %v11008, %v11006
  %v11029 = vpack.c.b16 %v11011, %v11009
  %v11030 = vpack.c.b16 %v11012, %v11010
  %v11031 = vpack.c.b16 %v11015, %v11013
  %v11032 = vpack.c.b16 %v11016, %v11014
  %11049 = vmatprep.subr.bf16.mxu0 %v11018
  %11050 = vmatpush1.bf16.msra.mxu0 %v11017
  %11051 = vmatprep.subr.bf16.mxu0 %v11020
  %11052 = vmatpush1.bf16.msra.mxu0 %v11019
  %11053 = vmatprep.subr.bf16.mxu0 %v11022
  %11054 = vmatpush1.bf16.msra.mxu0 %v11021
  %11055 = vmatprep.subr.bf16.mxu0 %v11024
  %11056 = vmatpush1.bf16.msra.mxu0 %v11023
  %11057 = vmatprep.subr.bf16.mxu0 %v11026
  %11058 = vmatpush1.bf16.msra.mxu0 %v11025
  %11059 = vmatprep.subr.bf16.mxu0 %v11028
  %11060 = vmatpush1.bf16.msra.mxu0 %v11027
  %11061 = vmatprep.subr.bf16.mxu0 %v11030
  %11062 = vmatpush1.bf16.msra.mxu0 %v11029
  %11063 = vmatprep.subr.bf16.mxu0 %v11032
  %11064 = vmatpush1.bf16.msra.mxu0 %v11031
  %11065 = vmatprep.subr.bf16.mxu0 0
  %11066 = vmatpush1.bf16.msra.mxu0 0
  %11067 = vmatprep.subr.bf16.mxu0 0
  %11068 = vmatpush1.bf16.msra.mxu0 0
  %11069 = vmatprep.subr.bf16.mxu0 0
  %11070 = vmatpush1.bf16.msra.mxu0 0
  %11071 = vmatprep.subr.bf16.mxu0 0
  %11072 = vmatpush1.bf16.msra.mxu0 0
  %11073 = vmatprep.subr.bf16.mxu0 0
  %11074 = vmatpush1.bf16.msra.mxu0 0
  %11075 = vmatprep.subr.bf16.mxu0 0
  %11076 = vmatpush1.bf16.msra.mxu0 0
  %11077 = vmatprep.subr.bf16.mxu0 0
  %11078 = vmatpush1.bf16.msra.mxu0 0
  %11079 = vmatprep.subr.bf16.mxu0 0
  %11080 = vmatpush1.bf16.msra.mxu0 0
  %11081 = vmatprep.mubr.bf16.mxu0 0
  %11082 = vmatmul.mubr.bf16.gmra.mrb[0].mxu0 %v10950
  %v11083 = vpop.f32.mrb[0].mxu0
  %v11084 = vadd.f32 0.0, %v11083
  %v11085 = vpop.f32.mrb[0].mxu0
  %v11086 = vadd.f32 0.0, %v11085
  %v11087 = vpop.f32.mrb[0].mxu0
  %v11088 = vadd.f32 0.0, %v11087
  %v11089 = vpop.f32.mrb[0].mxu0
  %v11090 = vadd.f32 0.0, %v11089
  %11091 = vmatprep.mubr.bf16.mxu0 0
  %11092 = vmatmul.mubr.bf16.gmra.mrb[0].mxu0 %v10951
  %v11093 = vpop.f32.mrb[0].mxu0
  %v11094 = vadd.f32 0.0, %v11093
  %v11095 = vpop.f32.mrb[0].mxu0
  %v11096 = vadd.f32 0.0, %v11095
  %v11097 = vpop.f32.mrb[0].mxu0
  %v11098 = vadd.f32 0.0, %v11097
  %v11099 = vpop.f32.mrb[0].mxu0
  %v11100 = vadd.f32 0.0, %v11099
  %11101 = vdwg.mxu0
  %v11102 = vadd.f32 %v10938, %v11084
  %v11103 = vadd.f32 %v10939, %v11086
  %v11104 = vadd.f32 %v10940, %v11088
  %v11105 = vadd.f32 %v10941, %v11090
  %v11106 = vadd.f32 %v10942, %v11094
  %v11107 = vadd.f32 %v10943, %v11096
  %v11108 = vadd.f32 %v10944, %v11098
  %v11109 = vadd.f32 %v10945, %v11100
  %v11110 = vld [vmem:[%s10781 + $0x10] sm:$0xff]
  %v11111 = vld [vmem:[%s10781 + $0x18] sm:$0xff]
  %v11112 = vld [vmem:[%s10781 + $0x30] sm:$0xff]
  %v11113 = vld [vmem:[%s10781 + $0x38] sm:$0xff]
  %v11114 = vpack.c.bf16 %v11111, %v11110
  %v11115 = vpack.c.bf16 %v11113, %v11112
  %s11116 = scalar_lea.vmem %s7, 1024
  %v11117 = vld [vmem:[%s11116] sm:$0xff]
  %v11118 = vld [vmem:[%s11116 + $0x8] sm:$0xff]
  %v11119 = vld [vmem:[%s11116 + $0x10] sm:$0xff]
  %v11120 = vld [vmem:[%s11116 + $0x18] sm:$0xff]
  %v11121 = vld [vmem:[%s11116 + $0x20] sm:$0xff]
  %v11122 = vld [vmem:[%s11116 + $0x28] sm:$0xff]
  %v11123 = vld [vmem:[%s11116 + $0x30] sm:$0xff]
  %v11124 = vld [vmem:[%s11116 + $0x38] sm:$0xff]
  %v11125 = vld [vmem:[%s11116 + $0x40] sm:$0xff]
  %v11126 = vld [vmem:[%s11116 + $0x48] sm:$0xff]
  %v11127 = vld [vmem:[%s11116 + $0x50] sm:$0xff]
  %v11128 = vld [vmem:[%s11116 + $0x58] sm:$0xff]
  %v11129 = vld [vmem:[%s11116 + $0x60] sm:$0xff]
  %v11130 = vld [vmem:[%s11116 + $0x68] sm:$0xff]
  %v11131 = vld [vmem:[%s11116 + $0x70] sm:$0xff]
  %v11132 = vld [vmem:[%s11116 + $0x78] sm:$0xff]
  %v11149 = vunpack.c.l.b16 %v11117
  %v11150 = vunpack.c.h.b16 %v11117
  %v11151 = vunpack.c.l.b16 %v11118
  %v11152 = vunpack.c.h.b16 %v11118
  %v11153 = vunpack.c.l.b16 %v11119
  %v11154 = vunpack.c.h.b16 %v11119
  %v11155 = vunpack.c.l.b16 %v11120
  %v11156 = vunpack.c.h.b16 %v11120
  %v11157 = vunpack.c.l.b16 %v11121
  %v11158 = vunpack.c.h.b16 %v11121
  %v11159 = vunpack.c.l.b16 %v11122
  %v11160 = vunpack.c.h.b16 %v11122
  %v11161 = vunpack.c.l.b16 %v11123
  %v11162 = vunpack.c.h.b16 %v11123
  %v11163 = vunpack.c.l.b16 %v11124
  %v11164 = vunpack.c.h.b16 %v11124
  %v11165 = vunpack.c.l.b16 %v11125
  %v11166 = vunpack.c.h.b16 %v11125
  %v11167 = vunpack.c.l.b16 %v11126
  %v11168 = vunpack.c.h.b16 %v11126
  %v11169 = vunpack.c.l.b16 %v11127
  %v11170 = vunpack.c.h.b16 %v11127
  %v11171 = vunpack.c.l.b16 %v11128
  %v11172 = vunpack.c.h.b16 %v11128
  %v11173 = vunpack.c.l.b16 %v11129
  %v11174 = vunpack.c.h.b16 %v11129
  %v11175 = vunpack.c.l.b16 %v11130
  %v11176 = vunpack.c.h.b16 %v11130
  %v11177 = vunpack.c.l.b16 %v11131
  %v11178 = vunpack.c.h.b16 %v11131
  %v11179 = vunpack.c.l.b16 %v11132
  %v11180 = vunpack.c.h.b16 %v11132
  %v11181 = vpack.c.b16 %v11151, %v11149
  %v11182 = vpack.c.b16 %v11152, %v11150
  %v11183 = vpack.c.b16 %v11155, %v11153
  %v11184 = vpack.c.b16 %v11156, %v11154
  %v11185 = vpack.c.b16 %v11159, %v11157
  %v11186 = vpack.c.b16 %v11160, %v11158
  %v11187 = vpack.c.b16 %v11163, %v11161
  %v11188 = vpack.c.b16 %v11164, %v11162
  %v11189 = vpack.c.b16 %v11167, %v11165
  %v11190 = vpack.c.b16 %v11168, %v11166
  %v11191 = vpack.c.b16 %v11171, %v11169
  %v11192 = vpack.c.b16 %v11172, %v11170
  %v11193 = vpack.c.b16 %v11175, %v11173
  %v11194 = vpack.c.b16 %v11176, %v11174
  %v11195 = vpack.c.b16 %v11179, %v11177
  %v11196 = vpack.c.b16 %v11180, %v11178
  %11213 = vmatprep.subr.bf16.mxu0 %v11182
  %11214 = vmatpush1.bf16.msra.mxu0 %v11181
  %11215 = vmatprep.subr.bf16.mxu0 %v11184
  %11216 = vmatpush1.bf16.msra.mxu0 %v11183
  %11217 = vmatprep.subr.bf16.mxu0 %v11186
  %11218 = vmatpush1.bf16.msra.mxu0 %v11185
  %11219 = vmatprep.subr.bf16.mxu0 %v11188
  %11220 = vmatpush1.bf16.msra.mxu0 %v11187
  %11221 = vmatprep.subr.bf16.mxu0 %v11190
  %11222 = vmatpush1.bf16.msra.mxu0 %v11189
  %11223 = vmatprep.subr.bf16.mxu0 %v11192
  %11224 = vmatpush1.bf16.msra.mxu0 %v11191
  %11225 = vmatprep.subr.bf16.mxu0 %v11194
  %11226 = vmatpush1.bf16.msra.mxu0 %v11193
  %11227 = vmatprep.subr.bf16.mxu0 %v11196
  %11228 = vmatpush1.bf16.msra.mxu0 %v11195
  %11229 = vmatprep.subr.bf16.mxu0 0
  %11230 = vmatpush1.bf16.msra.mxu0 0
  %11231 = vmatprep.subr.bf16.mxu0 0
  %11232 = vmatpush1.bf16.msra.mxu0 0
  %11233 = vmatprep.subr.bf16.mxu0 0
  %11234 = vmatpush1.bf16.msra.mxu0 0
  %11235 = vmatprep.subr.bf16.mxu0 0
  %11236 = vmatpush1.bf16.msra.mxu0 0
  %11237 = vmatprep.subr.bf16.mxu0 0
  %11238 = vmatpush1.bf16.msra.mxu0 0
  %11239 = vmatprep.subr.bf16.mxu0 0
  %11240 = vmatpush1.bf16.msra.mxu0 0
  %11241 = vmatprep.subr.bf16.mxu0 0
  %11242 = vmatpush1.bf16.msra.mxu0 0
  %11243 = vmatprep.subr.bf16.mxu0 0
  %11244 = vmatpush1.bf16.msra.mxu0 0
  %11245 = vmatprep.mubr.bf16.mxu0 0
  %11246 = vmatmul.mubr.bf16.gmra.mrb[0].mxu0 %v11114
  %v11247 = vpop.f32.mrb[0].mxu0
  %v11248 = vadd.f32 0.0, %v11247
  %v11249 = vpop.f32.mrb[0].mxu0
  %v11250 = vadd.f32 0.0, %v11249
  %v11251 = vpop.f32.mrb[0].mxu0
  %v11252 = vadd.f32 0.0, %v11251
  %v11253 = vpop.f32.mrb[0].mxu0
  %v11254 = vadd.f32 0.0, %v11253
  %11255 = vmatprep.mubr.bf16.mxu0 0
  %11256 = vmatmul.mubr.bf16.gmra.mrb[0].mxu0 %v11115
  %v11257 = vpop.f32.mrb[0].mxu0
  %v11258 = vadd.f32 0.0, %v11257
  %v11259 = vpop.f32.mrb[0].mxu0
  %v11260 = vadd.f32 0.0, %v11259
  %v11261 = vpop.f32.mrb[0].mxu0
  %v11262 = vadd.f32 0.0, %v11261
  %v11263 = vpop.f32.mrb[0].mxu0
  %v11264 = vadd.f32 0.0, %v11263
  %11265 = vdwg.mxu0
  %v11266 = vadd.f32 %v11102, %v11248
  %v11267 = vadd.f32 %v11103, %v11250
  %v11268 = vadd.f32 %v11104, %v11252
  %v11269 = vadd.f32 %v11105, %v11254
  %v11270 = vadd.f32 %v11106, %v11258
  %v11271 = vadd.f32 %v11107, %v11260
  %v11272 = vadd.f32 %v11108, %v11262
  %v11273 = vadd.f32 %v11109, %v11264
  %v11274 = vld [vmem:[%s8] sm:$0x3]
  %v11276 = vlaneseq
  %v11277 = vshrl.u32 %v11276, 7
  %v11278 = vsub.s32 0, %v11277
  %v11279 = vrot.slane %v11274, %v11278
  %v11280 = vlaneseq
  %v11281 = vshrl.u32 %v11280, 7
  %v11282 = vsub.s32 1, %v11281
  %v11283 = vrot.slane %v11274, %v11282
  %v11286 = vadd.f32 %v11266, %v11279
  %v11287 = vadd.f32 %v11267, %v11283
  %v11288 = vadd.f32 %v11268, %v11279
  %v11289 = vadd.f32 %v11269, %v11283
  %v11290 = vadd.f32 %v11270, %v11279
  %v11291 = vadd.f32 %v11271, %v11283
  %v11292 = vadd.f32 %v11272, %v11279
  %v11293 = vadd.f32 %v11273, %v11283
  %v11294 = vmax.f32 %v11286, 0.0
  %v11295 = vmax.f32 %v11287, 0.0
  %v11296 = vmax.f32 %v11288, 0.0
  %v11297 = vmax.f32 %v11289, 0.0
  %v11298 = vmax.f32 %v11290, 0.0
  %v11299 = vmax.f32 %v11291, 0.0
  %v11300 = vmax.f32 %v11292, 0.0
  %v11301 = vmax.f32 %v11293, 0.0
  %v11302 = vmax.f32 %v11294, %v11298
  %v11303 = vmax.f32 %v11295, %v11299
  %v11304 = vmax.f32 %v11296, %v11300
  %v11305 = vmax.f32 %v11297, %v11301
  %v11306 = vmax.f32 %v11302, %v11304
  %v11307 = vmax.f32 %v11303, %v11305
  %v11308 = vpack.c.bf16 %v11306, %v11306
  %v11309 = vpack.c.bf16 %v11307, %v11307
  %v11310 = vld [vmem:[%s9] sm:$0xff]
  %v11311 = vld [vmem:[%s9 + $0x8] sm:$0xff]
  %v11312 = vld [vmem:[%s9 + $0x10] sm:$0xff]
  %v11313 = vld [vmem:[%s9 + $0x18] sm:$0xff]
  %v11314 = vld [vmem:[%s9 + $0x20] sm:$0xff]
  %v11315 = vld [vmem:[%s9 + $0x28] sm:$0xff]
  %v11316 = vld [vmem:[%s9 + $0x30] sm:$0xff]
  %v11317 = vld [vmem:[%s9 + $0x38] sm:$0xff]
  %v11318 = vld [vmem:[%s9 + $0x40] sm:$0xff]
  %v11319 = vld [vmem:[%s9 + $0x48] sm:$0xff]
  %v11320 = vld [vmem:[%s9 + $0x50] sm:$0xff]
  %v11321 = vld [vmem:[%s9 + $0x58] sm:$0xff]
  %v11322 = vld [vmem:[%s9 + $0x60] sm:$0xff]
  %v11323 = vld [vmem:[%s9 + $0x68] sm:$0xff]
  %v11324 = vld [vmem:[%s9 + $0x70] sm:$0xff]
  %v11325 = vld [vmem:[%s9 + $0x78] sm:$0xff]
  %v11326 = vld [vmem:[%s9 + $0x80] sm:$0xff]
  %v11327 = vld [vmem:[%s9 + $0x88] sm:$0xff]
  %v11328 = vld [vmem:[%s9 + $0x90] sm:$0xff]
  %v11329 = vld [vmem:[%s9 + $0x98] sm:$0xff]
  %v11330 = vld [vmem:[%s9 + $0xa0] sm:$0xff]
  %v11331 = vld [vmem:[%s9 + $0xa8] sm:$0xff]
  %v11332 = vld [vmem:[%s9 + $0xb0] sm:$0xff]
  %v11333 = vld [vmem:[%s9 + $0xb8] sm:$0xff]
  %v11334 = vld [vmem:[%s9 + $0xc0] sm:$0xff]
  %v11335 = vld [vmem:[%s9 + $0xc8] sm:$0xff]
  %v11336 = vld [vmem:[%s9 + $0xd0] sm:$0xff]
  %v11337 = vld [vmem:[%s9 + $0xd8] sm:$0xff]
  %v11338 = vld [vmem:[%s9 + $0xe0] sm:$0xff]
  %v11339 = vld [vmem:[%s9 + $0xe8] sm:$0xff]
  %v11340 = vld [vmem:[%s9 + $0xf0] sm:$0xff]
  %v11341 = vld [vmem:[%s9 + $0xf8] sm:$0xff]
  %v11342 = vld [vmem:[%s9 + $0x100] sm:$0xff]
  %v11343 = vld [vmem:[%s9 + $0x108] sm:$0xff]
  %v11344 = vld [vmem:[%s9 + $0x110] sm:$0xff]
  %v11345 = vld [vmem:[%s9 + $0x118] sm:$0xff]
  %v11346 = vld [vmem:[%s9 + $0x120] sm:$0xff]
  %v11347 = vld [vmem:[%s9 + $0x128] sm:$0xff]
  %v11348 = vld [vmem:[%s9 + $0x130] sm:$0xff]
  %v11349 = vld [vmem:[%s9 + $0x138] sm:$0xff]
  %v11350 = vld [vmem:[%s9 + $0x140] sm:$0xff]
  %v11351 = vld [vmem:[%s9 + $0x148] sm:$0xff]
  %v11352 = vld [vmem:[%s9 + $0x150] sm:$0xff]
  %v11353 = vld [vmem:[%s9 + $0x158] sm:$0xff]
  %v11354 = vld [vmem:[%s9 + $0x160] sm:$0xff]
  %v11355 = vld [vmem:[%s9 + $0x168] sm:$0xff]
  %v11356 = vld [vmem:[%s9 + $0x170] sm:$0xff]
  %v11357 = vld [vmem:[%s9 + $0x178] sm:$0xff]
  %v11358 = vld [vmem:[%s9 + $0x180] sm:$0xff]
  %v11359 = vld [vmem:[%s9 + $0x188] sm:$0xff]
  %v11360 = vld [vmem:[%s9 + $0x190] sm:$0xff]
  %v11361 = vld [vmem:[%s9 + $0x198] sm:$0xff]
  %v11362 = vld [vmem:[%s9 + $0x1a0] sm:$0xff]
  %v11363 = vld [vmem:[%s9 + $0x1a8] sm:$0xff]
  %v11364 = vld [vmem:[%s9 + $0x1b0] sm:$0xff]
  %v11365 = vld [vmem:[%s9 + $0x1b8] sm:$0xff]
  %v11366 = vld [vmem:[%s9 + $0x1c0] sm:$0xff]
  %v11367 = vld [vmem:[%s9 + $0x1c8] sm:$0xff]
  %v11368 = vld [vmem:[%s9 + $0x1d0] sm:$0xff]
  %v11369 = vld [vmem:[%s9 + $0x1d8] sm:$0xff]
  %v11370 = vld [vmem:[%s9 + $0x1e0] sm:$0xff]
  %v11371 = vld [vmem:[%s9 + $0x1e8] sm:$0xff]
  %v11372 = vld [vmem:[%s9 + $0x1f0] sm:$0xff]
  %v11373 = vld [vmem:[%s9 + $0x1f8] sm:$0xff]
  %v11374 = vld [vmem:[%s10] sm:$0xf]
  %v11376 = vlaneseq
  %v11377 = vshrl.u32 %v11376, 7
  %v11378 = vsub.s32 0, %v11377
  %v11379 = vrot.slane %v11374, %v11378
  %v11380 = vlaneseq
  %v11381 = vshrl.u32 %v11380, 7
  %v11382 = vsub.s32 1, %v11381
  %v11383 = vrot.slane %v11374, %v11382
  %v11384 = vlaneseq
  %v11385 = vshrl.u32 %v11384, 7
  %v11386 = vsub.s32 2, %v11385
  %v11387 = vrot.slane %v11374, %v11386
  %v11388 = vlaneseq
  %v11389 = vshrl.u32 %v11388, 7
  %v11390 = vsub.s32 3, %v11389
  %v11391 = vrot.slane %v11374, %v11390
  %v11460 = vunpack.c.l.b16 %v11310
  %v11461 = vunpack.c.h.b16 %v11310
  %v11462 = vunpack.c.l.b16 %v11311
  %v11463 = vunpack.c.h.b16 %v11311
  %v11464 = vunpack.c.l.b16 %v11312
  %v11465 = vunpack.c.h.b16 %v11312
  %v11466 = vunpack.c.l.b16 %v11313
  %v11467 = vunpack.c.h.b16 %v11313
  %v11468 = vunpack.c.l.b16 %v11314
  %v11469 = vunpack.c.h.b16 %v11314
  %v11470 = vunpack.c.l.b16 %v11315
  %v11471 = vunpack.c.h.b16 %v11315
  %v11472 = vunpack.c.l.b16 %v11316
  %v11473 = vunpack.c.h.b16 %v11316
  %v11474 = vunpack.c.l.b16 %v11317
  %v11475 = vunpack.c.h.b16 %v11317
  %v11476 = vunpack.c.l.b16 %v11318
  %v11477 = vunpack.c.h.b16 %v11318
  %v11478 = vunpack.c.l.b16 %v11319
  %v11479 = vunpack.c.h.b16 %v11319
  %v11480 = vunpack.c.l.b16 %v11320
  %v11481 = vunpack.c.h.b16 %v11320
  %v11482 = vunpack.c.l.b16 %v11321
  %v11483 = vunpack.c.h.b16 %v11321
  %v11484 = vunpack.c.l.b16 %v11322
  %v11485 = vunpack.c.h.b16 %v11322
  %v11486 = vunpack.c.l.b16 %v11323
  %v11487 = vunpack.c.h.b16 %v11323
  %v11488 = vunpack.c.l.b16 %v11324
  %v11489 = vunpack.c.h.b16 %v11324
  %v11490 = vunpack.c.l.b16 %v11325
  %v11491 = vunpack.c.h.b16 %v11325
  %v11492 = vunpack.c.l.b16 %v11326
  %v11493 = vunpack.c.h.b16 %v11326
  %v11494 = vunpack.c.l.b16 %v11327
  %v11495 = vunpack.c.h.b16 %v11327
  %v11496 = vunpack.c.l.b16 %v11328
  %v11497 = vunpack.c.h.b16 %v11328
  %v11498 = vunpack.c.l.b16 %v11329
  %v11499 = vunpack.c.h.b16 %v11329
  %v11500 = vunpack.c.l.b16 %v11330
  %v11501 = vunpack.c.h.b16 %v11330
  %v11502 = vunpack.c.l.b16 %v11331
  %v11503 = vunpack.c.h.b16 %v11331
  %v11504 = vunpack.c.l.b16 %v11332
  %v11505 = vunpack.c.h.b16 %v11332
  %v11506 = vunpack.c.l.b16 %v11333
  %v11507 = vunpack.c.h.b16 %v11333
  %v11508 = vunpack.c.l.b16 %v11334
  %v11509 = vunpack.c.h.b16 %v11334
  %v11510 = vunpack.c.l.b16 %v11335
  %v11511 = vunpack.c.h.b16 %v11335
  %v11512 = vunpack.c.l.b16 %v11336
  %v11513 = vunpack.c.h.b16 %v11336
  %v11514 = vunpack.c.l.b16 %v11337
  %v11515 = vunpack.c.h.b16 %v11337
  %v11516 = vunpack.c.l.b16 %v11338
  %v11517 = vunpack.c.h.b16 %v11338
  %v11518 = vunpack.c.l.b16 %v11339
  %v11519 = vunpack.c.h.b16 %v11339
  %v11520 = vunpack.c.l.b16 %v11340
  %v11521 = vunpack.c.h.b16 %v11340
  %v11522 = vunpack.c.l.b16 %v11341
  %v11523 = vunpack.c.h.b16 %v11341
  %v11524 = vunpack.c.l.b16 %v11342
  %v11525 = vunpack.c.h.b16 %v11342
  %v11526 = vunpack.c.l.b16 %v11343
  %v11527 = vunpack.c.h.b16 %v11343
  %v11528 = vunpack.c.l.b16 %v11344
  %v11529 = vunpack.c.h.b16 %v11344
  %v11530 = vunpack.c.l.b16 %v11345
  %v11531 = vunpack.c.h.b16 %v11345
  %v11532 = vunpack.c.l.b16 %v11346
  %v11533 = vunpack.c.h.b16 %v11346
  %v11534 = vunpack.c.l.b16 %v11347
  %v11535 = vunpack.c.h.b16 %v11347
  %v11536 = vunpack.c.l.b16 %v11348
  %v11537 = vunpack.c.h.b16 %v11348
  %v11538 = vunpack.c.l.b16 %v11349
  %v11539 = vunpack.c.h.b16 %v11349
  %v11540 = vunpack.c.l.b16 %v11350
  %v11541 = vunpack.c.h.b16 %v11350
  %v11542 = vunpack.c.l.b16 %v11351
  %v11543 = vunpack.c.h.b16 %v11351
  %v11544 = vunpack.c.l.b16 %v11352
  %v11545 = vunpack.c.h.b16 %v11352
  %v11546 = vunpack.c.l.b16 %v11353
  %v11547 = vunpack.c.h.b16 %v11353
  %v11548 = vunpack.c.l.b16 %v11354
  %v11549 = vunpack.c.h.b16 %v11354
  %v11550 = vunpack.c.l.b16 %v11355
  %v11551 = vunpack.c.h.b16 %v11355
  %v11552 = vunpack.c.l.b16 %v11356
  %v11553 = vunpack.c.h.b16 %v11356
  %v11554 = vunpack.c.l.b16 %v11357
  %v11555 = vunpack.c.h.b16 %v11357
  %v11556 = vunpack.c.l.b16 %v11358
  %v11557 = vunpack.c.h.b16 %v11358
  %v11558 = vunpack.c.l.b16 %v11359
  %v11559 = vunpack.c.h.b16 %v11359
  %v11560 = vunpack.c.l.b16 %v11360
  %v11561 = vunpack.c.h.b16 %v11360
  %v11562 = vunpack.c.l.b16 %v11361
  %v11563 = vunpack.c.h.b16 %v11361
  %v11564 = vunpack.c.l.b16 %v11362
  %v11565 = vunpack.c.h.b16 %v11362
  %v11566 = vunpack.c.l.b16 %v11363
  %v11567 = vunpack.c.h.b16 %v11363
  %v11568 = vunpack.c.l.b16 %v11364
  %v11569 = vunpack.c.h.b16 %v11364
  %v11570 = vunpack.c.l.b16 %v11365
  %v11571 = vunpack.c.h.b16 %v11365
  %v11572 = vunpack.c.l.b16 %v11366
  %v11573 = vunpack.c.h.b16 %v11366
  %v11574 = vunpack.c.l.b16 %v11367
  %v11575 = vunpack.c.h.b16 %v11367
  %v11576 = vunpack.c.l.b16 %v11368
  %v11577 = vunpack.c.h.b16 %v11368
  %v11578 = vunpack.c.l.b16 %v11369
  %v11579 = vunpack.c.h.b16 %v11369
  %v11580 = vunpack.c.l.b16 %v11370
  %v11581 = vunpack.c.h.b16 %v11370
  %v11582 = vunpack.c.l.b16 %v11371
  %v11583 = vunpack.c.h.b16 %v11371
  %v11584 = vunpack.c.l.b16 %v11372
  %v11585 = vunpack.c.h.b16 %v11372
  %v11586 = vunpack.c.l.b16 %v11373
  %v11587 = vunpack.c.h.b16 %v11373
  %v11588 = vpack.c.b16 %v11464, %v11460
  %v11589 = vpack.c.b16 %v11465, %v11461
  %v11590 = vpack.c.b16 %v11466, %v11462
  %v11591 = vpack.c.b16 %v11467, %v11463
  %v11592 = vpack.c.b16 %v11472, %v11468
  %v11593 = vpack.c.b16 %v11473, %v11469
  %v11594 = vpack.c.b16 %v11474, %v11470
  %v11595 = vpack.c.b16 %v11475, %v11471
  %v11596 = vpack.c.b16 %v11480, %v11476
  %v11597 = vpack.c.b16 %v11481, %v11477
  %v11598 = vpack.c.b16 %v11482, %v11478
  %v11599 = vpack.c.b16 %v11483, %v11479
  %v11600 = vpack.c.b16 %v11488, %v11484
  %v11601 = vpack.c.b16 %v11489, %v11485
  %v11602 = vpack.c.b16 %v11490, %v11486
  %v11603 = vpack.c.b16 %v11491, %v11487
  %v11604 = vpack.c.b16 %v11496, %v11492
  %v11605 = vpack.c.b16 %v11497, %v11493
  %v11606 = vpack.c.b16 %v11498, %v11494
  %v11607 = vpack.c.b16 %v11499, %v11495
  %v11608 = vpack.c.b16 %v11504, %v11500
  %v11609 = vpack.c.b16 %v11505, %v11501
  %v11610 = vpack.c.b16 %v11506, %v11502
  %v11611 = vpack.c.b16 %v11507, %v11503
  %v11612 = vpack.c.b16 %v11512, %v11508
  %v11613 = vpack.c.b16 %v11513, %v11509
  %v11614 = vpack.c.b16 %v11514, %v11510
  %v11615 = vpack.c.b16 %v11515, %v11511
  %v11616 = vpack.c.b16 %v11520, %v11516
  %v11617 = vpack.c.b16 %v11521, %v11517
  %v11618 = vpack.c.b16 %v11522, %v11518
  %v11619 = vpack.c.b16 %v11523, %v11519
  %v11620 = vpack.c.b16 %v11528, %v11524
  %v11621 = vpack.c.b16 %v11529, %v11525
  %v11622 = vpack.c.b16 %v11530, %v11526
  %v11623 = vpack.c.b16 %v11531, %v11527
  %v11624 = vpack.c.b16 %v11536, %v11532
  %v11625 = vpack.c.b16 %v11537, %v11533
  %v11626 = vpack.c.b16 %v11538, %v11534
  %v11627 = vpack.c.b16 %v11539, %v11535
  %v11628 = vpack.c.b16 %v11544, %v11540
  %v11629 = vpack.c.b16 %v11545, %v11541
  %v11630 = vpack.c.b16 %v11546, %v11542
  %v11631 = vpack.c.b16 %v11547, %v11543
  %v11632 = vpack.c.b16 %v11552, %v11548
  %v11633 = vpack.c.b16 %v11553, %v11549
  %v11634 = vpack.c.b16 %v11554, %v11550
  %v11635 = vpack.c.b16 %v11555, %v11551
  %v11636 = vpack.c.b16 %v11560, %v11556
  %v11637 = vpack.c.b16 %v11561, %v11557
  %v11638 = vpack.c.b16 %v11562, %v11558
  %v11639 = vpack.c.b16 %v11563, %v11559
  %v11640 = vpack.c.b16 %v11568, %v11564
  %v11641 = vpack.c.b16 %v11569, %v11565
  %v11642 = vpack.c.b16 %v11570, %v11566
  %v11643 = vpack.c.b16 %v11571, %v11567
  %v11644 = vpack.c.b16 %v11576, %v11572
  %v11645 = vpack.c.b16 %v11577, %v11573
  %v11646 = vpack.c.b16 %v11578, %v11574
  %v11647 = vpack.c.b16 %v11579, %v11575
  %v11648 = vpack.c.b16 %v11584, %v11580
  %v11649 = vpack.c.b16 %v11585, %v11581
  %v11650 = vpack.c.b16 %v11586, %v11582
  %v11651 = vpack.c.b16 %v11587, %v11583
  %11716 = vmatprep.subr.bf16.mxu0 %v11589
  %11717 = vmatpush1.bf16.msra.mxu0 %v11588
  %11718 = vmatprep.subr.bf16.mxu0 %v11593
  %11719 = vmatpush1.bf16.msra.mxu0 %v11592
  %11720 = vmatprep.subr.bf16.mxu0 %v11597
  %11721 = vmatpush1.bf16.msra.mxu0 %v11596
  %11722 = vmatprep.subr.bf16.mxu0 %v11601
  %11723 = vmatpush1.bf16.msra.mxu0 %v11600
  %11724 = vmatprep.subr.bf16.mxu0 %v11605
  %11725 = vmatpush1.bf16.msra.mxu0 %v11604
  %11726 = vmatprep.subr.bf16.mxu0 %v11609
  %11727 = vmatpush1.bf16.msra.mxu0 %v11608
  %11728 = vmatprep.subr.bf16.mxu0 %v11613
  %11729 = vmatpush1.bf16.msra.mxu0 %v11612
  %11730 = vmatprep.subr.bf16.mxu0 %v11617
  %11731 = vmatpush1.bf16.msra.mxu0 %v11616
  %11732 = vmatprep.subr.bf16.mxu0 %v11621
  %11733 = vmatpush1.bf16.msra.mxu0 %v11620
  %11734 = vmatprep.subr.bf16.mxu0 %v11625
  %11735 = vmatpush1.bf16.msra.mxu0 %v11624
  %11736 = vmatprep.subr.bf16.mxu0 %v11629
  %11737 = vmatpush1.bf16.msra.mxu0 %v11628
  %11738 = vmatprep.subr.bf16.mxu0 %v11633
  %11739 = vmatpush1.bf16.msra.mxu0 %v11632
  %11740 = vmatprep.subr.bf16.mxu0 %v11637
  %11741 = vmatpush1.bf16.msra.mxu0 %v11636
  %11742 = vmatprep.subr.bf16.mxu0 %v11641
  %11743 = vmatpush1.bf16.msra.mxu0 %v11640
  %11744 = vmatprep.subr.bf16.mxu0 %v11645
  %11745 = vmatpush1.bf16.msra.mxu0 %v11644
  %11746 = vmatprep.subr.bf16.mxu0 %v11649
  %11747 = vmatpush1.bf16.msra.mxu0 %v11648
  %11748 = vmatprep.mubr.bf16.mxu0 %v11309
  %11749 = vmatmul.mubr.bf16.gmra.mrb[0].mxu0 %v11308
  %v11750 = vpop.f32.mrb[0].mxu0
  %v11751 = vadd.f32 %v11379, %v11750
  %v11752 = vpop.f32.mrb[0].mxu0
  %v11753 = vadd.f32 %v11383, %v11752
  %v11754 = vpop.f32.mrb[0].mxu0
  %v11755 = vpop.f32.mrb[0].mxu0
  %11756 = vdwg.mxu0
  %11757 = vmatprep.subr.bf16.mxu0 %v11591
  %11758 = vmatpush1.bf16.msra.mxu0 %v11590
  %11759 = vmatprep.subr.bf16.mxu0 %v11595
  %11760 = vmatpush1.bf16.msra.mxu0 %v11594
  %11761 = vmatprep.subr.bf16.mxu0 %v11599
  %11762 = vmatpush1.bf16.msra.mxu0 %v11598
  %11763 = vmatprep.subr.bf16.mxu0 %v11603
  %11764 = vmatpush1.bf16.msra.mxu0 %v11602
  %11765 = vmatprep.subr.bf16.mxu0 %v11607
  %11766 = vmatpush1.bf16.msra.mxu0 %v11606
  %11767 = vmatprep.subr.bf16.mxu0 %v11611
  %11768 = vmatpush1.bf16.msra.mxu0 %v11610
  %11769 = vmatprep.subr.bf16.mxu0 %v11615
  %11770 = vmatpush1.bf16.msra.mxu0 %v11614
  %11771 = vmatprep.subr.bf16.mxu0 %v11619
  %11772 = vmatpush1.bf16.msra.mxu0 %v11618
  %11773 = vmatprep.subr.bf16.mxu0 %v11623
  %11774 = vmatpush1.bf16.msra.mxu0 %v11622
  %11775 = vmatprep.subr.bf16.mxu0 %v11627
  %11776 = vmatpush1.bf16.msra.mxu0 %v11626
  %11777 = vmatprep.subr.bf16.mxu0 %v11631
  %11778 = vmatpush1.bf16.msra.mxu0 %v11630
  %11779 = vmatprep.subr.bf16.mxu0 %v11635
  %11780 = vmatpush1.bf16.msra.mxu0 %v11634
  %11781 = vmatprep.subr.bf16.mxu0 %v11639
  %11782 = vmatpush1.bf16.msra.mxu0 %v11638
  %11783 = vmatprep.subr.bf16.mxu0 %v11643
  %11784 = vmatpush1.bf16.msra.mxu0 %v11642
  %11785 = vmatprep.subr.bf16.mxu0 %v11647
  %11786 = vmatpush1.bf16.msra.mxu0 %v11646
  %11787 = vmatprep.subr.bf16.mxu0 %v11651
  %11788 = vmatpush1.bf16.msra.mxu0 %v11650
  %11789 = vmatprep.mubr.bf16.mxu0 %v11309
  %11790 = vmatmul.mubr.bf16.gmra.mrb[0].mxu0 %v11308
  %v11791 = vpop.f32.mrb[0].mxu0
  %v11792 = vadd.f32 %v11387, %v11791
  %v11793 = vpop.f32.mrb[0].mxu0
  %v11794 = vadd.f32 %v11391, %v11793
  %v11795 = vpop.f32.mrb[0].mxu0
  %v11796 = vpop.f32.mrb[0].mxu0
  %11797 = vdwg.mxu0
  %v11798 = vmax.f32 %v11751, 0.0
  %v11799 = vmax.f32 %v11753, 0.0
  %v11800 = vmax.f32 %v11792, 0.0
  %v11801 = vmax.f32 %v11794, 0.0
  %v11802 = vpack.c.bf16 %v11798, %v11798
  %v11803 = vpack.c.bf16 %v11799, %v11799
  %v11804 = vpack.c.bf16 %v11800, %v11800
  %v11805 = vpack.c.bf16 %v11801, %v11801
  %v11806 = vld [vmem:[%s11] sm:$0xf]
  %v11807 = vld [vmem:[%s11 + $0x4] sm:$0xf]
  %v11808 = vld [vmem:[%s11 + $0x8] sm:$0xf]
  %v11809 = vld [vmem:[%s11 + $0xc] sm:$0xf]
  %v11810 = vld [vmem:[%s11 + $0x10] sm:$0xf]
  %v11811 = vld [vmem:[%s11 + $0x14] sm:$0xf]
  %v11812 = vld [vmem:[%s11 + $0x18] sm:$0xf]
  %v11813 = vld [vmem:[%s11 + $0x1c] sm:$0xf]
  %v11814 = vld [vmem:[%s11 + $0x20] sm:$0xf]
  %v11815 = vld [vmem:[%s11 + $0x24] sm:$0xf]
  %v11816 = vld [vmem:[%s11 + $0x28] sm:$0xf]
  %v11817 = vld [vmem:[%s11 + $0x2c] sm:$0xf]
  %v11818 = vld [vmem:[%s11 + $0x30] sm:$0xf]
  %v11819 = vld [vmem:[%s11 + $0x34] sm:$0xf]
  %v11820 = vld [vmem:[%s11 + $0x38] sm:$0xf]
  %v11821 = vld [vmem:[%s11 + $0x3c] sm:$0xf]
  %v11822 = vld [vmem:[%s11 + $0x40] sm:$0xf]
  %v11823 = vld [vmem:[%s11 + $0x44] sm:$0xf]
  %v11824 = vld [vmem:[%s11 + $0x48] sm:$0xf]
  %v11825 = vld [vmem:[%s11 + $0x4c] sm:$0xf]
  %v11826 = vld [vmem:[%s11 + $0x50] sm:$0xf]
  %v11827 = vld [vmem:[%s11 + $0x54] sm:$0xf]
  %v11828 = vld [vmem:[%s11 + $0x58] sm:$0xf]
  %v11829 = vld [vmem:[%s11 + $0x5c] sm:$0xf]
  %v11830 = vld [vmem:[%s11 + $0x60] sm:$0xf]
  %v11831 = vld [vmem:[%s11 + $0x64] sm:$0xf]
  %v11832 = vld [vmem:[%s11 + $0x68] sm:$0xf]
  %v11833 = vld [vmem:[%s11 + $0x6c] sm:$0xf]
  %v11834 = vld [vmem:[%s11 + $0x70] sm:$0xf]
  %v11835 = vld [vmem:[%s11 + $0x74] sm:$0xf]
  %v11836 = vld [vmem:[%s11 + $0x78] sm:$0xf]
  %v11837 = vld [vmem:[%s11 + $0x7c] sm:$0xf]
  %v11838 = vld [vmem:[%s11 + $0x80] sm:$0xf]
  %v11839 = vld [vmem:[%s11 + $0x84] sm:$0xf]
  %v11840 = vld [vmem:[%s11 + $0x88] sm:$0xf]
  %v11841 = vld [vmem:[%s11 + $0x8c] sm:$0xf]
  %v11842 = vld [vmem:[%s11 + $0x90] sm:$0xf]
  %v11843 = vld [vmem:[%s11 + $0x94] sm:$0xf]
  %v11844 = vld [vmem:[%s11 + $0x98] sm:$0xf]
  %v11845 = vld [vmem:[%s11 + $0x9c] sm:$0xf]
  %v11846 = vld [vmem:[%s11 + $0xa0] sm:$0xf]
  %v11847 = vld [vmem:[%s11 + $0xa4] sm:$0xf]
  %v11848 = vld [vmem:[%s11 + $0xa8] sm:$0xf]
  %v11849 = vld [vmem:[%s11 + $0xac] sm:$0xf]
  %v11850 = vld [vmem:[%s11 + $0xb0] sm:$0xf]
  %v11851 = vld [vmem:[%s11 + $0xb4] sm:$0xf]
  %v11852 = vld [vmem:[%s11 + $0xb8] sm:$0xf]
  %v11853 = vld [vmem:[%s11 + $0xbc] sm:$0xf]
  %v11854 = vld [vmem:[%s11 + $0xc0] sm:$0xf]
  %v11855 = vld [vmem:[%s11 + $0xc4] sm:$0xf]
  %v11856 = vld [vmem:[%s11 + $0xc8] sm:$0xf]
  %v11857 = vld [vmem:[%s11 + $0xcc] sm:$0xf]
  %v11858 = vld [vmem:[%s11 + $0xd0] sm:$0xf]
  %v11859 = vld [vmem:[%s11 + $0xd4] sm:$0xf]
  %v11860 = vld [vmem:[%s11 + $0xd8] sm:$0xf]
  %v11861 = vld [vmem:[%s11 + $0xdc] sm:$0xf]
  %v11862 = vld [vmem:[%s11 + $0xe0] sm:$0xf]
  %v11863 = vld [vmem:[%s11 + $0xe4] sm:$0xf]
  %v11864 = vld [vmem:[%s11 + $0xe8] sm:$0xf]
  %v11865 = vld [vmem:[%s11 + $0xec] sm:$0xf]
  %v11866 = vld [vmem:[%s11 + $0xf0] sm:$0xf]
  %v11867 = vld [vmem:[%s11 + $0xf4] sm:$0xf]
  %v11868 = vld [vmem:[%s11 + $0xf8] sm:$0xf]
  %v11869 = vld [vmem:[%s11 + $0xfc] sm:$0xf]
  %v11870 = vld [vmem:[%s12] sm:$0x1]
  %v11872 = vlaneseq
  %v11873 = vshrl.u32 %v11872, 7
  %v11874 = vsub.s32 0, %v11873
  %v11875 = vrot.slane %v11870, %v11874
  %v11941 = vunpack.c.l.b16 %v11806
  %v11942 = vunpack.c.l.b16 %v11807
  %v11943 = vunpack.c.l.b16 %v11808
  %v11944 = vunpack.c.l.b16 %v11809
  %v11945 = vunpack.c.l.b16 %v11810
  %v11946 = vunpack.c.l.b16 %v11811
  %v11947 = vunpack.c.l.b16 %v11812
  %v11948 = vunpack.c.l.b16 %v11813
  %v11949 = vunpack.c.l.b16 %v11814
  %v11950 = vunpack.c.l.b16 %v11815
  %v11951 = vunpack.c.l.b16 %v11816
  %v11952 = vunpack.c.l.b16 %v11817
  %v11953 = vunpack.c.l.b16 %v11818
  %v11954 = vunpack.c.l.b16 %v11819
  %v11955 = vunpack.c.l.b16 %v11820
  %v11956 = vunpack.c.l.b16 %v11821
  %v11957 = vunpack.c.l.b16 %v11822
  %v11958 = vunpack.c.l.b16 %v11823
  %v11959 = vunpack.c.l.b16 %v11824
  %v11960 = vunpack.c.l.b16 %v11825
  %v11961 = vunpack.c.l.b16 %v11826
  %v11962 = vunpack.c.l.b16 %v11827
  %v11963 = vunpack.c.l.b16 %v11828
  %v11964 = vunpack.c.l.b16 %v11829
  %v11965 = vunpack.c.l.b16 %v11830
  %v11966 = vunpack.c.l.b16 %v11831
  %v11967 = vunpack.c.l.b16 %v11832
  %v11968 = vunpack.c.l.b16 %v11833
  %v11969 = vunpack.c.l.b16 %v11834
  %v11970 = vunpack.c.l.b16 %v11835
  %v11971 = vunpack.c.l.b16 %v11836
  %v11972 = vunpack.c.l.b16 %v11837
  %v11973 = vunpack.c.l.b16 %v11838
  %v11974 = vunpack.c.l.b16 %v11839
  %v11975 = vunpack.c.l.b16 %v11840
  %v11976 = vunpack.c.l.b16 %v11841
  %v11977 = vunpack.c.l.b16 %v11842
  %v11978 = vunpack.c.l.b16 %v11843
  %v11979 = vunpack.c.l.b16 %v11844
  %v11980 = vunpack.c.l.b16 %v11845
  %v11981 = vunpack.c.l.b16 %v11846
  %v11982 = vunpack.c.l.b16 %v11847
  %v11983 = vunpack.c.l.b16 %v11848
  %v11984 = vunpack.c.l.b16 %v11849
  %v11985 = vunpack.c.l.b16 %v11850
  %v11986 = vunpack.c.l.b16 %v11851
  %v11987 = vunpack.c.l.b16 %v11852
  %v11988 = vunpack.c.l.b16 %v11853
  %v11989 = vunpack.c.l.b16 %v11854
  %v11990 = vunpack.c.l.b16 %v11855
  %v11991 = vunpack.c.l.b16 %v11856
  %v11992 = vunpack.c.l.b16 %v11857
  %v11993 = vunpack.c.l.b16 %v11858
  %v11994 = vunpack.c.l.b16 %v11859
  %v11995 = vunpack.c.l.b16 %v11860
  %v11996 = vunpack.c.l.b16 %v11861
  %v11997 = vunpack.c.l.b16 %v11862
  %v11998 = vunpack.c.l.b16 %v11863
  %v11999 = vunpack.c.l.b16 %v11864
  %v12000 = vunpack.c.l.b16 %v11865
  %v12001 = vunpack.c.l.b16 %v11866
  %v12002 = vunpack.c.l.b16 %v11867
  %v12003 = vunpack.c.l.b16 %v11868
  %v12004 = vunpack.c.l.b16 %v11869
  %v12005 = vpack.c.b16 %v11942, %v11941
  %v12006 = vpack.c.b16 %v11944, %v11943
  %v12007 = vpack.c.b16 %v11946, %v11945
  %v12008 = vpack.c.b16 %v11948, %v11947
  %v12009 = vpack.c.b16 %v11950, %v11949
  %v12010 = vpack.c.b16 %v11952, %v11951
  %v12011 = vpack.c.b16 %v11954, %v11953
  %v12012 = vpack.c.b16 %v11956, %v11955
  %v12013 = vpack.c.b16 %v11958, %v11957
  %v12014 = vpack.c.b16 %v11960, %v11959
  %v12015 = vpack.c.b16 %v11962, %v11961
  %v12016 = vpack.c.b16 %v11964, %v11963
  %v12017 = vpack.c.b16 %v11966, %v11965
  %v12018 = vpack.c.b16 %v11968, %v11967
  %v12019 = vpack.c.b16 %v11970, %v11969
  %v12020 = vpack.c.b16 %v11972, %v11971
  %v12021 = vpack.c.b16 %v11974, %v11973
  %v12022 = vpack.c.b16 %v11976, %v11975
  %v12023 = vpack.c.b16 %v11978, %v11977
  %v12024 = vpack.c.b16 %v11980, %v11979
  %v12025 = vpack.c.b16 %v11982, %v11981
  %v12026 = vpack.c.b16 %v11984, %v11983
  %v12027 = vpack.c.b16 %v11986, %v11985
  %v12028 = vpack.c.b16 %v11988, %v11987
  %v12029 = vpack.c.b16 %v11990, %v11989
  %v12030 = vpack.c.b16 %v11992, %v11991
  %v12031 = vpack.c.b16 %v11994, %v11993
  %v12032 = vpack.c.b16 %v11996, %v11995
  %v12033 = vpack.c.b16 %v11998, %v11997
  %v12034 = vpack.c.b16 %v12000, %v11999
  %v12035 = vpack.c.b16 %v12002, %v12001
  %v12036 = vpack.c.b16 %v12004, %v12003
  %12069 = vmatprep.subr.bf16.mxu0 0
  %12070 = vmatpush1.bf16.msra.mxu0 %v12005
  %12071 = vmatprep.subr.bf16.mxu0 0
  %12072 = vmatpush1.bf16.msra.mxu0 %v12006
  %12073 = vmatprep.subr.bf16.mxu0 0
  %12074 = vmatpush1.bf16.msra.mxu0 %v12007
  %12075 = vmatprep.subr.bf16.mxu0 0
  %12076 = vmatpush1.bf16.msra.mxu0 %v12008
  %12077 = vmatprep.subr.bf16.mxu0 0
  %12078 = vmatpush1.bf16.msra.mxu0 %v12009
  %12079 = vmatprep.subr.bf16.mxu0 0
  %12080 = vmatpush1.bf16.msra.mxu0 %v12010
  %12081 = vmatprep.subr.bf16.mxu0 0
  %12082 = vmatpush1.bf16.msra.mxu0 %v12011
  %12083 = vmatprep.subr.bf16.mxu0 0
  %12084 = vmatpush1.bf16.msra.mxu0 %v12012
  %12085 = vmatprep.subr.bf16.mxu0 0
  %12086 = vmatpush1.bf16.msra.mxu0 %v12013
  %12087 = vmatprep.subr.bf16.mxu0 0
  %12088 = vmatpush1.bf16.msra.mxu0 %v12014
  %12089 = vmatprep.subr.bf16.mxu0 0
  %12090 = vmatpush1.bf16.msra.mxu0 %v12015
  %12091 = vmatprep.subr.bf16.mxu0 0
  %12092 = vmatpush1.bf16.msra.mxu0 %v12016
  %12093 = vmatprep.subr.bf16.mxu0 0
  %12094 = vmatpush1.bf16.msra.mxu0 %v12017
  %12095 = vmatprep.subr.bf16.mxu0 0
  %12096 = vmatpush1.bf16.msra.mxu0 %v12018
  %12097 = vmatprep.subr.bf16.mxu0 0
  %12098 = vmatpush1.bf16.msra.mxu0 %v12019
  %12099 = vmatprep.subr.bf16.mxu0 0
  %12100 = vmatpush1.bf16.msra.mxu0 %v12020
  %12101 = vmatprep.mubr.bf16.mxu0 %v11803
  %12102 = vmatmul.mubr.bf16.gmra.mrb[0].mxu0 %v11802
  %v12103 = vpop.f32.mrb[0].mxu0
  %v12104 = vadd.f32 %v11875, %v12103
  %v12105 = vpop.f32.mrb[0].mxu0
  %v12106 = vpop.f32.mrb[0].mxu0
  %v12107 = vpop.f32.mrb[0].mxu0
  %12108 = vdwg.mxu0
  %12109 = vmatprep.subr.bf16.mxu0 0
  %12110 = vmatpush1.bf16.msra.mxu0 %v12021
  %12111 = vmatprep.subr.bf16.mxu0 0
  %12112 = vmatpush1.bf16.msra.mxu0 %v12022
  %12113 = vmatprep.subr.bf16.mxu0 0
  %12114 = vmatpush1.bf16.msra.mxu0 %v12023
  %12115 = vmatprep.subr.bf16.mxu0 0
  %12116 = vmatpush1.bf16.msra.mxu0 %v12024
  %12117 = vmatprep.subr.bf16.mxu0 0
  %12118 = vmatpush1.bf16.msra.mxu0 %v12025
  %12119 = vmatprep.subr.bf16.mxu0 0
  %12120 = vmatpush1.bf16.msra.mxu0 %v12026
  %12121 = vmatprep.subr.bf16.mxu0 0
  %12122 = vmatpush1.bf16.msra.mxu0 %v12027
  %12123 = vmatprep.subr.bf16.mxu0 0
  %12124 = vmatpush1.bf16.msra.mxu0 %v12028
  %12125 = vmatprep.subr.bf16.mxu0 0
  %12126 = vmatpush1.bf16.msra.mxu0 %v12029
  %12127 = vmatprep.subr.bf16.mxu0 0
  %12128 = vmatpush1.bf16.msra.mxu0 %v12030
  %12129 = vmatprep.subr.bf16.mxu0 0
  %12130 = vmatpush1.bf16.msra.mxu0 %v12031
  %12131 = vmatprep.subr.bf16.mxu0 0
  %12132 = vmatpush1.bf16.msra.mxu0 %v12032
  %12133 = vmatprep.subr.bf16.mxu0 0
  %12134 = vmatpush1.bf16.msra.mxu0 %v12033
  %12135 = vmatprep.subr.bf16.mxu0 0
  %12136 = vmatpush1.bf16.msra.mxu0 %v12034
  %12137 = vmatprep.subr.bf16.mxu0 0
  %12138 = vmatpush1.bf16.msra.mxu0 %v12035
  %12139 = vmatprep.subr.bf16.mxu0 0
  %12140 = vmatpush1.bf16.msra.mxu0 %v12036
  %12141 = vmatprep.mubr.bf16.mxu0 %v11805
  %12142 = vmatmul.mubr.bf16.gmra.mrb[0].mxu0 %v11804
  %v12143 = vpop.f32.mrb[0].mxu0
  %v12144 = vadd.f32 %v12104, %v12143
  %v12145 = vpop.f32.mrb[0].mxu0
  %v12146 = vpop.f32.mrb[0].mxu0
  %v12147 = vpop.f32.mrb[0].mxu0
  %12148 = vdwg.mxu0
  %vm12149 = vcmask 80896
  %12150 = vst.msk [vmem:[%s13] sm:$0xff] %vm12149, %v12144
  // Predicated region
  $region54: #{cnn_forward.1} parent=0 // pred_check
    _
  $region55: #{cnn_forward.1} parent=0 // pred_check_branch
    %12152 = sbr.rel (0) target = $region57
  $region56: #{cnn_forward.1} parent=0 // pred_region
    _
  $region57: #{cnn_forward.1} parent=0 // pred_fallthru
    _
  // Predicated region
  $region58: #{cnn_forward.1} parent=0 // pred_check
    _
  $region59: #{cnn_forward.1} parent=0 // pred_check_branch
    %12154 = sbr.rel (0) target = $region61
  $region60: #{cnn_forward.1} parent=0 // pred_region
    _
  $region61: #{cnn_forward.1} parent=0 // pred_fallthru
    _

</llo_original>
